<compile_context>
chip_gen: v7x
topology: tpu7x:2x2x1
jax: 0.10.0
libtpu: 0.0.40
codegen_flags: <defaults>
</compile_context>

<pallas_src>
import functools

import jax
import jax.numpy as jnp
from jax.experimental import pallas as pl
from jax.experimental.pallas import tpu as pltpu


def _bn_kernel(x_ref, gb_ref, o_ref, *, eps, inv_r):
    # x_ref:  (tile_c, R) slab in VMEM -- channels on sublanes, N*H*W on lanes.
    # gb_ref: (tile_c, 2) -- column 0 = gamma, column 1 = beta.
    x = x_ref[...].astype(jnp.float32)
    r = x.shape[1]

    # Per-channel reductions on the MXU (idle otherwise).  axis=1 jnp.sum would
    # be a cross-lane XLU reduce over every vreg of the tile; a (tc,R)@(R,1)
    # matmul against a ones column does the same sum on the MXU.
    ones_col = jnp.ones((r, 1), jnp.float32)
    s = jnp.dot(x, ones_col, preferred_element_type=jnp.float32)        # (tc, 1)
    ss = jnp.dot(x * x, ones_col, preferred_element_type=jnp.float32)   # (tc, 1)

    mean = s * inv_r
    var = ss * inv_r - mean * mean                 # biased variance (training-mode BN)
    var = jnp.maximum(var, 0.0)                    # guard one-pass cancellation
    inv_std = jax.lax.rsqrt(var + eps)

    gamma = gb_ref[:, 0:1].astype(jnp.float32)
    beta = gb_ref[:, 1:2].astype(jnp.float32)

    # Fold normalization + affine into one per-channel scale/shift FMA.
    scale = gamma * inv_std
    shift = beta - mean * scale
    o_ref[...] = (x * scale + shift).astype(o_ref.dtype)


def _cores_per_chip():
    """Best-effort TensorCores-per-chip query; falls back to 1 (v5e/v6e)."""
    try:
        info = pltpu.get_tpu_info()
        for attr in ("num_tensorcores", "tensorcores_per_chip", "num_cores",
                     "cores_per_chip", "core_count"):
            v = getattr(info, attr, None)
            if isinstance(v, int) and v > 0:
                return int(v)
    except Exception:
        pass
    try:
        kind = jax.devices()[0].device_kind.lower()
        if "v7" in kind:
            return 2
    except Exception:
        pass
    return 1


def _num_c_tiles(C, want):
    """Largest tile count <= `want` whose channel tile is a multiple of 8 sublanes."""
    for nt in range(max(want, 1), 1, -1):
        if C % nt == 0 and (C // nt) % 8 == 0:
            return nt
    return 1


@functools.partial(jax.jit, static_argnames=("eps", "n_ct"))
def _batchnorm2d_pallas(x_nchw, gamma, beta, eps, n_ct):
    N, C, H, W = x_nchw.shape
    HW = H * W
    R = N * HW

    # NCHW-native slab: (C, N*H*W).  For N == 1 this is a pure reshape (no data
    # movement); for N > 1 a transpose is unavoidable in this layout.
    if N == 1:
        x2d = x_nchw.reshape(C, HW)
    else:
        x2d = jnp.transpose(x_nchw.reshape(N, C, HW), (1, 0, 2)).reshape(C, R)

    # Pack gamma/beta into one (C, 2) array -> one BlockSpec, half the tiny DMAs.
    gb = jnp.stack([gamma.astype(jnp.float32), beta.astype(jnp.float32)], axis=1)

    tc = C // n_ct

    out2d = pl.pallas_call(
        functools.partial(_bn_kernel, eps=eps, inv_r=1.0 / R),
        out_shape=jax.ShapeDtypeStruct((C, R), x2d.dtype),
        grid=(n_ct,),
        in_specs=[
            # (tc, R): tc is a multiple of 8 sublanes; R equals the full lane extent.
            pl.BlockSpec((tc, R), lambda i: (i, 0)),
            pl.BlockSpec((tc, 2), lambda i: (i, 0)),
        ],
        out_specs=pl.BlockSpec((tc, R), lambda i: (i, 0)),
        compiler_params=pltpu.CompilerParams(
            dimension_semantics=("parallel",)),
        cost_estimate=pl.CostEstimate(
            flops=7 * C * R,              # 2 tiny matmuls + elementwise FMA path
            transcendentals=C,
            bytes_accessed=2 * C * R * 4 + 2 * C * 4,
        ),
    )(x2d, gb)

    if N == 1:
        return out2d.reshape(N, C, H, W)
    return jnp.transpose(out2d.reshape(C, N, HW), (1, 0, 2)).reshape(N, C, H, W)


def batchnorm2d_pallas(x_nchw, gamma, beta, eps=1e-5):
    """Training-mode BatchNorm2d forward.  x_nchw: (N, C, H, W)."""
    C = x_nchw.shape[1]
    # Single grid step on single-TC chips (v5e/v6e); 2-way channel split on v7x.
    n_ct = _num_c_tiles(C, want=_cores_per_chip())
    return _batchnorm2d_pallas(x_nchw, gamma, beta, eps, n_ct)


def _reference(x_nchw, gamma, beta, eps=1e-5):
    mean = jnp.mean(x_nchw, axis=(0, 2, 3), keepdims=True)
    var = jnp.mean((x_nchw - mean) ** 2, axis=(0, 2, 3), keepdims=True)
    g = gamma.reshape(1, -1, 1, 1)
    b = beta.reshape(1, -1, 1, 1)
    return (x_nchw - mean) * jax.lax.rsqrt(var + eps) * g + b


if __name__ == "__main__":
    key = jax.random.PRNGKey(0)
    kx, kg, kb = jax.random.split(key, 3)

    N, C, H, W = 1, 1632, 7, 7  # shapes implied by the module / captured input
    x = jax.random.normal(kx, (N, C, H, W), dtype=jnp.float32)
    # Deterministic, non-trivial affine params (PyTorch default would be 1/0).
    gamma = 1.0 + 0.1 * jax.random.normal(kg, (C,), dtype=jnp.float32)
    beta = 0.1 * jax.random.normal(kb, (C,), dtype=jnp.float32)

    out = batchnorm2d_pallas(x, gamma, beta, eps=1e-5)
    out = jax.block_until_ready(out)

    ref = _reference(x, gamma, beta, eps=1e-5)
    assert out.shape == (N, C, H, W)
    assert jnp.allclose(out, ref, atol=1e-4, rtol=1e-4), "mismatch vs reference"

    print("KERNEL_OK")
</pallas_src>

<mosaic_0001>
module attributes {stable_mosaic.version = 11 : i64} {
  func.func @_bn_kernel(%arg0: i32, %arg1: memref<1632x49xf32, #tpu.memory_space<vmem>>, %arg2: memref<1632x2xf32, #tpu.memory_space<vmem>>, %arg3: memref<1632x49xf32, #tpu.memory_space<vmem>>) attributes {dimension_semantics = [#tpu.dimension_semantics<parallel>], iteration_bounds = array<i64: 1>, scalar_prefetch = 0 : i64, scratch_operands = 0 : i64, tpu.core_type = #tpu.core_type<tc>, window_params = [{transform_indices = @transform_0, window_bounds = array<i64: 1632, 49>}, {transform_indices = @transform_1, window_bounds = array<i64: 1632, 2>}, {transform_indices = @transform_2, window_bounds = array<i64: 1632, 49>}]} {
    %c0 = arith.constant 0 : index
    %c0_0 = arith.constant 0 : index
    %0 = vector.load %arg1[%c0, %c0_0] : memref<1632x49xf32, #tpu.memory_space<vmem>>, vector<1632x49xf32>
    %cst = arith.constant 1.000000e+00 : f32
    %1 = vector.broadcast %cst : f32 to vector<49x1xf32>
    %cst_1 = arith.constant dense<0.000000e+00> : vector<1632x1xf32>
    %2 = tpu.matmul %0, %1, %cst_1 {dimension_numbers = #tpu.dot_dimension_numbers<[1], [0], [0], [1], [0, 0, 1, 1], [], []>} : vector<1632x49xf32>, vector<49x1xf32>, vector<1632x1xf32> -> vector<1632x1xf32>
    %3 = arith.mulf %0, %0 : vector<1632x49xf32>
    %cst_2 = arith.constant dense<0.000000e+00> : vector<1632x1xf32>
    %4 = tpu.matmul %3, %1, %cst_2 {dimension_numbers = #tpu.dot_dimension_numbers<[1], [0], [0], [1], [0, 0, 1, 1], [], []>} : vector<1632x49xf32>, vector<49x1xf32>, vector<1632x1xf32> -> vector<1632x1xf32>
    %cst_3 = arith.constant 0.0204081628 : f32
    %5 = vector.broadcast %cst_3 : f32 to vector<1632x1xf32>
    %6 = arith.mulf %2, %5 : vector<1632x1xf32>
    %cst_4 = arith.constant 0.0204081628 : f32
    %7 = vector.broadcast %cst_4 : f32 to vector<1632x1xf32>
    %8 = arith.mulf %4, %7 : vector<1632x1xf32>
    %9 = arith.mulf %6, %6 : vector<1632x1xf32>
    %10 = arith.subf %8, %9 : vector<1632x1xf32>
    %cst_5 = arith.constant 0.000000e+00 : f32
    %11 = vector.broadcast %cst_5 : f32 to vector<1632x1xf32>
    %12 = arith.maximumf %10, %11 : vector<1632x1xf32>
    %cst_6 = arith.constant 9.99999974E-6 : f32
    %13 = vector.broadcast %cst_6 : f32 to vector<1632x1xf32>
    %14 = arith.addf %12, %13 : vector<1632x1xf32>
    %15 = math.rsqrt %14 : vector<1632x1xf32>
    %c0_7 = arith.constant 0 : index
    %c0_8 = arith.constant 0 : index
    %16 = vector.load %arg2[%c0_7, %c0_8] : memref<1632x2xf32, #tpu.memory_space<vmem>>, vector<1632x1xf32>
    %c0_9 = arith.constant 0 : index
    %c1 = arith.constant 1 : index
    %17 = vector.load %arg2[%c0_9, %c1] : memref<1632x2xf32, #tpu.memory_space<vmem>>, vector<1632x1xf32>
    %18 = arith.mulf %16, %15 : vector<1632x1xf32>
    %19 = arith.mulf %6, %18 : vector<1632x1xf32>
    %20 = arith.subf %17, %19 : vector<1632x1xf32>
    %21 = vector.broadcast %18 : vector<1632x1xf32> to vector<1632x49xf32>
    %22 = arith.mulf %0, %21 : vector<1632x49xf32>
    %23 = vector.broadcast %20 : vector<1632x1xf32> to vector<1632x49xf32>
    %24 = arith.addf %22, %23 : vector<1632x49xf32>
    %c0_10 = arith.constant 0 : index
    %c0_11 = arith.constant 0 : index
    %25 = vector.load %arg3[%c0_10, %c0_11] : memref<1632x49xf32, #tpu.memory_space<vmem>>, vector<1632x49xf32>
    tpu.vector_store %arg3[%c0_10, %c0_11], %24 {strides = array<i32>} : memref<1632x49xf32, #tpu.memory_space<vmem>>, vector<1632x49xf32>,
    return
  }
  func.func @transform_0(%arg0: i32) -> (i32, i32) {
    %c0_i32 = arith.constant 0 : i32
    %c0_i32_0 = arith.constant 0 : i32
    return %arg0, %c0_i32 : i32, i32
  }
  func.func @transform_1(%arg0: i32) -> (i32, i32) {
    %c0_i32 = arith.constant 0 : i32
    %c0_i32_0 = arith.constant 0 : i32
    return %arg0, %c0_i32 : i32, i32
  }
  func.func @transform_2(%arg0: i32) -> (i32, i32) {
    %c0_i32 = arith.constant 0 : i32
    %c0_i32_0 = arith.constant 0 : i32
    return %arg0, %c0_i32 : i32, i32
  }
}

</mosaic_0001>

<llo_original>
// kernel: _batchnorm2d_pallas.1
$region0: #{_batchnorm2d_pallas.1}
  #allocation0 [shape = 'u32[]', space=smem, size = 0x4, offset = 0x4, fixed_abs, tag = 'smem constant byte address 0x4 - core index']
  #allocation1 [shape = 'u32[144,128]{1,0:T(1,128)}', space=vmem, size = 0x12000, scoped, tag = 'internal scratch']
  %s0 = inlined_call_operand.vmem [shape: f32[1632,49], index: 0, kind: input, shape index: {}]
  %s1 = inlined_call_operand.vmem [shape: f32[1632,2], index: 1, kind: input, shape index: {}]
  %s2 = inlined_call_operand.vmem [shape: f32[1632,49], index: 2, kind: output, shape index: {}]
  %s3 = sld [smem:[#allocation0]]
  $region18: #{_batchnorm2d_pallas.1} parent=0
    _
  %s5 = ssub.s32 1, %s3
  %s6 = scalar_select 0, %s5, %s3
  // Predicated region
  $region2: #{_batchnorm2d_pallas.1} parent=0 // pred_check
    _
  $region3: #{_batchnorm2d_pallas.1} parent=0 // pred_check_branch
    %8 = sbr.rel (0) target = $region5
  $region4: #{_batchnorm2d_pallas.1} parent=0 // pred_region
    _
  $region5: #{_batchnorm2d_pallas.1} parent=0 // pred_fallthru
    _
  // Predicated region
  $region6: #{_batchnorm2d_pallas.1} parent=0 // pred_check
    _
  $region7: #{_batchnorm2d_pallas.1} parent=0 // pred_check_branch
    %10 = sbr.rel (0) target = $region9
  $region8: #{_batchnorm2d_pallas.1} parent=0 // pred_region
    _
  $region9: #{_batchnorm2d_pallas.1} parent=0 // pred_fallthru
    _
  %v11 = vld [vmem:[%s0] sm:$0xff]
  %v12 = vld [vmem:[%s0 + $0x8] sm:$0xff]
  %v13 = vld [vmem:[%s0 + $0x10] sm:$0xff]
  %v14 = vld [vmem:[%s0 + $0x18] sm:$0xff]
  %v15 = vld [vmem:[%s0 + $0x20] sm:$0xff]
  %v16 = vld [vmem:[%s0 + $0x28] sm:$0xff]
  %v17 = vld [vmem:[%s0 + $0x30] sm:$0xff]
  %v18 = vld [vmem:[%s0 + $0x38] sm:$0xff]
  %v19 = vld [vmem:[%s0 + $0x40] sm:$0xff]
  %v20 = vld [vmem:[%s0 + $0x48] sm:$0xff]
  %v21 = vld [vmem:[%s0 + $0x50] sm:$0xff]
  %v22 = vld [vmem:[%s0 + $0x58] sm:$0xff]
  %v23 = vld [vmem:[%s0 + $0x60] sm:$0xff]
  %v24 = vld [vmem:[%s0 + $0x68] sm:$0xff]
  %v25 = vld [vmem:[%s0 + $0x70] sm:$0xff]
  %v26 = vld [vmem:[%s0 + $0x78] sm:$0xff]
  %v27 = vld [vmem:[%s0 + $0x80] sm:$0xff]
  %v28 = vld [vmem:[%s0 + $0x88] sm:$0xff]
  %v29 = vld [vmem:[%s0 + $0x90] sm:$0xff]
  %v30 = vld [vmem:[%s0 + $0x98] sm:$0xff]
  %v31 = vld [vmem:[%s0 + $0xa0] sm:$0xff]
  %v32 = vld [vmem:[%s0 + $0xa8] sm:$0xff]
  %v33 = vld [vmem:[%s0 + $0xb0] sm:$0xff]
  %v34 = vld [vmem:[%s0 + $0xb8] sm:$0xff]
  %v35 = vld [vmem:[%s0 + $0xc0] sm:$0xff]
  %v36 = vld [vmem:[%s0 + $0xc8] sm:$0xff]
  %v37 = vld [vmem:[%s0 + $0xd0] sm:$0xff]
  %v38 = vld [vmem:[%s0 + $0xd8] sm:$0xff]
  %v39 = vld [vmem:[%s0 + $0xe0] sm:$0xff]
  %v40 = vld [vmem:[%s0 + $0xe8] sm:$0xff]
  %v41 = vld [vmem:[%s0 + $0xf0] sm:$0xff]
  %v42 = vld [vmem:[%s0 + $0xf8] sm:$0xff]
  %v43 = vld [vmem:[%s0 + $0x100] sm:$0xff]
  %v44 = vld [vmem:[%s0 + $0x108] sm:$0xff]
  %v45 = vld [vmem:[%s0 + $0x110] sm:$0xff]
  %v46 = vld [vmem:[%s0 + $0x118] sm:$0xff]
  %v47 = vld [vmem:[%s0 + $0x120] sm:$0xff]
  %v48 = vld [vmem:[%s0 + $0x128] sm:$0xff]
  %v49 = vld [vmem:[%s0 + $0x130] sm:$0xff]
  %v50 = vld [vmem:[%s0 + $0x138] sm:$0xff]
  %v51 = vld [vmem:[%s0 + $0x140] sm:$0xff]
  %v52 = vld [vmem:[%s0 + $0x148] sm:$0xff]
  %v53 = vld [vmem:[%s0 + $0x150] sm:$0xff]
  %v54 = vld [vmem:[%s0 + $0x158] sm:$0xff]
  %v55 = vld [vmem:[%s0 + $0x160] sm:$0xff]
  %v56 = vld [vmem:[%s0 + $0x168] sm:$0xff]
  %v57 = vld [vmem:[%s0 + $0x170] sm:$0xff]
  %v58 = vld [vmem:[%s0 + $0x178] sm:$0xff]
  %v59 = vld [vmem:[%s0 + $0x180] sm:$0xff]
  %v60 = vld [vmem:[%s0 + $0x188] sm:$0xff]
  %v61 = vld [vmem:[%s0 + $0x190] sm:$0xff]
  %v62 = vld [vmem:[%s0 + $0x198] sm:$0xff]
  %v63 = vld [vmem:[%s0 + $0x1a0] sm:$0xff]
  %v64 = vld [vmem:[%s0 + $0x1a8] sm:$0xff]
  %v65 = vld [vmem:[%s0 + $0x1b0] sm:$0xff]
  %v66 = vld [vmem:[%s0 + $0x1b8] sm:$0xff]
  %v67 = vld [vmem:[%s0 + $0x1c0] sm:$0xff]
  %v68 = vld [vmem:[%s0 + $0x1c8] sm:$0xff]
  %v69 = vld [vmem:[%s0 + $0x1d0] sm:$0xff]
  %v70 = vld [vmem:[%s0 + $0x1d8] sm:$0xff]
  %v71 = vld [vmem:[%s0 + $0x1e0] sm:$0xff]
  %v72 = vld [vmem:[%s0 + $0x1e8] sm:$0xff]
  %v73 = vld [vmem:[%s0 + $0x1f0] sm:$0xff]
  %v74 = vld [vmem:[%s0 + $0x1f8] sm:$0xff]
  %v75 = vld [vmem:[%s0 + $0x200] sm:$0xff]
  %v76 = vld [vmem:[%s0 + $0x208] sm:$0xff]
  %v77 = vld [vmem:[%s0 + $0x210] sm:$0xff]
  %v78 = vld [vmem:[%s0 + $0x218] sm:$0xff]
  %v79 = vld [vmem:[%s0 + $0x220] sm:$0xff]
  %v80 = vld [vmem:[%s0 + $0x228] sm:$0xff]
  %v81 = vld [vmem:[%s0 + $0x230] sm:$0xff]
  %v82 = vld [vmem:[%s0 + $0x238] sm:$0xff]
  %v83 = vld [vmem:[%s0 + $0x240] sm:$0xff]
  %v84 = vld [vmem:[%s0 + $0x248] sm:$0xff]
  %v85 = vld [vmem:[%s0 + $0x250] sm:$0xff]
  %v86 = vld [vmem:[%s0 + $0x258] sm:$0xff]
  %v87 = vld [vmem:[%s0 + $0x260] sm:$0xff]
  %v88 = vld [vmem:[%s0 + $0x268] sm:$0xff]
  %v89 = vld [vmem:[%s0 + $0x270] sm:$0xff]
  %v90 = vld [vmem:[%s0 + $0x278] sm:$0xff]
  %v91 = vld [vmem:[%s0 + $0x280] sm:$0xff]
  %v92 = vld [vmem:[%s0 + $0x288] sm:$0xff]
  %v93 = vld [vmem:[%s0 + $0x290] sm:$0xff]
  %v94 = vld [vmem:[%s0 + $0x298] sm:$0xff]
  %v95 = vld [vmem:[%s0 + $0x2a0] sm:$0xff]
  %v96 = vld [vmem:[%s0 + $0x2a8] sm:$0xff]
  %v97 = vld [vmem:[%s0 + $0x2b0] sm:$0xff]
  %v98 = vld [vmem:[%s0 + $0x2b8] sm:$0xff]
  %v99 = vld [vmem:[%s0 + $0x2c0] sm:$0xff]
  %v100 = vld [vmem:[%s0 + $0x2c8] sm:$0xff]
  %v101 = vld [vmem:[%s0 + $0x2d0] sm:$0xff]
  %v102 = vld [vmem:[%s0 + $0x2d8] sm:$0xff]
  %v103 = vld [vmem:[%s0 + $0x2e0] sm:$0xff]
  %v104 = vld [vmem:[%s0 + $0x2e8] sm:$0xff]
  %v105 = vld [vmem:[%s0 + $0x2f0] sm:$0xff]
  %v106 = vld [vmem:[%s0 + $0x2f8] sm:$0xff]
  %v107 = vld [vmem:[%s0 + $0x300] sm:$0xff]
  %v108 = vld [vmem:[%s0 + $0x308] sm:$0xff]
  %v109 = vld [vmem:[%s0 + $0x310] sm:$0xff]
  %v110 = vld [vmem:[%s0 + $0x318] sm:$0xff]
  %v111 = vld [vmem:[%s0 + $0x320] sm:$0xff]
  %v112 = vld [vmem:[%s0 + $0x328] sm:$0xff]
  %v113 = vld [vmem:[%s0 + $0x330] sm:$0xff]
  %v114 = vld [vmem:[%s0 + $0x338] sm:$0xff]
  %v115 = vld [vmem:[%s0 + $0x340] sm:$0xff]
  %v116 = vld [vmem:[%s0 + $0x348] sm:$0xff]
  %v117 = vld [vmem:[%s0 + $0x350] sm:$0xff]
  %v118 = vld [vmem:[%s0 + $0x358] sm:$0xff]
  %v119 = vld [vmem:[%s0 + $0x360] sm:$0xff]
  %v120 = vld [vmem:[%s0 + $0x368] sm:$0xff]
  %v121 = vld [vmem:[%s0 + $0x370] sm:$0xff]
  %v122 = vld [vmem:[%s0 + $0x378] sm:$0xff]
  %v123 = vld [vmem:[%s0 + $0x380] sm:$0xff]
  %v124 = vld [vmem:[%s0 + $0x388] sm:$0xff]
  %v125 = vld [vmem:[%s0 + $0x390] sm:$0xff]
  %v126 = vld [vmem:[%s0 + $0x398] sm:$0xff]
  %v127 = vld [vmem:[%s0 + $0x3a0] sm:$0xff]
  %v128 = vld [vmem:[%s0 + $0x3a8] sm:$0xff]
  %v129 = vld [vmem:[%s0 + $0x3b0] sm:$0xff]
  %v130 = vld [vmem:[%s0 + $0x3b8] sm:$0xff]
  %v131 = vld [vmem:[%s0 + $0x3c0] sm:$0xff]
  %v132 = vld [vmem:[%s0 + $0x3c8] sm:$0xff]
  %v133 = vld [vmem:[%s0 + $0x3d0] sm:$0xff]
  %v134 = vld [vmem:[%s0 + $0x3d8] sm:$0xff]
  %v135 = vld [vmem:[%s0 + $0x3e0] sm:$0xff]
  %v136 = vld [vmem:[%s0 + $0x3e8] sm:$0xff]
  %v137 = vld [vmem:[%s0 + $0x3f0] sm:$0xff]
  %v138 = vld [vmem:[%s0 + $0x3f8] sm:$0xff]
  %v139 = vld [vmem:[%s0 + $0x400] sm:$0xff]
  %v140 = vld [vmem:[%s0 + $0x408] sm:$0xff]
  %v141 = vld [vmem:[%s0 + $0x410] sm:$0xff]
  %v142 = vld [vmem:[%s0 + $0x418] sm:$0xff]
  %v143 = vld [vmem:[%s0 + $0x420] sm:$0xff]
  %v144 = vld [vmem:[%s0 + $0x428] sm:$0xff]
  %v145 = vld [vmem:[%s0 + $0x430] sm:$0xff]
  %v146 = vld [vmem:[%s0 + $0x438] sm:$0xff]
  %v147 = vld [vmem:[%s0 + $0x440] sm:$0xff]
  %v148 = vld [vmem:[%s0 + $0x448] sm:$0xff]
  %v149 = vld [vmem:[%s0 + $0x450] sm:$0xff]
  %v150 = vld [vmem:[%s0 + $0x458] sm:$0xff]
  %v151 = vld [vmem:[%s0 + $0x460] sm:$0xff]
  %v152 = vld [vmem:[%s0 + $0x468] sm:$0xff]
  %v153 = vld [vmem:[%s0 + $0x470] sm:$0xff]
  %v154 = vld [vmem:[%s0 + $0x478] sm:$0xff]
  %v155 = vld [vmem:[%s0 + $0x480] sm:$0xff]
  %v156 = vld [vmem:[%s0 + $0x488] sm:$0xff]
  %v157 = vld [vmem:[%s0 + $0x490] sm:$0xff]
  %v158 = vld [vmem:[%s0 + $0x498] sm:$0xff]
  %v159 = vld [vmem:[%s0 + $0x4a0] sm:$0xff]
  %v160 = vld [vmem:[%s0 + $0x4a8] sm:$0xff]
  %v161 = vld [vmem:[%s0 + $0x4b0] sm:$0xff]
  %v162 = vld [vmem:[%s0 + $0x4b8] sm:$0xff]
  %v163 = vld [vmem:[%s0 + $0x4c0] sm:$0xff]
  %v164 = vld [vmem:[%s0 + $0x4c8] sm:$0xff]
  %v165 = vld [vmem:[%s0 + $0x4d0] sm:$0xff]
  %v166 = vld [vmem:[%s0 + $0x4d8] sm:$0xff]
  %v167 = vld [vmem:[%s0 + $0x4e0] sm:$0xff]
  %v168 = vld [vmem:[%s0 + $0x4e8] sm:$0xff]
  %v169 = vld [vmem:[%s0 + $0x4f0] sm:$0xff]
  %v170 = vld [vmem:[%s0 + $0x4f8] sm:$0xff]
  %v171 = vld [vmem:[%s0 + $0x500] sm:$0xff]
  %v172 = vld [vmem:[%s0 + $0x508] sm:$0xff]
  %v173 = vld [vmem:[%s0 + $0x510] sm:$0xff]
  %v174 = vld [vmem:[%s0 + $0x518] sm:$0xff]
  %v175 = vld [vmem:[%s0 + $0x520] sm:$0xff]
  %v176 = vld [vmem:[%s0 + $0x528] sm:$0xff]
  %v177 = vld [vmem:[%s0 + $0x530] sm:$0xff]
  %v178 = vld [vmem:[%s0 + $0x538] sm:$0xff]
  %v179 = vld [vmem:[%s0 + $0x540] sm:$0xff]
  %v180 = vld [vmem:[%s0 + $0x548] sm:$0xff]
  %v181 = vld [vmem:[%s0 + $0x550] sm:$0xff]
  %v182 = vld [vmem:[%s0 + $0x558] sm:$0xff]
  %v183 = vld [vmem:[%s0 + $0x560] sm:$0xff]
  %v184 = vld [vmem:[%s0 + $0x568] sm:$0xff]
  %v185 = vld [vmem:[%s0 + $0x570] sm:$0xff]
  %v186 = vld [vmem:[%s0 + $0x578] sm:$0xff]
  %v187 = vld [vmem:[%s0 + $0x580] sm:$0xff]
  %v188 = vld [vmem:[%s0 + $0x588] sm:$0xff]
  %v189 = vld [vmem:[%s0 + $0x590] sm:$0xff]
  %v190 = vld [vmem:[%s0 + $0x598] sm:$0xff]
  %v191 = vld [vmem:[%s0 + $0x5a0] sm:$0xff]
  %v192 = vld [vmem:[%s0 + $0x5a8] sm:$0xff]
  %v193 = vld [vmem:[%s0 + $0x5b0] sm:$0xff]
  %v194 = vld [vmem:[%s0 + $0x5b8] sm:$0xff]
  %v195 = vld [vmem:[%s0 + $0x5c0] sm:$0xff]
  %v196 = vld [vmem:[%s0 + $0x5c8] sm:$0xff]
  %v197 = vld [vmem:[%s0 + $0x5d0] sm:$0xff]
  %v198 = vld [vmem:[%s0 + $0x5d8] sm:$0xff]
  %v199 = vld [vmem:[%s0 + $0x5e0] sm:$0xff]
  %v200 = vld [vmem:[%s0 + $0x5e8] sm:$0xff]
  %v201 = vld [vmem:[%s0 + $0x5f0] sm:$0xff]
  %v202 = vld [vmem:[%s0 + $0x5f8] sm:$0xff]
  %v203 = vld [vmem:[%s0 + $0x600] sm:$0xff]
  %v204 = vld [vmem:[%s0 + $0x608] sm:$0xff]
  %v205 = vld [vmem:[%s0 + $0x610] sm:$0xff]
  %v206 = vld [vmem:[%s0 + $0x618] sm:$0xff]
  %v207 = vld [vmem:[%s0 + $0x620] sm:$0xff]
  %v208 = vld [vmem:[%s0 + $0x628] sm:$0xff]
  %v209 = vld [vmem:[%s0 + $0x630] sm:$0xff]
  %v210 = vld [vmem:[%s0 + $0x638] sm:$0xff]
  %v211 = vld [vmem:[%s0 + $0x640] sm:$0xff]
  %v212 = vld [vmem:[%s0 + $0x648] sm:$0xff]
  %v213 = vld [vmem:[%s0 + $0x650] sm:$0xff]
  %v214 = vld [vmem:[%s0 + $0x658] sm:$0xff]
  %vm215 = vcmask 400384
  %v217 = vsel %vm215, %v11, 0
  %v220 = vsel %vm215, %v12, 0
  %v223 = vsel %vm215, %v13, 0
  %v226 = vsel %vm215, %v14, 0
  %v229 = vsel %vm215, %v15, 0
  %v232 = vsel %vm215, %v16, 0
  %v235 = vsel %vm215, %v17, 0
  %v238 = vsel %vm215, %v18, 0
  %v241 = vsel %vm215, %v19, 0
  %v244 = vsel %vm215, %v20, 0
  %v247 = vsel %vm215, %v21, 0
  %v250 = vsel %vm215, %v22, 0
  %v253 = vsel %vm215, %v23, 0
  %v256 = vsel %vm215, %v24, 0
  %v259 = vsel %vm215, %v25, 0
  %v262 = vsel %vm215, %v26, 0
  %v265 = vsel %vm215, %v27, 0
  %v268 = vsel %vm215, %v28, 0
  %v271 = vsel %vm215, %v29, 0
  %v274 = vsel %vm215, %v30, 0
  %v277 = vsel %vm215, %v31, 0
  %v280 = vsel %vm215, %v32, 0
  %v283 = vsel %vm215, %v33, 0
  %v286 = vsel %vm215, %v34, 0
  %v289 = vsel %vm215, %v35, 0
  %v292 = vsel %vm215, %v36, 0
  %v295 = vsel %vm215, %v37, 0
  %v298 = vsel %vm215, %v38, 0
  %v301 = vsel %vm215, %v39, 0
  %v304 = vsel %vm215, %v40, 0
  %v307 = vsel %vm215, %v41, 0
  %v310 = vsel %vm215, %v42, 0
  %v313 = vsel %vm215, %v43, 0
  %v316 = vsel %vm215, %v44, 0
  %v319 = vsel %vm215, %v45, 0
  %v322 = vsel %vm215, %v46, 0
  %v325 = vsel %vm215, %v47, 0
  %v328 = vsel %vm215, %v48, 0
  %v331 = vsel %vm215, %v49, 0
  %v334 = vsel %vm215, %v50, 0
  %v337 = vsel %vm215, %v51, 0
  %v340 = vsel %vm215, %v52, 0
  %v343 = vsel %vm215, %v53, 0
  %v346 = vsel %vm215, %v54, 0
  %v349 = vsel %vm215, %v55, 0
  %v352 = vsel %vm215, %v56, 0
  %v355 = vsel %vm215, %v57, 0
  %v358 = vsel %vm215, %v58, 0
  %v361 = vsel %vm215, %v59, 0
  %v364 = vsel %vm215, %v60, 0
  %v367 = vsel %vm215, %v61, 0
  %v370 = vsel %vm215, %v62, 0
  %v373 = vsel %vm215, %v63, 0
  %v376 = vsel %vm215, %v64, 0
  %v379 = vsel %vm215, %v65, 0
  %v382 = vsel %vm215, %v66, 0
  %v385 = vsel %vm215, %v67, 0
  %v388 = vsel %vm215, %v68, 0
  %v391 = vsel %vm215, %v69, 0
  %v394 = vsel %vm215, %v70, 0
  %v397 = vsel %vm215, %v71, 0
  %v400 = vsel %vm215, %v72, 0
  %v403 = vsel %vm215, %v73, 0
  %v406 = vsel %vm215, %v74, 0
  %v409 = vsel %vm215, %v75, 0
  %v412 = vsel %vm215, %v76, 0
  %v415 = vsel %vm215, %v77, 0
  %v418 = vsel %vm215, %v78, 0
  %v421 = vsel %vm215, %v79, 0
  %v424 = vsel %vm215, %v80, 0
  %v427 = vsel %vm215, %v81, 0
  %v430 = vsel %vm215, %v82, 0
  %v433 = vsel %vm215, %v83, 0
  %v436 = vsel %vm215, %v84, 0
  %v439 = vsel %vm215, %v85, 0
  %v442 = vsel %vm215, %v86, 0
  %v445 = vsel %vm215, %v87, 0
  %v448 = vsel %vm215, %v88, 0
  %v451 = vsel %vm215, %v89, 0
  %v454 = vsel %vm215, %v90, 0
  %v457 = vsel %vm215, %v91, 0
  %v460 = vsel %vm215, %v92, 0
  %v463 = vsel %vm215, %v93, 0
  %v466 = vsel %vm215, %v94, 0
  %v469 = vsel %vm215, %v95, 0
  %v472 = vsel %vm215, %v96, 0
  %v475 = vsel %vm215, %v97, 0
  %v478 = vsel %vm215, %v98, 0
  %v481 = vsel %vm215, %v99, 0
  %v484 = vsel %vm215, %v100, 0
  %v487 = vsel %vm215, %v101, 0
  %v490 = vsel %vm215, %v102, 0
  %v493 = vsel %vm215, %v103, 0
  %v496 = vsel %vm215, %v104, 0
  %v499 = vsel %vm215, %v105, 0
  %v502 = vsel %vm215, %v106, 0
  %v505 = vsel %vm215, %v107, 0
  %v508 = vsel %vm215, %v108, 0
  %v511 = vsel %vm215, %v109, 0
  %v514 = vsel %vm215, %v110, 0
  %v517 = vsel %vm215, %v111, 0
  %v520 = vsel %vm215, %v112, 0
  %v523 = vsel %vm215, %v113, 0
  %v526 = vsel %vm215, %v114, 0
  %v529 = vsel %vm215, %v115, 0
  %v532 = vsel %vm215, %v116, 0
  %v535 = vsel %vm215, %v117, 0
  %v538 = vsel %vm215, %v118, 0
  %v541 = vsel %vm215, %v119, 0
  %v544 = vsel %vm215, %v120, 0
  %v547 = vsel %vm215, %v121, 0
  %v550 = vsel %vm215, %v122, 0
  %v553 = vsel %vm215, %v123, 0
  %v556 = vsel %vm215, %v124, 0
  %v559 = vsel %vm215, %v125, 0
  %v562 = vsel %vm215, %v126, 0
  %v565 = vsel %vm215, %v127, 0
  %v568 = vsel %vm215, %v128, 0
  %v571 = vsel %vm215, %v129, 0
  %v574 = vsel %vm215, %v130, 0
  %v577 = vsel %vm215, %v131, 0
  %v580 = vsel %vm215, %v132, 0
  %v583 = vsel %vm215, %v133, 0
  %v586 = vsel %vm215, %v134, 0
  %v589 = vsel %vm215, %v135, 0
  %v592 = vsel %vm215, %v136, 0
  %v595 = vsel %vm215, %v137, 0
  %v598 = vsel %vm215, %v138, 0
  %v601 = vsel %vm215, %v139, 0
  %v604 = vsel %vm215, %v140, 0
  %v607 = vsel %vm215, %v141, 0
  %v610 = vsel %vm215, %v142, 0
  %v613 = vsel %vm215, %v143, 0
  %v616 = vsel %vm215, %v144, 0
  %v619 = vsel %vm215, %v145, 0
  %v622 = vsel %vm215, %v146, 0
  %v625 = vsel %vm215, %v147, 0
  %v628 = vsel %vm215, %v148, 0
  %v631 = vsel %vm215, %v149, 0
  %v634 = vsel %vm215, %v150, 0
  %v637 = vsel %vm215, %v151, 0
  %v640 = vsel %vm215, %v152, 0
  %v643 = vsel %vm215, %v153, 0
  %v646 = vsel %vm215, %v154, 0
  %v649 = vsel %vm215, %v155, 0
  %v652 = vsel %vm215, %v156, 0
  %v655 = vsel %vm215, %v157, 0
  %v658 = vsel %vm215, %v158, 0
  %v661 = vsel %vm215, %v159, 0
  %v664 = vsel %vm215, %v160, 0
  %v667 = vsel %vm215, %v161, 0
  %v670 = vsel %vm215, %v162, 0
  %v673 = vsel %vm215, %v163, 0
  %v676 = vsel %vm215, %v164, 0
  %v679 = vsel %vm215, %v165, 0
  %v682 = vsel %vm215, %v166, 0
  %v685 = vsel %vm215, %v167, 0
  %v688 = vsel %vm215, %v168, 0
  %v691 = vsel %vm215, %v169, 0
  %v694 = vsel %vm215, %v170, 0
  %v697 = vsel %vm215, %v171, 0
  %v700 = vsel %vm215, %v172, 0
  %v703 = vsel %vm215, %v173, 0
  %v706 = vsel %vm215, %v174, 0
  %v709 = vsel %vm215, %v175, 0
  %v712 = vsel %vm215, %v176, 0
  %v715 = vsel %vm215, %v177, 0
  %v718 = vsel %vm215, %v178, 0
  %v721 = vsel %vm215, %v179, 0
  %v724 = vsel %vm215, %v180, 0
  %v727 = vsel %vm215, %v181, 0
  %v730 = vsel %vm215, %v182, 0
  %v733 = vsel %vm215, %v183, 0
  %v736 = vsel %vm215, %v184, 0
  %v739 = vsel %vm215, %v185, 0
  %v742 = vsel %vm215, %v186, 0
  %v745 = vsel %vm215, %v187, 0
  %v748 = vsel %vm215, %v188, 0
  %v751 = vsel %vm215, %v189, 0
  %v754 = vsel %vm215, %v190, 0
  %v757 = vsel %vm215, %v191, 0
  %v760 = vsel %vm215, %v192, 0
  %v763 = vsel %vm215, %v193, 0
  %v766 = vsel %vm215, %v194, 0
  %v769 = vsel %vm215, %v195, 0
  %v772 = vsel %vm215, %v196, 0
  %v775 = vsel %vm215, %v197, 0
  %v778 = vsel %vm215, %v198, 0
  %v781 = vsel %vm215, %v199, 0
  %v784 = vsel %vm215, %v200, 0
  %v787 = vsel %vm215, %v201, 0
  %v790 = vsel %vm215, %v202, 0
  %v793 = vsel %vm215, %v203, 0
  %v796 = vsel %vm215, %v204, 0
  %v799 = vsel %vm215, %v205, 0
  %v802 = vsel %vm215, %v206, 0
  %v805 = vsel %vm215, %v207, 0
  %v808 = vsel %vm215, %v208, 0
  %v811 = vsel %vm215, %v209, 0
  %v814 = vsel %vm215, %v210, 0
  %v817 = vsel %vm215, %v211, 0
  %v820 = vsel %vm215, %v212, 0
  %v823 = vsel %vm215, %v213, 0
  %v826 = vsel %vm215, %v214, 0
  %vm828 = vcmask 1040384
  %v830 = vsel %vm828, 1.0, 0
  %832 = vmatprep.subr.mxu0 0.0
  %833 = vmatpush1.msra.mxu0 1.0
  %834 = vmatprep.subr.mxu0 0.0
  %835 = vmatpush1.msra.mxu0 1.0
  %836 = vmatprep.subr.mxu0 0.0
  %837 = vmatpush1.msra.mxu0 1.0
  %838 = vmatprep.subr.mxu0 0.0
  %839 = vmatpush1.msra.mxu0 1.0
  %840 = vmatprep.subr.mxu0 0.0
  %841 = vmatpush1.msra.mxu0 1.0
  %842 = vmatprep.subr.mxu0 0.0
  %843 = vmatpush1.msra.mxu0 1.0
  %844 = vmatprep.subr.mxu0 0.0
  %845 = vmatpush1.msra.mxu0 %v830
  %846 = vmatprep.subr.mxu0 0.0
  %847 = vmatpush1.msra.mxu0 0.0
  %848 = vmatprep.subr.mxu0 0.0
  %849 = vmatpush1.msra.mxu0 0.0
  %850 = vmatprep.subr.mxu0 0.0
  %851 = vmatpush1.msra.mxu0 0.0
  %852 = vmatprep.subr.mxu0 0.0
  %853 = vmatpush1.msra.mxu0 0.0
  %854 = vmatprep.subr.mxu0 0.0
  %855 = vmatpush1.msra.mxu0 0.0
  %856 = vmatprep.subr.mxu0 0.0
  %857 = vmatpush1.msra.mxu0 0.0
  %858 = vmatprep.subr.mxu0 0.0
  %859 = vmatpush1.msra.mxu0 0.0
  %860 = vmatprep.subr.mxu0 0.0
  %861 = vmatpush1.msra.mxu0 0.0
  %862 = vmatprep.subr.mxu0 0.0
  %863 = vmatpush1.msra.mxu0 0.0
  %864 = vmatprep.subr.mxu0 0.0
  %865 = vmatpush1.msra.mxu0 0.0
  %866 = vmatprep.subr.mxu0 0.0
  %867 = vmatpush1.msra.mxu0 0.0
  %868 = vmatprep.subr.mxu0 0.0
  %869 = vmatpush1.msra.mxu0 0.0
  %870 = vmatprep.subr.mxu0 0.0
  %871 = vmatpush1.msra.mxu0 0.0
  %872 = vmatprep.subr.mxu0 0.0
  %873 = vmatpush1.msra.mxu0 0.0
  %874 = vmatprep.subr.mxu0 0.0
  %875 = vmatpush1.msra.mxu0 0.0
  %876 = vmatprep.subr.mxu0 0.0
  %877 = vmatpush1.msra.mxu0 0.0
  %878 = vmatprep.subr.mxu0 0.0
  %879 = vmatpush1.msra.mxu0 0.0
  %880 = vmatprep.subr.mxu0 0.0
  %881 = vmatpush1.msra.mxu0 0.0
  %882 = vmatprep.subr.mxu0 0.0
  %883 = vmatpush1.msra.mxu0 0.0
  %884 = vmatprep.subr.mxu0 0.0
  %885 = vmatpush1.msra.mxu0 0.0
  %886 = vmatprep.subr.mxu0 0.0
  %887 = vmatpush1.msra.mxu0 0.0
  %888 = vmatprep.subr.mxu0 0.0
  %889 = vmatpush1.msra.mxu0 0.0
  %890 = vmatprep.subr.mxu0 0.0
  %891 = vmatpush1.msra.mxu0 0.0
  %892 = vmatprep.subr.mxu0 0.0
  %893 = vmatpush1.msra.mxu0 0.0
  %894 = vmatprep.subr.mxu0 0.0
  %895 = vmatpush1.msra.mxu0 0.0
  %896 = vmatprep.mubr.f32.mxu0 0.0
  %897 = vmatmul.mubr.f32.gmra.mrb[0].mxu0 %v217
  %v898 = vpop.f32.mrb[0].mxu0
  %v899 = vadd.f32 0.0, %v898
  %v900 = vpop.f32.mrb[0].mxu0
  %901 = vmatprep.mubr.f32.mxu0 0.0
  %902 = vmatmul.mubr.f32.gmra.mrb[0].mxu0 %v220
  %v903 = vpop.f32.mrb[0].mxu0
  %v904 = vadd.f32 0.0, %v903
  %v905 = vpop.f32.mrb[0].mxu0
  %906 = vmatprep.mubr.f32.mxu0 0.0
  %907 = vmatmul.mubr.f32.gmra.mrb[0].mxu0 %v223
  %v908 = vpop.f32.mrb[0].mxu0
  %v909 = vadd.f32 0.0, %v908
  %v910 = vpop.f32.mrb[0].mxu0
  %911 = vmatprep.mubr.f32.mxu0 0.0
  %912 = vmatmul.mubr.f32.gmra.mrb[0].mxu0 %v226
  %v913 = vpop.f32.mrb[0].mxu0
  %v914 = vadd.f32 0.0, %v913
  %v915 = vpop.f32.mrb[0].mxu0
  %916 = vmatprep.mubr.f32.mxu0 0.0
  %917 = vmatmul.mubr.f32.gmra.mrb[0].mxu0 %v229
  %v918 = vpop.f32.mrb[0].mxu0
  %v919 = vadd.f32 0.0, %v918
  %v920 = vpop.f32.mrb[0].mxu0
  %921 = vmatprep.mubr.f32.mxu0 0.0
  %922 = vmatmul.mubr.f32.gmra.mrb[0].mxu0 %v232
  %v923 = vpop.f32.mrb[0].mxu0
  %v924 = vadd.f32 0.0, %v923
  %v925 = vpop.f32.mrb[0].mxu0
  %926 = vmatprep.mubr.f32.mxu0 0.0
  %927 = vmatmul.mubr.f32.gmra.mrb[0].mxu0 %v235
  %v928 = vpop.f32.mrb[0].mxu0
  %v929 = vadd.f32 0.0, %v928
  %v930 = vpop.f32.mrb[0].mxu0
  %931 = vmatprep.mubr.f32.mxu0 0.0
  %932 = vmatmul.mubr.f32.gmra.mrb[0].mxu0 %v238
  %v933 = vpop.f32.mrb[0].mxu0
  %v934 = vadd.f32 0.0, %v933
  %v935 = vpop.f32.mrb[0].mxu0
  %936 = vmatprep.mubr.f32.mxu0 0.0
  %937 = vmatmul.mubr.f32.gmra.mrb[0].mxu0 %v241
  %v938 = vpop.f32.mrb[0].mxu0
  %v939 = vadd.f32 0.0, %v938
  %v940 = vpop.f32.mrb[0].mxu0
  %941 = vmatprep.mubr.f32.mxu0 0.0
  %942 = vmatmul.mubr.f32.gmra.mrb[0].mxu0 %v244
  %v943 = vpop.f32.mrb[0].mxu0
  %v944 = vadd.f32 0.0, %v943
  %v945 = vpop.f32.mrb[0].mxu0
  %946 = vmatprep.mubr.f32.mxu0 0.0
  %947 = vmatmul.mubr.f32.gmra.mrb[0].mxu0 %v247
  %v948 = vpop.f32.mrb[0].mxu0
  %v949 = vadd.f32 0.0, %v948
  %v950 = vpop.f32.mrb[0].mxu0
  %951 = vmatprep.mubr.f32.mxu0 0.0
  %952 = vmatmul.mubr.f32.gmra.mrb[0].mxu0 %v250
  %v953 = vpop.f32.mrb[0].mxu0
  %v954 = vadd.f32 0.0, %v953
  %v955 = vpop.f32.mrb[0].mxu0
  %956 = vmatprep.mubr.f32.mxu0 0.0
  %957 = vmatmul.mubr.f32.gmra.mrb[0].mxu0 %v253
  %v958 = vpop.f32.mrb[0].mxu0
  %v959 = vadd.f32 0.0, %v958
  %v960 = vpop.f32.mrb[0].mxu0
  %961 = vmatprep.mubr.f32.mxu0 0.0
  %962 = vmatmul.mubr.f32.gmra.mrb[0].mxu0 %v256
  %v963 = vpop.f32.mrb[0].mxu0
  %v964 = vadd.f32 0.0, %v963
  %v965 = vpop.f32.mrb[0].mxu0
  %966 = vmatprep.mubr.f32.mxu0 0.0
  %967 = vmatmul.mubr.f32.gmra.mrb[0].mxu0 %v259
  %v968 = vpop.f32.mrb[0].mxu0
  %v969 = vadd.f32 0.0, %v968
  %v970 = vpop.f32.mrb[0].mxu0
  %971 = vmatprep.mubr.f32.mxu0 0.0
  %972 = vmatmul.mubr.f32.gmra.mrb[0].mxu0 %v262
  %v973 = vpop.f32.mrb[0].mxu0
  %v974 = vadd.f32 0.0, %v973
  %v975 = vpop.f32.mrb[0].mxu0
  %976 = vmatprep.mubr.f32.mxu0 0.0
  %977 = vmatmul.mubr.f32.gmra.mrb[0].mxu0 %v265
  %v978 = vpop.f32.mrb[0].mxu0
  %v979 = vadd.f32 0.0, %v978
  %v980 = vpop.f32.mrb[0].mxu0
  %981 = vmatprep.mubr.f32.mxu0 0.0
  %982 = vmatmul.mubr.f32.gmra.mrb[0].mxu0 %v268
  %v983 = vpop.f32.mrb[0].mxu0
  %v984 = vadd.f32 0.0, %v983
  %v985 = vpop.f32.mrb[0].mxu0
  %986 = vmatprep.mubr.f32.mxu0 0.0
  %987 = vmatmul.mubr.f32.gmra.mrb[0].mxu0 %v271
  %v988 = vpop.f32.mrb[0].mxu0
  %v989 = vadd.f32 0.0, %v988
  %v990 = vpop.f32.mrb[0].mxu0
  %991 = vmatprep.mubr.f32.mxu0 0.0
  %992 = vmatmul.mubr.f32.gmra.mrb[0].mxu0 %v274
  %v993 = vpop.f32.mrb[0].mxu0
  %v994 = vadd.f32 0.0, %v993
  %v995 = vpop.f32.mrb[0].mxu0
  %996 = vmatprep.mubr.f32.mxu0 0.0
  %997 = vmatmul.mubr.f32.gmra.mrb[0].mxu0 %v277
  %v998 = vpop.f32.mrb[0].mxu0
  %v999 = vadd.f32 0.0, %v998
  %v1000 = vpop.f32.mrb[0].mxu0
  %1001 = vmatprep.mubr.f32.mxu0 0.0
  %1002 = vmatmul.mubr.f32.gmra.mrb[0].mxu0 %v280
  %v1003 = vpop.f32.mrb[0].mxu0
  %v1004 = vadd.f32 0.0, %v1003
  %v1005 = vpop.f32.mrb[0].mxu0
  %1006 = vmatprep.mubr.f32.mxu0 0.0
  %1007 = vmatmul.mubr.f32.gmra.mrb[0].mxu0 %v283
  %v1008 = vpop.f32.mrb[0].mxu0
  %v1009 = vadd.f32 0.0, %v1008
  %v1010 = vpop.f32.mrb[0].mxu0
  %1011 = vmatprep.mubr.f32.mxu0 0.0
  %1012 = vmatmul.mubr.f32.gmra.mrb[0].mxu0 %v286
  %v1013 = vpop.f32.mrb[0].mxu0
  %v1014 = vadd.f32 0.0, %v1013
  %v1015 = vpop.f32.mrb[0].mxu0
  %1016 = vmatprep.mubr.f32.mxu0 0.0
  %1017 = vmatmul.mubr.f32.gmra.mrb[0].mxu0 %v289
  %v1018 = vpop.f32.mrb[0].mxu0
  %v1019 = vadd.f32 0.0, %v1018
  %v1020 = vpop.f32.mrb[0].mxu0
  %1021 = vmatprep.mubr.f32.mxu0 0.0
  %1022 = vmatmul.mubr.f32.gmra.mrb[0].mxu0 %v292
  %v1023 = vpop.f32.mrb[0].mxu0
  %v1024 = vadd.f32 0.0, %v1023
  %v1025 = vpop.f32.mrb[0].mxu0
  %1026 = vmatprep.mubr.f32.mxu0 0.0
  %1027 = vmatmul.mubr.f32.gmra.mrb[0].mxu0 %v295
  %v1028 = vpop.f32.mrb[0].mxu0
  %v1029 = vadd.f32 0.0, %v1028
  %v1030 = vpop.f32.mrb[0].mxu0
  %1031 = vmatprep.mubr.f32.mxu0 0.0
  %1032 = vmatmul.mubr.f32.gmra.mrb[0].mxu0 %v298
  %v1033 = vpop.f32.mrb[0].mxu0
  %v1034 = vadd.f32 0.0, %v1033
  %v1035 = vpop.f32.mrb[0].mxu0
  %1036 = vmatprep.mubr.f32.mxu0 0.0
  %1037 = vmatmul.mubr.f32.gmra.mrb[0].mxu0 %v301
  %v1038 = vpop.f32.mrb[0].mxu0
  %v1039 = vadd.f32 0.0, %v1038
  %v1040 = vpop.f32.mrb[0].mxu0
  %1041 = vmatprep.mubr.f32.mxu0 0.0
  %1042 = vmatmul.mubr.f32.gmra.mrb[0].mxu0 %v304
  %v1043 = vpop.f32.mrb[0].mxu0
  %v1044 = vadd.f32 0.0, %v1043
  %v1045 = vpop.f32.mrb[0].mxu0
  %1046 = vmatprep.mubr.f32.mxu0 0.0
  %1047 = vmatmul.mubr.f32.gmra.mrb[0].mxu0 %v307
  %v1048 = vpop.f32.mrb[0].mxu0
  %v1049 = vadd.f32 0.0, %v1048
  %v1050 = vpop.f32.mrb[0].mxu0
  %1051 = vmatprep.mubr.f32.mxu0 0.0
  %1052 = vmatmul.mubr.f32.gmra.mrb[0].mxu0 %v310
  %v1053 = vpop.f32.mrb[0].mxu0
  %v1054 = vadd.f32 0.0, %v1053
  %v1055 = vpop.f32.mrb[0].mxu0
  %1056 = vmatprep.mubr.f32.mxu0 0.0
  %1057 = vmatmul.mubr.f32.gmra.mrb[0].mxu0 %v313
  %v1058 = vpop.f32.mrb[0].mxu0
  %v1059 = vadd.f32 0.0, %v1058
  %v1060 = vpop.f32.mrb[0].mxu0
  %1061 = vmatprep.mubr.f32.mxu0 0.0
  %1062 = vmatmul.mubr.f32.gmra.mrb[0].mxu0 %v316
  %v1063 = vpop.f32.mrb[0].mxu0
  %v1064 = vadd.f32 0.0, %v1063
  %v1065 = vpop.f32.mrb[0].mxu0
  %1066 = vmatprep.mubr.f32.mxu0 0.0
  %1067 = vmatmul.mubr.f32.gmra.mrb[0].mxu0 %v319
  %v1068 = vpop.f32.mrb[0].mxu0
  %v1069 = vadd.f32 0.0, %v1068
  %v1070 = vpop.f32.mrb[0].mxu0
  %1071 = vmatprep.mubr.f32.mxu0 0.0
  %1072 = vmatmul.mubr.f32.gmra.mrb[0].mxu0 %v322
  %v1073 = vpop.f32.mrb[0].mxu0
  %v1074 = vadd.f32 0.0, %v1073
  %v1075 = vpop.f32.mrb[0].mxu0
  %1076 = vmatprep.mubr.f32.mxu0 0.0
  %1077 = vmatmul.mubr.f32.gmra.mrb[0].mxu0 %v325
  %v1078 = vpop.f32.mrb[0].mxu0
  %v1079 = vadd.f32 0.0, %v1078
  %v1080 = vpop.f32.mrb[0].mxu0
  %1081 = vmatprep.mubr.f32.mxu0 0.0
  %1082 = vmatmul.mubr.f32.gmra.mrb[0].mxu0 %v328
  %v1083 = vpop.f32.mrb[0].mxu0
  %v1084 = vadd.f32 0.0, %v1083
  %v1085 = vpop.f32.mrb[0].mxu0
  %1086 = vmatprep.mubr.f32.mxu0 0.0
  %1087 = vmatmul.mubr.f32.gmra.mrb[0].mxu0 %v331
  %v1088 = vpop.f32.mrb[0].mxu0
  %v1089 = vadd.f32 0.0, %v1088
  %v1090 = vpop.f32.mrb[0].mxu0
  %1091 = vmatprep.mubr.f32.mxu0 0.0
  %1092 = vmatmul.mubr.f32.gmra.mrb[0].mxu0 %v334
  %v1093 = vpop.f32.mrb[0].mxu0
  %v1094 = vadd.f32 0.0, %v1093
  %v1095 = vpop.f32.mrb[0].mxu0
  %1096 = vmatprep.mubr.f32.mxu0 0.0
  %1097 = vmatmul.mubr.f32.gmra.mrb[0].mxu0 %v337
  %v1098 = vpop.f32.mrb[0].mxu0
  %v1099 = vadd.f32 0.0, %v1098
  %v1100 = vpop.f32.mrb[0].mxu0
  %1101 = vmatprep.mubr.f32.mxu0 0.0
  %1102 = vmatmul.mubr.f32.gmra.mrb[0].mxu0 %v340
  %v1103 = vpop.f32.mrb[0].mxu0
  %v1104 = vadd.f32 0.0, %v1103
  %v1105 = vpop.f32.mrb[0].mxu0
  %1106 = vmatprep.mubr.f32.mxu0 0.0
  %1107 = vmatmul.mubr.f32.gmra.mrb[0].mxu0 %v343
  %v1108 = vpop.f32.mrb[0].mxu0
  %v1109 = vadd.f32 0.0, %v1108
  %v1110 = vpop.f32.mrb[0].mxu0
  %1111 = vmatprep.mubr.f32.mxu0 0.0
  %1112 = vmatmul.mubr.f32.gmra.mrb[0].mxu0 %v346
  %v1113 = vpop.f32.mrb[0].mxu0
  %v1114 = vadd.f32 0.0, %v1113
  %v1115 = vpop.f32.mrb[0].mxu0
  %1116 = vmatprep.mubr.f32.mxu0 0.0
  %1117 = vmatmul.mubr.f32.gmra.mrb[0].mxu0 %v349
  %v1118 = vpop.f32.mrb[0].mxu0
  %v1119 = vadd.f32 0.0, %v1118
  %v1120 = vpop.f32.mrb[0].mxu0
  %1121 = vmatprep.mubr.f32.mxu0 0.0
  %1122 = vmatmul.mubr.f32.gmra.mrb[0].mxu0 %v352
  %v1123 = vpop.f32.mrb[0].mxu0
  %v1124 = vadd.f32 0.0, %v1123
  %v1125 = vpop.f32.mrb[0].mxu0
  %1126 = vmatprep.mubr.f32.mxu0 0.0
  %1127 = vmatmul.mubr.f32.gmra.mrb[0].mxu0 %v355
  %v1128 = vpop.f32.mrb[0].mxu0
  %v1129 = vadd.f32 0.0, %v1128
  %v1130 = vpop.f32.mrb[0].mxu0
  %1131 = vmatprep.mubr.f32.mxu0 0.0
  %1132 = vmatmul.mubr.f32.gmra.mrb[0].mxu0 %v358
  %v1133 = vpop.f32.mrb[0].mxu0
  %v1134 = vadd.f32 0.0, %v1133
  %v1135 = vpop.f32.mrb[0].mxu0
  %1136 = vmatprep.mubr.f32.mxu0 0.0
  %1137 = vmatmul.mubr.f32.gmra.mrb[0].mxu0 %v361
  %v1138 = vpop.f32.mrb[0].mxu0
  %v1139 = vadd.f32 0.0, %v1138
  %v1140 = vpop.f32.mrb[0].mxu0
  %1141 = vmatprep.mubr.f32.mxu0 0.0
  %1142 = vmatmul.mubr.f32.gmra.mrb[0].mxu0 %v364
  %v1143 = vpop.f32.mrb[0].mxu0
  %v1144 = vadd.f32 0.0, %v1143
  %v1145 = vpop.f32.mrb[0].mxu0
  %1146 = vmatprep.mubr.f32.mxu0 0.0
  %1147 = vmatmul.mubr.f32.gmra.mrb[0].mxu0 %v367
  %v1148 = vpop.f32.mrb[0].mxu0
  %v1149 = vadd.f32 0.0, %v1148
  %v1150 = vpop.f32.mrb[0].mxu0
  %1151 = vmatprep.mubr.f32.mxu0 0.0
  %1152 = vmatmul.mubr.f32.gmra.mrb[0].mxu0 %v370
  %v1153 = vpop.f32.mrb[0].mxu0
  %v1154 = vadd.f32 0.0, %v1153
  %v1155 = vpop.f32.mrb[0].mxu0
  %1156 = vmatprep.mubr.f32.mxu0 0.0
  %1157 = vmatmul.mubr.f32.gmra.mrb[0].mxu0 %v373
  %v1158 = vpop.f32.mrb[0].mxu0
  %v1159 = vadd.f32 0.0, %v1158
  %v1160 = vpop.f32.mrb[0].mxu0
  %1161 = vmatprep.mubr.f32.mxu0 0.0
  %1162 = vmatmul.mubr.f32.gmra.mrb[0].mxu0 %v376
  %v1163 = vpop.f32.mrb[0].mxu0
  %v1164 = vadd.f32 0.0, %v1163
  %v1165 = vpop.f32.mrb[0].mxu0
  %1166 = vmatprep.mubr.f32.mxu0 0.0
  %1167 = vmatmul.mubr.f32.gmra.mrb[0].mxu0 %v379
  %v1168 = vpop.f32.mrb[0].mxu0
  %v1169 = vadd.f32 0.0, %v1168
  %v1170 = vpop.f32.mrb[0].mxu0
  %1171 = vmatprep.mubr.f32.mxu0 0.0
  %1172 = vmatmul.mubr.f32.gmra.mrb[0].mxu0 %v382
  %v1173 = vpop.f32.mrb[0].mxu0
  %v1174 = vadd.f32 0.0, %v1173
  %v1175 = vpop.f32.mrb[0].mxu0
  %1176 = vmatprep.mubr.f32.mxu0 0.0
  %1177 = vmatmul.mubr.f32.gmra.mrb[0].mxu0 %v385
  %v1178 = vpop.f32.mrb[0].mxu0
  %v1179 = vadd.f32 0.0, %v1178
  %v1180 = vpop.f32.mrb[0].mxu0
  %1181 = vmatprep.mubr.f32.mxu0 0.0
  %1182 = vmatmul.mubr.f32.gmra.mrb[0].mxu0 %v388
  %v1183 = vpop.f32.mrb[0].mxu0
  %v1184 = vadd.f32 0.0, %v1183
  %v1185 = vpop.f32.mrb[0].mxu0
  %1186 = vmatprep.mubr.f32.mxu0 0.0
  %1187 = vmatmul.mubr.f32.gmra.mrb[0].mxu0 %v391
  %v1188 = vpop.f32.mrb[0].mxu0
  %v1189 = vadd.f32 0.0, %v1188
  %v1190 = vpop.f32.mrb[0].mxu0
  %1191 = vmatprep.mubr.f32.mxu0 0.0
  %1192 = vmatmul.mubr.f32.gmra.mrb[0].mxu0 %v394
  %v1193 = vpop.f32.mrb[0].mxu0
  %v1194 = vadd.f32 0.0, %v1193
  %v1195 = vpop.f32.mrb[0].mxu0
  %1196 = vmatprep.mubr.f32.mxu0 0.0
  %1197 = vmatmul.mubr.f32.gmra.mrb[0].mxu0 %v397
  %v1198 = vpop.f32.mrb[0].mxu0
  %v1199 = vadd.f32 0.0, %v1198
  %v1200 = vpop.f32.mrb[0].mxu0
  %1201 = vmatprep.mubr.f32.mxu0 0.0
  %1202 = vmatmul.mubr.f32.gmra.mrb[0].mxu0 %v400
  %v1203 = vpop.f32.mrb[0].mxu0
  %v1204 = vadd.f32 0.0, %v1203
  %v1205 = vpop.f32.mrb[0].mxu0
  %1206 = vmatprep.mubr.f32.mxu0 0.0
  %1207 = vmatmul.mubr.f32.gmra.mrb[0].mxu0 %v403
  %v1208 = vpop.f32.mrb[0].mxu0
  %v1209 = vadd.f32 0.0, %v1208
  %v1210 = vpop.f32.mrb[0].mxu0
  %1211 = vmatprep.mubr.f32.mxu0 0.0
  %1212 = vmatmul.mubr.f32.gmra.mrb[0].mxu0 %v406
  %v1213 = vpop.f32.mrb[0].mxu0
  %v1214 = vadd.f32 0.0, %v1213
  %v1215 = vpop.f32.mrb[0].mxu0
  %1216 = vmatprep.mubr.f32.mxu0 0.0
  %1217 = vmatmul.mubr.f32.gmra.mrb[0].mxu0 %v409
  %v1218 = vpop.f32.mrb[0].mxu0
  %v1219 = vadd.f32 0.0, %v1218
  %v1220 = vpop.f32.mrb[0].mxu0
  %1221 = vmatprep.mubr.f32.mxu0 0.0
  %1222 = vmatmul.mubr.f32.gmra.mrb[0].mxu0 %v412
  %v1223 = vpop.f32.mrb[0].mxu0
  %v1224 = vadd.f32 0.0, %v1223
  %v1225 = vpop.f32.mrb[0].mxu0
  %1226 = vmatprep.mubr.f32.mxu0 0.0
  %1227 = vmatmul.mubr.f32.gmra.mrb[0].mxu0 %v415
  %v1228 = vpop.f32.mrb[0].mxu0
  %v1229 = vadd.f32 0.0, %v1228
  %v1230 = vpop.f32.mrb[0].mxu0
  %1231 = vmatprep.mubr.f32.mxu0 0.0
  %1232 = vmatmul.mubr.f32.gmra.mrb[0].mxu0 %v418
  %v1233 = vpop.f32.mrb[0].mxu0
  %v1234 = vadd.f32 0.0, %v1233
  %v1235 = vpop.f32.mrb[0].mxu0
  %1236 = vmatprep.mubr.f32.mxu0 0.0
  %1237 = vmatmul.mubr.f32.gmra.mrb[0].mxu0 %v421
  %v1238 = vpop.f32.mrb[0].mxu0
  %v1239 = vadd.f32 0.0, %v1238
  %v1240 = vpop.f32.mrb[0].mxu0
  %1241 = vmatprep.mubr.f32.mxu0 0.0
  %1242 = vmatmul.mubr.f32.gmra.mrb[0].mxu0 %v424
  %v1243 = vpop.f32.mrb[0].mxu0
  %v1244 = vadd.f32 0.0, %v1243
  %v1245 = vpop.f32.mrb[0].mxu0
  %1246 = vmatprep.mubr.f32.mxu0 0.0
  %1247 = vmatmul.mubr.f32.gmra.mrb[0].mxu0 %v427
  %v1248 = vpop.f32.mrb[0].mxu0
  %v1249 = vadd.f32 0.0, %v1248
  %v1250 = vpop.f32.mrb[0].mxu0
  %1251 = vmatprep.mubr.f32.mxu0 0.0
  %1252 = vmatmul.mubr.f32.gmra.mrb[0].mxu0 %v430
  %v1253 = vpop.f32.mrb[0].mxu0
  %v1254 = vadd.f32 0.0, %v1253
  %v1255 = vpop.f32.mrb[0].mxu0
  %1256 = vmatprep.mubr.f32.mxu0 0.0
  %1257 = vmatmul.mubr.f32.gmra.mrb[0].mxu0 %v433
  %v1258 = vpop.f32.mrb[0].mxu0
  %v1259 = vadd.f32 0.0, %v1258
  %v1260 = vpop.f32.mrb[0].mxu0
  %1261 = vmatprep.mubr.f32.mxu0 0.0
  %1262 = vmatmul.mubr.f32.gmra.mrb[0].mxu0 %v436
  %v1263 = vpop.f32.mrb[0].mxu0
  %v1264 = vadd.f32 0.0, %v1263
  %v1265 = vpop.f32.mrb[0].mxu0
  %1266 = vmatprep.mubr.f32.mxu0 0.0
  %1267 = vmatmul.mubr.f32.gmra.mrb[0].mxu0 %v439
  %v1268 = vpop.f32.mrb[0].mxu0
  %v1269 = vadd.f32 0.0, %v1268
  %v1270 = vpop.f32.mrb[0].mxu0
  %1271 = vmatprep.mubr.f32.mxu0 0.0
  %1272 = vmatmul.mubr.f32.gmra.mrb[0].mxu0 %v442
  %v1273 = vpop.f32.mrb[0].mxu0
  %v1274 = vadd.f32 0.0, %v1273
  %v1275 = vpop.f32.mrb[0].mxu0
  %1276 = vmatprep.mubr.f32.mxu0 0.0
  %1277 = vmatmul.mubr.f32.gmra.mrb[0].mxu0 %v445
  %v1278 = vpop.f32.mrb[0].mxu0
  %v1279 = vadd.f32 0.0, %v1278
  %v1280 = vpop.f32.mrb[0].mxu0
  %1281 = vmatprep.mubr.f32.mxu0 0.0
  %1282 = vmatmul.mubr.f32.gmra.mrb[0].mxu0 %v448
  %v1283 = vpop.f32.mrb[0].mxu0
  %v1284 = vadd.f32 0.0, %v1283
  %v1285 = vpop.f32.mrb[0].mxu0
  %1286 = vmatprep.mubr.f32.mxu0 0.0
  %1287 = vmatmul.mubr.f32.gmra.mrb[0].mxu0 %v451
  %v1288 = vpop.f32.mrb[0].mxu0
  %v1289 = vadd.f32 0.0, %v1288
  %v1290 = vpop.f32.mrb[0].mxu0
  %1291 = vmatprep.mubr.f32.mxu0 0.0
  %1292 = vmatmul.mubr.f32.gmra.mrb[0].mxu0 %v454
  %v1293 = vpop.f32.mrb[0].mxu0
  %v1294 = vadd.f32 0.0, %v1293
  %v1295 = vpop.f32.mrb[0].mxu0
  %1296 = vmatprep.mubr.f32.mxu0 0.0
  %1297 = vmatmul.mubr.f32.gmra.mrb[0].mxu0 %v457
  %v1298 = vpop.f32.mrb[0].mxu0
  %v1299 = vadd.f32 0.0, %v1298
  %v1300 = vpop.f32.mrb[0].mxu0
  %1301 = vmatprep.mubr.f32.mxu0 0.0
  %1302 = vmatmul.mubr.f32.gmra.mrb[0].mxu0 %v460
  %v1303 = vpop.f32.mrb[0].mxu0
  %v1304 = vadd.f32 0.0, %v1303
  %v1305 = vpop.f32.mrb[0].mxu0
  %1306 = vmatprep.mubr.f32.mxu0 0.0
  %1307 = vmatmul.mubr.f32.gmra.mrb[0].mxu0 %v463
  %v1308 = vpop.f32.mrb[0].mxu0
  %v1309 = vadd.f32 0.0, %v1308
  %v1310 = vpop.f32.mrb[0].mxu0
  %1311 = vmatprep.mubr.f32.mxu0 0.0
  %1312 = vmatmul.mubr.f32.gmra.mrb[0].mxu0 %v466
  %v1313 = vpop.f32.mrb[0].mxu0
  %v1314 = vadd.f32 0.0, %v1313
  %v1315 = vpop.f32.mrb[0].mxu0
  %1316 = vmatprep.mubr.f32.mxu0 0.0
  %1317 = vmatmul.mubr.f32.gmra.mrb[0].mxu0 %v469
  %v1318 = vpop.f32.mrb[0].mxu0
  %v1319 = vadd.f32 0.0, %v1318
  %v1320 = vpop.f32.mrb[0].mxu0
  %1321 = vmatprep.mubr.f32.mxu0 0.0
  %1322 = vmatmul.mubr.f32.gmra.mrb[0].mxu0 %v472
  %v1323 = vpop.f32.mrb[0].mxu0
  %v1324 = vadd.f32 0.0, %v1323
  %v1325 = vpop.f32.mrb[0].mxu0
  %1326 = vmatprep.mubr.f32.mxu0 0.0
  %1327 = vmatmul.mubr.f32.gmra.mrb[0].mxu0 %v475
  %v1328 = vpop.f32.mrb[0].mxu0
  %v1329 = vadd.f32 0.0, %v1328
  %v1330 = vpop.f32.mrb[0].mxu0
  %1331 = vmatprep.mubr.f32.mxu0 0.0
  %1332 = vmatmul.mubr.f32.gmra.mrb[0].mxu0 %v478
  %v1333 = vpop.f32.mrb[0].mxu0
  %v1334 = vadd.f32 0.0, %v1333
  %v1335 = vpop.f32.mrb[0].mxu0
  %1336 = vmatprep.mubr.f32.mxu0 0.0
  %1337 = vmatmul.mubr.f32.gmra.mrb[0].mxu0 %v481
  %v1338 = vpop.f32.mrb[0].mxu0
  %v1339 = vadd.f32 0.0, %v1338
  %v1340 = vpop.f32.mrb[0].mxu0
  %1341 = vmatprep.mubr.f32.mxu0 0.0
  %1342 = vmatmul.mubr.f32.gmra.mrb[0].mxu0 %v484
  %v1343 = vpop.f32.mrb[0].mxu0
  %v1344 = vadd.f32 0.0, %v1343
  %v1345 = vpop.f32.mrb[0].mxu0
  %1346 = vmatprep.mubr.f32.mxu0 0.0
  %1347 = vmatmul.mubr.f32.gmra.mrb[0].mxu0 %v487
  %v1348 = vpop.f32.mrb[0].mxu0
  %v1349 = vadd.f32 0.0, %v1348
  %v1350 = vpop.f32.mrb[0].mxu0
  %1351 = vmatprep.mubr.f32.mxu0 0.0
  %1352 = vmatmul.mubr.f32.gmra.mrb[0].mxu0 %v490
  %v1353 = vpop.f32.mrb[0].mxu0
  %v1354 = vadd.f32 0.0, %v1353
  %v1355 = vpop.f32.mrb[0].mxu0
  %1356 = vmatprep.mubr.f32.mxu0 0.0
  %1357 = vmatmul.mubr.f32.gmra.mrb[0].mxu0 %v493
  %v1358 = vpop.f32.mrb[0].mxu0
  %v1359 = vadd.f32 0.0, %v1358
  %v1360 = vpop.f32.mrb[0].mxu0
  %1361 = vmatprep.mubr.f32.mxu0 0.0
  %1362 = vmatmul.mubr.f32.gmra.mrb[0].mxu0 %v496
  %v1363 = vpop.f32.mrb[0].mxu0
  %v1364 = vadd.f32 0.0, %v1363
  %v1365 = vpop.f32.mrb[0].mxu0
  %1366 = vmatprep.mubr.f32.mxu0 0.0
  %1367 = vmatmul.mubr.f32.gmra.mrb[0].mxu0 %v499
  %v1368 = vpop.f32.mrb[0].mxu0
  %v1369 = vadd.f32 0.0, %v1368
  %v1370 = vpop.f32.mrb[0].mxu0
  %1371 = vmatprep.mubr.f32.mxu0 0.0
  %1372 = vmatmul.mubr.f32.gmra.mrb[0].mxu0 %v502
  %v1373 = vpop.f32.mrb[0].mxu0
  %v1374 = vadd.f32 0.0, %v1373
  %v1375 = vpop.f32.mrb[0].mxu0
  %1376 = vmatprep.mubr.f32.mxu0 0.0
  %1377 = vmatmul.mubr.f32.gmra.mrb[0].mxu0 %v505
  %v1378 = vpop.f32.mrb[0].mxu0
  %v1379 = vadd.f32 0.0, %v1378
  %v1380 = vpop.f32.mrb[0].mxu0
  %1381 = vmatprep.mubr.f32.mxu0 0.0
  %1382 = vmatmul.mubr.f32.gmra.mrb[0].mxu0 %v508
  %v1383 = vpop.f32.mrb[0].mxu0
  %v1384 = vadd.f32 0.0, %v1383
  %v1385 = vpop.f32.mrb[0].mxu0
  %1386 = vmatprep.mubr.f32.mxu0 0.0
  %1387 = vmatmul.mubr.f32.gmra.mrb[0].mxu0 %v511
  %v1388 = vpop.f32.mrb[0].mxu0
  %v1389 = vadd.f32 0.0, %v1388
  %v1390 = vpop.f32.mrb[0].mxu0
  %1391 = vmatprep.mubr.f32.mxu0 0.0
  %1392 = vmatmul.mubr.f32.gmra.mrb[0].mxu0 %v514
  %v1393 = vpop.f32.mrb[0].mxu0
  %v1394 = vadd.f32 0.0, %v1393
  %v1395 = vpop.f32.mrb[0].mxu0
  %1396 = vmatprep.mubr.f32.mxu0 0.0
  %1397 = vmatmul.mubr.f32.gmra.mrb[0].mxu0 %v517
  %v1398 = vpop.f32.mrb[0].mxu0
  %v1399 = vadd.f32 0.0, %v1398
  %v1400 = vpop.f32.mrb[0].mxu0
  %1401 = vmatprep.mubr.f32.mxu0 0.0
  %1402 = vmatmul.mubr.f32.gmra.mrb[0].mxu0 %v520
  %v1403 = vpop.f32.mrb[0].mxu0
  %v1404 = vadd.f32 0.0, %v1403
  %v1405 = vpop.f32.mrb[0].mxu0
  %1406 = vmatprep.mubr.f32.mxu0 0.0
  %1407 = vmatmul.mubr.f32.gmra.mrb[0].mxu0 %v523
  %v1408 = vpop.f32.mrb[0].mxu0
  %v1409 = vadd.f32 0.0, %v1408
  %v1410 = vpop.f32.mrb[0].mxu0
  %1411 = vmatprep.mubr.f32.mxu0 0.0
  %1412 = vmatmul.mubr.f32.gmra.mrb[0].mxu0 %v526
  %v1413 = vpop.f32.mrb[0].mxu0
  %v1414 = vadd.f32 0.0, %v1413
  %v1415 = vpop.f32.mrb[0].mxu0
  %1416 = vmatprep.mubr.f32.mxu0 0.0
  %1417 = vmatmul.mubr.f32.gmra.mrb[0].mxu0 %v529
  %v1418 = vpop.f32.mrb[0].mxu0
  %v1419 = vadd.f32 0.0, %v1418
  %v1420 = vpop.f32.mrb[0].mxu0
  %1421 = vmatprep.mubr.f32.mxu0 0.0
  %1422 = vmatmul.mubr.f32.gmra.mrb[0].mxu0 %v532
  %v1423 = vpop.f32.mrb[0].mxu0
  %v1424 = vadd.f32 0.0, %v1423
  %v1425 = vpop.f32.mrb[0].mxu0
  %1426 = vmatprep.mubr.f32.mxu0 0.0
  %1427 = vmatmul.mubr.f32.gmra.mrb[0].mxu0 %v535
  %v1428 = vpop.f32.mrb[0].mxu0
  %v1429 = vadd.f32 0.0, %v1428
  %v1430 = vpop.f32.mrb[0].mxu0
  %1431 = vmatprep.mubr.f32.mxu0 0.0
  %1432 = vmatmul.mubr.f32.gmra.mrb[0].mxu0 %v538
  %v1433 = vpop.f32.mrb[0].mxu0
  %v1434 = vadd.f32 0.0, %v1433
  %v1435 = vpop.f32.mrb[0].mxu0
  %1436 = vmatprep.mubr.f32.mxu0 0.0
  %1437 = vmatmul.mubr.f32.gmra.mrb[0].mxu0 %v541
  %v1438 = vpop.f32.mrb[0].mxu0
  %v1439 = vadd.f32 0.0, %v1438
  %v1440 = vpop.f32.mrb[0].mxu0
  %1441 = vmatprep.mubr.f32.mxu0 0.0
  %1442 = vmatmul.mubr.f32.gmra.mrb[0].mxu0 %v544
  %v1443 = vpop.f32.mrb[0].mxu0
  %v1444 = vadd.f32 0.0, %v1443
  %v1445 = vpop.f32.mrb[0].mxu0
  %1446 = vmatprep.mubr.f32.mxu0 0.0
  %1447 = vmatmul.mubr.f32.gmra.mrb[0].mxu0 %v547
  %v1448 = vpop.f32.mrb[0].mxu0
  %v1449 = vadd.f32 0.0, %v1448
  %v1450 = vpop.f32.mrb[0].mxu0
  %1451 = vmatprep.mubr.f32.mxu0 0.0
  %1452 = vmatmul.mubr.f32.gmra.mrb[0].mxu0 %v550
  %v1453 = vpop.f32.mrb[0].mxu0
  %v1454 = vadd.f32 0.0, %v1453
  %v1455 = vpop.f32.mrb[0].mxu0
  %1456 = vmatprep.mubr.f32.mxu0 0.0
  %1457 = vmatmul.mubr.f32.gmra.mrb[0].mxu0 %v553
  %v1458 = vpop.f32.mrb[0].mxu0
  %v1459 = vadd.f32 0.0, %v1458
  %v1460 = vpop.f32.mrb[0].mxu0
  %1461 = vmatprep.mubr.f32.mxu0 0.0
  %1462 = vmatmul.mubr.f32.gmra.mrb[0].mxu0 %v556
  %v1463 = vpop.f32.mrb[0].mxu0
  %v1464 = vadd.f32 0.0, %v1463
  %v1465 = vpop.f32.mrb[0].mxu0
  %1466 = vmatprep.mubr.f32.mxu0 0.0
  %1467 = vmatmul.mubr.f32.gmra.mrb[0].mxu0 %v559
  %v1468 = vpop.f32.mrb[0].mxu0
  %v1469 = vadd.f32 0.0, %v1468
  %v1470 = vpop.f32.mrb[0].mxu0
  %1471 = vmatprep.mubr.f32.mxu0 0.0
  %1472 = vmatmul.mubr.f32.gmra.mrb[0].mxu0 %v562
  %v1473 = vpop.f32.mrb[0].mxu0
  %v1474 = vadd.f32 0.0, %v1473
  %v1475 = vpop.f32.mrb[0].mxu0
  %1476 = vmatprep.mubr.f32.mxu0 0.0
  %1477 = vmatmul.mubr.f32.gmra.mrb[0].mxu0 %v565
  %v1478 = vpop.f32.mrb[0].mxu0
  %v1479 = vadd.f32 0.0, %v1478
  %v1480 = vpop.f32.mrb[0].mxu0
  %1481 = vmatprep.mubr.f32.mxu0 0.0
  %1482 = vmatmul.mubr.f32.gmra.mrb[0].mxu0 %v568
  %v1483 = vpop.f32.mrb[0].mxu0
  %v1484 = vadd.f32 0.0, %v1483
  %v1485 = vpop.f32.mrb[0].mxu0
  %1486 = vmatprep.mubr.f32.mxu0 0.0
  %1487 = vmatmul.mubr.f32.gmra.mrb[0].mxu0 %v571
  %v1488 = vpop.f32.mrb[0].mxu0
  %v1489 = vadd.f32 0.0, %v1488
  %v1490 = vpop.f32.mrb[0].mxu0
  %1491 = vmatprep.mubr.f32.mxu0 0.0
  %1492 = vmatmul.mubr.f32.gmra.mrb[0].mxu0 %v574
  %v1493 = vpop.f32.mrb[0].mxu0
  %v1494 = vadd.f32 0.0, %v1493
  %v1495 = vpop.f32.mrb[0].mxu0
  %1496 = vmatprep.mubr.f32.mxu0 0.0
  %1497 = vmatmul.mubr.f32.gmra.mrb[0].mxu0 %v577
  %v1498 = vpop.f32.mrb[0].mxu0
  %v1499 = vadd.f32 0.0, %v1498
  %v1500 = vpop.f32.mrb[0].mxu0
  %1501 = vmatprep.mubr.f32.mxu0 0.0
  %1502 = vmatmul.mubr.f32.gmra.mrb[0].mxu0 %v580
  %v1503 = vpop.f32.mrb[0].mxu0
  %v1504 = vadd.f32 0.0, %v1503
  %v1505 = vpop.f32.mrb[0].mxu0
  %1506 = vmatprep.mubr.f32.mxu0 0.0
  %1507 = vmatmul.mubr.f32.gmra.mrb[0].mxu0 %v583
  %v1508 = vpop.f32.mrb[0].mxu0
  %v1509 = vadd.f32 0.0, %v1508
  %v1510 = vpop.f32.mrb[0].mxu0
  %1511 = vmatprep.mubr.f32.mxu0 0.0
  %1512 = vmatmul.mubr.f32.gmra.mrb[0].mxu0 %v586
  %v1513 = vpop.f32.mrb[0].mxu0
  %v1514 = vadd.f32 0.0, %v1513
  %v1515 = vpop.f32.mrb[0].mxu0
  %1516 = vmatprep.mubr.f32.mxu0 0.0
  %1517 = vmatmul.mubr.f32.gmra.mrb[0].mxu0 %v589
  %v1518 = vpop.f32.mrb[0].mxu0
  %v1519 = vadd.f32 0.0, %v1518
  %v1520 = vpop.f32.mrb[0].mxu0
  %1521 = vmatprep.mubr.f32.mxu0 0.0
  %1522 = vmatmul.mubr.f32.gmra.mrb[0].mxu0 %v592
  %v1523 = vpop.f32.mrb[0].mxu0
  %v1524 = vadd.f32 0.0, %v1523
  %v1525 = vpop.f32.mrb[0].mxu0
  %1526 = vmatprep.mubr.f32.mxu0 0.0
  %1527 = vmatmul.mubr.f32.gmra.mrb[0].mxu0 %v595
  %v1528 = vpop.f32.mrb[0].mxu0
  %v1529 = vadd.f32 0.0, %v1528
  %v1530 = vpop.f32.mrb[0].mxu0
  %1531 = vmatprep.mubr.f32.mxu0 0.0
  %1532 = vmatmul.mubr.f32.gmra.mrb[0].mxu0 %v598
  %v1533 = vpop.f32.mrb[0].mxu0
  %v1534 = vadd.f32 0.0, %v1533
  %v1535 = vpop.f32.mrb[0].mxu0
  %1536 = vmatprep.mubr.f32.mxu0 0.0
  %1537 = vmatmul.mubr.f32.gmra.mrb[0].mxu0 %v601
  %v1538 = vpop.f32.mrb[0].mxu0
  %v1539 = vadd.f32 0.0, %v1538
  %v1540 = vpop.f32.mrb[0].mxu0
  %1541 = vmatprep.mubr.f32.mxu0 0.0
  %1542 = vmatmul.mubr.f32.gmra.mrb[0].mxu0 %v604
  %v1543 = vpop.f32.mrb[0].mxu0
  %v1544 = vadd.f32 0.0, %v1543
  %v1545 = vpop.f32.mrb[0].mxu0
  %1546 = vmatprep.mubr.f32.mxu0 0.0
  %1547 = vmatmul.mubr.f32.gmra.mrb[0].mxu0 %v607
  %v1548 = vpop.f32.mrb[0].mxu0
  %v1549 = vadd.f32 0.0, %v1548
  %v1550 = vpop.f32.mrb[0].mxu0
  %1551 = vmatprep.mubr.f32.mxu0 0.0
  %1552 = vmatmul.mubr.f32.gmra.mrb[0].mxu0 %v610
  %v1553 = vpop.f32.mrb[0].mxu0
  %v1554 = vadd.f32 0.0, %v1553
  %v1555 = vpop.f32.mrb[0].mxu0
  %1556 = vmatprep.mubr.f32.mxu0 0.0
  %1557 = vmatmul.mubr.f32.gmra.mrb[0].mxu0 %v613
  %v1558 = vpop.f32.mrb[0].mxu0
  %v1559 = vadd.f32 0.0, %v1558
  %v1560 = vpop.f32.mrb[0].mxu0
  %1561 = vmatprep.mubr.f32.mxu0 0.0
  %1562 = vmatmul.mubr.f32.gmra.mrb[0].mxu0 %v616
  %v1563 = vpop.f32.mrb[0].mxu0
  %v1564 = vadd.f32 0.0, %v1563
  %v1565 = vpop.f32.mrb[0].mxu0
  %1566 = vmatprep.mubr.f32.mxu0 0.0
  %1567 = vmatmul.mubr.f32.gmra.mrb[0].mxu0 %v619
  %v1568 = vpop.f32.mrb[0].mxu0
  %v1569 = vadd.f32 0.0, %v1568
  %v1570 = vpop.f32.mrb[0].mxu0
  %1571 = vmatprep.mubr.f32.mxu0 0.0
  %1572 = vmatmul.mubr.f32.gmra.mrb[0].mxu0 %v622
  %v1573 = vpop.f32.mrb[0].mxu0
  %v1574 = vadd.f32 0.0, %v1573
  %v1575 = vpop.f32.mrb[0].mxu0
  %1576 = vmatprep.mubr.f32.mxu0 0.0
  %1577 = vmatmul.mubr.f32.gmra.mrb[0].mxu0 %v625
  %v1578 = vpop.f32.mrb[0].mxu0
  %v1579 = vadd.f32 0.0, %v1578
  %v1580 = vpop.f32.mrb[0].mxu0
  %1581 = vmatprep.mubr.f32.mxu0 0.0
  %1582 = vmatmul.mubr.f32.gmra.mrb[0].mxu0 %v628
  %v1583 = vpop.f32.mrb[0].mxu0
  %v1584 = vadd.f32 0.0, %v1583
  %v1585 = vpop.f32.mrb[0].mxu0
  %1586 = vmatprep.mubr.f32.mxu0 0.0
  %1587 = vmatmul.mubr.f32.gmra.mrb[0].mxu0 %v631
  %v1588 = vpop.f32.mrb[0].mxu0
  %v1589 = vadd.f32 0.0, %v1588
  %v1590 = vpop.f32.mrb[0].mxu0
  %1591 = vmatprep.mubr.f32.mxu0 0.0
  %1592 = vmatmul.mubr.f32.gmra.mrb[0].mxu0 %v634
  %v1593 = vpop.f32.mrb[0].mxu0
  %v1594 = vadd.f32 0.0, %v1593
  %v1595 = vpop.f32.mrb[0].mxu0
  %1596 = vmatprep.mubr.f32.mxu0 0.0
  %1597 = vmatmul.mubr.f32.gmra.mrb[0].mxu0 %v637
  %v1598 = vpop.f32.mrb[0].mxu0
  %v1599 = vadd.f32 0.0, %v1598
  %v1600 = vpop.f32.mrb[0].mxu0
  %1601 = vmatprep.mubr.f32.mxu0 0.0
  %1602 = vmatmul.mubr.f32.gmra.mrb[0].mxu0 %v640
  %v1603 = vpop.f32.mrb[0].mxu0
  %v1604 = vadd.f32 0.0, %v1603
  %v1605 = vpop.f32.mrb[0].mxu0
  %1606 = vmatprep.mubr.f32.mxu0 0.0
  %1607 = vmatmul.mubr.f32.gmra.mrb[0].mxu0 %v643
  %v1608 = vpop.f32.mrb[0].mxu0
  %v1609 = vadd.f32 0.0, %v1608
  %v1610 = vpop.f32.mrb[0].mxu0
  %1611 = vmatprep.mubr.f32.mxu0 0.0
  %1612 = vmatmul.mubr.f32.gmra.mrb[0].mxu0 %v646
  %v1613 = vpop.f32.mrb[0].mxu0
  %v1614 = vadd.f32 0.0, %v1613
  %v1615 = vpop.f32.mrb[0].mxu0
  %1616 = vmatprep.mubr.f32.mxu0 0.0
  %1617 = vmatmul.mubr.f32.gmra.mrb[0].mxu0 %v649
  %v1618 = vpop.f32.mrb[0].mxu0
  %v1619 = vadd.f32 0.0, %v1618
  %v1620 = vpop.f32.mrb[0].mxu0
  %1621 = vmatprep.mubr.f32.mxu0 0.0
  %1622 = vmatmul.mubr.f32.gmra.mrb[0].mxu0 %v652
  %v1623 = vpop.f32.mrb[0].mxu0
  %v1624 = vadd.f32 0.0, %v1623
  %v1625 = vpop.f32.mrb[0].mxu0
  %1626 = vmatprep.mubr.f32.mxu0 0.0
  %1627 = vmatmul.mubr.f32.gmra.mrb[0].mxu0 %v655
  %v1628 = vpop.f32.mrb[0].mxu0
  %v1629 = vadd.f32 0.0, %v1628
  %v1630 = vpop.f32.mrb[0].mxu0
  %1631 = vmatprep.mubr.f32.mxu0 0.0
  %1632 = vmatmul.mubr.f32.gmra.mrb[0].mxu0 %v658
  %v1633 = vpop.f32.mrb[0].mxu0
  %v1634 = vadd.f32 0.0, %v1633
  %v1635 = vpop.f32.mrb[0].mxu0
  %1636 = vmatprep.mubr.f32.mxu0 0.0
  %1637 = vmatmul.mubr.f32.gmra.mrb[0].mxu0 %v661
  %v1638 = vpop.f32.mrb[0].mxu0
  %v1639 = vadd.f32 0.0, %v1638
  %v1640 = vpop.f32.mrb[0].mxu0
  %1641 = vmatprep.mubr.f32.mxu0 0.0
  %1642 = vmatmul.mubr.f32.gmra.mrb[0].mxu0 %v664
  %v1643 = vpop.f32.mrb[0].mxu0
  %v1644 = vadd.f32 0.0, %v1643
  %v1645 = vpop.f32.mrb[0].mxu0
  %1646 = vmatprep.mubr.f32.mxu0 0.0
  %1647 = vmatmul.mubr.f32.gmra.mrb[0].mxu0 %v667
  %v1648 = vpop.f32.mrb[0].mxu0
  %v1649 = vadd.f32 0.0, %v1648
  %v1650 = vpop.f32.mrb[0].mxu0
  %1651 = vmatprep.mubr.f32.mxu0 0.0
  %1652 = vmatmul.mubr.f32.gmra.mrb[0].mxu0 %v670
  %v1653 = vpop.f32.mrb[0].mxu0
  %v1654 = vadd.f32 0.0, %v1653
  %v1655 = vpop.f32.mrb[0].mxu0
  %1656 = vmatprep.mubr.f32.mxu0 0.0
  %1657 = vmatmul.mubr.f32.gmra.mrb[0].mxu0 %v673
  %v1658 = vpop.f32.mrb[0].mxu0
  %v1659 = vadd.f32 0.0, %v1658
  %v1660 = vpop.f32.mrb[0].mxu0
  %1661 = vmatprep.mubr.f32.mxu0 0.0
  %1662 = vmatmul.mubr.f32.gmra.mrb[0].mxu0 %v676
  %v1663 = vpop.f32.mrb[0].mxu0
  %v1664 = vadd.f32 0.0, %v1663
  %v1665 = vpop.f32.mrb[0].mxu0
  %1666 = vmatprep.mubr.f32.mxu0 0.0
  %1667 = vmatmul.mubr.f32.gmra.mrb[0].mxu0 %v679
  %v1668 = vpop.f32.mrb[0].mxu0
  %v1669 = vadd.f32 0.0, %v1668
  %v1670 = vpop.f32.mrb[0].mxu0
  %1671 = vmatprep.mubr.f32.mxu0 0.0
  %1672 = vmatmul.mubr.f32.gmra.mrb[0].mxu0 %v682
  %v1673 = vpop.f32.mrb[0].mxu0
  %v1674 = vadd.f32 0.0, %v1673
  %v1675 = vpop.f32.mrb[0].mxu0
  %1676 = vmatprep.mubr.f32.mxu0 0.0
  %1677 = vmatmul.mubr.f32.gmra.mrb[0].mxu0 %v685
  %v1678 = vpop.f32.mrb[0].mxu0
  %v1679 = vadd.f32 0.0, %v1678
  %v1680 = vpop.f32.mrb[0].mxu0
  %1681 = vmatprep.mubr.f32.mxu0 0.0
  %1682 = vmatmul.mubr.f32.gmra.mrb[0].mxu0 %v688
  %v1683 = vpop.f32.mrb[0].mxu0
  %v1684 = vadd.f32 0.0, %v1683
  %v1685 = vpop.f32.mrb[0].mxu0
  %1686 = vmatprep.mubr.f32.mxu0 0.0
  %1687 = vmatmul.mubr.f32.gmra.mrb[0].mxu0 %v691
  %v1688 = vpop.f32.mrb[0].mxu0
  %v1689 = vadd.f32 0.0, %v1688
  %v1690 = vpop.f32.mrb[0].mxu0
  %1691 = vmatprep.mubr.f32.mxu0 0.0
  %1692 = vmatmul.mubr.f32.gmra.mrb[0].mxu0 %v694
  %v1693 = vpop.f32.mrb[0].mxu0
  %v1694 = vadd.f32 0.0, %v1693
  %v1695 = vpop.f32.mrb[0].mxu0
  %1696 = vmatprep.mubr.f32.mxu0 0.0
  %1697 = vmatmul.mubr.f32.gmra.mrb[0].mxu0 %v697
  %v1698 = vpop.f32.mrb[0].mxu0
  %v1699 = vadd.f32 0.0, %v1698
  %v1700 = vpop.f32.mrb[0].mxu0
  %1701 = vmatprep.mubr.f32.mxu0 0.0
  %1702 = vmatmul.mubr.f32.gmra.mrb[0].mxu0 %v700
  %v1703 = vpop.f32.mrb[0].mxu0
  %v1704 = vadd.f32 0.0, %v1703
  %v1705 = vpop.f32.mrb[0].mxu0
  %1706 = vmatprep.mubr.f32.mxu0 0.0
  %1707 = vmatmul.mubr.f32.gmra.mrb[0].mxu0 %v703
  %v1708 = vpop.f32.mrb[0].mxu0
  %v1709 = vadd.f32 0.0, %v1708
  %v1710 = vpop.f32.mrb[0].mxu0
  %1711 = vmatprep.mubr.f32.mxu0 0.0
  %1712 = vmatmul.mubr.f32.gmra.mrb[0].mxu0 %v706
  %v1713 = vpop.f32.mrb[0].mxu0
  %v1714 = vadd.f32 0.0, %v1713
  %v1715 = vpop.f32.mrb[0].mxu0
  %1716 = vmatprep.mubr.f32.mxu0 0.0
  %1717 = vmatmul.mubr.f32.gmra.mrb[0].mxu0 %v709
  %v1718 = vpop.f32.mrb[0].mxu0
  %v1719 = vadd.f32 0.0, %v1718
  %v1720 = vpop.f32.mrb[0].mxu0
  %1721 = vmatprep.mubr.f32.mxu0 0.0
  %1722 = vmatmul.mubr.f32.gmra.mrb[0].mxu0 %v712
  %v1723 = vpop.f32.mrb[0].mxu0
  %v1724 = vadd.f32 0.0, %v1723
  %v1725 = vpop.f32.mrb[0].mxu0
  %1726 = vmatprep.mubr.f32.mxu0 0.0
  %1727 = vmatmul.mubr.f32.gmra.mrb[0].mxu0 %v715
  %v1728 = vpop.f32.mrb[0].mxu0
  %v1729 = vadd.f32 0.0, %v1728
  %v1730 = vpop.f32.mrb[0].mxu0
  %1731 = vmatprep.mubr.f32.mxu0 0.0
  %1732 = vmatmul.mubr.f32.gmra.mrb[0].mxu0 %v718
  %v1733 = vpop.f32.mrb[0].mxu0
  %v1734 = vadd.f32 0.0, %v1733
  %v1735 = vpop.f32.mrb[0].mxu0
  %1736 = vmatprep.mubr.f32.mxu0 0.0
  %1737 = vmatmul.mubr.f32.gmra.mrb[0].mxu0 %v721
  %v1738 = vpop.f32.mrb[0].mxu0
  %v1739 = vadd.f32 0.0, %v1738
  %v1740 = vpop.f32.mrb[0].mxu0
  %1741 = vmatprep.mubr.f32.mxu0 0.0
  %1742 = vmatmul.mubr.f32.gmra.mrb[0].mxu0 %v724
  %v1743 = vpop.f32.mrb[0].mxu0
  %v1744 = vadd.f32 0.0, %v1743
  %v1745 = vpop.f32.mrb[0].mxu0
  %1746 = vmatprep.mubr.f32.mxu0 0.0
  %1747 = vmatmul.mubr.f32.gmra.mrb[0].mxu0 %v727
  %v1748 = vpop.f32.mrb[0].mxu0
  %v1749 = vadd.f32 0.0, %v1748
  %v1750 = vpop.f32.mrb[0].mxu0
  %1751 = vmatprep.mubr.f32.mxu0 0.0
  %1752 = vmatmul.mubr.f32.gmra.mrb[0].mxu0 %v730
  %v1753 = vpop.f32.mrb[0].mxu0
  %v1754 = vadd.f32 0.0, %v1753
  %v1755 = vpop.f32.mrb[0].mxu0
  %1756 = vmatprep.mubr.f32.mxu0 0.0
  %1757 = vmatmul.mubr.f32.gmra.mrb[0].mxu0 %v733
  %v1758 = vpop.f32.mrb[0].mxu0
  %v1759 = vadd.f32 0.0, %v1758
  %v1760 = vpop.f32.mrb[0].mxu0
  %1761 = vmatprep.mubr.f32.mxu0 0.0
  %1762 = vmatmul.mubr.f32.gmra.mrb[0].mxu0 %v736
  %v1763 = vpop.f32.mrb[0].mxu0
  %v1764 = vadd.f32 0.0, %v1763
  %v1765 = vpop.f32.mrb[0].mxu0
  %1766 = vmatprep.mubr.f32.mxu0 0.0
  %1767 = vmatmul.mubr.f32.gmra.mrb[0].mxu0 %v739
  %v1768 = vpop.f32.mrb[0].mxu0
  %v1769 = vadd.f32 0.0, %v1768
  %v1770 = vpop.f32.mrb[0].mxu0
  %1771 = vmatprep.mubr.f32.mxu0 0.0
  %1772 = vmatmul.mubr.f32.gmra.mrb[0].mxu0 %v742
  %v1773 = vpop.f32.mrb[0].mxu0
  %v1774 = vadd.f32 0.0, %v1773
  %v1775 = vpop.f32.mrb[0].mxu0
  %1776 = vmatprep.mubr.f32.mxu0 0.0
  %1777 = vmatmul.mubr.f32.gmra.mrb[0].mxu0 %v745
  %v1778 = vpop.f32.mrb[0].mxu0
  %v1779 = vadd.f32 0.0, %v1778
  %v1780 = vpop.f32.mrb[0].mxu0
  %1781 = vmatprep.mubr.f32.mxu0 0.0
  %1782 = vmatmul.mubr.f32.gmra.mrb[0].mxu0 %v748
  %v1783 = vpop.f32.mrb[0].mxu0
  %v1784 = vadd.f32 0.0, %v1783
  %v1785 = vpop.f32.mrb[0].mxu0
  %1786 = vmatprep.mubr.f32.mxu0 0.0
  %1787 = vmatmul.mubr.f32.gmra.mrb[0].mxu0 %v751
  %v1788 = vpop.f32.mrb[0].mxu0
  %v1789 = vadd.f32 0.0, %v1788
  %v1790 = vpop.f32.mrb[0].mxu0
  %1791 = vmatprep.mubr.f32.mxu0 0.0
  %1792 = vmatmul.mubr.f32.gmra.mrb[0].mxu0 %v754
  %v1793 = vpop.f32.mrb[0].mxu0
  %v1794 = vadd.f32 0.0, %v1793
  %v1795 = vpop.f32.mrb[0].mxu0
  %1796 = vmatprep.mubr.f32.mxu0 0.0
  %1797 = vmatmul.mubr.f32.gmra.mrb[0].mxu0 %v757
  %v1798 = vpop.f32.mrb[0].mxu0
  %v1799 = vadd.f32 0.0, %v1798
  %v1800 = vpop.f32.mrb[0].mxu0
  %1801 = vmatprep.mubr.f32.mxu0 0.0
  %1802 = vmatmul.mubr.f32.gmra.mrb[0].mxu0 %v760
  %v1803 = vpop.f32.mrb[0].mxu0
  %v1804 = vadd.f32 0.0, %v1803
  %v1805 = vpop.f32.mrb[0].mxu0
  %1806 = vmatprep.mubr.f32.mxu0 0.0
  %1807 = vmatmul.mubr.f32.gmra.mrb[0].mxu0 %v763
  %v1808 = vpop.f32.mrb[0].mxu0
  %v1809 = vadd.f32 0.0, %v1808
  %v1810 = vpop.f32.mrb[0].mxu0
  %1811 = vmatprep.mubr.f32.mxu0 0.0
  %1812 = vmatmul.mubr.f32.gmra.mrb[0].mxu0 %v766
  %v1813 = vpop.f32.mrb[0].mxu0
  %v1814 = vadd.f32 0.0, %v1813
  %v1815 = vpop.f32.mrb[0].mxu0
  %1816 = vmatprep.mubr.f32.mxu0 0.0
  %1817 = vmatmul.mubr.f32.gmra.mrb[0].mxu0 %v769
  %v1818 = vpop.f32.mrb[0].mxu0
  %v1819 = vadd.f32 0.0, %v1818
  %v1820 = vpop.f32.mrb[0].mxu0
  %1821 = vmatprep.mubr.f32.mxu0 0.0
  %1822 = vmatmul.mubr.f32.gmra.mrb[0].mxu0 %v772
  %v1823 = vpop.f32.mrb[0].mxu0
  %v1824 = vadd.f32 0.0, %v1823
  %v1825 = vpop.f32.mrb[0].mxu0
  %1826 = vmatprep.mubr.f32.mxu0 0.0
  %1827 = vmatmul.mubr.f32.gmra.mrb[0].mxu0 %v775
  %v1828 = vpop.f32.mrb[0].mxu0
  %v1829 = vadd.f32 0.0, %v1828
  %v1830 = vpop.f32.mrb[0].mxu0
  %1831 = vmatprep.mubr.f32.mxu0 0.0
  %1832 = vmatmul.mubr.f32.gmra.mrb[0].mxu0 %v778
  %v1833 = vpop.f32.mrb[0].mxu0
  %v1834 = vadd.f32 0.0, %v1833
  %v1835 = vpop.f32.mrb[0].mxu0
  %1836 = vmatprep.mubr.f32.mxu0 0.0
  %1837 = vmatmul.mubr.f32.gmra.mrb[0].mxu0 %v781
  %v1838 = vpop.f32.mrb[0].mxu0
  %v1839 = vadd.f32 0.0, %v1838
  %v1840 = vpop.f32.mrb[0].mxu0
  %1841 = vmatprep.mubr.f32.mxu0 0.0
  %1842 = vmatmul.mubr.f32.gmra.mrb[0].mxu0 %v784
  %v1843 = vpop.f32.mrb[0].mxu0
  %v1844 = vadd.f32 0.0, %v1843
  %v1845 = vpop.f32.mrb[0].mxu0
  %1846 = vmatprep.mubr.f32.mxu0 0.0
  %1847 = vmatmul.mubr.f32.gmra.mrb[0].mxu0 %v787
  %v1848 = vpop.f32.mrb[0].mxu0
  %v1849 = vadd.f32 0.0, %v1848
  %v1850 = vpop.f32.mrb[0].mxu0
  %1851 = vmatprep.mubr.f32.mxu0 0.0
  %1852 = vmatmul.mubr.f32.gmra.mrb[0].mxu0 %v790
  %v1853 = vpop.f32.mrb[0].mxu0
  %v1854 = vadd.f32 0.0, %v1853
  %v1855 = vpop.f32.mrb[0].mxu0
  %1856 = vmatprep.mubr.f32.mxu0 0.0
  %1857 = vmatmul.mubr.f32.gmra.mrb[0].mxu0 %v793
  %v1858 = vpop.f32.mrb[0].mxu0
  %v1859 = vadd.f32 0.0, %v1858
  %v1860 = vpop.f32.mrb[0].mxu0
  %1861 = vmatprep.mubr.f32.mxu0 0.0
  %1862 = vmatmul.mubr.f32.gmra.mrb[0].mxu0 %v796
  %v1863 = vpop.f32.mrb[0].mxu0
  %v1864 = vadd.f32 0.0, %v1863
  %v1865 = vpop.f32.mrb[0].mxu0
  %1866 = vmatprep.mubr.f32.mxu0 0.0
  %1867 = vmatmul.mubr.f32.gmra.mrb[0].mxu0 %v799
  %v1868 = vpop.f32.mrb[0].mxu0
  %v1869 = vadd.f32 0.0, %v1868
  %v1870 = vpop.f32.mrb[0].mxu0
  %1871 = vmatprep.mubr.f32.mxu0 0.0
  %1872 = vmatmul.mubr.f32.gmra.mrb[0].mxu0 %v802
  %v1873 = vpop.f32.mrb[0].mxu0
  %v1874 = vadd.f32 0.0, %v1873
  %v1875 = vpop.f32.mrb[0].mxu0
  %1876 = vmatprep.mubr.f32.mxu0 0.0
  %1877 = vmatmul.mubr.f32.gmra.mrb[0].mxu0 %v805
  %v1878 = vpop.f32.mrb[0].mxu0
  %v1879 = vadd.f32 0.0, %v1878
  %v1880 = vpop.f32.mrb[0].mxu0
  %1881 = vmatprep.mubr.f32.mxu0 0.0
  %1882 = vmatmul.mubr.f32.gmra.mrb[0].mxu0 %v808
  %v1883 = vpop.f32.mrb[0].mxu0
  %v1884 = vadd.f32 0.0, %v1883
  %v1885 = vpop.f32.mrb[0].mxu0
  %1886 = vmatprep.mubr.f32.mxu0 0.0
  %1887 = vmatmul.mubr.f32.gmra.mrb[0].mxu0 %v811
  %v1888 = vpop.f32.mrb[0].mxu0
  %v1889 = vadd.f32 0.0, %v1888
  %v1890 = vpop.f32.mrb[0].mxu0
  %1891 = vmatprep.mubr.f32.mxu0 0.0
  %1892 = vmatmul.mubr.f32.gmra.mrb[0].mxu0 %v814
  %v1893 = vpop.f32.mrb[0].mxu0
  %v1894 = vadd.f32 0.0, %v1893
  %v1895 = vpop.f32.mrb[0].mxu0
  %1896 = vmatprep.mubr.f32.mxu0 0.0
  %1897 = vmatmul.mubr.f32.gmra.mrb[0].mxu0 %v817
  %v1898 = vpop.f32.mrb[0].mxu0
  %v1899 = vadd.f32 0.0, %v1898
  %v1900 = vpop.f32.mrb[0].mxu0
  %1901 = vmatprep.mubr.f32.mxu0 0.0
  %1902 = vmatmul.mubr.f32.gmra.mrb[0].mxu0 %v820
  %v1903 = vpop.f32.mrb[0].mxu0
  %v1904 = vadd.f32 0.0, %v1903
  %v1905 = vpop.f32.mrb[0].mxu0
  %1906 = vmatprep.mubr.f32.mxu0 0.0
  %1907 = vmatmul.mubr.f32.gmra.mrb[0].mxu0 %v823
  %v1908 = vpop.f32.mrb[0].mxu0
  %v1909 = vadd.f32 0.0, %v1908
  %v1910 = vpop.f32.mrb[0].mxu0
  %1911 = vmatprep.mubr.f32.mxu0 0.0
  %1912 = vmatmul.mubr.f32.gmra.mrb[0].mxu0 %v826
  %v1913 = vpop.f32.mrb[0].mxu0
  %v1914 = vadd.f32 0.0, %v1913
  %v1915 = vpop.f32.mrb[0].mxu0
  %1916 = vdwg.mxu0
  %v1917 = vmul.f32 %v11, %v11
  %v1918 = vmul.f32 %v12, %v12
  %v1919 = vmul.f32 %v13, %v13
  %v1920 = vmul.f32 %v14, %v14
  %v1921 = vmul.f32 %v15, %v15
  %v1922 = vmul.f32 %v16, %v16
  %v1923 = vmul.f32 %v17, %v17
  %v1924 = vmul.f32 %v18, %v18
  %v1925 = vmul.f32 %v19, %v19
  %v1926 = vmul.f32 %v20, %v20
  %v1927 = vmul.f32 %v21, %v21
  %v1928 = vmul.f32 %v22, %v22
  %v1929 = vmul.f32 %v23, %v23
  %v1930 = vmul.f32 %v24, %v24
  %v1931 = vmul.f32 %v25, %v25
  %v1932 = vmul.f32 %v26, %v26
  %v1933 = vmul.f32 %v27, %v27
  %v1934 = vmul.f32 %v28, %v28
  %v1935 = vmul.f32 %v29, %v29
  %v1936 = vmul.f32 %v30, %v30
  %v1937 = vmul.f32 %v31, %v31
  %v1938 = vmul.f32 %v32, %v32
  %v1939 = vmul.f32 %v33, %v33
  %v1940 = vmul.f32 %v34, %v34
  %v1941 = vmul.f32 %v35, %v35
  %v1942 = vmul.f32 %v36, %v36
  %v1943 = vmul.f32 %v37, %v37
  %v1944 = vmul.f32 %v38, %v38
  %v1945 = vmul.f32 %v39, %v39
  %v1946 = vmul.f32 %v40, %v40
  %v1947 = vmul.f32 %v41, %v41
  %v1948 = vmul.f32 %v42, %v42
  %v1949 = vmul.f32 %v43, %v43
  %v1950 = vmul.f32 %v44, %v44
  %v1951 = vmul.f32 %v45, %v45
  %v1952 = vmul.f32 %v46, %v46
  %v1953 = vmul.f32 %v47, %v47
  %v1954 = vmul.f32 %v48, %v48
  %v1955 = vmul.f32 %v49, %v49
  %v1956 = vmul.f32 %v50, %v50
  %v1957 = vmul.f32 %v51, %v51
  %v1958 = vmul.f32 %v52, %v52
  %v1959 = vmul.f32 %v53, %v53
  %v1960 = vmul.f32 %v54, %v54
  %v1961 = vmul.f32 %v55, %v55
  %v1962 = vmul.f32 %v56, %v56
  %v1963 = vmul.f32 %v57, %v57
  %v1964 = vmul.f32 %v58, %v58
  %v1965 = vmul.f32 %v59, %v59
  %v1966 = vmul.f32 %v60, %v60
  %v1967 = vmul.f32 %v61, %v61
  %v1968 = vmul.f32 %v62, %v62
  %v1969 = vmul.f32 %v63, %v63
  %v1970 = vmul.f32 %v64, %v64
  %v1971 = vmul.f32 %v65, %v65
  %v1972 = vmul.f32 %v66, %v66
  %v1973 = vmul.f32 %v67, %v67
  %v1974 = vmul.f32 %v68, %v68
  %v1975 = vmul.f32 %v69, %v69
  %v1976 = vmul.f32 %v70, %v70
  %v1977 = vmul.f32 %v71, %v71
  %v1978 = vmul.f32 %v72, %v72
  %v1979 = vmul.f32 %v73, %v73
  %v1980 = vmul.f32 %v74, %v74
  %v1981 = vmul.f32 %v75, %v75
  %v1982 = vmul.f32 %v76, %v76
  %v1983 = vmul.f32 %v77, %v77
  %v1984 = vmul.f32 %v78, %v78
  %v1985 = vmul.f32 %v79, %v79
  %v1986 = vmul.f32 %v80, %v80
  %v1987 = vmul.f32 %v81, %v81
  %v1988 = vmul.f32 %v82, %v82
  %v1989 = vmul.f32 %v83, %v83
  %v1990 = vmul.f32 %v84, %v84
  %v1991 = vmul.f32 %v85, %v85
  %v1992 = vmul.f32 %v86, %v86
  %v1993 = vmul.f32 %v87, %v87
  %v1994 = vmul.f32 %v88, %v88
  %v1995 = vmul.f32 %v89, %v89
  %v1996 = vmul.f32 %v90, %v90
  %v1997 = vmul.f32 %v91, %v91
  %v1998 = vmul.f32 %v92, %v92
  %v1999 = vmul.f32 %v93, %v93
  %v2000 = vmul.f32 %v94, %v94
  %v2001 = vmul.f32 %v95, %v95
  %v2002 = vmul.f32 %v96, %v96
  %v2003 = vmul.f32 %v97, %v97
  %v2004 = vmul.f32 %v98, %v98
  %v2005 = vmul.f32 %v99, %v99
  %v2006 = vmul.f32 %v100, %v100
  %v2007 = vmul.f32 %v101, %v101
  %v2008 = vmul.f32 %v102, %v102
  %v2009 = vmul.f32 %v103, %v103
  %v2010 = vmul.f32 %v104, %v104
  %v2011 = vmul.f32 %v105, %v105
  %v2012 = vmul.f32 %v106, %v106
  %v2013 = vmul.f32 %v107, %v107
  %v2014 = vmul.f32 %v108, %v108
  %v2015 = vmul.f32 %v109, %v109
  %v2016 = vmul.f32 %v110, %v110
  %v2017 = vmul.f32 %v111, %v111
  %v2018 = vmul.f32 %v112, %v112
  %v2019 = vmul.f32 %v113, %v113
  %v2020 = vmul.f32 %v114, %v114
  %v2021 = vmul.f32 %v115, %v115
  %v2022 = vmul.f32 %v116, %v116
  %v2023 = vmul.f32 %v117, %v117
  %v2024 = vmul.f32 %v118, %v118
  %v2025 = vmul.f32 %v119, %v119
  %v2026 = vmul.f32 %v120, %v120
  %v2027 = vmul.f32 %v121, %v121
  %v2028 = vmul.f32 %v122, %v122
  %v2029 = vmul.f32 %v123, %v123
  %v2030 = vmul.f32 %v124, %v124
  %v2031 = vmul.f32 %v125, %v125
  %v2032 = vmul.f32 %v126, %v126
  %v2033 = vmul.f32 %v127, %v127
  %v2034 = vmul.f32 %v128, %v128
  %v2035 = vmul.f32 %v129, %v129
  %v2036 = vmul.f32 %v130, %v130
  %v2037 = vmul.f32 %v131, %v131
  %v2038 = vmul.f32 %v132, %v132
  %v2039 = vmul.f32 %v133, %v133
  %v2040 = vmul.f32 %v134, %v134
  %v2041 = vmul.f32 %v135, %v135
  %v2042 = vmul.f32 %v136, %v136
  %v2043 = vmul.f32 %v137, %v137
  %v2044 = vmul.f32 %v138, %v138
  %v2045 = vmul.f32 %v139, %v139
  %v2046 = vmul.f32 %v140, %v140
  %v2047 = vmul.f32 %v141, %v141
  %v2048 = vmul.f32 %v142, %v142
  %v2049 = vmul.f32 %v143, %v143
  %v2050 = vmul.f32 %v144, %v144
  %v2051 = vmul.f32 %v145, %v145
  %v2052 = vmul.f32 %v146, %v146
  %v2053 = vmul.f32 %v147, %v147
  %v2054 = vmul.f32 %v148, %v148
  %v2055 = vmul.f32 %v149, %v149
  %v2056 = vmul.f32 %v150, %v150
  %v2057 = vmul.f32 %v151, %v151
  %v2058 = vmul.f32 %v152, %v152
  %v2059 = vmul.f32 %v153, %v153
  %v2060 = vmul.f32 %v154, %v154
  %v2061 = vmul.f32 %v155, %v155
  %v2062 = vmul.f32 %v156, %v156
  %v2063 = vmul.f32 %v157, %v157
  %v2064 = vmul.f32 %v158, %v158
  %v2065 = vmul.f32 %v159, %v159
  %v2066 = vmul.f32 %v160, %v160
  %v2067 = vmul.f32 %v161, %v161
  %v2068 = vmul.f32 %v162, %v162
  %v2069 = vmul.f32 %v163, %v163
  %v2070 = vmul.f32 %v164, %v164
  %v2071 = vmul.f32 %v165, %v165
  %v2072 = vmul.f32 %v166, %v166
  %v2073 = vmul.f32 %v167, %v167
  %v2074 = vmul.f32 %v168, %v168
  %v2075 = vmul.f32 %v169, %v169
  %v2076 = vmul.f32 %v170, %v170
  %v2077 = vmul.f32 %v171, %v171
  %v2078 = vmul.f32 %v172, %v172
  %v2079 = vmul.f32 %v173, %v173
  %v2080 = vmul.f32 %v174, %v174
  %v2081 = vmul.f32 %v175, %v175
  %v2082 = vmul.f32 %v176, %v176
  %v2083 = vmul.f32 %v177, %v177
  %v2084 = vmul.f32 %v178, %v178
  %v2085 = vmul.f32 %v179, %v179
  %v2086 = vmul.f32 %v180, %v180
  %v2087 = vmul.f32 %v181, %v181
  %v2088 = vmul.f32 %v182, %v182
  %v2089 = vmul.f32 %v183, %v183
  %v2090 = vmul.f32 %v184, %v184
  %v2091 = vmul.f32 %v185, %v185
  %v2092 = vmul.f32 %v186, %v186
  %v2093 = vmul.f32 %v187, %v187
  %v2094 = vmul.f32 %v188, %v188
  %v2095 = vmul.f32 %v189, %v189
  %v2096 = vmul.f32 %v190, %v190
  %v2097 = vmul.f32 %v191, %v191
  %v2098 = vmul.f32 %v192, %v192
  %v2099 = vmul.f32 %v193, %v193
  %v2100 = vmul.f32 %v194, %v194
  %v2101 = vmul.f32 %v195, %v195
  %v2102 = vmul.f32 %v196, %v196
  %v2103 = vmul.f32 %v197, %v197
  %v2104 = vmul.f32 %v198, %v198
  %v2105 = vmul.f32 %v199, %v199
  %v2106 = vmul.f32 %v200, %v200
  %v2107 = vmul.f32 %v201, %v201
  %v2108 = vmul.f32 %v202, %v202
  %v2109 = vmul.f32 %v203, %v203
  %v2110 = vmul.f32 %v204, %v204
  %v2111 = vmul.f32 %v205, %v205
  %v2112 = vmul.f32 %v206, %v206
  %v2113 = vmul.f32 %v207, %v207
  %v2114 = vmul.f32 %v208, %v208
  %v2115 = vmul.f32 %v209, %v209
  %v2116 = vmul.f32 %v210, %v210
  %v2117 = vmul.f32 %v211, %v211
  %v2118 = vmul.f32 %v212, %v212
  %v2119 = vmul.f32 %v213, %v213
  %v2120 = vmul.f32 %v214, %v214
  %v2122 = vsel %vm215, %v1917, 0
  %v2125 = vsel %vm215, %v1918, 0
  %v2128 = vsel %vm215, %v1919, 0
  %v2131 = vsel %vm215, %v1920, 0
  %v2134 = vsel %vm215, %v1921, 0
  %v2137 = vsel %vm215, %v1922, 0
  %v2140 = vsel %vm215, %v1923, 0
  %v2143 = vsel %vm215, %v1924, 0
  %v2146 = vsel %vm215, %v1925, 0
  %v2149 = vsel %vm215, %v1926, 0
  %v2152 = vsel %vm215, %v1927, 0
  %v2155 = vsel %vm215, %v1928, 0
  %v2158 = vsel %vm215, %v1929, 0
  %v2161 = vsel %vm215, %v1930, 0
  %v2164 = vsel %vm215, %v1931, 0
  %v2167 = vsel %vm215, %v1932, 0
  %v2170 = vsel %vm215, %v1933, 0
  %v2173 = vsel %vm215, %v1934, 0
  %v2176 = vsel %vm215, %v1935, 0
  %v2179 = vsel %vm215, %v1936, 0
  %v2182 = vsel %vm215, %v1937, 0
  %v2185 = vsel %vm215, %v1938, 0
  %v2188 = vsel %vm215, %v1939, 0
  %v2191 = vsel %vm215, %v1940, 0
  %v2194 = vsel %vm215, %v1941, 0
  %v2197 = vsel %vm215, %v1942, 0
  %v2200 = vsel %vm215, %v1943, 0
  %v2203 = vsel %vm215, %v1944, 0
  %v2206 = vsel %vm215, %v1945, 0
  %v2209 = vsel %vm215, %v1946, 0
  %v2212 = vsel %vm215, %v1947, 0
  %v2215 = vsel %vm215, %v1948, 0
  %v2218 = vsel %vm215, %v1949, 0
  %v2221 = vsel %vm215, %v1950, 0
  %v2224 = vsel %vm215, %v1951, 0
  %v2227 = vsel %vm215, %v1952, 0
  %v2230 = vsel %vm215, %v1953, 0
  %v2233 = vsel %vm215, %v1954, 0
  %v2236 = vsel %vm215, %v1955, 0
  %v2239 = vsel %vm215, %v1956, 0
  %v2242 = vsel %vm215, %v1957, 0
  %v2245 = vsel %vm215, %v1958, 0
  %v2248 = vsel %vm215, %v1959, 0
  %v2251 = vsel %vm215, %v1960, 0
  %v2254 = vsel %vm215, %v1961, 0
  %v2257 = vsel %vm215, %v1962, 0
  %v2260 = vsel %vm215, %v1963, 0
  %v2263 = vsel %vm215, %v1964, 0
  %v2266 = vsel %vm215, %v1965, 0
  %v2269 = vsel %vm215, %v1966, 0
  %v2272 = vsel %vm215, %v1967, 0
  %v2275 = vsel %vm215, %v1968, 0
  %v2278 = vsel %vm215, %v1969, 0
  %v2281 = vsel %vm215, %v1970, 0
  %v2284 = vsel %vm215, %v1971, 0
  %v2287 = vsel %vm215, %v1972, 0
  %v2290 = vsel %vm215, %v1973, 0
  %v2293 = vsel %vm215, %v1974, 0
  %v2296 = vsel %vm215, %v1975, 0
  %v2299 = vsel %vm215, %v1976, 0
  %v2302 = vsel %vm215, %v1977, 0
  %v2305 = vsel %vm215, %v1978, 0
  %v2308 = vsel %vm215, %v1979, 0
  %v2311 = vsel %vm215, %v1980, 0
  %v2314 = vsel %vm215, %v1981, 0
  %v2317 = vsel %vm215, %v1982, 0
  %v2320 = vsel %vm215, %v1983, 0
  %v2323 = vsel %vm215, %v1984, 0
  %v2326 = vsel %vm215, %v1985, 0
  %v2329 = vsel %vm215, %v1986, 0
  %v2332 = vsel %vm215, %v1987, 0
  %v2335 = vsel %vm215, %v1988, 0
  %v2338 = vsel %vm215, %v1989, 0
  %v2341 = vsel %vm215, %v1990, 0
  %v2344 = vsel %vm215, %v1991, 0
  %v2347 = vsel %vm215, %v1992, 0
  %v2350 = vsel %vm215, %v1993, 0
  %v2353 = vsel %vm215, %v1994, 0
  %v2356 = vsel %vm215, %v1995, 0
  %v2359 = vsel %vm215, %v1996, 0
  %v2362 = vsel %vm215, %v1997, 0
  %v2365 = vsel %vm215, %v1998, 0
  %v2368 = vsel %vm215, %v1999, 0
  %v2371 = vsel %vm215, %v2000, 0
  %v2374 = vsel %vm215, %v2001, 0
  %v2377 = vsel %vm215, %v2002, 0
  %v2380 = vsel %vm215, %v2003, 0
  %v2383 = vsel %vm215, %v2004, 0
  %v2386 = vsel %vm215, %v2005, 0
  %v2389 = vsel %vm215, %v2006, 0
  %v2392 = vsel %vm215, %v2007, 0
  %v2395 = vsel %vm215, %v2008, 0
  %v2398 = vsel %vm215, %v2009, 0
  %v2401 = vsel %vm215, %v2010, 0
  %v2404 = vsel %vm215, %v2011, 0
  %v2407 = vsel %vm215, %v2012, 0
  %v2410 = vsel %vm215, %v2013, 0
  %v2413 = vsel %vm215, %v2014, 0
  %v2416 = vsel %vm215, %v2015, 0
  %v2419 = vsel %vm215, %v2016, 0
  %v2422 = vsel %vm215, %v2017, 0
  %v2425 = vsel %vm215, %v2018, 0
  %v2428 = vsel %vm215, %v2019, 0
  %v2431 = vsel %vm215, %v2020, 0
  %v2434 = vsel %vm215, %v2021, 0
  %v2437 = vsel %vm215, %v2022, 0
  %v2440 = vsel %vm215, %v2023, 0
  %v2443 = vsel %vm215, %v2024, 0
  %v2446 = vsel %vm215, %v2025, 0
  %v2449 = vsel %vm215, %v2026, 0
  %v2452 = vsel %vm215, %v2027, 0
  %v2455 = vsel %vm215, %v2028, 0
  %v2458 = vsel %vm215, %v2029, 0
  %v2461 = vsel %vm215, %v2030, 0
  %v2464 = vsel %vm215, %v2031, 0
  %v2467 = vsel %vm215, %v2032, 0
  %v2470 = vsel %vm215, %v2033, 0
  %v2473 = vsel %vm215, %v2034, 0
  %v2476 = vsel %vm215, %v2035, 0
  %v2479 = vsel %vm215, %v2036, 0
  %v2482 = vsel %vm215, %v2037, 0
  %v2485 = vsel %vm215, %v2038, 0
  %v2488 = vsel %vm215, %v2039, 0
  %v2491 = vsel %vm215, %v2040, 0
  %v2494 = vsel %vm215, %v2041, 0
  %v2497 = vsel %vm215, %v2042, 0
  %v2500 = vsel %vm215, %v2043, 0
  %v2503 = vsel %vm215, %v2044, 0
  %v2506 = vsel %vm215, %v2045, 0
  %v2509 = vsel %vm215, %v2046, 0
  %v2512 = vsel %vm215, %v2047, 0
  %v2515 = vsel %vm215, %v2048, 0
  %v2518 = vsel %vm215, %v2049, 0
  %v2521 = vsel %vm215, %v2050, 0
  %v2524 = vsel %vm215, %v2051, 0
  %v2527 = vsel %vm215, %v2052, 0
  %v2530 = vsel %vm215, %v2053, 0
  %v2533 = vsel %vm215, %v2054, 0
  %v2536 = vsel %vm215, %v2055, 0
  %v2539 = vsel %vm215, %v2056, 0
  %v2542 = vsel %vm215, %v2057, 0
  %v2545 = vsel %vm215, %v2058, 0
  %v2548 = vsel %vm215, %v2059, 0
  %v2551 = vsel %vm215, %v2060, 0
  %v2554 = vsel %vm215, %v2061, 0
  %v2557 = vsel %vm215, %v2062, 0
  %v2560 = vsel %vm215, %v2063, 0
  %v2563 = vsel %vm215, %v2064, 0
  %v2566 = vsel %vm215, %v2065, 0
  %v2569 = vsel %vm215, %v2066, 0
  %v2572 = vsel %vm215, %v2067, 0
  %v2575 = vsel %vm215, %v2068, 0
  %v2578 = vsel %vm215, %v2069, 0
  %v2581 = vsel %vm215, %v2070, 0
  %v2584 = vsel %vm215, %v2071, 0
  %v2587 = vsel %vm215, %v2072, 0
  %v2590 = vsel %vm215, %v2073, 0
  %v2593 = vsel %vm215, %v2074, 0
  %v2596 = vsel %vm215, %v2075, 0
  %v2599 = vsel %vm215, %v2076, 0
  %v2602 = vsel %vm215, %v2077, 0
  %v2605 = vsel %vm215, %v2078, 0
  %v2608 = vsel %vm215, %v2079, 0
  %v2611 = vsel %vm215, %v2080, 0
  %v2614 = vsel %vm215, %v2081, 0
  %v2617 = vsel %vm215, %v2082, 0
  %v2620 = vsel %vm215, %v2083, 0
  %v2623 = vsel %vm215, %v2084, 0
  %v2626 = vsel %vm215, %v2085, 0
  %v2629 = vsel %vm215, %v2086, 0
  %v2632 = vsel %vm215, %v2087, 0
  %v2635 = vsel %vm215, %v2088, 0
  %v2638 = vsel %vm215, %v2089, 0
  %v2641 = vsel %vm215, %v2090, 0
  %v2644 = vsel %vm215, %v2091, 0
  %v2647 = vsel %vm215, %v2092, 0
  %v2650 = vsel %vm215, %v2093, 0
  %v2653 = vsel %vm215, %v2094, 0
  %v2656 = vsel %vm215, %v2095, 0
  %v2659 = vsel %vm215, %v2096, 0
  %v2662 = vsel %vm215, %v2097, 0
  %v2665 = vsel %vm215, %v2098, 0
  %v2668 = vsel %vm215, %v2099, 0
  %v2671 = vsel %vm215, %v2100, 0
  %v2674 = vsel %vm215, %v2101, 0
  %v2677 = vsel %vm215, %v2102, 0
  %v2680 = vsel %vm215, %v2103, 0
  %v2683 = vsel %vm215, %v2104, 0
  %v2686 = vsel %vm215, %v2105, 0
  %v2689 = vsel %vm215, %v2106, 0
  %v2692 = vsel %vm215, %v2107, 0
  %v2695 = vsel %vm215, %v2108, 0
  %v2698 = vsel %vm215, %v2109, 0
  %v2701 = vsel %vm215, %v2110, 0
  %v2704 = vsel %vm215, %v2111, 0
  %v2707 = vsel %vm215, %v2112, 0
  %v2710 = vsel %vm215, %v2113, 0
  %v2713 = vsel %vm215, %v2114, 0
  %v2716 = vsel %vm215, %v2115, 0
  %v2719 = vsel %vm215, %v2116, 0
  %v2722 = vsel %vm215, %v2117, 0
  %v2725 = vsel %vm215, %v2118, 0
  %v2728 = vsel %vm215, %v2119, 0
  %v2731 = vsel %vm215, %v2120, 0
  %2733 = vmatprep.subr.mxu0 0.0
  %2734 = vmatpush1.msra.mxu0 1.0
  %2735 = vmatprep.subr.mxu0 0.0
  %2736 = vmatpush1.msra.mxu0 1.0
  %2737 = vmatprep.subr.mxu0 0.0
  %2738 = vmatpush1.msra.mxu0 1.0
  %2739 = vmatprep.subr.mxu0 0.0
  %2740 = vmatpush1.msra.mxu0 1.0
  %2741 = vmatprep.subr.mxu0 0.0
  %2742 = vmatpush1.msra.mxu0 1.0
  %2743 = vmatprep.subr.mxu0 0.0
  %2744 = vmatpush1.msra.mxu0 1.0
  %2745 = vmatprep.subr.mxu0 0.0
  %2746 = vmatpush1.msra.mxu0 %v830
  %2747 = vmatprep.subr.mxu0 0.0
  %2748 = vmatpush1.msra.mxu0 0.0
  %2749 = vmatprep.subr.mxu0 0.0
  %2750 = vmatpush1.msra.mxu0 0.0
  %2751 = vmatprep.subr.mxu0 0.0
  %2752 = vmatpush1.msra.mxu0 0.0
  %2753 = vmatprep.subr.mxu0 0.0
  %2754 = vmatpush1.msra.mxu0 0.0
  %2755 = vmatprep.subr.mxu0 0.0
  %2756 = vmatpush1.msra.mxu0 0.0
  %2757 = vmatprep.subr.mxu0 0.0
  %2758 = vmatpush1.msra.mxu0 0.0
  %2759 = vmatprep.subr.mxu0 0.0
  %2760 = vmatpush1.msra.mxu0 0.0
  %2761 = vmatprep.subr.mxu0 0.0
  %2762 = vmatpush1.msra.mxu0 0.0
  %2763 = vmatprep.subr.mxu0 0.0
  %2764 = vmatpush1.msra.mxu0 0.0
  %2765 = vmatprep.subr.mxu0 0.0
  %2766 = vmatpush1.msra.mxu0 0.0
  %2767 = vmatprep.subr.mxu0 0.0
  %2768 = vmatpush1.msra.mxu0 0.0
  %2769 = vmatprep.subr.mxu0 0.0
  %2770 = vmatpush1.msra.mxu0 0.0
  %2771 = vmatprep.subr.mxu0 0.0
  %2772 = vmatpush1.msra.mxu0 0.0
  %2773 = vmatprep.subr.mxu0 0.0
  %2774 = vmatpush1.msra.mxu0 0.0
  %2775 = vmatprep.subr.mxu0 0.0
  %2776 = vmatpush1.msra.mxu0 0.0
  %2777 = vmatprep.subr.mxu0 0.0
  %2778 = vmatpush1.msra.mxu0 0.0
  %2779 = vmatprep.subr.mxu0 0.0
  %2780 = vmatpush1.msra.mxu0 0.0
  %2781 = vmatprep.subr.mxu0 0.0
  %2782 = vmatpush1.msra.mxu0 0.0
  %2783 = vmatprep.subr.mxu0 0.0
  %2784 = vmatpush1.msra.mxu0 0.0
  %2785 = vmatprep.subr.mxu0 0.0
  %2786 = vmatpush1.msra.mxu0 0.0
  %2787 = vmatprep.subr.mxu0 0.0
  %2788 = vmatpush1.msra.mxu0 0.0
  %2789 = vmatprep.subr.mxu0 0.0
  %2790 = vmatpush1.msra.mxu0 0.0
  %2791 = vmatprep.subr.mxu0 0.0
  %2792 = vmatpush1.msra.mxu0 0.0
  %2793 = vmatprep.subr.mxu0 0.0
  %2794 = vmatpush1.msra.mxu0 0.0
  %2795 = vmatprep.subr.mxu0 0.0
  %2796 = vmatpush1.msra.mxu0 0.0
  %2797 = vmatprep.mubr.f32.mxu0 0.0
  %2798 = vmatmul.mubr.f32.gmra.mrb[0].mxu0 %v2122
  %v2799 = vpop.f32.mrb[0].mxu0
  %v2800 = vadd.f32 0.0, %v2799
  %v2801 = vpop.f32.mrb[0].mxu0
  %2802 = vmatprep.mubr.f32.mxu0 0.0
  %2803 = vmatmul.mubr.f32.gmra.mrb[0].mxu0 %v2125
  %v2804 = vpop.f32.mrb[0].mxu0
  %v2805 = vadd.f32 0.0, %v2804
  %v2806 = vpop.f32.mrb[0].mxu0
  %2807 = vmatprep.mubr.f32.mxu0 0.0
  %2808 = vmatmul.mubr.f32.gmra.mrb[0].mxu0 %v2128
  %v2809 = vpop.f32.mrb[0].mxu0
  %v2810 = vadd.f32 0.0, %v2809
  %v2811 = vpop.f32.mrb[0].mxu0
  %2812 = vmatprep.mubr.f32.mxu0 0.0
  %2813 = vmatmul.mubr.f32.gmra.mrb[0].mxu0 %v2131
  %v2814 = vpop.f32.mrb[0].mxu0
  %v2815 = vadd.f32 0.0, %v2814
  %v2816 = vpop.f32.mrb[0].mxu0
  %2817 = vmatprep.mubr.f32.mxu0 0.0
  %2818 = vmatmul.mubr.f32.gmra.mrb[0].mxu0 %v2134
  %v2819 = vpop.f32.mrb[0].mxu0
  %v2820 = vadd.f32 0.0, %v2819
  %v2821 = vpop.f32.mrb[0].mxu0
  %2822 = vmatprep.mubr.f32.mxu0 0.0
  %2823 = vmatmul.mubr.f32.gmra.mrb[0].mxu0 %v2137
  %v2824 = vpop.f32.mrb[0].mxu0
  %v2825 = vadd.f32 0.0, %v2824
  %v2826 = vpop.f32.mrb[0].mxu0
  %2827 = vmatprep.mubr.f32.mxu0 0.0
  %2828 = vmatmul.mubr.f32.gmra.mrb[0].mxu0 %v2140
  %v2829 = vpop.f32.mrb[0].mxu0
  %v2830 = vadd.f32 0.0, %v2829
  %v2831 = vpop.f32.mrb[0].mxu0
  %2832 = vmatprep.mubr.f32.mxu0 0.0
  %2833 = vmatmul.mubr.f32.gmra.mrb[0].mxu0 %v2143
  %v2834 = vpop.f32.mrb[0].mxu0
  %v2835 = vadd.f32 0.0, %v2834
  %v2836 = vpop.f32.mrb[0].mxu0
  %2837 = vmatprep.mubr.f32.mxu0 0.0
  %2838 = vmatmul.mubr.f32.gmra.mrb[0].mxu0 %v2146
  %v2839 = vpop.f32.mrb[0].mxu0
  %v2840 = vadd.f32 0.0, %v2839
  %v2841 = vpop.f32.mrb[0].mxu0
  %2842 = vmatprep.mubr.f32.mxu0 0.0
  %2843 = vmatmul.mubr.f32.gmra.mrb[0].mxu0 %v2149
  %v2844 = vpop.f32.mrb[0].mxu0
  %v2845 = vadd.f32 0.0, %v2844
  %v2846 = vpop.f32.mrb[0].mxu0
  %2847 = vmatprep.mubr.f32.mxu0 0.0
  %2848 = vmatmul.mubr.f32.gmra.mrb[0].mxu0 %v2152
  %v2849 = vpop.f32.mrb[0].mxu0
  %v2850 = vadd.f32 0.0, %v2849
  %v2851 = vpop.f32.mrb[0].mxu0
  %2852 = vmatprep.mubr.f32.mxu0 0.0
  %2853 = vmatmul.mubr.f32.gmra.mrb[0].mxu0 %v2155
  %v2854 = vpop.f32.mrb[0].mxu0
  %v2855 = vadd.f32 0.0, %v2854
  %v2856 = vpop.f32.mrb[0].mxu0
  %2857 = vmatprep.mubr.f32.mxu0 0.0
  %2858 = vmatmul.mubr.f32.gmra.mrb[0].mxu0 %v2158
  %v2859 = vpop.f32.mrb[0].mxu0
  %v2860 = vadd.f32 0.0, %v2859
  %v2861 = vpop.f32.mrb[0].mxu0
  %2862 = vmatprep.mubr.f32.mxu0 0.0
  %2863 = vmatmul.mubr.f32.gmra.mrb[0].mxu0 %v2161
  %v2864 = vpop.f32.mrb[0].mxu0
  %v2865 = vadd.f32 0.0, %v2864
  %v2866 = vpop.f32.mrb[0].mxu0
  %2867 = vmatprep.mubr.f32.mxu0 0.0
  %2868 = vmatmul.mubr.f32.gmra.mrb[0].mxu0 %v2164
  %v2869 = vpop.f32.mrb[0].mxu0
  %v2870 = vadd.f32 0.0, %v2869
  %v2871 = vpop.f32.mrb[0].mxu0
  %2872 = vmatprep.mubr.f32.mxu0 0.0
  %2873 = vmatmul.mubr.f32.gmra.mrb[0].mxu0 %v2167
  %v2874 = vpop.f32.mrb[0].mxu0
  %v2875 = vadd.f32 0.0, %v2874
  %v2876 = vpop.f32.mrb[0].mxu0
  %2877 = vmatprep.mubr.f32.mxu0 0.0
  %2878 = vmatmul.mubr.f32.gmra.mrb[0].mxu0 %v2170
  %v2879 = vpop.f32.mrb[0].mxu0
  %v2880 = vadd.f32 0.0, %v2879
  %v2881 = vpop.f32.mrb[0].mxu0
  %2882 = vmatprep.mubr.f32.mxu0 0.0
  %2883 = vmatmul.mubr.f32.gmra.mrb[0].mxu0 %v2173
  %v2884 = vpop.f32.mrb[0].mxu0
  %v2885 = vadd.f32 0.0, %v2884
  %v2886 = vpop.f32.mrb[0].mxu0
  %2887 = vmatprep.mubr.f32.mxu0 0.0
  %2888 = vmatmul.mubr.f32.gmra.mrb[0].mxu0 %v2176
  %v2889 = vpop.f32.mrb[0].mxu0
  %v2890 = vadd.f32 0.0, %v2889
  %v2891 = vpop.f32.mrb[0].mxu0
  %2892 = vmatprep.mubr.f32.mxu0 0.0
  %2893 = vmatmul.mubr.f32.gmra.mrb[0].mxu0 %v2179
  %v2894 = vpop.f32.mrb[0].mxu0
  %v2895 = vadd.f32 0.0, %v2894
  %v2896 = vpop.f32.mrb[0].mxu0
  %2897 = vmatprep.mubr.f32.mxu0 0.0
  %2898 = vmatmul.mubr.f32.gmra.mrb[0].mxu0 %v2182
  %v2899 = vpop.f32.mrb[0].mxu0
  %v2900 = vadd.f32 0.0, %v2899
  %v2901 = vpop.f32.mrb[0].mxu0
  %2902 = vmatprep.mubr.f32.mxu0 0.0
  %2903 = vmatmul.mubr.f32.gmra.mrb[0].mxu0 %v2185
  %v2904 = vpop.f32.mrb[0].mxu0
  %v2905 = vadd.f32 0.0, %v2904
  %v2906 = vpop.f32.mrb[0].mxu0
  %2907 = vmatprep.mubr.f32.mxu0 0.0
  %2908 = vmatmul.mubr.f32.gmra.mrb[0].mxu0 %v2188
  %v2909 = vpop.f32.mrb[0].mxu0
  %v2910 = vadd.f32 0.0, %v2909
  %v2911 = vpop.f32.mrb[0].mxu0
  %2912 = vmatprep.mubr.f32.mxu0 0.0
  %2913 = vmatmul.mubr.f32.gmra.mrb[0].mxu0 %v2191
  %v2914 = vpop.f32.mrb[0].mxu0
  %v2915 = vadd.f32 0.0, %v2914
  %v2916 = vpop.f32.mrb[0].mxu0
  %2917 = vmatprep.mubr.f32.mxu0 0.0
  %2918 = vmatmul.mubr.f32.gmra.mrb[0].mxu0 %v2194
  %v2919 = vpop.f32.mrb[0].mxu0
  %v2920 = vadd.f32 0.0, %v2919
  %v2921 = vpop.f32.mrb[0].mxu0
  %2922 = vmatprep.mubr.f32.mxu0 0.0
  %2923 = vmatmul.mubr.f32.gmra.mrb[0].mxu0 %v2197
  %v2924 = vpop.f32.mrb[0].mxu0
  %v2925 = vadd.f32 0.0, %v2924
  %v2926 = vpop.f32.mrb[0].mxu0
  %2927 = vmatprep.mubr.f32.mxu0 0.0
  %2928 = vmatmul.mubr.f32.gmra.mrb[0].mxu0 %v2200
  %v2929 = vpop.f32.mrb[0].mxu0
  %v2930 = vadd.f32 0.0, %v2929
  %v2931 = vpop.f32.mrb[0].mxu0
  %2932 = vmatprep.mubr.f32.mxu0 0.0
  %2933 = vmatmul.mubr.f32.gmra.mrb[0].mxu0 %v2203
  %v2934 = vpop.f32.mrb[0].mxu0
  %v2935 = vadd.f32 0.0, %v2934
  %v2936 = vpop.f32.mrb[0].mxu0
  %2937 = vmatprep.mubr.f32.mxu0 0.0
  %2938 = vmatmul.mubr.f32.gmra.mrb[0].mxu0 %v2206
  %v2939 = vpop.f32.mrb[0].mxu0
  %v2940 = vadd.f32 0.0, %v2939
  %v2941 = vpop.f32.mrb[0].mxu0
  %2942 = vmatprep.mubr.f32.mxu0 0.0
  %2943 = vmatmul.mubr.f32.gmra.mrb[0].mxu0 %v2209
  %v2944 = vpop.f32.mrb[0].mxu0
  %v2945 = vadd.f32 0.0, %v2944
  %v2946 = vpop.f32.mrb[0].mxu0
  %2947 = vmatprep.mubr.f32.mxu0 0.0
  %2948 = vmatmul.mubr.f32.gmra.mrb[0].mxu0 %v2212
  %v2949 = vpop.f32.mrb[0].mxu0
  %v2950 = vadd.f32 0.0, %v2949
  %v2951 = vpop.f32.mrb[0].mxu0
  %2952 = vmatprep.mubr.f32.mxu0 0.0
  %2953 = vmatmul.mubr.f32.gmra.mrb[0].mxu0 %v2215
  %v2954 = vpop.f32.mrb[0].mxu0
  %v2955 = vadd.f32 0.0, %v2954
  %v2956 = vpop.f32.mrb[0].mxu0
  %2957 = vmatprep.mubr.f32.mxu0 0.0
  %2958 = vmatmul.mubr.f32.gmra.mrb[0].mxu0 %v2218
  %v2959 = vpop.f32.mrb[0].mxu0
  %v2960 = vadd.f32 0.0, %v2959
  %v2961 = vpop.f32.mrb[0].mxu0
  %2962 = vmatprep.mubr.f32.mxu0 0.0
  %2963 = vmatmul.mubr.f32.gmra.mrb[0].mxu0 %v2221
  %v2964 = vpop.f32.mrb[0].mxu0
  %v2965 = vadd.f32 0.0, %v2964
  %v2966 = vpop.f32.mrb[0].mxu0
  %2967 = vmatprep.mubr.f32.mxu0 0.0
  %2968 = vmatmul.mubr.f32.gmra.mrb[0].mxu0 %v2224
  %v2969 = vpop.f32.mrb[0].mxu0
  %v2970 = vadd.f32 0.0, %v2969
  %v2971 = vpop.f32.mrb[0].mxu0
  %2972 = vmatprep.mubr.f32.mxu0 0.0
  %2973 = vmatmul.mubr.f32.gmra.mrb[0].mxu0 %v2227
  %v2974 = vpop.f32.mrb[0].mxu0
  %v2975 = vadd.f32 0.0, %v2974
  %v2976 = vpop.f32.mrb[0].mxu0
  %2977 = vmatprep.mubr.f32.mxu0 0.0
  %2978 = vmatmul.mubr.f32.gmra.mrb[0].mxu0 %v2230
  %v2979 = vpop.f32.mrb[0].mxu0
  %v2980 = vadd.f32 0.0, %v2979
  %v2981 = vpop.f32.mrb[0].mxu0
  %2982 = vmatprep.mubr.f32.mxu0 0.0
  %2983 = vmatmul.mubr.f32.gmra.mrb[0].mxu0 %v2233
  %v2984 = vpop.f32.mrb[0].mxu0
  %v2985 = vadd.f32 0.0, %v2984
  %v2986 = vpop.f32.mrb[0].mxu0
  %2987 = vmatprep.mubr.f32.mxu0 0.0
  %2988 = vmatmul.mubr.f32.gmra.mrb[0].mxu0 %v2236
  %v2989 = vpop.f32.mrb[0].mxu0
  %v2990 = vadd.f32 0.0, %v2989
  %v2991 = vpop.f32.mrb[0].mxu0
  %2992 = vmatprep.mubr.f32.mxu0 0.0
  %2993 = vmatmul.mubr.f32.gmra.mrb[0].mxu0 %v2239
  %v2994 = vpop.f32.mrb[0].mxu0
  %v2995 = vadd.f32 0.0, %v2994
  %v2996 = vpop.f32.mrb[0].mxu0
  %2997 = vmatprep.mubr.f32.mxu0 0.0
  %2998 = vmatmul.mubr.f32.gmra.mrb[0].mxu0 %v2242
  %v2999 = vpop.f32.mrb[0].mxu0
  %v3000 = vadd.f32 0.0, %v2999
  %v3001 = vpop.f32.mrb[0].mxu0
  %3002 = vmatprep.mubr.f32.mxu0 0.0
  %3003 = vmatmul.mubr.f32.gmra.mrb[0].mxu0 %v2245
  %v3004 = vpop.f32.mrb[0].mxu0
  %v3005 = vadd.f32 0.0, %v3004
  %v3006 = vpop.f32.mrb[0].mxu0
  %3007 = vmatprep.mubr.f32.mxu0 0.0
  %3008 = vmatmul.mubr.f32.gmra.mrb[0].mxu0 %v2248
  %v3009 = vpop.f32.mrb[0].mxu0
  %v3010 = vadd.f32 0.0, %v3009
  %v3011 = vpop.f32.mrb[0].mxu0
  %3012 = vmatprep.mubr.f32.mxu0 0.0
  %3013 = vmatmul.mubr.f32.gmra.mrb[0].mxu0 %v2251
  %v3014 = vpop.f32.mrb[0].mxu0
  %v3015 = vadd.f32 0.0, %v3014
  %v3016 = vpop.f32.mrb[0].mxu0
  %3017 = vmatprep.mubr.f32.mxu0 0.0
  %3018 = vmatmul.mubr.f32.gmra.mrb[0].mxu0 %v2254
  %v3019 = vpop.f32.mrb[0].mxu0
  %v3020 = vadd.f32 0.0, %v3019
  %v3021 = vpop.f32.mrb[0].mxu0
  %3022 = vmatprep.mubr.f32.mxu0 0.0
  %3023 = vmatmul.mubr.f32.gmra.mrb[0].mxu0 %v2257
  %v3024 = vpop.f32.mrb[0].mxu0
  %v3025 = vadd.f32 0.0, %v3024
  %v3026 = vpop.f32.mrb[0].mxu0
  %3027 = vmatprep.mubr.f32.mxu0 0.0
  %3028 = vmatmul.mubr.f32.gmra.mrb[0].mxu0 %v2260
  %v3029 = vpop.f32.mrb[0].mxu0
  %v3030 = vadd.f32 0.0, %v3029
  %v3031 = vpop.f32.mrb[0].mxu0
  %3032 = vmatprep.mubr.f32.mxu0 0.0
  %3033 = vmatmul.mubr.f32.gmra.mrb[0].mxu0 %v2263
  %v3034 = vpop.f32.mrb[0].mxu0
  %v3035 = vadd.f32 0.0, %v3034
  %v3036 = vpop.f32.mrb[0].mxu0
  %3037 = vmatprep.mubr.f32.mxu0 0.0
  %3038 = vmatmul.mubr.f32.gmra.mrb[0].mxu0 %v2266
  %v3039 = vpop.f32.mrb[0].mxu0
  %v3040 = vadd.f32 0.0, %v3039
  %v3041 = vpop.f32.mrb[0].mxu0
  %3042 = vmatprep.mubr.f32.mxu0 0.0
  %3043 = vmatmul.mubr.f32.gmra.mrb[0].mxu0 %v2269
  %v3044 = vpop.f32.mrb[0].mxu0
  %v3045 = vadd.f32 0.0, %v3044
  %v3046 = vpop.f32.mrb[0].mxu0
  %3047 = vmatprep.mubr.f32.mxu0 0.0
  %3048 = vmatmul.mubr.f32.gmra.mrb[0].mxu0 %v2272
  %v3049 = vpop.f32.mrb[0].mxu0
  %v3050 = vadd.f32 0.0, %v3049
  %v3051 = vpop.f32.mrb[0].mxu0
  %3052 = vmatprep.mubr.f32.mxu0 0.0
  %3053 = vmatmul.mubr.f32.gmra.mrb[0].mxu0 %v2275
  %v3054 = vpop.f32.mrb[0].mxu0
  %v3055 = vadd.f32 0.0, %v3054
  %v3056 = vpop.f32.mrb[0].mxu0
  %3057 = vmatprep.mubr.f32.mxu0 0.0
  %3058 = vmatmul.mubr.f32.gmra.mrb[0].mxu0 %v2278
  %v3059 = vpop.f32.mrb[0].mxu0
  %v3060 = vadd.f32 0.0, %v3059
  %v3061 = vpop.f32.mrb[0].mxu0
  %3062 = vmatprep.mubr.f32.mxu0 0.0
  %3063 = vmatmul.mubr.f32.gmra.mrb[0].mxu0 %v2281
  %v3064 = vpop.f32.mrb[0].mxu0
  %v3065 = vadd.f32 0.0, %v3064
  %v3066 = vpop.f32.mrb[0].mxu0
  %3067 = vmatprep.mubr.f32.mxu0 0.0
  %3068 = vmatmul.mubr.f32.gmra.mrb[0].mxu0 %v2284
  %v3069 = vpop.f32.mrb[0].mxu0
  %v3070 = vadd.f32 0.0, %v3069
  %v3071 = vpop.f32.mrb[0].mxu0
  %3072 = vmatprep.mubr.f32.mxu0 0.0
  %3073 = vmatmul.mubr.f32.gmra.mrb[0].mxu0 %v2287
  %v3074 = vpop.f32.mrb[0].mxu0
  %v3075 = vadd.f32 0.0, %v3074
  %v3076 = vpop.f32.mrb[0].mxu0
  %3077 = vmatprep.mubr.f32.mxu0 0.0
  %3078 = vmatmul.mubr.f32.gmra.mrb[0].mxu0 %v2290
  %v3079 = vpop.f32.mrb[0].mxu0
  %v3080 = vadd.f32 0.0, %v3079
  %v3081 = vpop.f32.mrb[0].mxu0
  %3082 = vmatprep.mubr.f32.mxu0 0.0
  %3083 = vmatmul.mubr.f32.gmra.mrb[0].mxu0 %v2293
  %v3084 = vpop.f32.mrb[0].mxu0
  %v3085 = vadd.f32 0.0, %v3084
  %v3086 = vpop.f32.mrb[0].mxu0
  %3087 = vmatprep.mubr.f32.mxu0 0.0
  %3088 = vmatmul.mubr.f32.gmra.mrb[0].mxu0 %v2296
  %v3089 = vpop.f32.mrb[0].mxu0
  %v3090 = vadd.f32 0.0, %v3089
  %v3091 = vpop.f32.mrb[0].mxu0
  %3092 = vmatprep.mubr.f32.mxu0 0.0
  %3093 = vmatmul.mubr.f32.gmra.mrb[0].mxu0 %v2299
  %v3094 = vpop.f32.mrb[0].mxu0
  %v3095 = vadd.f32 0.0, %v3094
  %v3096 = vpop.f32.mrb[0].mxu0
  %3097 = vmatprep.mubr.f32.mxu0 0.0
  %3098 = vmatmul.mubr.f32.gmra.mrb[0].mxu0 %v2302
  %v3099 = vpop.f32.mrb[0].mxu0
  %v3100 = vadd.f32 0.0, %v3099
  %v3101 = vpop.f32.mrb[0].mxu0
  %3102 = vmatprep.mubr.f32.mxu0 0.0
  %3103 = vmatmul.mubr.f32.gmra.mrb[0].mxu0 %v2305
  %v3104 = vpop.f32.mrb[0].mxu0
  %v3105 = vadd.f32 0.0, %v3104
  %v3106 = vpop.f32.mrb[0].mxu0
  %3107 = vmatprep.mubr.f32.mxu0 0.0
  %3108 = vmatmul.mubr.f32.gmra.mrb[0].mxu0 %v2308
  %v3109 = vpop.f32.mrb[0].mxu0
  %v3110 = vadd.f32 0.0, %v3109
  %v3111 = vpop.f32.mrb[0].mxu0
  %3112 = vmatprep.mubr.f32.mxu0 0.0
  %3113 = vmatmul.mubr.f32.gmra.mrb[0].mxu0 %v2311
  %v3114 = vpop.f32.mrb[0].mxu0
  %v3115 = vadd.f32 0.0, %v3114
  %v3116 = vpop.f32.mrb[0].mxu0
  %3117 = vmatprep.mubr.f32.mxu0 0.0
  %3118 = vmatmul.mubr.f32.gmra.mrb[0].mxu0 %v2314
  %v3119 = vpop.f32.mrb[0].mxu0
  %v3120 = vadd.f32 0.0, %v3119
  %v3121 = vpop.f32.mrb[0].mxu0
  %3122 = vmatprep.mubr.f32.mxu0 0.0
  %3123 = vmatmul.mubr.f32.gmra.mrb[0].mxu0 %v2317
  %v3124 = vpop.f32.mrb[0].mxu0
  %v3125 = vadd.f32 0.0, %v3124
  %v3126 = vpop.f32.mrb[0].mxu0
  %3127 = vmatprep.mubr.f32.mxu0 0.0
  %3128 = vmatmul.mubr.f32.gmra.mrb[0].mxu0 %v2320
  %v3129 = vpop.f32.mrb[0].mxu0
  %v3130 = vadd.f32 0.0, %v3129
  %v3131 = vpop.f32.mrb[0].mxu0
  %3132 = vmatprep.mubr.f32.mxu0 0.0
  %3133 = vmatmul.mubr.f32.gmra.mrb[0].mxu0 %v2323
  %v3134 = vpop.f32.mrb[0].mxu0
  %v3135 = vadd.f32 0.0, %v3134
  %v3136 = vpop.f32.mrb[0].mxu0
  %3137 = vmatprep.mubr.f32.mxu0 0.0
  %3138 = vmatmul.mubr.f32.gmra.mrb[0].mxu0 %v2326
  %v3139 = vpop.f32.mrb[0].mxu0
  %v3140 = vadd.f32 0.0, %v3139
  %v3141 = vpop.f32.mrb[0].mxu0
  %3142 = vmatprep.mubr.f32.mxu0 0.0
  %3143 = vmatmul.mubr.f32.gmra.mrb[0].mxu0 %v2329
  %v3144 = vpop.f32.mrb[0].mxu0
  %v3145 = vadd.f32 0.0, %v3144
  %v3146 = vpop.f32.mrb[0].mxu0
  %3147 = vmatprep.mubr.f32.mxu0 0.0
  %3148 = vmatmul.mubr.f32.gmra.mrb[0].mxu0 %v2332
  %v3149 = vpop.f32.mrb[0].mxu0
  %v3150 = vadd.f32 0.0, %v3149
  %v3151 = vpop.f32.mrb[0].mxu0
  %3152 = vmatprep.mubr.f32.mxu0 0.0
  %3153 = vmatmul.mubr.f32.gmra.mrb[0].mxu0 %v2335
  %v3154 = vpop.f32.mrb[0].mxu0
  %v3155 = vadd.f32 0.0, %v3154
  %v3156 = vpop.f32.mrb[0].mxu0
  %3157 = vmatprep.mubr.f32.mxu0 0.0
  %3158 = vmatmul.mubr.f32.gmra.mrb[0].mxu0 %v2338
  %v3159 = vpop.f32.mrb[0].mxu0
  %v3160 = vadd.f32 0.0, %v3159
  %v3161 = vpop.f32.mrb[0].mxu0
  %3162 = vmatprep.mubr.f32.mxu0 0.0
  %3163 = vmatmul.mubr.f32.gmra.mrb[0].mxu0 %v2341
  %v3164 = vpop.f32.mrb[0].mxu0
  %v3165 = vadd.f32 0.0, %v3164
  %v3166 = vpop.f32.mrb[0].mxu0
  %3167 = vmatprep.mubr.f32.mxu0 0.0
  %3168 = vmatmul.mubr.f32.gmra.mrb[0].mxu0 %v2344
  %v3169 = vpop.f32.mrb[0].mxu0
  %v3170 = vadd.f32 0.0, %v3169
  %v3171 = vpop.f32.mrb[0].mxu0
  %3172 = vmatprep.mubr.f32.mxu0 0.0
  %3173 = vmatmul.mubr.f32.gmra.mrb[0].mxu0 %v2347
  %v3174 = vpop.f32.mrb[0].mxu0
  %v3175 = vadd.f32 0.0, %v3174
  %v3176 = vpop.f32.mrb[0].mxu0
  %3177 = vmatprep.mubr.f32.mxu0 0.0
  %3178 = vmatmul.mubr.f32.gmra.mrb[0].mxu0 %v2350
  %v3179 = vpop.f32.mrb[0].mxu0
  %v3180 = vadd.f32 0.0, %v3179
  %v3181 = vpop.f32.mrb[0].mxu0
  %3182 = vmatprep.mubr.f32.mxu0 0.0
  %3183 = vmatmul.mubr.f32.gmra.mrb[0].mxu0 %v2353
  %v3184 = vpop.f32.mrb[0].mxu0
  %v3185 = vadd.f32 0.0, %v3184
  %v3186 = vpop.f32.mrb[0].mxu0
  %3187 = vmatprep.mubr.f32.mxu0 0.0
  %3188 = vmatmul.mubr.f32.gmra.mrb[0].mxu0 %v2356
  %v3189 = vpop.f32.mrb[0].mxu0
  %v3190 = vadd.f32 0.0, %v3189
  %v3191 = vpop.f32.mrb[0].mxu0
  %3192 = vmatprep.mubr.f32.mxu0 0.0
  %3193 = vmatmul.mubr.f32.gmra.mrb[0].mxu0 %v2359
  %v3194 = vpop.f32.mrb[0].mxu0
  %v3195 = vadd.f32 0.0, %v3194
  %v3196 = vpop.f32.mrb[0].mxu0
  %3197 = vmatprep.mubr.f32.mxu0 0.0
  %3198 = vmatmul.mubr.f32.gmra.mrb[0].mxu0 %v2362
  %v3199 = vpop.f32.mrb[0].mxu0
  %v3200 = vadd.f32 0.0, %v3199
  %v3201 = vpop.f32.mrb[0].mxu0
  %3202 = vmatprep.mubr.f32.mxu0 0.0
  %3203 = vmatmul.mubr.f32.gmra.mrb[0].mxu0 %v2365
  %v3204 = vpop.f32.mrb[0].mxu0
  %v3205 = vadd.f32 0.0, %v3204
  %v3206 = vpop.f32.mrb[0].mxu0
  %3207 = vmatprep.mubr.f32.mxu0 0.0
  %3208 = vmatmul.mubr.f32.gmra.mrb[0].mxu0 %v2368
  %v3209 = vpop.f32.mrb[0].mxu0
  %v3210 = vadd.f32 0.0, %v3209
  %v3211 = vpop.f32.mrb[0].mxu0
  %3212 = vmatprep.mubr.f32.mxu0 0.0
  %3213 = vmatmul.mubr.f32.gmra.mrb[0].mxu0 %v2371
  %v3214 = vpop.f32.mrb[0].mxu0
  %v3215 = vadd.f32 0.0, %v3214
  %v3216 = vpop.f32.mrb[0].mxu0
  %3217 = vmatprep.mubr.f32.mxu0 0.0
  %3218 = vmatmul.mubr.f32.gmra.mrb[0].mxu0 %v2374
  %v3219 = vpop.f32.mrb[0].mxu0
  %v3220 = vadd.f32 0.0, %v3219
  %v3221 = vpop.f32.mrb[0].mxu0
  %3222 = vmatprep.mubr.f32.mxu0 0.0
  %3223 = vmatmul.mubr.f32.gmra.mrb[0].mxu0 %v2377
  %v3224 = vpop.f32.mrb[0].mxu0
  %v3225 = vadd.f32 0.0, %v3224
  %v3226 = vpop.f32.mrb[0].mxu0
  %3227 = vmatprep.mubr.f32.mxu0 0.0
  %3228 = vmatmul.mubr.f32.gmra.mrb[0].mxu0 %v2380
  %v3229 = vpop.f32.mrb[0].mxu0
  %v3230 = vadd.f32 0.0, %v3229
  %v3231 = vpop.f32.mrb[0].mxu0
  %3232 = vmatprep.mubr.f32.mxu0 0.0
  %3233 = vmatmul.mubr.f32.gmra.mrb[0].mxu0 %v2383
  %v3234 = vpop.f32.mrb[0].mxu0
  %v3235 = vadd.f32 0.0, %v3234
  %v3236 = vpop.f32.mrb[0].mxu0
  %3237 = vmatprep.mubr.f32.mxu0 0.0
  %3238 = vmatmul.mubr.f32.gmra.mrb[0].mxu0 %v2386
  %v3239 = vpop.f32.mrb[0].mxu0
  %v3240 = vadd.f32 0.0, %v3239
  %v3241 = vpop.f32.mrb[0].mxu0
  %3242 = vmatprep.mubr.f32.mxu0 0.0
  %3243 = vmatmul.mubr.f32.gmra.mrb[0].mxu0 %v2389
  %v3244 = vpop.f32.mrb[0].mxu0
  %v3245 = vadd.f32 0.0, %v3244
  %v3246 = vpop.f32.mrb[0].mxu0
  %3247 = vmatprep.mubr.f32.mxu0 0.0
  %3248 = vmatmul.mubr.f32.gmra.mrb[0].mxu0 %v2392
  %v3249 = vpop.f32.mrb[0].mxu0
  %v3250 = vadd.f32 0.0, %v3249
  %v3251 = vpop.f32.mrb[0].mxu0
  %3252 = vmatprep.mubr.f32.mxu0 0.0
  %3253 = vmatmul.mubr.f32.gmra.mrb[0].mxu0 %v2395
  %v3254 = vpop.f32.mrb[0].mxu0
  %v3255 = vadd.f32 0.0, %v3254
  %v3256 = vpop.f32.mrb[0].mxu0
  %3257 = vmatprep.mubr.f32.mxu0 0.0
  %3258 = vmatmul.mubr.f32.gmra.mrb[0].mxu0 %v2398
  %v3259 = vpop.f32.mrb[0].mxu0
  %v3260 = vadd.f32 0.0, %v3259
  %v3261 = vpop.f32.mrb[0].mxu0
  %3262 = vmatprep.mubr.f32.mxu0 0.0
  %3263 = vmatmul.mubr.f32.gmra.mrb[0].mxu0 %v2401
  %v3264 = vpop.f32.mrb[0].mxu0
  %v3265 = vadd.f32 0.0, %v3264
  %v3266 = vpop.f32.mrb[0].mxu0
  %3267 = vmatprep.mubr.f32.mxu0 0.0
  %3268 = vmatmul.mubr.f32.gmra.mrb[0].mxu0 %v2404
  %v3269 = vpop.f32.mrb[0].mxu0
  %v3270 = vadd.f32 0.0, %v3269
  %v3271 = vpop.f32.mrb[0].mxu0
  %3272 = vmatprep.mubr.f32.mxu0 0.0
  %3273 = vmatmul.mubr.f32.gmra.mrb[0].mxu0 %v2407
  %v3274 = vpop.f32.mrb[0].mxu0
  %v3275 = vadd.f32 0.0, %v3274
  %v3276 = vpop.f32.mrb[0].mxu0
  %3277 = vmatprep.mubr.f32.mxu0 0.0
  %3278 = vmatmul.mubr.f32.gmra.mrb[0].mxu0 %v2410
  %v3279 = vpop.f32.mrb[0].mxu0
  %v3280 = vadd.f32 0.0, %v3279
  %v3281 = vpop.f32.mrb[0].mxu0
  %3282 = vmatprep.mubr.f32.mxu0 0.0
  %3283 = vmatmul.mubr.f32.gmra.mrb[0].mxu0 %v2413
  %v3284 = vpop.f32.mrb[0].mxu0
  %v3285 = vadd.f32 0.0, %v3284
  %v3286 = vpop.f32.mrb[0].mxu0
  %3287 = vmatprep.mubr.f32.mxu0 0.0
  %3288 = vmatmul.mubr.f32.gmra.mrb[0].mxu0 %v2416
  %v3289 = vpop.f32.mrb[0].mxu0
  %v3290 = vadd.f32 0.0, %v3289
  %v3291 = vpop.f32.mrb[0].mxu0
  %3292 = vmatprep.mubr.f32.mxu0 0.0
  %3293 = vmatmul.mubr.f32.gmra.mrb[0].mxu0 %v2419
  %v3294 = vpop.f32.mrb[0].mxu0
  %v3295 = vadd.f32 0.0, %v3294
  %v3296 = vpop.f32.mrb[0].mxu0
  %3297 = vmatprep.mubr.f32.mxu0 0.0
  %3298 = vmatmul.mubr.f32.gmra.mrb[0].mxu0 %v2422
  %v3299 = vpop.f32.mrb[0].mxu0
  %v3300 = vadd.f32 0.0, %v3299
  %v3301 = vpop.f32.mrb[0].mxu0
  %3302 = vmatprep.mubr.f32.mxu0 0.0
  %3303 = vmatmul.mubr.f32.gmra.mrb[0].mxu0 %v2425
  %v3304 = vpop.f32.mrb[0].mxu0
  %v3305 = vadd.f32 0.0, %v3304
  %v3306 = vpop.f32.mrb[0].mxu0
  %3307 = vmatprep.mubr.f32.mxu0 0.0
  %3308 = vmatmul.mubr.f32.gmra.mrb[0].mxu0 %v2428
  %v3309 = vpop.f32.mrb[0].mxu0
  %v3310 = vadd.f32 0.0, %v3309
  %v3311 = vpop.f32.mrb[0].mxu0
  %3312 = vmatprep.mubr.f32.mxu0 0.0
  %3313 = vmatmul.mubr.f32.gmra.mrb[0].mxu0 %v2431
  %v3314 = vpop.f32.mrb[0].mxu0
  %v3315 = vadd.f32 0.0, %v3314
  %v3316 = vpop.f32.mrb[0].mxu0
  %3317 = vmatprep.mubr.f32.mxu0 0.0
  %3318 = vmatmul.mubr.f32.gmra.mrb[0].mxu0 %v2434
  %v3319 = vpop.f32.mrb[0].mxu0
  %v3320 = vadd.f32 0.0, %v3319
  %v3321 = vpop.f32.mrb[0].mxu0
  %3322 = vmatprep.mubr.f32.mxu0 0.0
  %3323 = vmatmul.mubr.f32.gmra.mrb[0].mxu0 %v2437
  %v3324 = vpop.f32.mrb[0].mxu0
  %v3325 = vadd.f32 0.0, %v3324
  %v3326 = vpop.f32.mrb[0].mxu0
  %3327 = vmatprep.mubr.f32.mxu0 0.0
  %3328 = vmatmul.mubr.f32.gmra.mrb[0].mxu0 %v2440
  %v3329 = vpop.f32.mrb[0].mxu0
  %v3330 = vadd.f32 0.0, %v3329
  %v3331 = vpop.f32.mrb[0].mxu0
  %3332 = vmatprep.mubr.f32.mxu0 0.0
  %3333 = vmatmul.mubr.f32.gmra.mrb[0].mxu0 %v2443
  %v3334 = vpop.f32.mrb[0].mxu0
  %v3335 = vadd.f32 0.0, %v3334
  %v3336 = vpop.f32.mrb[0].mxu0
  %3337 = vmatprep.mubr.f32.mxu0 0.0
  %3338 = vmatmul.mubr.f32.gmra.mrb[0].mxu0 %v2446
  %v3339 = vpop.f32.mrb[0].mxu0
  %v3340 = vadd.f32 0.0, %v3339
  %v3341 = vpop.f32.mrb[0].mxu0
  %3342 = vmatprep.mubr.f32.mxu0 0.0
  %3343 = vmatmul.mubr.f32.gmra.mrb[0].mxu0 %v2449
  %v3344 = vpop.f32.mrb[0].mxu0
  %v3345 = vadd.f32 0.0, %v3344
  %v3346 = vpop.f32.mrb[0].mxu0
  %3347 = vmatprep.mubr.f32.mxu0 0.0
  %3348 = vmatmul.mubr.f32.gmra.mrb[0].mxu0 %v2452
  %v3349 = vpop.f32.mrb[0].mxu0
  %v3350 = vadd.f32 0.0, %v3349
  %v3351 = vpop.f32.mrb[0].mxu0
  %3352 = vmatprep.mubr.f32.mxu0 0.0
  %3353 = vmatmul.mubr.f32.gmra.mrb[0].mxu0 %v2455
  %v3354 = vpop.f32.mrb[0].mxu0
  %v3355 = vadd.f32 0.0, %v3354
  %v3356 = vpop.f32.mrb[0].mxu0
  %3357 = vmatprep.mubr.f32.mxu0 0.0
  %3358 = vmatmul.mubr.f32.gmra.mrb[0].mxu0 %v2458
  %v3359 = vpop.f32.mrb[0].mxu0
  %v3360 = vadd.f32 0.0, %v3359
  %v3361 = vpop.f32.mrb[0].mxu0
  %3362 = vmatprep.mubr.f32.mxu0 0.0
  %3363 = vmatmul.mubr.f32.gmra.mrb[0].mxu0 %v2461
  %v3364 = vpop.f32.mrb[0].mxu0
  %v3365 = vadd.f32 0.0, %v3364
  %v3366 = vpop.f32.mrb[0].mxu0
  %3367 = vmatprep.mubr.f32.mxu0 0.0
  %3368 = vmatmul.mubr.f32.gmra.mrb[0].mxu0 %v2464
  %v3369 = vpop.f32.mrb[0].mxu0
  %v3370 = vadd.f32 0.0, %v3369
  %v3371 = vpop.f32.mrb[0].mxu0
  %3372 = vmatprep.mubr.f32.mxu0 0.0
  %3373 = vmatmul.mubr.f32.gmra.mrb[0].mxu0 %v2467
  %v3374 = vpop.f32.mrb[0].mxu0
  %v3375 = vadd.f32 0.0, %v3374
  %v3376 = vpop.f32.mrb[0].mxu0
  %3377 = vmatprep.mubr.f32.mxu0 0.0
  %3378 = vmatmul.mubr.f32.gmra.mrb[0].mxu0 %v2470
  %v3379 = vpop.f32.mrb[0].mxu0
  %v3380 = vadd.f32 0.0, %v3379
  %v3381 = vpop.f32.mrb[0].mxu0
  %3382 = vmatprep.mubr.f32.mxu0 0.0
  %3383 = vmatmul.mubr.f32.gmra.mrb[0].mxu0 %v2473
  %v3384 = vpop.f32.mrb[0].mxu0
  %v3385 = vadd.f32 0.0, %v3384
  %v3386 = vpop.f32.mrb[0].mxu0
  %3387 = vmatprep.mubr.f32.mxu0 0.0
  %3388 = vmatmul.mubr.f32.gmra.mrb[0].mxu0 %v2476
  %v3389 = vpop.f32.mrb[0].mxu0
  %v3390 = vadd.f32 0.0, %v3389
  %v3391 = vpop.f32.mrb[0].mxu0
  %3392 = vmatprep.mubr.f32.mxu0 0.0
  %3393 = vmatmul.mubr.f32.gmra.mrb[0].mxu0 %v2479
  %v3394 = vpop.f32.mrb[0].mxu0
  %v3395 = vadd.f32 0.0, %v3394
  %v3396 = vpop.f32.mrb[0].mxu0
  %3397 = vmatprep.mubr.f32.mxu0 0.0
  %3398 = vmatmul.mubr.f32.gmra.mrb[0].mxu0 %v2482
  %v3399 = vpop.f32.mrb[0].mxu0
  %v3400 = vadd.f32 0.0, %v3399
  %v3401 = vpop.f32.mrb[0].mxu0
  %3402 = vmatprep.mubr.f32.mxu0 0.0
  %3403 = vmatmul.mubr.f32.gmra.mrb[0].mxu0 %v2485
  %v3404 = vpop.f32.mrb[0].mxu0
  %v3405 = vadd.f32 0.0, %v3404
  %v3406 = vpop.f32.mrb[0].mxu0
  %3407 = vmatprep.mubr.f32.mxu0 0.0
  %3408 = vmatmul.mubr.f32.gmra.mrb[0].mxu0 %v2488
  %v3409 = vpop.f32.mrb[0].mxu0
  %v3410 = vadd.f32 0.0, %v3409
  %v3411 = vpop.f32.mrb[0].mxu0
  %3412 = vmatprep.mubr.f32.mxu0 0.0
  %3413 = vmatmul.mubr.f32.gmra.mrb[0].mxu0 %v2491
  %v3414 = vpop.f32.mrb[0].mxu0
  %v3415 = vadd.f32 0.0, %v3414
  %v3416 = vpop.f32.mrb[0].mxu0
  %3417 = vmatprep.mubr.f32.mxu0 0.0
  %3418 = vmatmul.mubr.f32.gmra.mrb[0].mxu0 %v2494
  %v3419 = vpop.f32.mrb[0].mxu0
  %v3420 = vadd.f32 0.0, %v3419
  %v3421 = vpop.f32.mrb[0].mxu0
  %3422 = vmatprep.mubr.f32.mxu0 0.0
  %3423 = vmatmul.mubr.f32.gmra.mrb[0].mxu0 %v2497
  %v3424 = vpop.f32.mrb[0].mxu0
  %v3425 = vadd.f32 0.0, %v3424
  %v3426 = vpop.f32.mrb[0].mxu0
  %3427 = vmatprep.mubr.f32.mxu0 0.0
  %3428 = vmatmul.mubr.f32.gmra.mrb[0].mxu0 %v2500
  %v3429 = vpop.f32.mrb[0].mxu0
  %v3430 = vadd.f32 0.0, %v3429
  %v3431 = vpop.f32.mrb[0].mxu0
  %3432 = vmatprep.mubr.f32.mxu0 0.0
  %3433 = vmatmul.mubr.f32.gmra.mrb[0].mxu0 %v2503
  %v3434 = vpop.f32.mrb[0].mxu0
  %v3435 = vadd.f32 0.0, %v3434
  %v3436 = vpop.f32.mrb[0].mxu0
  %3437 = vmatprep.mubr.f32.mxu0 0.0
  %3438 = vmatmul.mubr.f32.gmra.mrb[0].mxu0 %v2506
  %v3439 = vpop.f32.mrb[0].mxu0
  %v3440 = vadd.f32 0.0, %v3439
  %v3441 = vpop.f32.mrb[0].mxu0
  %3442 = vmatprep.mubr.f32.mxu0 0.0
  %3443 = vmatmul.mubr.f32.gmra.mrb[0].mxu0 %v2509
  %v3444 = vpop.f32.mrb[0].mxu0
  %v3445 = vadd.f32 0.0, %v3444
  %v3446 = vpop.f32.mrb[0].mxu0
  %3447 = vmatprep.mubr.f32.mxu0 0.0
  %3448 = vmatmul.mubr.f32.gmra.mrb[0].mxu0 %v2512
  %v3449 = vpop.f32.mrb[0].mxu0
  %v3450 = vadd.f32 0.0, %v3449
  %v3451 = vpop.f32.mrb[0].mxu0
  %3452 = vmatprep.mubr.f32.mxu0 0.0
  %3453 = vmatmul.mubr.f32.gmra.mrb[0].mxu0 %v2515
  %v3454 = vpop.f32.mrb[0].mxu0
  %v3455 = vadd.f32 0.0, %v3454
  %v3456 = vpop.f32.mrb[0].mxu0
  %3457 = vmatprep.mubr.f32.mxu0 0.0
  %3458 = vmatmul.mubr.f32.gmra.mrb[0].mxu0 %v2518
  %v3459 = vpop.f32.mrb[0].mxu0
  %v3460 = vadd.f32 0.0, %v3459
  %v3461 = vpop.f32.mrb[0].mxu0
  %3462 = vmatprep.mubr.f32.mxu0 0.0
  %3463 = vmatmul.mubr.f32.gmra.mrb[0].mxu0 %v2521
  %v3464 = vpop.f32.mrb[0].mxu0
  %v3465 = vadd.f32 0.0, %v3464
  %v3466 = vpop.f32.mrb[0].mxu0
  %3467 = vmatprep.mubr.f32.mxu0 0.0
  %3468 = vmatmul.mubr.f32.gmra.mrb[0].mxu0 %v2524
  %v3469 = vpop.f32.mrb[0].mxu0
  %v3470 = vadd.f32 0.0, %v3469
  %v3471 = vpop.f32.mrb[0].mxu0
  %3472 = vmatprep.mubr.f32.mxu0 0.0
  %3473 = vmatmul.mubr.f32.gmra.mrb[0].mxu0 %v2527
  %v3474 = vpop.f32.mrb[0].mxu0
  %v3475 = vadd.f32 0.0, %v3474
  %v3476 = vpop.f32.mrb[0].mxu0
  %3477 = vmatprep.mubr.f32.mxu0 0.0
  %3478 = vmatmul.mubr.f32.gmra.mrb[0].mxu0 %v2530
  %v3479 = vpop.f32.mrb[0].mxu0
  %v3480 = vadd.f32 0.0, %v3479
  %v3481 = vpop.f32.mrb[0].mxu0
  %3482 = vmatprep.mubr.f32.mxu0 0.0
  %3483 = vmatmul.mubr.f32.gmra.mrb[0].mxu0 %v2533
  %v3484 = vpop.f32.mrb[0].mxu0
  %v3485 = vadd.f32 0.0, %v3484
  %v3486 = vpop.f32.mrb[0].mxu0
  %3487 = vmatprep.mubr.f32.mxu0 0.0
  %3488 = vmatmul.mubr.f32.gmra.mrb[0].mxu0 %v2536
  %v3489 = vpop.f32.mrb[0].mxu0
  %v3490 = vadd.f32 0.0, %v3489
  %v3491 = vpop.f32.mrb[0].mxu0
  %3492 = vmatprep.mubr.f32.mxu0 0.0
  %3493 = vmatmul.mubr.f32.gmra.mrb[0].mxu0 %v2539
  %v3494 = vpop.f32.mrb[0].mxu0
  %v3495 = vadd.f32 0.0, %v3494
  %v3496 = vpop.f32.mrb[0].mxu0
  %3497 = vmatprep.mubr.f32.mxu0 0.0
  %3498 = vmatmul.mubr.f32.gmra.mrb[0].mxu0 %v2542
  %v3499 = vpop.f32.mrb[0].mxu0
  %v3500 = vadd.f32 0.0, %v3499
  %v3501 = vpop.f32.mrb[0].mxu0
  %3502 = vmatprep.mubr.f32.mxu0 0.0
  %3503 = vmatmul.mubr.f32.gmra.mrb[0].mxu0 %v2545
  %v3504 = vpop.f32.mrb[0].mxu0
  %v3505 = vadd.f32 0.0, %v3504
  %v3506 = vpop.f32.mrb[0].mxu0
  %3507 = vmatprep.mubr.f32.mxu0 0.0
  %3508 = vmatmul.mubr.f32.gmra.mrb[0].mxu0 %v2548
  %v3509 = vpop.f32.mrb[0].mxu0
  %v3510 = vadd.f32 0.0, %v3509
  %v3511 = vpop.f32.mrb[0].mxu0
  %3512 = vmatprep.mubr.f32.mxu0 0.0
  %3513 = vmatmul.mubr.f32.gmra.mrb[0].mxu0 %v2551
  %v3514 = vpop.f32.mrb[0].mxu0
  %v3515 = vadd.f32 0.0, %v3514
  %v3516 = vpop.f32.mrb[0].mxu0
  %3517 = vmatprep.mubr.f32.mxu0 0.0
  %3518 = vmatmul.mubr.f32.gmra.mrb[0].mxu0 %v2554
  %v3519 = vpop.f32.mrb[0].mxu0
  %v3520 = vadd.f32 0.0, %v3519
  %v3521 = vpop.f32.mrb[0].mxu0
  %3522 = vmatprep.mubr.f32.mxu0 0.0
  %3523 = vmatmul.mubr.f32.gmra.mrb[0].mxu0 %v2557
  %v3524 = vpop.f32.mrb[0].mxu0
  %v3525 = vadd.f32 0.0, %v3524
  %v3526 = vpop.f32.mrb[0].mxu0
  %3527 = vmatprep.mubr.f32.mxu0 0.0
  %3528 = vmatmul.mubr.f32.gmra.mrb[0].mxu0 %v2560
  %v3529 = vpop.f32.mrb[0].mxu0
  %v3530 = vadd.f32 0.0, %v3529
  %v3531 = vpop.f32.mrb[0].mxu0
  %3532 = vmatprep.mubr.f32.mxu0 0.0
  %3533 = vmatmul.mubr.f32.gmra.mrb[0].mxu0 %v2563
  %v3534 = vpop.f32.mrb[0].mxu0
  %v3535 = vadd.f32 0.0, %v3534
  %v3536 = vpop.f32.mrb[0].mxu0
  %3537 = vmatprep.mubr.f32.mxu0 0.0
  %3538 = vmatmul.mubr.f32.gmra.mrb[0].mxu0 %v2566
  %v3539 = vpop.f32.mrb[0].mxu0
  %v3540 = vadd.f32 0.0, %v3539
  %v3541 = vpop.f32.mrb[0].mxu0
  %3542 = vmatprep.mubr.f32.mxu0 0.0
  %3543 = vmatmul.mubr.f32.gmra.mrb[0].mxu0 %v2569
  %v3544 = vpop.f32.mrb[0].mxu0
  %v3545 = vadd.f32 0.0, %v3544
  %v3546 = vpop.f32.mrb[0].mxu0
  %3547 = vmatprep.mubr.f32.mxu0 0.0
  %3548 = vmatmul.mubr.f32.gmra.mrb[0].mxu0 %v2572
  %v3549 = vpop.f32.mrb[0].mxu0
  %v3550 = vadd.f32 0.0, %v3549
  %v3551 = vpop.f32.mrb[0].mxu0
  %3552 = vmatprep.mubr.f32.mxu0 0.0
  %3553 = vmatmul.mubr.f32.gmra.mrb[0].mxu0 %v2575
  %v3554 = vpop.f32.mrb[0].mxu0
  %v3555 = vadd.f32 0.0, %v3554
  %v3556 = vpop.f32.mrb[0].mxu0
  %3557 = vmatprep.mubr.f32.mxu0 0.0
  %3558 = vmatmul.mubr.f32.gmra.mrb[0].mxu0 %v2578
  %v3559 = vpop.f32.mrb[0].mxu0
  %v3560 = vadd.f32 0.0, %v3559
  %v3561 = vpop.f32.mrb[0].mxu0
  %3562 = vmatprep.mubr.f32.mxu0 0.0
  %3563 = vmatmul.mubr.f32.gmra.mrb[0].mxu0 %v2581
  %v3564 = vpop.f32.mrb[0].mxu0
  %v3565 = vadd.f32 0.0, %v3564
  %v3566 = vpop.f32.mrb[0].mxu0
  %3567 = vmatprep.mubr.f32.mxu0 0.0
  %3568 = vmatmul.mubr.f32.gmra.mrb[0].mxu0 %v2584
  %v3569 = vpop.f32.mrb[0].mxu0
  %v3570 = vadd.f32 0.0, %v3569
  %v3571 = vpop.f32.mrb[0].mxu0
  %3572 = vmatprep.mubr.f32.mxu0 0.0
  %3573 = vmatmul.mubr.f32.gmra.mrb[0].mxu0 %v2587
  %v3574 = vpop.f32.mrb[0].mxu0
  %v3575 = vadd.f32 0.0, %v3574
  %v3576 = vpop.f32.mrb[0].mxu0
  %3577 = vmatprep.mubr.f32.mxu0 0.0
  %3578 = vmatmul.mubr.f32.gmra.mrb[0].mxu0 %v2590
  %v3579 = vpop.f32.mrb[0].mxu0
  %v3580 = vadd.f32 0.0, %v3579
  %v3581 = vpop.f32.mrb[0].mxu0
  %3582 = vmatprep.mubr.f32.mxu0 0.0
  %3583 = vmatmul.mubr.f32.gmra.mrb[0].mxu0 %v2593
  %v3584 = vpop.f32.mrb[0].mxu0
  %v3585 = vadd.f32 0.0, %v3584
  %v3586 = vpop.f32.mrb[0].mxu0
  %3587 = vmatprep.mubr.f32.mxu0 0.0
  %3588 = vmatmul.mubr.f32.gmra.mrb[0].mxu0 %v2596
  %v3589 = vpop.f32.mrb[0].mxu0
  %v3590 = vadd.f32 0.0, %v3589
  %v3591 = vpop.f32.mrb[0].mxu0
  %3592 = vmatprep.mubr.f32.mxu0 0.0
  %3593 = vmatmul.mubr.f32.gmra.mrb[0].mxu0 %v2599
  %v3594 = vpop.f32.mrb[0].mxu0
  %v3595 = vadd.f32 0.0, %v3594
  %v3596 = vpop.f32.mrb[0].mxu0
  %3597 = vmatprep.mubr.f32.mxu0 0.0
  %3598 = vmatmul.mubr.f32.gmra.mrb[0].mxu0 %v2602
  %v3599 = vpop.f32.mrb[0].mxu0
  %v3600 = vadd.f32 0.0, %v3599
  %v3601 = vpop.f32.mrb[0].mxu0
  %3602 = vmatprep.mubr.f32.mxu0 0.0
  %3603 = vmatmul.mubr.f32.gmra.mrb[0].mxu0 %v2605
  %v3604 = vpop.f32.mrb[0].mxu0
  %v3605 = vadd.f32 0.0, %v3604
  %v3606 = vpop.f32.mrb[0].mxu0
  %3607 = vmatprep.mubr.f32.mxu0 0.0
  %3608 = vmatmul.mubr.f32.gmra.mrb[0].mxu0 %v2608
  %v3609 = vpop.f32.mrb[0].mxu0
  %v3610 = vadd.f32 0.0, %v3609
  %v3611 = vpop.f32.mrb[0].mxu0
  %3612 = vmatprep.mubr.f32.mxu0 0.0
  %3613 = vmatmul.mubr.f32.gmra.mrb[0].mxu0 %v2611
  %v3614 = vpop.f32.mrb[0].mxu0
  %v3615 = vadd.f32 0.0, %v3614
  %v3616 = vpop.f32.mrb[0].mxu0
  %3617 = vmatprep.mubr.f32.mxu0 0.0
  %3618 = vmatmul.mubr.f32.gmra.mrb[0].mxu0 %v2614
  %v3619 = vpop.f32.mrb[0].mxu0
  %v3620 = vadd.f32 0.0, %v3619
  %v3621 = vpop.f32.mrb[0].mxu0
  %3622 = vmatprep.mubr.f32.mxu0 0.0
  %3623 = vmatmul.mubr.f32.gmra.mrb[0].mxu0 %v2617
  %v3624 = vpop.f32.mrb[0].mxu0
  %v3625 = vadd.f32 0.0, %v3624
  %v3626 = vpop.f32.mrb[0].mxu0
  %3627 = vmatprep.mubr.f32.mxu0 0.0
  %3628 = vmatmul.mubr.f32.gmra.mrb[0].mxu0 %v2620
  %v3629 = vpop.f32.mrb[0].mxu0
  %v3630 = vadd.f32 0.0, %v3629
  %v3631 = vpop.f32.mrb[0].mxu0
  %3632 = vmatprep.mubr.f32.mxu0 0.0
  %3633 = vmatmul.mubr.f32.gmra.mrb[0].mxu0 %v2623
  %v3634 = vpop.f32.mrb[0].mxu0
  %v3635 = vadd.f32 0.0, %v3634
  %v3636 = vpop.f32.mrb[0].mxu0
  %3637 = vmatprep.mubr.f32.mxu0 0.0
  %3638 = vmatmul.mubr.f32.gmra.mrb[0].mxu0 %v2626
  %v3639 = vpop.f32.mrb[0].mxu0
  %v3640 = vadd.f32 0.0, %v3639
  %v3641 = vpop.f32.mrb[0].mxu0
  %3642 = vmatprep.mubr.f32.mxu0 0.0
  %3643 = vmatmul.mubr.f32.gmra.mrb[0].mxu0 %v2629
  %v3644 = vpop.f32.mrb[0].mxu0
  %v3645 = vadd.f32 0.0, %v3644
  %v3646 = vpop.f32.mrb[0].mxu0
  %3647 = vmatprep.mubr.f32.mxu0 0.0
  %3648 = vmatmul.mubr.f32.gmra.mrb[0].mxu0 %v2632
  %v3649 = vpop.f32.mrb[0].mxu0
  %v3650 = vadd.f32 0.0, %v3649
  %v3651 = vpop.f32.mrb[0].mxu0
  %3652 = vmatprep.mubr.f32.mxu0 0.0
  %3653 = vmatmul.mubr.f32.gmra.mrb[0].mxu0 %v2635
  %v3654 = vpop.f32.mrb[0].mxu0
  %v3655 = vadd.f32 0.0, %v3654
  %v3656 = vpop.f32.mrb[0].mxu0
  %3657 = vmatprep.mubr.f32.mxu0 0.0
  %3658 = vmatmul.mubr.f32.gmra.mrb[0].mxu0 %v2638
  %v3659 = vpop.f32.mrb[0].mxu0
  %v3660 = vadd.f32 0.0, %v3659
  %v3661 = vpop.f32.mrb[0].mxu0
  %3662 = vmatprep.mubr.f32.mxu0 0.0
  %3663 = vmatmul.mubr.f32.gmra.mrb[0].mxu0 %v2641
  %v3664 = vpop.f32.mrb[0].mxu0
  %v3665 = vadd.f32 0.0, %v3664
  %v3666 = vpop.f32.mrb[0].mxu0
  %3667 = vmatprep.mubr.f32.mxu0 0.0
  %3668 = vmatmul.mubr.f32.gmra.mrb[0].mxu0 %v2644
  %v3669 = vpop.f32.mrb[0].mxu0
  %v3670 = vadd.f32 0.0, %v3669
  %v3671 = vpop.f32.mrb[0].mxu0
  %3672 = vmatprep.mubr.f32.mxu0 0.0
  %3673 = vmatmul.mubr.f32.gmra.mrb[0].mxu0 %v2647
  %v3674 = vpop.f32.mrb[0].mxu0
  %v3675 = vadd.f32 0.0, %v3674
  %v3676 = vpop.f32.mrb[0].mxu0
  %3677 = vmatprep.mubr.f32.mxu0 0.0
  %3678 = vmatmul.mubr.f32.gmra.mrb[0].mxu0 %v2650
  %v3679 = vpop.f32.mrb[0].mxu0
  %v3680 = vadd.f32 0.0, %v3679
  %v3681 = vpop.f32.mrb[0].mxu0
  %3682 = vmatprep.mubr.f32.mxu0 0.0
  %3683 = vmatmul.mubr.f32.gmra.mrb[0].mxu0 %v2653
  %v3684 = vpop.f32.mrb[0].mxu0
  %v3685 = vadd.f32 0.0, %v3684
  %v3686 = vpop.f32.mrb[0].mxu0
  %3687 = vmatprep.mubr.f32.mxu0 0.0
  %3688 = vmatmul.mubr.f32.gmra.mrb[0].mxu0 %v2656
  %v3689 = vpop.f32.mrb[0].mxu0
  %v3690 = vadd.f32 0.0, %v3689
  %v3691 = vpop.f32.mrb[0].mxu0
  %3692 = vmatprep.mubr.f32.mxu0 0.0
  %3693 = vmatmul.mubr.f32.gmra.mrb[0].mxu0 %v2659
  %v3694 = vpop.f32.mrb[0].mxu0
  %v3695 = vadd.f32 0.0, %v3694
  %v3696 = vpop.f32.mrb[0].mxu0
  %3697 = vmatprep.mubr.f32.mxu0 0.0
  %3698 = vmatmul.mubr.f32.gmra.mrb[0].mxu0 %v2662
  %v3699 = vpop.f32.mrb[0].mxu0
  %v3700 = vadd.f32 0.0, %v3699
  %v3701 = vpop.f32.mrb[0].mxu0
  %3702 = vmatprep.mubr.f32.mxu0 0.0
  %3703 = vmatmul.mubr.f32.gmra.mrb[0].mxu0 %v2665
  %v3704 = vpop.f32.mrb[0].mxu0
  %v3705 = vadd.f32 0.0, %v3704
  %v3706 = vpop.f32.mrb[0].mxu0
  %3707 = vmatprep.mubr.f32.mxu0 0.0
  %3708 = vmatmul.mubr.f32.gmra.mrb[0].mxu0 %v2668
  %v3709 = vpop.f32.mrb[0].mxu0
  %v3710 = vadd.f32 0.0, %v3709
  %v3711 = vpop.f32.mrb[0].mxu0
  %3712 = vmatprep.mubr.f32.mxu0 0.0
  %3713 = vmatmul.mubr.f32.gmra.mrb[0].mxu0 %v2671
  %v3714 = vpop.f32.mrb[0].mxu0
  %v3715 = vadd.f32 0.0, %v3714
  %v3716 = vpop.f32.mrb[0].mxu0
  %3717 = vmatprep.mubr.f32.mxu0 0.0
  %3718 = vmatmul.mubr.f32.gmra.mrb[0].mxu0 %v2674
  %v3719 = vpop.f32.mrb[0].mxu0
  %v3720 = vadd.f32 0.0, %v3719
  %v3721 = vpop.f32.mrb[0].mxu0
  %3722 = vmatprep.mubr.f32.mxu0 0.0
  %3723 = vmatmul.mubr.f32.gmra.mrb[0].mxu0 %v2677
  %v3724 = vpop.f32.mrb[0].mxu0
  %v3725 = vadd.f32 0.0, %v3724
  %v3726 = vpop.f32.mrb[0].mxu0
  %3727 = vmatprep.mubr.f32.mxu0 0.0
  %3728 = vmatmul.mubr.f32.gmra.mrb[0].mxu0 %v2680
  %v3729 = vpop.f32.mrb[0].mxu0
  %v3730 = vadd.f32 0.0, %v3729
  %v3731 = vpop.f32.mrb[0].mxu0
  %3732 = vmatprep.mubr.f32.mxu0 0.0
  %3733 = vmatmul.mubr.f32.gmra.mrb[0].mxu0 %v2683
  %v3734 = vpop.f32.mrb[0].mxu0
  %v3735 = vadd.f32 0.0, %v3734
  %v3736 = vpop.f32.mrb[0].mxu0
  %3737 = vmatprep.mubr.f32.mxu0 0.0
  %3738 = vmatmul.mubr.f32.gmra.mrb[0].mxu0 %v2686
  %v3739 = vpop.f32.mrb[0].mxu0
  %v3740 = vadd.f32 0.0, %v3739
  %v3741 = vpop.f32.mrb[0].mxu0
  %3742 = vmatprep.mubr.f32.mxu0 0.0
  %3743 = vmatmul.mubr.f32.gmra.mrb[0].mxu0 %v2689
  %v3744 = vpop.f32.mrb[0].mxu0
  %v3745 = vadd.f32 0.0, %v3744
  %v3746 = vpop.f32.mrb[0].mxu0
  %3747 = vmatprep.mubr.f32.mxu0 0.0
  %3748 = vmatmul.mubr.f32.gmra.mrb[0].mxu0 %v2692
  %v3749 = vpop.f32.mrb[0].mxu0
  %v3750 = vadd.f32 0.0, %v3749
  %v3751 = vpop.f32.mrb[0].mxu0
  %3752 = vmatprep.mubr.f32.mxu0 0.0
  %3753 = vmatmul.mubr.f32.gmra.mrb[0].mxu0 %v2695
  %v3754 = vpop.f32.mrb[0].mxu0
  %v3755 = vadd.f32 0.0, %v3754
  %v3756 = vpop.f32.mrb[0].mxu0
  %3757 = vmatprep.mubr.f32.mxu0 0.0
  %3758 = vmatmul.mubr.f32.gmra.mrb[0].mxu0 %v2698
  %v3759 = vpop.f32.mrb[0].mxu0
  %v3760 = vadd.f32 0.0, %v3759
  %v3761 = vpop.f32.mrb[0].mxu0
  %3762 = vmatprep.mubr.f32.mxu0 0.0
  %3763 = vmatmul.mubr.f32.gmra.mrb[0].mxu0 %v2701
  %v3764 = vpop.f32.mrb[0].mxu0
  %v3765 = vadd.f32 0.0, %v3764
  %v3766 = vpop.f32.mrb[0].mxu0
  %3767 = vmatprep.mubr.f32.mxu0 0.0
  %3768 = vmatmul.mubr.f32.gmra.mrb[0].mxu0 %v2704
  %v3769 = vpop.f32.mrb[0].mxu0
  %v3770 = vadd.f32 0.0, %v3769
  %v3771 = vpop.f32.mrb[0].mxu0
  %3772 = vmatprep.mubr.f32.mxu0 0.0
  %3773 = vmatmul.mubr.f32.gmra.mrb[0].mxu0 %v2707
  %v3774 = vpop.f32.mrb[0].mxu0
  %v3775 = vadd.f32 0.0, %v3774
  %v3776 = vpop.f32.mrb[0].mxu0
  %3777 = vmatprep.mubr.f32.mxu0 0.0
  %3778 = vmatmul.mubr.f32.gmra.mrb[0].mxu0 %v2710
  %v3779 = vpop.f32.mrb[0].mxu0
  %v3780 = vadd.f32 0.0, %v3779
  %v3781 = vpop.f32.mrb[0].mxu0
  %3782 = vmatprep.mubr.f32.mxu0 0.0
  %3783 = vmatmul.mubr.f32.gmra.mrb[0].mxu0 %v2713
  %v3784 = vpop.f32.mrb[0].mxu0
  %v3785 = vadd.f32 0.0, %v3784
  %v3786 = vpop.f32.mrb[0].mxu0
  %3787 = vmatprep.mubr.f32.mxu0 0.0
  %3788 = vmatmul.mubr.f32.gmra.mrb[0].mxu0 %v2716
  %v3789 = vpop.f32.mrb[0].mxu0
  %v3790 = vadd.f32 0.0, %v3789
  %v3791 = vpop.f32.mrb[0].mxu0
  %3792 = vmatprep.mubr.f32.mxu0 0.0
  %3793 = vmatmul.mubr.f32.gmra.mrb[0].mxu0 %v2719
  %v3794 = vpop.f32.mrb[0].mxu0
  %v3795 = vadd.f32 0.0, %v3794
  %v3796 = vpop.f32.mrb[0].mxu0
  %3797 = vmatprep.mubr.f32.mxu0 0.0
  %3798 = vmatmul.mubr.f32.gmra.mrb[0].mxu0 %v2722
  %v3799 = vpop.f32.mrb[0].mxu0
  %v3800 = vadd.f32 0.0, %v3799
  %v3801 = vpop.f32.mrb[0].mxu0
  %3802 = vmatprep.mubr.f32.mxu0 0.0
  %3803 = vmatmul.mubr.f32.gmra.mrb[0].mxu0 %v2725
  %v3804 = vpop.f32.mrb[0].mxu0
  %v3805 = vadd.f32 0.0, %v3804
  %v3806 = vpop.f32.mrb[0].mxu0
  %3807 = vmatprep.mubr.f32.mxu0 0.0
  %3808 = vmatmul.mubr.f32.gmra.mrb[0].mxu0 %v2728
  %v3809 = vpop.f32.mrb[0].mxu0
  %v3810 = vadd.f32 0.0, %v3809
  %v3811 = vpop.f32.mrb[0].mxu0
  %3812 = vmatprep.mubr.f32.mxu0 0.0
  %3813 = vmatmul.mubr.f32.gmra.mrb[0].mxu0 %v2731
  %v3814 = vpop.f32.mrb[0].mxu0
  %v3815 = vadd.f32 0.0, %v3814
  %v3816 = vpop.f32.mrb[0].mxu0
  %3817 = vdwg.mxu0
  %v3818 = vmul.f32 %v899, 0.020408163
  %v3819 = vmul.f32 %v904, 0.020408163
  %v3820 = vmul.f32 %v909, 0.020408163
  %v3821 = vmul.f32 %v914, 0.020408163
  %v3822 = vmul.f32 %v919, 0.020408163
  %v3823 = vmul.f32 %v924, 0.020408163
  %v3824 = vmul.f32 %v929, 0.020408163
  %v3825 = vmul.f32 %v934, 0.020408163
  %v3826 = vmul.f32 %v939, 0.020408163
  %v3827 = vmul.f32 %v944, 0.020408163
  %v3828 = vmul.f32 %v949, 0.020408163
  %v3829 = vmul.f32 %v954, 0.020408163
  %v3830 = vmul.f32 %v959, 0.020408163
  %v3831 = vmul.f32 %v964, 0.020408163
  %v3832 = vmul.f32 %v969, 0.020408163
  %v3833 = vmul.f32 %v974, 0.020408163
  %v3834 = vmul.f32 %v979, 0.020408163
  %v3835 = vmul.f32 %v984, 0.020408163
  %v3836 = vmul.f32 %v989, 0.020408163
  %v3837 = vmul.f32 %v994, 0.020408163
  %v3838 = vmul.f32 %v999, 0.020408163
  %v3839 = vmul.f32 %v1004, 0.020408163
  %v3840 = vmul.f32 %v1009, 0.020408163
  %v3841 = vmul.f32 %v1014, 0.020408163
  %v3842 = vmul.f32 %v1019, 0.020408163
  %v3843 = vmul.f32 %v1024, 0.020408163
  %v3844 = vmul.f32 %v1029, 0.020408163
  %v3845 = vmul.f32 %v1034, 0.020408163
  %v3846 = vmul.f32 %v1039, 0.020408163
  %v3847 = vmul.f32 %v1044, 0.020408163
  %v3848 = vmul.f32 %v1049, 0.020408163
  %v3849 = vmul.f32 %v1054, 0.020408163
  %v3850 = vmul.f32 %v1059, 0.020408163
  %v3851 = vmul.f32 %v1064, 0.020408163
  %v3852 = vmul.f32 %v1069, 0.020408163
  %v3853 = vmul.f32 %v1074, 0.020408163
  %v3854 = vmul.f32 %v1079, 0.020408163
  %v3855 = vmul.f32 %v1084, 0.020408163
  %v3856 = vmul.f32 %v1089, 0.020408163
  %v3857 = vmul.f32 %v1094, 0.020408163
  %v3858 = vmul.f32 %v1099, 0.020408163
  %v3859 = vmul.f32 %v1104, 0.020408163
  %v3860 = vmul.f32 %v1109, 0.020408163
  %v3861 = vmul.f32 %v1114, 0.020408163
  %v3862 = vmul.f32 %v1119, 0.020408163
  %v3863 = vmul.f32 %v1124, 0.020408163
  %v3864 = vmul.f32 %v1129, 0.020408163
  %v3865 = vmul.f32 %v1134, 0.020408163
  %v3866 = vmul.f32 %v1139, 0.020408163
  %v3867 = vmul.f32 %v1144, 0.020408163
  %v3868 = vmul.f32 %v1149, 0.020408163
  %v3869 = vmul.f32 %v1154, 0.020408163
  %v3870 = vmul.f32 %v1159, 0.020408163
  %v3871 = vmul.f32 %v1164, 0.020408163
  %v3872 = vmul.f32 %v1169, 0.020408163
  %v3873 = vmul.f32 %v1174, 0.020408163
  %v3874 = vmul.f32 %v1179, 0.020408163
  %v3875 = vmul.f32 %v1184, 0.020408163
  %v3876 = vmul.f32 %v1189, 0.020408163
  %v3877 = vmul.f32 %v1194, 0.020408163
  %v3878 = vmul.f32 %v1199, 0.020408163
  %v3879 = vmul.f32 %v1204, 0.020408163
  %v3880 = vmul.f32 %v1209, 0.020408163
  %v3881 = vmul.f32 %v1214, 0.020408163
  %v3882 = vmul.f32 %v1219, 0.020408163
  %v3883 = vmul.f32 %v1224, 0.020408163
  %v3884 = vmul.f32 %v1229, 0.020408163
  %v3885 = vmul.f32 %v1234, 0.020408163
  %v3886 = vmul.f32 %v1239, 0.020408163
  %v3887 = vmul.f32 %v1244, 0.020408163
  %v3888 = vmul.f32 %v1249, 0.020408163
  %v3889 = vmul.f32 %v1254, 0.020408163
  %v3890 = vmul.f32 %v1259, 0.020408163
  %v3891 = vmul.f32 %v1264, 0.020408163
  %v3892 = vmul.f32 %v1269, 0.020408163
  %v3893 = vmul.f32 %v1274, 0.020408163
  %v3894 = vmul.f32 %v1279, 0.020408163
  %v3895 = vmul.f32 %v1284, 0.020408163
  %v3896 = vmul.f32 %v1289, 0.020408163
  %v3897 = vmul.f32 %v1294, 0.020408163
  %v3898 = vmul.f32 %v1299, 0.020408163
  %v3899 = vmul.f32 %v1304, 0.020408163
  %v3900 = vmul.f32 %v1309, 0.020408163
  %v3901 = vmul.f32 %v1314, 0.020408163
  %v3902 = vmul.f32 %v1319, 0.020408163
  %v3903 = vmul.f32 %v1324, 0.020408163
  %v3904 = vmul.f32 %v1329, 0.020408163
  %v3905 = vmul.f32 %v1334, 0.020408163
  %v3906 = vmul.f32 %v1339, 0.020408163
  %v3907 = vmul.f32 %v1344, 0.020408163
  %v3908 = vmul.f32 %v1349, 0.020408163
  %v3909 = vmul.f32 %v1354, 0.020408163
  %v3910 = vmul.f32 %v1359, 0.020408163
  %v3911 = vmul.f32 %v1364, 0.020408163
  %v3912 = vmul.f32 %v1369, 0.020408163
  %v3913 = vmul.f32 %v1374, 0.020408163
  %v3914 = vmul.f32 %v1379, 0.020408163
  %v3915 = vmul.f32 %v1384, 0.020408163
  %v3916 = vmul.f32 %v1389, 0.020408163
  %v3917 = vmul.f32 %v1394, 0.020408163
  %v3918 = vmul.f32 %v1399, 0.020408163
  %v3919 = vmul.f32 %v1404, 0.020408163
  %v3920 = vmul.f32 %v1409, 0.020408163
  %v3921 = vmul.f32 %v1414, 0.020408163
  %v3922 = vmul.f32 %v1419, 0.020408163
  %v3923 = vmul.f32 %v1424, 0.020408163
  %v3924 = vmul.f32 %v1429, 0.020408163
  %v3925 = vmul.f32 %v1434, 0.020408163
  %v3926 = vmul.f32 %v1439, 0.020408163
  %v3927 = vmul.f32 %v1444, 0.020408163
  %v3928 = vmul.f32 %v1449, 0.020408163
  %v3929 = vmul.f32 %v1454, 0.020408163
  %v3930 = vmul.f32 %v1459, 0.020408163
  %v3931 = vmul.f32 %v1464, 0.020408163
  %v3932 = vmul.f32 %v1469, 0.020408163
  %v3933 = vmul.f32 %v1474, 0.020408163
  %v3934 = vmul.f32 %v1479, 0.020408163
  %v3935 = vmul.f32 %v1484, 0.020408163
  %v3936 = vmul.f32 %v1489, 0.020408163
  %v3937 = vmul.f32 %v1494, 0.020408163
  %v3938 = vmul.f32 %v1499, 0.020408163
  %v3939 = vmul.f32 %v1504, 0.020408163
  %v3940 = vmul.f32 %v1509, 0.020408163
  %v3941 = vmul.f32 %v1514, 0.020408163
  %v3942 = vmul.f32 %v1519, 0.020408163
  %v3943 = vmul.f32 %v1524, 0.020408163
  %v3944 = vmul.f32 %v1529, 0.020408163
  %v3945 = vmul.f32 %v1534, 0.020408163
  %v3946 = vmul.f32 %v1539, 0.020408163
  %v3947 = vmul.f32 %v1544, 0.020408163
  %v3948 = vmul.f32 %v1549, 0.020408163
  %v3949 = vmul.f32 %v1554, 0.020408163
  %v3950 = vmul.f32 %v1559, 0.020408163
  %v3951 = vmul.f32 %v1564, 0.020408163
  %v3952 = vmul.f32 %v1569, 0.020408163
  %v3953 = vmul.f32 %v1574, 0.020408163
  %v3954 = vmul.f32 %v1579, 0.020408163
  %v3955 = vmul.f32 %v1584, 0.020408163
  %v3956 = vmul.f32 %v1589, 0.020408163
  %v3957 = vmul.f32 %v1594, 0.020408163
  %v3958 = vmul.f32 %v1599, 0.020408163
  %v3959 = vmul.f32 %v1604, 0.020408163
  %v3960 = vmul.f32 %v1609, 0.020408163
  %v3961 = vmul.f32 %v1614, 0.020408163
  %v3962 = vmul.f32 %v1619, 0.020408163
  %v3963 = vmul.f32 %v1624, 0.020408163
  %v3964 = vmul.f32 %v1629, 0.020408163
  %v3965 = vmul.f32 %v1634, 0.020408163
  %v3966 = vmul.f32 %v1639, 0.020408163
  %v3967 = vmul.f32 %v1644, 0.020408163
  %v3968 = vmul.f32 %v1649, 0.020408163
  %v3969 = vmul.f32 %v1654, 0.020408163
  %v3970 = vmul.f32 %v1659, 0.020408163
  %v3971 = vmul.f32 %v1664, 0.020408163
  %v3972 = vmul.f32 %v1669, 0.020408163
  %v3973 = vmul.f32 %v1674, 0.020408163
  %v3974 = vmul.f32 %v1679, 0.020408163
  %v3975 = vmul.f32 %v1684, 0.020408163
  %v3976 = vmul.f32 %v1689, 0.020408163
  %v3977 = vmul.f32 %v1694, 0.020408163
  %v3978 = vmul.f32 %v1699, 0.020408163
  %v3979 = vmul.f32 %v1704, 0.020408163
  %v3980 = vmul.f32 %v1709, 0.020408163
  %v3981 = vmul.f32 %v1714, 0.020408163
  %v3982 = vmul.f32 %v1719, 0.020408163
  %v3983 = vmul.f32 %v1724, 0.020408163
  %v3984 = vmul.f32 %v1729, 0.020408163
  %v3985 = vmul.f32 %v1734, 0.020408163
  %v3986 = vmul.f32 %v1739, 0.020408163
  %v3987 = vmul.f32 %v1744, 0.020408163
  %v3988 = vmul.f32 %v1749, 0.020408163
  %v3989 = vmul.f32 %v1754, 0.020408163
  %v3990 = vmul.f32 %v1759, 0.020408163
  %v3991 = vmul.f32 %v1764, 0.020408163
  %v3992 = vmul.f32 %v1769, 0.020408163
  %v3993 = vmul.f32 %v1774, 0.020408163
  %v3994 = vmul.f32 %v1779, 0.020408163
  %v3995 = vmul.f32 %v1784, 0.020408163
  %v3996 = vmul.f32 %v1789, 0.020408163
  %v3997 = vmul.f32 %v1794, 0.020408163
  %v3998 = vmul.f32 %v1799, 0.020408163
  %v3999 = vmul.f32 %v1804, 0.020408163
  %v4000 = vmul.f32 %v1809, 0.020408163
  %v4001 = vmul.f32 %v1814, 0.020408163
  %v4002 = vmul.f32 %v1819, 0.020408163
  %v4003 = vmul.f32 %v1824, 0.020408163
  %v4004 = vmul.f32 %v1829, 0.020408163
  %v4005 = vmul.f32 %v1834, 0.020408163
  %v4006 = vmul.f32 %v1839, 0.020408163
  %v4007 = vmul.f32 %v1844, 0.020408163
  %v4008 = vmul.f32 %v1849, 0.020408163
  %v4009 = vmul.f32 %v1854, 0.020408163
  %v4010 = vmul.f32 %v1859, 0.020408163
  %v4011 = vmul.f32 %v1864, 0.020408163
  %v4012 = vmul.f32 %v1869, 0.020408163
  %v4013 = vmul.f32 %v1874, 0.020408163
  %v4014 = vmul.f32 %v1879, 0.020408163
  %v4015 = vmul.f32 %v1884, 0.020408163
  %v4016 = vmul.f32 %v1889, 0.020408163
  %v4017 = vmul.f32 %v1894, 0.020408163
  %v4018 = vmul.f32 %v1899, 0.020408163
  %v4019 = vmul.f32 %v1904, 0.020408163
  %v4020 = vmul.f32 %v1909, 0.020408163
  %v4021 = vmul.f32 %v1914, 0.020408163
  %v4022 = vmul.f32 %v2800, 0.020408163
  %v4023 = vmul.f32 %v2805, 0.020408163
  %v4024 = vmul.f32 %v2810, 0.020408163
  %v4025 = vmul.f32 %v2815, 0.020408163
  %v4026 = vmul.f32 %v2820, 0.020408163
  %v4027 = vmul.f32 %v2825, 0.020408163
  %v4028 = vmul.f32 %v2830, 0.020408163
  %v4029 = vmul.f32 %v2835, 0.020408163
  %v4030 = vmul.f32 %v2840, 0.020408163
  %v4031 = vmul.f32 %v2845, 0.020408163
  %v4032 = vmul.f32 %v2850, 0.020408163
  %v4033 = vmul.f32 %v2855, 0.020408163
  %v4034 = vmul.f32 %v2860, 0.020408163
  %v4035 = vmul.f32 %v2865, 0.020408163
  %v4036 = vmul.f32 %v2870, 0.020408163
  %v4037 = vmul.f32 %v2875, 0.020408163
  %v4038 = vmul.f32 %v2880, 0.020408163
  %v4039 = vmul.f32 %v2885, 0.020408163
  %v4040 = vmul.f32 %v2890, 0.020408163
  %v4041 = vmul.f32 %v2895, 0.020408163
  %v4042 = vmul.f32 %v2900, 0.020408163
  %v4043 = vmul.f32 %v2905, 0.020408163
  %v4044 = vmul.f32 %v2910, 0.020408163
  %v4045 = vmul.f32 %v2915, 0.020408163
  %v4046 = vmul.f32 %v2920, 0.020408163
  %v4047 = vmul.f32 %v2925, 0.020408163
  %v4048 = vmul.f32 %v2930, 0.020408163
  %v4049 = vmul.f32 %v2935, 0.020408163
  %v4050 = vmul.f32 %v2940, 0.020408163
  %v4051 = vmul.f32 %v2945, 0.020408163
  %v4052 = vmul.f32 %v2950, 0.020408163
  %v4053 = vmul.f32 %v2955, 0.020408163
  %v4054 = vmul.f32 %v2960, 0.020408163
  %v4055 = vmul.f32 %v2965, 0.020408163
  %v4056 = vmul.f32 %v2970, 0.020408163
  %v4057 = vmul.f32 %v2975, 0.020408163
  %v4058 = vmul.f32 %v2980, 0.020408163
  %v4059 = vmul.f32 %v2985, 0.020408163
  %v4060 = vmul.f32 %v2990, 0.020408163
  %v4061 = vmul.f32 %v2995, 0.020408163
  %v4062 = vmul.f32 %v3000, 0.020408163
  %v4063 = vmul.f32 %v3005, 0.020408163
  %v4064 = vmul.f32 %v3010, 0.020408163
  %v4065 = vmul.f32 %v3015, 0.020408163
  %v4066 = vmul.f32 %v3020, 0.020408163
  %v4067 = vmul.f32 %v3025, 0.020408163
  %v4068 = vmul.f32 %v3030, 0.020408163
  %v4069 = vmul.f32 %v3035, 0.020408163
  %v4070 = vmul.f32 %v3040, 0.020408163
  %v4071 = vmul.f32 %v3045, 0.020408163
  %v4072 = vmul.f32 %v3050, 0.020408163
  %v4073 = vmul.f32 %v3055, 0.020408163
  %v4074 = vmul.f32 %v3060, 0.020408163
  %v4075 = vmul.f32 %v3065, 0.020408163
  %v4076 = vmul.f32 %v3070, 0.020408163
  %v4077 = vmul.f32 %v3075, 0.020408163
  %v4078 = vmul.f32 %v3080, 0.020408163
  %v4079 = vmul.f32 %v3085, 0.020408163
  %v4080 = vmul.f32 %v3090, 0.020408163
  %v4081 = vmul.f32 %v3095, 0.020408163
  %v4082 = vmul.f32 %v3100, 0.020408163
  %v4083 = vmul.f32 %v3105, 0.020408163
  %v4084 = vmul.f32 %v3110, 0.020408163
  %v4085 = vmul.f32 %v3115, 0.020408163
  %v4086 = vmul.f32 %v3120, 0.020408163
  %v4087 = vmul.f32 %v3125, 0.020408163
  %v4088 = vmul.f32 %v3130, 0.020408163
  %v4089 = vmul.f32 %v3135, 0.020408163
  %v4090 = vmul.f32 %v3140, 0.020408163
  %v4091 = vmul.f32 %v3145, 0.020408163
  %v4092 = vmul.f32 %v3150, 0.020408163
  %v4093 = vmul.f32 %v3155, 0.020408163
  %v4094 = vmul.f32 %v3160, 0.020408163
  %v4095 = vmul.f32 %v3165, 0.020408163
  %v4096 = vmul.f32 %v3170, 0.020408163
  %v4097 = vmul.f32 %v3175, 0.020408163
  %v4098 = vmul.f32 %v3180, 0.020408163
  %v4099 = vmul.f32 %v3185, 0.020408163
  %v4100 = vmul.f32 %v3190, 0.020408163
  %v4101 = vmul.f32 %v3195, 0.020408163
  %v4102 = vmul.f32 %v3200, 0.020408163
  %v4103 = vmul.f32 %v3205, 0.020408163
  %v4104 = vmul.f32 %v3210, 0.020408163
  %v4105 = vmul.f32 %v3215, 0.020408163
  %v4106 = vmul.f32 %v3220, 0.020408163
  %v4107 = vmul.f32 %v3225, 0.020408163
  %v4108 = vmul.f32 %v3230, 0.020408163
  %v4109 = vmul.f32 %v3235, 0.020408163
  %v4110 = vmul.f32 %v3240, 0.020408163
  %v4111 = vmul.f32 %v3245, 0.020408163
  %v4112 = vmul.f32 %v3250, 0.020408163
  %v4113 = vmul.f32 %v3255, 0.020408163
  %v4114 = vmul.f32 %v3260, 0.020408163
  %v4115 = vmul.f32 %v3265, 0.020408163
  %v4116 = vmul.f32 %v3270, 0.020408163
  %v4117 = vmul.f32 %v3275, 0.020408163
  %v4118 = vmul.f32 %v3280, 0.020408163
  %v4119 = vmul.f32 %v3285, 0.020408163
  %v4120 = vmul.f32 %v3290, 0.020408163
  %v4121 = vmul.f32 %v3295, 0.020408163
  %v4122 = vmul.f32 %v3300, 0.020408163
  %v4123 = vmul.f32 %v3305, 0.020408163
  %v4124 = vmul.f32 %v3310, 0.020408163
  %v4125 = vmul.f32 %v3315, 0.020408163
  %v4126 = vmul.f32 %v3320, 0.020408163
  %v4127 = vmul.f32 %v3325, 0.020408163
  %v4128 = vmul.f32 %v3330, 0.020408163
  %v4129 = vmul.f32 %v3335, 0.020408163
  %v4130 = vmul.f32 %v3340, 0.020408163
  %v4131 = vmul.f32 %v3345, 0.020408163
  %v4132 = vmul.f32 %v3350, 0.020408163
  %v4133 = vmul.f32 %v3355, 0.020408163
  %v4134 = vmul.f32 %v3360, 0.020408163
  %v4135 = vmul.f32 %v3365, 0.020408163
  %v4136 = vmul.f32 %v3370, 0.020408163
  %v4137 = vmul.f32 %v3375, 0.020408163
  %v4138 = vmul.f32 %v3380, 0.020408163
  %v4139 = vmul.f32 %v3385, 0.020408163
  %v4140 = vmul.f32 %v3390, 0.020408163
  %v4141 = vmul.f32 %v3395, 0.020408163
  %v4142 = vmul.f32 %v3400, 0.020408163
  %v4143 = vmul.f32 %v3405, 0.020408163
  %v4144 = vmul.f32 %v3410, 0.020408163
  %v4145 = vmul.f32 %v3415, 0.020408163
  %v4146 = vmul.f32 %v3420, 0.020408163
  %v4147 = vmul.f32 %v3425, 0.020408163
  %v4148 = vmul.f32 %v3430, 0.020408163
  %v4149 = vmul.f32 %v3435, 0.020408163
  %v4150 = vmul.f32 %v3440, 0.020408163
  %v4151 = vmul.f32 %v3445, 0.020408163
  %v4152 = vmul.f32 %v3450, 0.020408163
  %v4153 = vmul.f32 %v3455, 0.020408163
  %v4154 = vmul.f32 %v3460, 0.020408163
  %v4155 = vmul.f32 %v3465, 0.020408163
  %v4156 = vmul.f32 %v3470, 0.020408163
  %v4157 = vmul.f32 %v3475, 0.020408163
  %v4158 = vmul.f32 %v3480, 0.020408163
  %v4159 = vmul.f32 %v3485, 0.020408163
  %v4160 = vmul.f32 %v3490, 0.020408163
  %v4161 = vmul.f32 %v3495, 0.020408163
  %v4162 = vmul.f32 %v3500, 0.020408163
  %v4163 = vmul.f32 %v3505, 0.020408163
  %v4164 = vmul.f32 %v3510, 0.020408163
  %v4165 = vmul.f32 %v3515, 0.020408163
  %v4166 = vmul.f32 %v3520, 0.020408163
  %v4167 = vmul.f32 %v3525, 0.020408163
  %v4168 = vmul.f32 %v3530, 0.020408163
  %v4169 = vmul.f32 %v3535, 0.020408163
  %v4170 = vmul.f32 %v3540, 0.020408163
  %v4171 = vmul.f32 %v3545, 0.020408163
  %v4172 = vmul.f32 %v3550, 0.020408163
  %v4173 = vmul.f32 %v3555, 0.020408163
  %v4174 = vmul.f32 %v3560, 0.020408163
  %v4175 = vmul.f32 %v3565, 0.020408163
  %v4176 = vmul.f32 %v3570, 0.020408163
  %v4177 = vmul.f32 %v3575, 0.020408163
  %v4178 = vmul.f32 %v3580, 0.020408163
  %v4179 = vmul.f32 %v3585, 0.020408163
  %v4180 = vmul.f32 %v3590, 0.020408163
  %v4181 = vmul.f32 %v3595, 0.020408163
  %v4182 = vmul.f32 %v3600, 0.020408163
  %v4183 = vmul.f32 %v3605, 0.020408163
  %v4184 = vmul.f32 %v3610, 0.020408163
  %v4185 = vmul.f32 %v3615, 0.020408163
  %v4186 = vmul.f32 %v3620, 0.020408163
  %v4187 = vmul.f32 %v3625, 0.020408163
  %v4188 = vmul.f32 %v3630, 0.020408163
  %v4189 = vmul.f32 %v3635, 0.020408163
  %v4190 = vmul.f32 %v3640, 0.020408163
  %v4191 = vmul.f32 %v3645, 0.020408163
  %v4192 = vmul.f32 %v3650, 0.020408163
  %v4193 = vmul.f32 %v3655, 0.020408163
  %v4194 = vmul.f32 %v3660, 0.020408163
  %v4195 = vmul.f32 %v3665, 0.020408163
  %v4196 = vmul.f32 %v3670, 0.020408163
  %v4197 = vmul.f32 %v3675, 0.020408163
  %v4198 = vmul.f32 %v3680, 0.020408163
  %v4199 = vmul.f32 %v3685, 0.020408163
  %v4200 = vmul.f32 %v3690, 0.020408163
  %v4201 = vmul.f32 %v3695, 0.020408163
  %v4202 = vmul.f32 %v3700, 0.020408163
  %v4203 = vmul.f32 %v3705, 0.020408163
  %v4204 = vmul.f32 %v3710, 0.020408163
  %v4205 = vmul.f32 %v3715, 0.020408163
  %v4206 = vmul.f32 %v3720, 0.020408163
  %v4207 = vmul.f32 %v3725, 0.020408163
  %v4208 = vmul.f32 %v3730, 0.020408163
  %v4209 = vmul.f32 %v3735, 0.020408163
  %v4210 = vmul.f32 %v3740, 0.020408163
  %v4211 = vmul.f32 %v3745, 0.020408163
  %v4212 = vmul.f32 %v3750, 0.020408163
  %v4213 = vmul.f32 %v3755, 0.020408163
  %v4214 = vmul.f32 %v3760, 0.020408163
  %v4215 = vmul.f32 %v3765, 0.020408163
  %v4216 = vmul.f32 %v3770, 0.020408163
  %v4217 = vmul.f32 %v3775, 0.020408163
  %v4218 = vmul.f32 %v3780, 0.020408163
  %v4219 = vmul.f32 %v3785, 0.020408163
  %v4220 = vmul.f32 %v3790, 0.020408163
  %v4221 = vmul.f32 %v3795, 0.020408163
  %v4222 = vmul.f32 %v3800, 0.020408163
  %v4223 = vmul.f32 %v3805, 0.020408163
  %v4224 = vmul.f32 %v3810, 0.020408163
  %v4225 = vmul.f32 %v3815, 0.020408163
  %v4226 = vmul.f32 %v3818, %v3818
  %v4227 = vmul.f32 %v3819, %v3819
  %v4228 = vmul.f32 %v3820, %v3820
  %v4229 = vmul.f32 %v3821, %v3821
  %v4230 = vmul.f32 %v3822, %v3822
  %v4231 = vmul.f32 %v3823, %v3823
  %v4232 = vmul.f32 %v3824, %v3824
  %v4233 = vmul.f32 %v3825, %v3825
  %v4234 = vmul.f32 %v3826, %v3826
  %v4235 = vmul.f32 %v3827, %v3827
  %v4236 = vmul.f32 %v3828, %v3828
  %v4237 = vmul.f32 %v3829, %v3829
  %v4238 = vmul.f32 %v3830, %v3830
  %v4239 = vmul.f32 %v3831, %v3831
  %v4240 = vmul.f32 %v3832, %v3832
  %v4241 = vmul.f32 %v3833, %v3833
  %v4242 = vmul.f32 %v3834, %v3834
  %v4243 = vmul.f32 %v3835, %v3835
  %v4244 = vmul.f32 %v3836, %v3836
  %v4245 = vmul.f32 %v3837, %v3837
  %v4246 = vmul.f32 %v3838, %v3838
  %v4247 = vmul.f32 %v3839, %v3839
  %v4248 = vmul.f32 %v3840, %v3840
  %v4249 = vmul.f32 %v3841, %v3841
  %v4250 = vmul.f32 %v3842, %v3842
  %v4251 = vmul.f32 %v3843, %v3843
  %v4252 = vmul.f32 %v3844, %v3844
  %v4253 = vmul.f32 %v3845, %v3845
  %v4254 = vmul.f32 %v3846, %v3846
  %v4255 = vmul.f32 %v3847, %v3847
  %v4256 = vmul.f32 %v3848, %v3848
  %v4257 = vmul.f32 %v3849, %v3849
  %v4258 = vmul.f32 %v3850, %v3850
  %v4259 = vmul.f32 %v3851, %v3851
  %v4260 = vmul.f32 %v3852, %v3852
  %v4261 = vmul.f32 %v3853, %v3853
  %v4262 = vmul.f32 %v3854, %v3854
  %v4263 = vmul.f32 %v3855, %v3855
  %v4264 = vmul.f32 %v3856, %v3856
  %v4265 = vmul.f32 %v3857, %v3857
  %v4266 = vmul.f32 %v3858, %v3858
  %v4267 = vmul.f32 %v3859, %v3859
  %v4268 = vmul.f32 %v3860, %v3860
  %v4269 = vmul.f32 %v3861, %v3861
  %v4270 = vmul.f32 %v3862, %v3862
  %v4271 = vmul.f32 %v3863, %v3863
  %v4272 = vmul.f32 %v3864, %v3864
  %v4273 = vmul.f32 %v3865, %v3865
  %v4274 = vmul.f32 %v3866, %v3866
  %v4275 = vmul.f32 %v3867, %v3867
  %v4276 = vmul.f32 %v3868, %v3868
  %v4277 = vmul.f32 %v3869, %v3869
  %v4278 = vmul.f32 %v3870, %v3870
  %v4279 = vmul.f32 %v3871, %v3871
  %v4280 = vmul.f32 %v3872, %v3872
  %v4281 = vmul.f32 %v3873, %v3873
  %v4282 = vmul.f32 %v3874, %v3874
  %v4283 = vmul.f32 %v3875, %v3875
  %v4284 = vmul.f32 %v3876, %v3876
  %v4285 = vmul.f32 %v3877, %v3877
  %v4286 = vmul.f32 %v3878, %v3878
  %v4287 = vmul.f32 %v3879, %v3879
  %v4288 = vmul.f32 %v3880, %v3880
  %v4289 = vmul.f32 %v3881, %v3881
  %v4290 = vmul.f32 %v3882, %v3882
  %v4291 = vmul.f32 %v3883, %v3883
  %v4292 = vmul.f32 %v3884, %v3884
  %v4293 = vmul.f32 %v3885, %v3885
  %v4294 = vmul.f32 %v3886, %v3886
  %v4295 = vmul.f32 %v3887, %v3887
  %v4296 = vmul.f32 %v3888, %v3888
  %v4297 = vmul.f32 %v3889, %v3889
  %v4298 = vmul.f32 %v3890, %v3890
  %v4299 = vmul.f32 %v3891, %v3891
  %v4300 = vmul.f32 %v3892, %v3892
  %v4301 = vmul.f32 %v3893, %v3893
  %v4302 = vmul.f32 %v3894, %v3894
  %v4303 = vmul.f32 %v3895, %v3895
  %v4304 = vmul.f32 %v3896, %v3896
  %v4305 = vmul.f32 %v3897, %v3897
  %v4306 = vmul.f32 %v3898, %v3898
  %v4307 = vmul.f32 %v3899, %v3899
  %v4308 = vmul.f32 %v3900, %v3900
  %v4309 = vmul.f32 %v3901, %v3901
  %v4310 = vmul.f32 %v3902, %v3902
  %v4311 = vmul.f32 %v3903, %v3903
  %v4312 = vmul.f32 %v3904, %v3904
  %v4313 = vmul.f32 %v3905, %v3905
  %v4314 = vmul.f32 %v3906, %v3906
  %v4315 = vmul.f32 %v3907, %v3907
  %v4316 = vmul.f32 %v3908, %v3908
  %v4317 = vmul.f32 %v3909, %v3909
  %v4318 = vmul.f32 %v3910, %v3910
  %v4319 = vmul.f32 %v3911, %v3911
  %v4320 = vmul.f32 %v3912, %v3912
  %v4321 = vmul.f32 %v3913, %v3913
  %v4322 = vmul.f32 %v3914, %v3914
  %v4323 = vmul.f32 %v3915, %v3915
  %v4324 = vmul.f32 %v3916, %v3916
  %v4325 = vmul.f32 %v3917, %v3917
  %v4326 = vmul.f32 %v3918, %v3918
  %v4327 = vmul.f32 %v3919, %v3919
  %v4328 = vmul.f32 %v3920, %v3920
  %v4329 = vmul.f32 %v3921, %v3921
  %v4330 = vmul.f32 %v3922, %v3922
  %v4331 = vmul.f32 %v3923, %v3923
  %v4332 = vmul.f32 %v3924, %v3924
  %v4333 = vmul.f32 %v3925, %v3925
  %v4334 = vmul.f32 %v3926, %v3926
  %v4335 = vmul.f32 %v3927, %v3927
  %v4336 = vmul.f32 %v3928, %v3928
  %v4337 = vmul.f32 %v3929, %v3929
  %v4338 = vmul.f32 %v3930, %v3930
  %v4339 = vmul.f32 %v3931, %v3931
  %v4340 = vmul.f32 %v3932, %v3932
  %v4341 = vmul.f32 %v3933, %v3933
  %v4342 = vmul.f32 %v3934, %v3934
  %v4343 = vmul.f32 %v3935, %v3935
  %v4344 = vmul.f32 %v3936, %v3936
  %v4345 = vmul.f32 %v3937, %v3937
  %v4346 = vmul.f32 %v3938, %v3938
  %v4347 = vmul.f32 %v3939, %v3939
  %v4348 = vmul.f32 %v3940, %v3940
  %v4349 = vmul.f32 %v3941, %v3941
  %v4350 = vmul.f32 %v3942, %v3942
  %v4351 = vmul.f32 %v3943, %v3943
  %v4352 = vmul.f32 %v3944, %v3944
  %v4353 = vmul.f32 %v3945, %v3945
  %v4354 = vmul.f32 %v3946, %v3946
  %v4355 = vmul.f32 %v3947, %v3947
  %v4356 = vmul.f32 %v3948, %v3948
  %v4357 = vmul.f32 %v3949, %v3949
  %v4358 = vmul.f32 %v3950, %v3950
  %v4359 = vmul.f32 %v3951, %v3951
  %v4360 = vmul.f32 %v3952, %v3952
  %v4361 = vmul.f32 %v3953, %v3953
  %v4362 = vmul.f32 %v3954, %v3954
  %v4363 = vmul.f32 %v3955, %v3955
  %v4364 = vmul.f32 %v3956, %v3956
  %v4365 = vmul.f32 %v3957, %v3957
  %v4366 = vmul.f32 %v3958, %v3958
  %v4367 = vmul.f32 %v3959, %v3959
  %v4368 = vmul.f32 %v3960, %v3960
  %v4369 = vmul.f32 %v3961, %v3961
  %v4370 = vmul.f32 %v3962, %v3962
  %v4371 = vmul.f32 %v3963, %v3963
  %v4372 = vmul.f32 %v3964, %v3964
  %v4373 = vmul.f32 %v3965, %v3965
  %v4374 = vmul.f32 %v3966, %v3966
  %v4375 = vmul.f32 %v3967, %v3967
  %v4376 = vmul.f32 %v3968, %v3968
  %v4377 = vmul.f32 %v3969, %v3969
  %v4378 = vmul.f32 %v3970, %v3970
  %v4379 = vmul.f32 %v3971, %v3971
  %v4380 = vmul.f32 %v3972, %v3972
  %v4381 = vmul.f32 %v3973, %v3973
  %v4382 = vmul.f32 %v3974, %v3974
  %v4383 = vmul.f32 %v3975, %v3975
  %v4384 = vmul.f32 %v3976, %v3976
  %v4385 = vmul.f32 %v3977, %v3977
  %v4386 = vmul.f32 %v3978, %v3978
  %v4387 = vmul.f32 %v3979, %v3979
  %v4388 = vmul.f32 %v3980, %v3980
  %v4389 = vmul.f32 %v3981, %v3981
  %v4390 = vmul.f32 %v3982, %v3982
  %v4391 = vmul.f32 %v3983, %v3983
  %v4392 = vmul.f32 %v3984, %v3984
  %v4393 = vmul.f32 %v3985, %v3985
  %v4394 = vmul.f32 %v3986, %v3986
  %v4395 = vmul.f32 %v3987, %v3987
  %v4396 = vmul.f32 %v3988, %v3988
  %v4397 = vmul.f32 %v3989, %v3989
  %v4398 = vmul.f32 %v3990, %v3990
  %v4399 = vmul.f32 %v3991, %v3991
  %v4400 = vmul.f32 %v3992, %v3992
  %v4401 = vmul.f32 %v3993, %v3993
  %v4402 = vmul.f32 %v3994, %v3994
  %v4403 = vmul.f32 %v3995, %v3995
  %v4404 = vmul.f32 %v3996, %v3996
  %v4405 = vmul.f32 %v3997, %v3997
  %v4406 = vmul.f32 %v3998, %v3998
  %v4407 = vmul.f32 %v3999, %v3999
  %v4408 = vmul.f32 %v4000, %v4000
  %v4409 = vmul.f32 %v4001, %v4001
  %v4410 = vmul.f32 %v4002, %v4002
  %v4411 = vmul.f32 %v4003, %v4003
  %v4412 = vmul.f32 %v4004, %v4004
  %v4413 = vmul.f32 %v4005, %v4005
  %v4414 = vmul.f32 %v4006, %v4006
  %v4415 = vmul.f32 %v4007, %v4007
  %v4416 = vmul.f32 %v4008, %v4008
  %v4417 = vmul.f32 %v4009, %v4009
  %v4418 = vmul.f32 %v4010, %v4010
  %v4419 = vmul.f32 %v4011, %v4011
  %v4420 = vmul.f32 %v4012, %v4012
  %v4421 = vmul.f32 %v4013, %v4013
  %v4422 = vmul.f32 %v4014, %v4014
  %v4423 = vmul.f32 %v4015, %v4015
  %v4424 = vmul.f32 %v4016, %v4016
  %v4425 = vmul.f32 %v4017, %v4017
  %v4426 = vmul.f32 %v4018, %v4018
  %v4427 = vmul.f32 %v4019, %v4019
  %v4428 = vmul.f32 %v4020, %v4020
  %v4429 = vmul.f32 %v4021, %v4021
  %v4430 = vsub.f32 %v4022, %v4226
  %v4431 = vsub.f32 %v4023, %v4227
  %v4432 = vsub.f32 %v4024, %v4228
  %v4433 = vsub.f32 %v4025, %v4229
  %v4434 = vsub.f32 %v4026, %v4230
  %v4435 = vsub.f32 %v4027, %v4231
  %v4436 = vsub.f32 %v4028, %v4232
  %v4437 = vsub.f32 %v4029, %v4233
  %v4438 = vsub.f32 %v4030, %v4234
  %v4439 = vsub.f32 %v4031, %v4235
  %v4440 = vsub.f32 %v4032, %v4236
  %v4441 = vsub.f32 %v4033, %v4237
  %v4442 = vsub.f32 %v4034, %v4238
  %v4443 = vsub.f32 %v4035, %v4239
  %v4444 = vsub.f32 %v4036, %v4240
  %v4445 = vsub.f32 %v4037, %v4241
  %v4446 = vsub.f32 %v4038, %v4242
  %v4447 = vsub.f32 %v4039, %v4243
  %v4448 = vsub.f32 %v4040, %v4244
  %v4449 = vsub.f32 %v4041, %v4245
  %v4450 = vsub.f32 %v4042, %v4246
  %v4451 = vsub.f32 %v4043, %v4247
  %v4452 = vsub.f32 %v4044, %v4248
  %v4453 = vsub.f32 %v4045, %v4249
  %v4454 = vsub.f32 %v4046, %v4250
  %v4455 = vsub.f32 %v4047, %v4251
  %v4456 = vsub.f32 %v4048, %v4252
  %v4457 = vsub.f32 %v4049, %v4253
  %v4458 = vsub.f32 %v4050, %v4254
  %v4459 = vsub.f32 %v4051, %v4255
  %v4460 = vsub.f32 %v4052, %v4256
  %v4461 = vsub.f32 %v4053, %v4257
  %v4462 = vsub.f32 %v4054, %v4258
  %v4463 = vsub.f32 %v4055, %v4259
  %v4464 = vsub.f32 %v4056, %v4260
  %v4465 = vsub.f32 %v4057, %v4261
  %v4466 = vsub.f32 %v4058, %v4262
  %v4467 = vsub.f32 %v4059, %v4263
  %v4468 = vsub.f32 %v4060, %v4264
  %v4469 = vsub.f32 %v4061, %v4265
  %v4470 = vsub.f32 %v4062, %v4266
  %v4471 = vsub.f32 %v4063, %v4267
  %v4472 = vsub.f32 %v4064, %v4268
  %v4473 = vsub.f32 %v4065, %v4269
  %v4474 = vsub.f32 %v4066, %v4270
  %v4475 = vsub.f32 %v4067, %v4271
  %v4476 = vsub.f32 %v4068, %v4272
  %v4477 = vsub.f32 %v4069, %v4273
  %v4478 = vsub.f32 %v4070, %v4274
  %v4479 = vsub.f32 %v4071, %v4275
  %v4480 = vsub.f32 %v4072, %v4276
  %v4481 = vsub.f32 %v4073, %v4277
  %v4482 = vsub.f32 %v4074, %v4278
  %v4483 = vsub.f32 %v4075, %v4279
  %v4484 = vsub.f32 %v4076, %v4280
  %v4485 = vsub.f32 %v4077, %v4281
  %v4486 = vsub.f32 %v4078, %v4282
  %v4487 = vsub.f32 %v4079, %v4283
  %v4488 = vsub.f32 %v4080, %v4284
  %v4489 = vsub.f32 %v4081, %v4285
  %v4490 = vsub.f32 %v4082, %v4286
  %v4491 = vsub.f32 %v4083, %v4287
  %v4492 = vsub.f32 %v4084, %v4288
  %v4493 = vsub.f32 %v4085, %v4289
  %v4494 = vsub.f32 %v4086, %v4290
  %v4495 = vsub.f32 %v4087, %v4291
  %v4496 = vsub.f32 %v4088, %v4292
  %v4497 = vsub.f32 %v4089, %v4293
  %v4498 = vsub.f32 %v4090, %v4294
  %v4499 = vsub.f32 %v4091, %v4295
  %v4500 = vsub.f32 %v4092, %v4296
  %v4501 = vsub.f32 %v4093, %v4297
  %v4502 = vsub.f32 %v4094, %v4298
  %v4503 = vsub.f32 %v4095, %v4299
  %v4504 = vsub.f32 %v4096, %v4300
  %v4505 = vsub.f32 %v4097, %v4301
  %v4506 = vsub.f32 %v4098, %v4302
  %v4507 = vsub.f32 %v4099, %v4303
  %v4508 = vsub.f32 %v4100, %v4304
  %v4509 = vsub.f32 %v4101, %v4305
  %v4510 = vsub.f32 %v4102, %v4306
  %v4511 = vsub.f32 %v4103, %v4307
  %v4512 = vsub.f32 %v4104, %v4308
  %v4513 = vsub.f32 %v4105, %v4309
  %v4514 = vsub.f32 %v4106, %v4310
  %v4515 = vsub.f32 %v4107, %v4311
  %v4516 = vsub.f32 %v4108, %v4312
  %v4517 = vsub.f32 %v4109, %v4313
  %v4518 = vsub.f32 %v4110, %v4314
  %v4519 = vsub.f32 %v4111, %v4315
  %v4520 = vsub.f32 %v4112, %v4316
  %v4521 = vsub.f32 %v4113, %v4317
  %v4522 = vsub.f32 %v4114, %v4318
  %v4523 = vsub.f32 %v4115, %v4319
  %v4524 = vsub.f32 %v4116, %v4320
  %v4525 = vsub.f32 %v4117, %v4321
  %v4526 = vsub.f32 %v4118, %v4322
  %v4527 = vsub.f32 %v4119, %v4323
  %v4528 = vsub.f32 %v4120, %v4324
  %v4529 = vsub.f32 %v4121, %v4325
  %v4530 = vsub.f32 %v4122, %v4326
  %v4531 = vsub.f32 %v4123, %v4327
  %v4532 = vsub.f32 %v4124, %v4328
  %v4533 = vsub.f32 %v4125, %v4329
  %v4534 = vsub.f32 %v4126, %v4330
  %v4535 = vsub.f32 %v4127, %v4331
  %v4536 = vsub.f32 %v4128, %v4332
  %v4537 = vsub.f32 %v4129, %v4333
  %v4538 = vsub.f32 %v4130, %v4334
  %v4539 = vsub.f32 %v4131, %v4335
  %v4540 = vsub.f32 %v4132, %v4336
  %v4541 = vsub.f32 %v4133, %v4337
  %v4542 = vsub.f32 %v4134, %v4338
  %v4543 = vsub.f32 %v4135, %v4339
  %v4544 = vsub.f32 %v4136, %v4340
  %v4545 = vsub.f32 %v4137, %v4341
  %v4546 = vsub.f32 %v4138, %v4342
  %v4547 = vsub.f32 %v4139, %v4343
  %v4548 = vsub.f32 %v4140, %v4344
  %v4549 = vsub.f32 %v4141, %v4345
  %v4550 = vsub.f32 %v4142, %v4346
  %v4551 = vsub.f32 %v4143, %v4347
  %v4552 = vsub.f32 %v4144, %v4348
  %v4553 = vsub.f32 %v4145, %v4349
  %v4554 = vsub.f32 %v4146, %v4350
  %v4555 = vsub.f32 %v4147, %v4351
  %v4556 = vsub.f32 %v4148, %v4352
  %v4557 = vsub.f32 %v4149, %v4353
  %v4558 = vsub.f32 %v4150, %v4354
  %v4559 = vsub.f32 %v4151, %v4355
  %v4560 = vsub.f32 %v4152, %v4356
  %v4561 = vsub.f32 %v4153, %v4357
  %v4562 = vsub.f32 %v4154, %v4358
  %v4563 = vsub.f32 %v4155, %v4359
  %v4564 = vsub.f32 %v4156, %v4360
  %v4565 = vsub.f32 %v4157, %v4361
  %v4566 = vsub.f32 %v4158, %v4362
  %v4567 = vsub.f32 %v4159, %v4363
  %v4568 = vsub.f32 %v4160, %v4364
  %v4569 = vsub.f32 %v4161, %v4365
  %v4570 = vsub.f32 %v4162, %v4366
  %v4571 = vsub.f32 %v4163, %v4367
  %v4572 = vsub.f32 %v4164, %v4368
  %v4573 = vsub.f32 %v4165, %v4369
  %v4574 = vsub.f32 %v4166, %v4370
  %v4575 = vsub.f32 %v4167, %v4371
  %v4576 = vsub.f32 %v4168, %v4372
  %v4577 = vsub.f32 %v4169, %v4373
  %v4578 = vsub.f32 %v4170, %v4374
  %v4579 = vsub.f32 %v4171, %v4375
  %v4580 = vsub.f32 %v4172, %v4376
  %v4581 = vsub.f32 %v4173, %v4377
  %v4582 = vsub.f32 %v4174, %v4378
  %v4583 = vsub.f32 %v4175, %v4379
  %v4584 = vsub.f32 %v4176, %v4380
  %v4585 = vsub.f32 %v4177, %v4381
  %v4586 = vsub.f32 %v4178, %v4382
  %v4587 = vsub.f32 %v4179, %v4383
  %v4588 = vsub.f32 %v4180, %v4384
  %v4589 = vsub.f32 %v4181, %v4385
  %v4590 = vsub.f32 %v4182, %v4386
  %v4591 = vsub.f32 %v4183, %v4387
  %v4592 = vsub.f32 %v4184, %v4388
  %v4593 = vsub.f32 %v4185, %v4389
  %v4594 = vsub.f32 %v4186, %v4390
  %v4595 = vsub.f32 %v4187, %v4391
  %v4596 = vsub.f32 %v4188, %v4392
  %v4597 = vsub.f32 %v4189, %v4393
  %v4598 = vsub.f32 %v4190, %v4394
  %v4599 = vsub.f32 %v4191, %v4395
  %v4600 = vsub.f32 %v4192, %v4396
  %v4601 = vsub.f32 %v4193, %v4397
  %v4602 = vsub.f32 %v4194, %v4398
  %v4603 = vsub.f32 %v4195, %v4399
  %v4604 = vsub.f32 %v4196, %v4400
  %v4605 = vsub.f32 %v4197, %v4401
  %v4606 = vsub.f32 %v4198, %v4402
  %v4607 = vsub.f32 %v4199, %v4403
  %v4608 = vsub.f32 %v4200, %v4404
  %v4609 = vsub.f32 %v4201, %v4405
  %v4610 = vsub.f32 %v4202, %v4406
  %v4611 = vsub.f32 %v4203, %v4407
  %v4612 = vsub.f32 %v4204, %v4408
  %v4613 = vsub.f32 %v4205, %v4409
  %v4614 = vsub.f32 %v4206, %v4410
  %v4615 = vsub.f32 %v4207, %v4411
  %v4616 = vsub.f32 %v4208, %v4412
  %v4617 = vsub.f32 %v4209, %v4413
  %v4618 = vsub.f32 %v4210, %v4414
  %v4619 = vsub.f32 %v4211, %v4415
  %v4620 = vsub.f32 %v4212, %v4416
  %v4621 = vsub.f32 %v4213, %v4417
  %v4622 = vsub.f32 %v4214, %v4418
  %v4623 = vsub.f32 %v4215, %v4419
  %v4624 = vsub.f32 %v4216, %v4420
  %v4625 = vsub.f32 %v4217, %v4421
  %v4626 = vsub.f32 %v4218, %v4422
  %v4627 = vsub.f32 %v4219, %v4423
  %v4628 = vsub.f32 %v4220, %v4424
  %v4629 = vsub.f32 %v4221, %v4425
  %v4630 = vsub.f32 %v4222, %v4426
  %v4631 = vsub.f32 %v4223, %v4427
  %v4632 = vsub.f32 %v4224, %v4428
  %v4633 = vsub.f32 %v4225, %v4429
  %v4634 = vmax.f32 %v4430, 0.0
  %v4635 = vmax.f32 %v4431, 0.0
  %v4636 = vmax.f32 %v4432, 0.0
  %v4637 = vmax.f32 %v4433, 0.0
  %v4638 = vmax.f32 %v4434, 0.0
  %v4639 = vmax.f32 %v4435, 0.0
  %v4640 = vmax.f32 %v4436, 0.0
  %v4641 = vmax.f32 %v4437, 0.0
  %v4642 = vmax.f32 %v4438, 0.0
  %v4643 = vmax.f32 %v4439, 0.0
  %v4644 = vmax.f32 %v4440, 0.0
  %v4645 = vmax.f32 %v4441, 0.0
  %v4646 = vmax.f32 %v4442, 0.0
  %v4647 = vmax.f32 %v4443, 0.0
  %v4648 = vmax.f32 %v4444, 0.0
  %v4649 = vmax.f32 %v4445, 0.0
  %v4650 = vmax.f32 %v4446, 0.0
  %v4651 = vmax.f32 %v4447, 0.0
  %v4652 = vmax.f32 %v4448, 0.0
  %v4653 = vmax.f32 %v4449, 0.0
  %v4654 = vmax.f32 %v4450, 0.0
  %v4655 = vmax.f32 %v4451, 0.0
  %v4656 = vmax.f32 %v4452, 0.0
  %v4657 = vmax.f32 %v4453, 0.0
  %v4658 = vmax.f32 %v4454, 0.0
  %v4659 = vmax.f32 %v4455, 0.0
  %v4660 = vmax.f32 %v4456, 0.0
  %v4661 = vmax.f32 %v4457, 0.0
  %v4662 = vmax.f32 %v4458, 0.0
  %v4663 = vmax.f32 %v4459, 0.0
  %v4664 = vmax.f32 %v4460, 0.0
  %v4665 = vmax.f32 %v4461, 0.0
  %v4666 = vmax.f32 %v4462, 0.0
  %v4667 = vmax.f32 %v4463, 0.0
  %v4668 = vmax.f32 %v4464, 0.0
  %v4669 = vmax.f32 %v4465, 0.0
  %v4670 = vmax.f32 %v4466, 0.0
  %v4671 = vmax.f32 %v4467, 0.0
  %v4672 = vmax.f32 %v4468, 0.0
  %v4673 = vmax.f32 %v4469, 0.0
  %v4674 = vmax.f32 %v4470, 0.0
  %v4675 = vmax.f32 %v4471, 0.0
  %v4676 = vmax.f32 %v4472, 0.0
  %v4677 = vmax.f32 %v4473, 0.0
  %v4678 = vmax.f32 %v4474, 0.0
  %v4679 = vmax.f32 %v4475, 0.0
  %v4680 = vmax.f32 %v4476, 0.0
  %v4681 = vmax.f32 %v4477, 0.0
  %v4682 = vmax.f32 %v4478, 0.0
  %v4683 = vmax.f32 %v4479, 0.0
  %v4684 = vmax.f32 %v4480, 0.0
  %v4685 = vmax.f32 %v4481, 0.0
  %v4686 = vmax.f32 %v4482, 0.0
  %v4687 = vmax.f32 %v4483, 0.0
  %v4688 = vmax.f32 %v4484, 0.0
  %v4689 = vmax.f32 %v4485, 0.0
  %v4690 = vmax.f32 %v4486, 0.0
  %v4691 = vmax.f32 %v4487, 0.0
  %v4692 = vmax.f32 %v4488, 0.0
  %v4693 = vmax.f32 %v4489, 0.0
  %v4694 = vmax.f32 %v4490, 0.0
  %v4695 = vmax.f32 %v4491, 0.0
  %v4696 = vmax.f32 %v4492, 0.0
  %v4697 = vmax.f32 %v4493, 0.0
  %v4698 = vmax.f32 %v4494, 0.0
  %v4699 = vmax.f32 %v4495, 0.0
  %v4700 = vmax.f32 %v4496, 0.0
  %v4701 = vmax.f32 %v4497, 0.0
  %v4702 = vmax.f32 %v4498, 0.0
  %v4703 = vmax.f32 %v4499, 0.0
  %v4704 = vmax.f32 %v4500, 0.0
  %v4705 = vmax.f32 %v4501, 0.0
  %v4706 = vmax.f32 %v4502, 0.0
  %v4707 = vmax.f32 %v4503, 0.0
  %v4708 = vmax.f32 %v4504, 0.0
  %v4709 = vmax.f32 %v4505, 0.0
  %v4710 = vmax.f32 %v4506, 0.0
  %v4711 = vmax.f32 %v4507, 0.0
  %v4712 = vmax.f32 %v4508, 0.0
  %v4713 = vmax.f32 %v4509, 0.0
  %v4714 = vmax.f32 %v4510, 0.0
  %v4715 = vmax.f32 %v4511, 0.0
  %v4716 = vmax.f32 %v4512, 0.0
  %v4717 = vmax.f32 %v4513, 0.0
  %v4718 = vmax.f32 %v4514, 0.0
  %v4719 = vmax.f32 %v4515, 0.0
  %v4720 = vmax.f32 %v4516, 0.0
  %v4721 = vmax.f32 %v4517, 0.0
  %v4722 = vmax.f32 %v4518, 0.0
  %v4723 = vmax.f32 %v4519, 0.0
  %v4724 = vmax.f32 %v4520, 0.0
  %v4725 = vmax.f32 %v4521, 0.0
  %v4726 = vmax.f32 %v4522, 0.0
  %v4727 = vmax.f32 %v4523, 0.0
  %v4728 = vmax.f32 %v4524, 0.0
  %v4729 = vmax.f32 %v4525, 0.0
  %v4730 = vmax.f32 %v4526, 0.0
  %v4731 = vmax.f32 %v4527, 0.0
  %v4732 = vmax.f32 %v4528, 0.0
  %v4733 = vmax.f32 %v4529, 0.0
  %v4734 = vmax.f32 %v4530, 0.0
  %v4735 = vmax.f32 %v4531, 0.0
  %v4736 = vmax.f32 %v4532, 0.0
  %v4737 = vmax.f32 %v4533, 0.0
  %v4738 = vmax.f32 %v4534, 0.0
  %v4739 = vmax.f32 %v4535, 0.0
  %v4740 = vmax.f32 %v4536, 0.0
  %v4741 = vmax.f32 %v4537, 0.0
  %v4742 = vmax.f32 %v4538, 0.0
  %v4743 = vmax.f32 %v4539, 0.0
  %v4744 = vmax.f32 %v4540, 0.0
  %v4745 = vmax.f32 %v4541, 0.0
  %v4746 = vmax.f32 %v4542, 0.0
  %v4747 = vmax.f32 %v4543, 0.0
  %v4748 = vmax.f32 %v4544, 0.0
  %v4749 = vmax.f32 %v4545, 0.0
  %v4750 = vmax.f32 %v4546, 0.0
  %v4751 = vmax.f32 %v4547, 0.0
  %v4752 = vmax.f32 %v4548, 0.0
  %v4753 = vmax.f32 %v4549, 0.0
  %v4754 = vmax.f32 %v4550, 0.0
  %v4755 = vmax.f32 %v4551, 0.0
  %v4756 = vmax.f32 %v4552, 0.0
  %v4757 = vmax.f32 %v4553, 0.0
  %v4758 = vmax.f32 %v4554, 0.0
  %v4759 = vmax.f32 %v4555, 0.0
  %v4760 = vmax.f32 %v4556, 0.0
  %v4761 = vmax.f32 %v4557, 0.0
  %v4762 = vmax.f32 %v4558, 0.0
  %v4763 = vmax.f32 %v4559, 0.0
  %v4764 = vmax.f32 %v4560, 0.0
  %v4765 = vmax.f32 %v4561, 0.0
  %v4766 = vmax.f32 %v4562, 0.0
  %v4767 = vmax.f32 %v4563, 0.0
  %v4768 = vmax.f32 %v4564, 0.0
  %v4769 = vmax.f32 %v4565, 0.0
  %v4770 = vmax.f32 %v4566, 0.0
  %v4771 = vmax.f32 %v4567, 0.0
  %v4772 = vmax.f32 %v4568, 0.0
  %v4773 = vmax.f32 %v4569, 0.0
  %v4774 = vmax.f32 %v4570, 0.0
  %v4775 = vmax.f32 %v4571, 0.0
  %v4776 = vmax.f32 %v4572, 0.0
  %v4777 = vmax.f32 %v4573, 0.0
  %v4778 = vmax.f32 %v4574, 0.0
  %v4779 = vmax.f32 %v4575, 0.0
  %v4780 = vmax.f32 %v4576, 0.0
  %v4781 = vmax.f32 %v4577, 0.0
  %v4782 = vmax.f32 %v4578, 0.0
  %v4783 = vmax.f32 %v4579, 0.0
  %v4784 = vmax.f32 %v4580, 0.0
  %v4785 = vmax.f32 %v4581, 0.0
  %v4786 = vmax.f32 %v4582, 0.0
  %v4787 = vmax.f32 %v4583, 0.0
  %v4788 = vmax.f32 %v4584, 0.0
  %v4789 = vmax.f32 %v4585, 0.0
  %v4790 = vmax.f32 %v4586, 0.0
  %v4791 = vmax.f32 %v4587, 0.0
  %v4792 = vmax.f32 %v4588, 0.0
  %v4793 = vmax.f32 %v4589, 0.0
  %v4794 = vmax.f32 %v4590, 0.0
  %v4795 = vmax.f32 %v4591, 0.0
  %v4796 = vmax.f32 %v4592, 0.0
  %v4797 = vmax.f32 %v4593, 0.0
  %v4798 = vmax.f32 %v4594, 0.0
  %v4799 = vmax.f32 %v4595, 0.0
  %v4800 = vmax.f32 %v4596, 0.0
  %v4801 = vmax.f32 %v4597, 0.0
  %v4802 = vmax.f32 %v4598, 0.0
  %v4803 = vmax.f32 %v4599, 0.0
  %v4804 = vmax.f32 %v4600, 0.0
  %v4805 = vmax.f32 %v4601, 0.0
  %v4806 = vmax.f32 %v4602, 0.0
  %v4807 = vmax.f32 %v4603, 0.0
  %v4808 = vmax.f32 %v4604, 0.0
  %v4809 = vmax.f32 %v4605, 0.0
  %v4810 = vmax.f32 %v4606, 0.0
  %v4811 = vmax.f32 %v4607, 0.0
  %v4812 = vmax.f32 %v4608, 0.0
  %v4813 = vmax.f32 %v4609, 0.0
  %v4814 = vmax.f32 %v4610, 0.0
  %v4815 = vmax.f32 %v4611, 0.0
  %v4816 = vmax.f32 %v4612, 0.0
  %v4817 = vmax.f32 %v4613, 0.0
  %v4818 = vmax.f32 %v4614, 0.0
  %v4819 = vmax.f32 %v4615, 0.0
  %v4820 = vmax.f32 %v4616, 0.0
  %v4821 = vmax.f32 %v4617, 0.0
  %v4822 = vmax.f32 %v4618, 0.0
  %v4823 = vmax.f32 %v4619, 0.0
  %v4824 = vmax.f32 %v4620, 0.0
  %v4825 = vmax.f32 %v4621, 0.0
  %v4826 = vmax.f32 %v4622, 0.0
  %v4827 = vmax.f32 %v4623, 0.0
  %v4828 = vmax.f32 %v4624, 0.0
  %v4829 = vmax.f32 %v4625, 0.0
  %v4830 = vmax.f32 %v4626, 0.0
  %v4831 = vmax.f32 %v4627, 0.0
  %v4832 = vmax.f32 %v4628, 0.0
  %v4833 = vmax.f32 %v4629, 0.0
  %v4834 = vmax.f32 %v4630, 0.0
  %v4835 = vmax.f32 %v4631, 0.0
  %v4836 = vmax.f32 %v4632, 0.0
  %v4837 = vmax.f32 %v4633, 0.0
  %v4838 = vadd.f32 %v4634, 1e-05
  %v4839 = vadd.f32 %v4635, 1e-05
  %v4840 = vadd.f32 %v4636, 1e-05
  %v4841 = vadd.f32 %v4637, 1e-05
  %v4842 = vadd.f32 %v4638, 1e-05
  %v4843 = vadd.f32 %v4639, 1e-05
  %v4844 = vadd.f32 %v4640, 1e-05
  %v4845 = vadd.f32 %v4641, 1e-05
  %v4846 = vadd.f32 %v4642, 1e-05
  %v4847 = vadd.f32 %v4643, 1e-05
  %v4848 = vadd.f32 %v4644, 1e-05
  %v4849 = vadd.f32 %v4645, 1e-05
  %v4850 = vadd.f32 %v4646, 1e-05
  %v4851 = vadd.f32 %v4647, 1e-05
  %v4852 = vadd.f32 %v4648, 1e-05
  %v4853 = vadd.f32 %v4649, 1e-05
  %v4854 = vadd.f32 %v4650, 1e-05
  %v4855 = vadd.f32 %v4651, 1e-05
  %v4856 = vadd.f32 %v4652, 1e-05
  %v4857 = vadd.f32 %v4653, 1e-05
  %v4858 = vadd.f32 %v4654, 1e-05
  %v4859 = vadd.f32 %v4655, 1e-05
  %v4860 = vadd.f32 %v4656, 1e-05
  %v4861 = vadd.f32 %v4657, 1e-05
  %v4862 = vadd.f32 %v4658, 1e-05
  %v4863 = vadd.f32 %v4659, 1e-05
  %v4864 = vadd.f32 %v4660, 1e-05
  %v4865 = vadd.f32 %v4661, 1e-05
  %v4866 = vadd.f32 %v4662, 1e-05
  %v4867 = vadd.f32 %v4663, 1e-05
  %v4868 = vadd.f32 %v4664, 1e-05
  %v4869 = vadd.f32 %v4665, 1e-05
  %v4870 = vadd.f32 %v4666, 1e-05
  %v4871 = vadd.f32 %v4667, 1e-05
  %v4872 = vadd.f32 %v4668, 1e-05
  %v4873 = vadd.f32 %v4669, 1e-05
  %v4874 = vadd.f32 %v4670, 1e-05
  %v4875 = vadd.f32 %v4671, 1e-05
  %v4876 = vadd.f32 %v4672, 1e-05
  %v4877 = vadd.f32 %v4673, 1e-05
  %v4878 = vadd.f32 %v4674, 1e-05
  %v4879 = vadd.f32 %v4675, 1e-05
  %v4880 = vadd.f32 %v4676, 1e-05
  %v4881 = vadd.f32 %v4677, 1e-05
  %v4882 = vadd.f32 %v4678, 1e-05
  %v4883 = vadd.f32 %v4679, 1e-05
  %v4884 = vadd.f32 %v4680, 1e-05
  %v4885 = vadd.f32 %v4681, 1e-05
  %v4886 = vadd.f32 %v4682, 1e-05
  %v4887 = vadd.f32 %v4683, 1e-05
  %v4888 = vadd.f32 %v4684, 1e-05
  %v4889 = vadd.f32 %v4685, 1e-05
  %v4890 = vadd.f32 %v4686, 1e-05
  %v4891 = vadd.f32 %v4687, 1e-05
  %v4892 = vadd.f32 %v4688, 1e-05
  %v4893 = vadd.f32 %v4689, 1e-05
  %v4894 = vadd.f32 %v4690, 1e-05
  %v4895 = vadd.f32 %v4691, 1e-05
  %v4896 = vadd.f32 %v4692, 1e-05
  %v4897 = vadd.f32 %v4693, 1e-05
  %v4898 = vadd.f32 %v4694, 1e-05
  %v4899 = vadd.f32 %v4695, 1e-05
  %v4900 = vadd.f32 %v4696, 1e-05
  %v4901 = vadd.f32 %v4697, 1e-05
  %v4902 = vadd.f32 %v4698, 1e-05
  %v4903 = vadd.f32 %v4699, 1e-05
  %v4904 = vadd.f32 %v4700, 1e-05
  %v4905 = vadd.f32 %v4701, 1e-05
  %v4906 = vadd.f32 %v4702, 1e-05
  %v4907 = vadd.f32 %v4703, 1e-05
  %v4908 = vadd.f32 %v4704, 1e-05
  %v4909 = vadd.f32 %v4705, 1e-05
  %v4910 = vadd.f32 %v4706, 1e-05
  %v4911 = vadd.f32 %v4707, 1e-05
  %v4912 = vadd.f32 %v4708, 1e-05
  %v4913 = vadd.f32 %v4709, 1e-05
  %v4914 = vadd.f32 %v4710, 1e-05
  %v4915 = vadd.f32 %v4711, 1e-05
  %v4916 = vadd.f32 %v4712, 1e-05
  %v4917 = vadd.f32 %v4713, 1e-05
  %v4918 = vadd.f32 %v4714, 1e-05
  %v4919 = vadd.f32 %v4715, 1e-05
  %v4920 = vadd.f32 %v4716, 1e-05
  %v4921 = vadd.f32 %v4717, 1e-05
  %v4922 = vadd.f32 %v4718, 1e-05
  %v4923 = vadd.f32 %v4719, 1e-05
  %v4924 = vadd.f32 %v4720, 1e-05
  %v4925 = vadd.f32 %v4721, 1e-05
  %v4926 = vadd.f32 %v4722, 1e-05
  %v4927 = vadd.f32 %v4723, 1e-05
  %v4928 = vadd.f32 %v4724, 1e-05
  %v4929 = vadd.f32 %v4725, 1e-05
  %v4930 = vadd.f32 %v4726, 1e-05
  %v4931 = vadd.f32 %v4727, 1e-05
  %v4932 = vadd.f32 %v4728, 1e-05
  %v4933 = vadd.f32 %v4729, 1e-05
  %v4934 = vadd.f32 %v4730, 1e-05
  %v4935 = vadd.f32 %v4731, 1e-05
  %v4936 = vadd.f32 %v4732, 1e-05
  %v4937 = vadd.f32 %v4733, 1e-05
  %v4938 = vadd.f32 %v4734, 1e-05
  %v4939 = vadd.f32 %v4735, 1e-05
  %v4940 = vadd.f32 %v4736, 1e-05
  %v4941 = vadd.f32 %v4737, 1e-05
  %v4942 = vadd.f32 %v4738, 1e-05
  %v4943 = vadd.f32 %v4739, 1e-05
  %v4944 = vadd.f32 %v4740, 1e-05
  %v4945 = vadd.f32 %v4741, 1e-05
  %v4946 = vadd.f32 %v4742, 1e-05
  %v4947 = vadd.f32 %v4743, 1e-05
  %v4948 = vadd.f32 %v4744, 1e-05
  %v4949 = vadd.f32 %v4745, 1e-05
  %v4950 = vadd.f32 %v4746, 1e-05
  %v4951 = vadd.f32 %v4747, 1e-05
  %v4952 = vadd.f32 %v4748, 1e-05
  %v4953 = vadd.f32 %v4749, 1e-05
  %v4954 = vadd.f32 %v4750, 1e-05
  %v4955 = vadd.f32 %v4751, 1e-05
  %v4956 = vadd.f32 %v4752, 1e-05
  %v4957 = vadd.f32 %v4753, 1e-05
  %v4958 = vadd.f32 %v4754, 1e-05
  %v4959 = vadd.f32 %v4755, 1e-05
  %v4960 = vadd.f32 %v4756, 1e-05
  %v4961 = vadd.f32 %v4757, 1e-05
  %v4962 = vadd.f32 %v4758, 1e-05
  %v4963 = vadd.f32 %v4759, 1e-05
  %v4964 = vadd.f32 %v4760, 1e-05
  %v4965 = vadd.f32 %v4761, 1e-05
  %v4966 = vadd.f32 %v4762, 1e-05
  %v4967 = vadd.f32 %v4763, 1e-05
  %v4968 = vadd.f32 %v4764, 1e-05
  %v4969 = vadd.f32 %v4765, 1e-05
  %v4970 = vadd.f32 %v4766, 1e-05
  %v4971 = vadd.f32 %v4767, 1e-05
  %v4972 = vadd.f32 %v4768, 1e-05
  %v4973 = vadd.f32 %v4769, 1e-05
  %v4974 = vadd.f32 %v4770, 1e-05
  %v4975 = vadd.f32 %v4771, 1e-05
  %v4976 = vadd.f32 %v4772, 1e-05
  %v4977 = vadd.f32 %v4773, 1e-05
  %v4978 = vadd.f32 %v4774, 1e-05
  %v4979 = vadd.f32 %v4775, 1e-05
  %v4980 = vadd.f32 %v4776, 1e-05
  %v4981 = vadd.f32 %v4777, 1e-05
  %v4982 = vadd.f32 %v4778, 1e-05
  %v4983 = vadd.f32 %v4779, 1e-05
  %v4984 = vadd.f32 %v4780, 1e-05
  %v4985 = vadd.f32 %v4781, 1e-05
  %v4986 = vadd.f32 %v4782, 1e-05
  %v4987 = vadd.f32 %v4783, 1e-05
  %v4988 = vadd.f32 %v4784, 1e-05
  %v4989 = vadd.f32 %v4785, 1e-05
  %v4990 = vadd.f32 %v4786, 1e-05
  %v4991 = vadd.f32 %v4787, 1e-05
  %v4992 = vadd.f32 %v4788, 1e-05
  %v4993 = vadd.f32 %v4789, 1e-05
  %v4994 = vadd.f32 %v4790, 1e-05
  %v4995 = vadd.f32 %v4791, 1e-05
  %v4996 = vadd.f32 %v4792, 1e-05
  %v4997 = vadd.f32 %v4793, 1e-05
  %v4998 = vadd.f32 %v4794, 1e-05
  %v4999 = vadd.f32 %v4795, 1e-05
  %v5000 = vadd.f32 %v4796, 1e-05
  %v5001 = vadd.f32 %v4797, 1e-05
  %v5002 = vadd.f32 %v4798, 1e-05
  %v5003 = vadd.f32 %v4799, 1e-05
  %v5004 = vadd.f32 %v4800, 1e-05
  %v5005 = vadd.f32 %v4801, 1e-05
  %v5006 = vadd.f32 %v4802, 1e-05
  %v5007 = vadd.f32 %v4803, 1e-05
  %v5008 = vadd.f32 %v4804, 1e-05
  %v5009 = vadd.f32 %v4805, 1e-05
  %v5010 = vadd.f32 %v4806, 1e-05
  %v5011 = vadd.f32 %v4807, 1e-05
  %v5012 = vadd.f32 %v4808, 1e-05
  %v5013 = vadd.f32 %v4809, 1e-05
  %v5014 = vadd.f32 %v4810, 1e-05
  %v5015 = vadd.f32 %v4811, 1e-05
  %v5016 = vadd.f32 %v4812, 1e-05
  %v5017 = vadd.f32 %v4813, 1e-05
  %v5018 = vadd.f32 %v4814, 1e-05
  %v5019 = vadd.f32 %v4815, 1e-05
  %v5020 = vadd.f32 %v4816, 1e-05
  %v5021 = vadd.f32 %v4817, 1e-05
  %v5022 = vadd.f32 %v4818, 1e-05
  %v5023 = vadd.f32 %v4819, 1e-05
  %v5024 = vadd.f32 %v4820, 1e-05
  %v5025 = vadd.f32 %v4821, 1e-05
  %v5026 = vadd.f32 %v4822, 1e-05
  %v5027 = vadd.f32 %v4823, 1e-05
  %v5028 = vadd.f32 %v4824, 1e-05
  %v5029 = vadd.f32 %v4825, 1e-05
  %v5030 = vadd.f32 %v4826, 1e-05
  %v5031 = vadd.f32 %v4827, 1e-05
  %v5032 = vadd.f32 %v4828, 1e-05
  %v5033 = vadd.f32 %v4829, 1e-05
  %v5034 = vadd.f32 %v4830, 1e-05
  %v5035 = vadd.f32 %v4831, 1e-05
  %v5036 = vadd.f32 %v4832, 1e-05
  %v5037 = vadd.f32 %v4833, 1e-05
  %v5038 = vadd.f32 %v4834, 1e-05
  %v5039 = vadd.f32 %v4835, 1e-05
  %v5040 = vadd.f32 %v4836, 1e-05
  %v5041 = vadd.f32 %v4837, 1e-05
  %v5042 = vrsqrt.pop %v4838
  %v5043 = vrsqrt.pop %v4839
  %v5044 = vrsqrt.pop %v4840
  %v5045 = vrsqrt.pop %v4841
  %v5046 = vrsqrt.pop %v4842
  %v5047 = vrsqrt.pop %v4843
  %v5048 = vrsqrt.pop %v4844
  %v5049 = vrsqrt.pop %v4845
  %v5050 = vrsqrt.pop %v4846
  %v5051 = vrsqrt.pop %v4847
  %v5052 = vrsqrt.pop %v4848
  %v5053 = vrsqrt.pop %v4849
  %v5054 = vrsqrt.pop %v4850
  %v5055 = vrsqrt.pop %v4851
  %v5056 = vrsqrt.pop %v4852
  %v5057 = vrsqrt.pop %v4853
  %v5058 = vrsqrt.pop %v4854
  %v5059 = vrsqrt.pop %v4855
  %v5060 = vrsqrt.pop %v4856
  %v5061 = vrsqrt.pop %v4857
  %v5062 = vrsqrt.pop %v4858
  %v5063 = vrsqrt.pop %v4859
  %v5064 = vrsqrt.pop %v4860
  %v5065 = vrsqrt.pop %v4861
  %v5066 = vrsqrt.pop %v4862
  %v5067 = vrsqrt.pop %v4863
  %v5068 = vrsqrt.pop %v4864
  %v5069 = vrsqrt.pop %v4865
  %v5070 = vrsqrt.pop %v4866
  %v5071 = vrsqrt.pop %v4867
  %v5072 = vrsqrt.pop %v4868
  %v5073 = vrsqrt.pop %v4869
  %v5074 = vrsqrt.pop %v4870
  %v5075 = vrsqrt.pop %v4871
  %v5076 = vrsqrt.pop %v4872
  %v5077 = vrsqrt.pop %v4873
  %v5078 = vrsqrt.pop %v4874
  %v5079 = vrsqrt.pop %v4875
  %v5080 = vrsqrt.pop %v4876
  %v5081 = vrsqrt.pop %v4877
  %v5082 = vrsqrt.pop %v4878
  %v5083 = vrsqrt.pop %v4879
  %v5084 = vrsqrt.pop %v4880
  %v5085 = vrsqrt.pop %v4881
  %v5086 = vrsqrt.pop %v4882
  %v5087 = vrsqrt.pop %v4883
  %v5088 = vrsqrt.pop %v4884
  %v5089 = vrsqrt.pop %v4885
  %v5090 = vrsqrt.pop %v4886
  %v5091 = vrsqrt.pop %v4887
  %v5092 = vrsqrt.pop %v4888
  %v5093 = vrsqrt.pop %v4889
  %v5094 = vrsqrt.pop %v4890
  %v5095 = vrsqrt.pop %v4891
  %v5096 = vrsqrt.pop %v4892
  %v5097 = vrsqrt.pop %v4893
  %v5098 = vrsqrt.pop %v4894
  %v5099 = vrsqrt.pop %v4895
  %v5100 = vrsqrt.pop %v4896
  %v5101 = vrsqrt.pop %v4897
  %v5102 = vrsqrt.pop %v4898
  %v5103 = vrsqrt.pop %v4899
  %v5104 = vrsqrt.pop %v4900
  %v5105 = vrsqrt.pop %v4901
  %v5106 = vrsqrt.pop %v4902
  %v5107 = vrsqrt.pop %v4903
  %v5108 = vrsqrt.pop %v4904
  %v5109 = vrsqrt.pop %v4905
  %v5110 = vrsqrt.pop %v4906
  %v5111 = vrsqrt.pop %v4907
  %v5112 = vrsqrt.pop %v4908
  %v5113 = vrsqrt.pop %v4909
  %v5114 = vrsqrt.pop %v4910
  %v5115 = vrsqrt.pop %v4911
  %v5116 = vrsqrt.pop %v4912
  %v5117 = vrsqrt.pop %v4913
  %v5118 = vrsqrt.pop %v4914
  %v5119 = vrsqrt.pop %v4915
  %v5120 = vrsqrt.pop %v4916
  %v5121 = vrsqrt.pop %v4917
  %v5122 = vrsqrt.pop %v4918
  %v5123 = vrsqrt.pop %v4919
  %v5124 = vrsqrt.pop %v4920
  %v5125 = vrsqrt.pop %v4921
  %v5126 = vrsqrt.pop %v4922
  %v5127 = vrsqrt.pop %v4923
  %v5128 = vrsqrt.pop %v4924
  %v5129 = vrsqrt.pop %v4925
  %v5130 = vrsqrt.pop %v4926
  %v5131 = vrsqrt.pop %v4927
  %v5132 = vrsqrt.pop %v4928
  %v5133 = vrsqrt.pop %v4929
  %v5134 = vrsqrt.pop %v4930
  %v5135 = vrsqrt.pop %v4931
  %v5136 = vrsqrt.pop %v4932
  %v5137 = vrsqrt.pop %v4933
  %v5138 = vrsqrt.pop %v4934
  %v5139 = vrsqrt.pop %v4935
  %v5140 = vrsqrt.pop %v4936
  %v5141 = vrsqrt.pop %v4937
  %v5142 = vrsqrt.pop %v4938
  %v5143 = vrsqrt.pop %v4939
  %v5144 = vrsqrt.pop %v4940
  %v5145 = vrsqrt.pop %v4941
  %v5146 = vrsqrt.pop %v4942
  %v5147 = vrsqrt.pop %v4943
  %v5148 = vrsqrt.pop %v4944
  %v5149 = vrsqrt.pop %v4945
  %v5150 = vrsqrt.pop %v4946
  %v5151 = vrsqrt.pop %v4947
  %v5152 = vrsqrt.pop %v4948
  %v5153 = vrsqrt.pop %v4949
  %v5154 = vrsqrt.pop %v4950
  %v5155 = vrsqrt.pop %v4951
  %v5156 = vrsqrt.pop %v4952
  %v5157 = vrsqrt.pop %v4953
  %v5158 = vrsqrt.pop %v4954
  %v5159 = vrsqrt.pop %v4955
  %v5160 = vrsqrt.pop %v4956
  %v5161 = vrsqrt.pop %v4957
  %v5162 = vrsqrt.pop %v4958
  %v5163 = vrsqrt.pop %v4959
  %v5164 = vrsqrt.pop %v4960
  %v5165 = vrsqrt.pop %v4961
  %v5166 = vrsqrt.pop %v4962
  %v5167 = vrsqrt.pop %v4963
  %v5168 = vrsqrt.pop %v4964
  %v5169 = vrsqrt.pop %v4965
  %v5170 = vrsqrt.pop %v4966
  %v5171 = vrsqrt.pop %v4967
  %v5172 = vrsqrt.pop %v4968
  %v5173 = vrsqrt.pop %v4969
  %v5174 = vrsqrt.pop %v4970
  %v5175 = vrsqrt.pop %v4971
  %v5176 = vrsqrt.pop %v4972
  %v5177 = vrsqrt.pop %v4973
  %v5178 = vrsqrt.pop %v4974
  %v5179 = vrsqrt.pop %v4975
  %v5180 = vrsqrt.pop %v4976
  %v5181 = vrsqrt.pop %v4977
  %v5182 = vrsqrt.pop %v4978
  %v5183 = vrsqrt.pop %v4979
  %v5184 = vrsqrt.pop %v4980
  %v5185 = vrsqrt.pop %v4981
  %v5186 = vrsqrt.pop %v4982
  %v5187 = vrsqrt.pop %v4983
  %v5188 = vrsqrt.pop %v4984
  %v5189 = vrsqrt.pop %v4985
  %v5190 = vrsqrt.pop %v4986
  %v5191 = vrsqrt.pop %v4987
  %v5192 = vrsqrt.pop %v4988
  %v5193 = vrsqrt.pop %v4989
  %v5194 = vrsqrt.pop %v4990
  %v5195 = vrsqrt.pop %v4991
  %v5196 = vrsqrt.pop %v4992
  %v5197 = vrsqrt.pop %v4993
  %v5198 = vrsqrt.pop %v4994
  %v5199 = vrsqrt.pop %v4995
  %v5200 = vrsqrt.pop %v4996
  %v5201 = vrsqrt.pop %v4997
  %v5202 = vrsqrt.pop %v4998
  %v5203 = vrsqrt.pop %v4999
  %v5204 = vrsqrt.pop %v5000
  %v5205 = vrsqrt.pop %v5001
  %v5206 = vrsqrt.pop %v5002
  %v5207 = vrsqrt.pop %v5003
  %v5208 = vrsqrt.pop %v5004
  %v5209 = vrsqrt.pop %v5005
  %v5210 = vrsqrt.pop %v5006
  %v5211 = vrsqrt.pop %v5007
  %v5212 = vrsqrt.pop %v5008
  %v5213 = vrsqrt.pop %v5009
  %v5214 = vrsqrt.pop %v5010
  %v5215 = vrsqrt.pop %v5011
  %v5216 = vrsqrt.pop %v5012
  %v5217 = vrsqrt.pop %v5013
  %v5218 = vrsqrt.pop %v5014
  %v5219 = vrsqrt.pop %v5015
  %v5220 = vrsqrt.pop %v5016
  %v5221 = vrsqrt.pop %v5017
  %v5222 = vrsqrt.pop %v5018
  %v5223 = vrsqrt.pop %v5019
  %v5224 = vrsqrt.pop %v5020
  %v5225 = vrsqrt.pop %v5021
  %v5226 = vrsqrt.pop %v5022
  %v5227 = vrsqrt.pop %v5023
  %v5228 = vrsqrt.pop %v5024
  %v5229 = vrsqrt.pop %v5025
  %v5230 = vrsqrt.pop %v5026
  %v5231 = vrsqrt.pop %v5027
  %v5232 = vrsqrt.pop %v5028
  %v5233 = vrsqrt.pop %v5029
  %v5234 = vrsqrt.pop %v5030
  %v5235 = vrsqrt.pop %v5031
  %v5236 = vrsqrt.pop %v5032
  %v5237 = vrsqrt.pop %v5033
  %v5238 = vrsqrt.pop %v5034
  %v5239 = vrsqrt.pop %v5035
  %v5240 = vrsqrt.pop %v5036
  %v5241 = vrsqrt.pop %v5037
  %v5242 = vrsqrt.pop %v5038
  %v5243 = vrsqrt.pop %v5039
  %v5244 = vrsqrt.pop %v5040
  %v5245 = vrsqrt.pop %v5041
  %v5246 = vld [vmem:[%s1] sm:$0xff]
  %v5247 = vld [vmem:[%s1 + $0x8] sm:$0xff]
  %v5248 = vld [vmem:[%s1 + $0x10] sm:$0xff]
  %v5249 = vld [vmem:[%s1 + $0x18] sm:$0xff]
  %v5250 = vld [vmem:[%s1 + $0x20] sm:$0xff]
  %v5251 = vld [vmem:[%s1 + $0x28] sm:$0xff]
  %v5252 = vld [vmem:[%s1 + $0x30] sm:$0xff]
  %v5253 = vld [vmem:[%s1 + $0x38] sm:$0xff]
  %v5254 = vld [vmem:[%s1 + $0x40] sm:$0xff]
  %v5255 = vld [vmem:[%s1 + $0x48] sm:$0xff]
  %v5256 = vld [vmem:[%s1 + $0x50] sm:$0xff]
  %v5257 = vld [vmem:[%s1 + $0x58] sm:$0xff]
  %v5258 = vld [vmem:[%s1 + $0x60] sm:$0xff]
  %v5259 = vld [vmem:[%s1 + $0x68] sm:$0xff]
  %v5260 = vld [vmem:[%s1 + $0x70] sm:$0xff]
  %v5261 = vld [vmem:[%s1 + $0x78] sm:$0xff]
  %v5262 = vld [vmem:[%s1 + $0x80] sm:$0xff]
  %v5263 = vld [vmem:[%s1 + $0x88] sm:$0xff]
  %v5264 = vld [vmem:[%s1 + $0x90] sm:$0xff]
  %v5265 = vld [vmem:[%s1 + $0x98] sm:$0xff]
  %v5266 = vld [vmem:[%s1 + $0xa0] sm:$0xff]
  %v5267 = vld [vmem:[%s1 + $0xa8] sm:$0xff]
  %v5268 = vld [vmem:[%s1 + $0xb0] sm:$0xff]
  %v5269 = vld [vmem:[%s1 + $0xb8] sm:$0xff]
  %v5270 = vld [vmem:[%s1 + $0xc0] sm:$0xff]
  %v5271 = vld [vmem:[%s1 + $0xc8] sm:$0xff]
  %v5272 = vld [vmem:[%s1 + $0xd0] sm:$0xff]
  %v5273 = vld [vmem:[%s1 + $0xd8] sm:$0xff]
  %v5274 = vld [vmem:[%s1 + $0xe0] sm:$0xff]
  %v5275 = vld [vmem:[%s1 + $0xe8] sm:$0xff]
  %v5276 = vld [vmem:[%s1 + $0xf0] sm:$0xff]
  %v5277 = vld [vmem:[%s1 + $0xf8] sm:$0xff]
  %v5278 = vld [vmem:[%s1 + $0x100] sm:$0xff]
  %v5279 = vld [vmem:[%s1 + $0x108] sm:$0xff]
  %v5280 = vld [vmem:[%s1 + $0x110] sm:$0xff]
  %v5281 = vld [vmem:[%s1 + $0x118] sm:$0xff]
  %v5282 = vld [vmem:[%s1 + $0x120] sm:$0xff]
  %v5283 = vld [vmem:[%s1 + $0x128] sm:$0xff]
  %v5284 = vld [vmem:[%s1 + $0x130] sm:$0xff]
  %v5285 = vld [vmem:[%s1 + $0x138] sm:$0xff]
  %v5286 = vld [vmem:[%s1 + $0x140] sm:$0xff]
  %v5287 = vld [vmem:[%s1 + $0x148] sm:$0xff]
  %v5288 = vld [vmem:[%s1 + $0x150] sm:$0xff]
  %v5289 = vld [vmem:[%s1 + $0x158] sm:$0xff]
  %v5290 = vld [vmem:[%s1 + $0x160] sm:$0xff]
  %v5291 = vld [vmem:[%s1 + $0x168] sm:$0xff]
  %v5292 = vld [vmem:[%s1 + $0x170] sm:$0xff]
  %v5293 = vld [vmem:[%s1 + $0x178] sm:$0xff]
  %v5294 = vld [vmem:[%s1 + $0x180] sm:$0xff]
  %v5295 = vld [vmem:[%s1 + $0x188] sm:$0xff]
  %v5296 = vld [vmem:[%s1 + $0x190] sm:$0xff]
  %v5297 = vld [vmem:[%s1 + $0x198] sm:$0xff]
  %v5298 = vld [vmem:[%s1 + $0x1a0] sm:$0xff]
  %v5299 = vld [vmem:[%s1 + $0x1a8] sm:$0xff]
  %v5300 = vld [vmem:[%s1 + $0x1b0] sm:$0xff]
  %v5301 = vld [vmem:[%s1 + $0x1b8] sm:$0xff]
  %v5302 = vld [vmem:[%s1 + $0x1c0] sm:$0xff]
  %v5303 = vld [vmem:[%s1 + $0x1c8] sm:$0xff]
  %v5304 = vld [vmem:[%s1 + $0x1d0] sm:$0xff]
  %v5305 = vld [vmem:[%s1 + $0x1d8] sm:$0xff]
  %v5306 = vld [vmem:[%s1 + $0x1e0] sm:$0xff]
  %v5307 = vld [vmem:[%s1 + $0x1e8] sm:$0xff]
  %v5308 = vld [vmem:[%s1 + $0x1f0] sm:$0xff]
  %v5309 = vld [vmem:[%s1 + $0x1f8] sm:$0xff]
  %v5310 = vld [vmem:[%s1 + $0x200] sm:$0xff]
  %v5311 = vld [vmem:[%s1 + $0x208] sm:$0xff]
  %v5312 = vld [vmem:[%s1 + $0x210] sm:$0xff]
  %v5313 = vld [vmem:[%s1 + $0x218] sm:$0xff]
  %v5314 = vld [vmem:[%s1 + $0x220] sm:$0xff]
  %v5315 = vld [vmem:[%s1 + $0x228] sm:$0xff]
  %v5316 = vld [vmem:[%s1 + $0x230] sm:$0xff]
  %v5317 = vld [vmem:[%s1 + $0x238] sm:$0xff]
  %v5318 = vld [vmem:[%s1 + $0x240] sm:$0xff]
  %v5319 = vld [vmem:[%s1 + $0x248] sm:$0xff]
  %v5320 = vld [vmem:[%s1 + $0x250] sm:$0xff]
  %v5321 = vld [vmem:[%s1 + $0x258] sm:$0xff]
  %v5322 = vld [vmem:[%s1 + $0x260] sm:$0xff]
  %v5323 = vld [vmem:[%s1 + $0x268] sm:$0xff]
  %v5324 = vld [vmem:[%s1 + $0x270] sm:$0xff]
  %v5325 = vld [vmem:[%s1 + $0x278] sm:$0xff]
  %v5326 = vld [vmem:[%s1 + $0x280] sm:$0xff]
  %v5327 = vld [vmem:[%s1 + $0x288] sm:$0xff]
  %v5328 = vld [vmem:[%s1 + $0x290] sm:$0xff]
  %v5329 = vld [vmem:[%s1 + $0x298] sm:$0xff]
  %v5330 = vld [vmem:[%s1 + $0x2a0] sm:$0xff]
  %v5331 = vld [vmem:[%s1 + $0x2a8] sm:$0xff]
  %v5332 = vld [vmem:[%s1 + $0x2b0] sm:$0xff]
  %v5333 = vld [vmem:[%s1 + $0x2b8] sm:$0xff]
  %v5334 = vld [vmem:[%s1 + $0x2c0] sm:$0xff]
  %v5335 = vld [vmem:[%s1 + $0x2c8] sm:$0xff]
  %v5336 = vld [vmem:[%s1 + $0x2d0] sm:$0xff]
  %v5337 = vld [vmem:[%s1 + $0x2d8] sm:$0xff]
  %v5338 = vld [vmem:[%s1 + $0x2e0] sm:$0xff]
  %v5339 = vld [vmem:[%s1 + $0x2e8] sm:$0xff]
  %v5340 = vld [vmem:[%s1 + $0x2f0] sm:$0xff]
  %v5341 = vld [vmem:[%s1 + $0x2f8] sm:$0xff]
  %v5342 = vld [vmem:[%s1 + $0x300] sm:$0xff]
  %v5343 = vld [vmem:[%s1 + $0x308] sm:$0xff]
  %v5344 = vld [vmem:[%s1 + $0x310] sm:$0xff]
  %v5345 = vld [vmem:[%s1 + $0x318] sm:$0xff]
  %v5346 = vld [vmem:[%s1 + $0x320] sm:$0xff]
  %v5347 = vld [vmem:[%s1 + $0x328] sm:$0xff]
  %v5348 = vld [vmem:[%s1 + $0x330] sm:$0xff]
  %v5349 = vld [vmem:[%s1 + $0x338] sm:$0xff]
  %v5350 = vld [vmem:[%s1 + $0x340] sm:$0xff]
  %v5351 = vld [vmem:[%s1 + $0x348] sm:$0xff]
  %v5352 = vld [vmem:[%s1 + $0x350] sm:$0xff]
  %v5353 = vld [vmem:[%s1 + $0x358] sm:$0xff]
  %v5354 = vld [vmem:[%s1 + $0x360] sm:$0xff]
  %v5355 = vld [vmem:[%s1 + $0x368] sm:$0xff]
  %v5356 = vld [vmem:[%s1 + $0x370] sm:$0xff]
  %v5357 = vld [vmem:[%s1 + $0x378] sm:$0xff]
  %v5358 = vld [vmem:[%s1 + $0x380] sm:$0xff]
  %v5359 = vld [vmem:[%s1 + $0x388] sm:$0xff]
  %v5360 = vld [vmem:[%s1 + $0x390] sm:$0xff]
  %v5361 = vld [vmem:[%s1 + $0x398] sm:$0xff]
  %v5362 = vld [vmem:[%s1 + $0x3a0] sm:$0xff]
  %v5363 = vld [vmem:[%s1 + $0x3a8] sm:$0xff]
  %v5364 = vld [vmem:[%s1 + $0x3b0] sm:$0xff]
  %v5365 = vld [vmem:[%s1 + $0x3b8] sm:$0xff]
  %v5366 = vld [vmem:[%s1 + $0x3c0] sm:$0xff]
  %v5367 = vld [vmem:[%s1 + $0x3c8] sm:$0xff]
  %v5368 = vld [vmem:[%s1 + $0x3d0] sm:$0xff]
  %v5369 = vld [vmem:[%s1 + $0x3d8] sm:$0xff]
  %v5370 = vld [vmem:[%s1 + $0x3e0] sm:$0xff]
  %v5371 = vld [vmem:[%s1 + $0x3e8] sm:$0xff]
  %v5372 = vld [vmem:[%s1 + $0x3f0] sm:$0xff]
  %v5373 = vld [vmem:[%s1 + $0x3f8] sm:$0xff]
  %v5374 = vld [vmem:[%s1 + $0x400] sm:$0xff]
  %v5375 = vld [vmem:[%s1 + $0x408] sm:$0xff]
  %v5376 = vld [vmem:[%s1 + $0x410] sm:$0xff]
  %v5377 = vld [vmem:[%s1 + $0x418] sm:$0xff]
  %v5378 = vld [vmem:[%s1 + $0x420] sm:$0xff]
  %v5379 = vld [vmem:[%s1 + $0x428] sm:$0xff]
  %v5380 = vld [vmem:[%s1 + $0x430] sm:$0xff]
  %v5381 = vld [vmem:[%s1 + $0x438] sm:$0xff]
  %v5382 = vld [vmem:[%s1 + $0x440] sm:$0xff]
  %v5383 = vld [vmem:[%s1 + $0x448] sm:$0xff]
  %v5384 = vld [vmem:[%s1 + $0x450] sm:$0xff]
  %v5385 = vld [vmem:[%s1 + $0x458] sm:$0xff]
  %v5386 = vld [vmem:[%s1 + $0x460] sm:$0xff]
  %v5387 = vld [vmem:[%s1 + $0x468] sm:$0xff]
  %v5388 = vld [vmem:[%s1 + $0x470] sm:$0xff]
  %v5389 = vld [vmem:[%s1 + $0x478] sm:$0xff]
  %v5390 = vld [vmem:[%s1 + $0x480] sm:$0xff]
  %v5391 = vld [vmem:[%s1 + $0x488] sm:$0xff]
  %v5392 = vld [vmem:[%s1 + $0x490] sm:$0xff]
  %v5393 = vld [vmem:[%s1 + $0x498] sm:$0xff]
  %v5394 = vld [vmem:[%s1 + $0x4a0] sm:$0xff]
  %v5395 = vld [vmem:[%s1 + $0x4a8] sm:$0xff]
  %v5396 = vld [vmem:[%s1 + $0x4b0] sm:$0xff]
  %v5397 = vld [vmem:[%s1 + $0x4b8] sm:$0xff]
  %v5398 = vld [vmem:[%s1 + $0x4c0] sm:$0xff]
  %v5399 = vld [vmem:[%s1 + $0x4c8] sm:$0xff]
  %v5400 = vld [vmem:[%s1 + $0x4d0] sm:$0xff]
  %v5401 = vld [vmem:[%s1 + $0x4d8] sm:$0xff]
  %v5402 = vld [vmem:[%s1 + $0x4e0] sm:$0xff]
  %v5403 = vld [vmem:[%s1 + $0x4e8] sm:$0xff]
  %v5404 = vld [vmem:[%s1 + $0x4f0] sm:$0xff]
  %v5405 = vld [vmem:[%s1 + $0x4f8] sm:$0xff]
  %v5406 = vld [vmem:[%s1 + $0x500] sm:$0xff]
  %v5407 = vld [vmem:[%s1 + $0x508] sm:$0xff]
  %v5408 = vld [vmem:[%s1 + $0x510] sm:$0xff]
  %v5409 = vld [vmem:[%s1 + $0x518] sm:$0xff]
  %v5410 = vld [vmem:[%s1 + $0x520] sm:$0xff]
  %v5411 = vld [vmem:[%s1 + $0x528] sm:$0xff]
  %v5412 = vld [vmem:[%s1 + $0x530] sm:$0xff]
  %v5413 = vld [vmem:[%s1 + $0x538] sm:$0xff]
  %v5414 = vld [vmem:[%s1 + $0x540] sm:$0xff]
  %v5415 = vld [vmem:[%s1 + $0x548] sm:$0xff]
  %v5416 = vld [vmem:[%s1 + $0x550] sm:$0xff]
  %v5417 = vld [vmem:[%s1 + $0x558] sm:$0xff]
  %v5418 = vld [vmem:[%s1 + $0x560] sm:$0xff]
  %v5419 = vld [vmem:[%s1 + $0x568] sm:$0xff]
  %v5420 = vld [vmem:[%s1 + $0x570] sm:$0xff]
  %v5421 = vld [vmem:[%s1 + $0x578] sm:$0xff]
  %v5422 = vld [vmem:[%s1 + $0x580] sm:$0xff]
  %v5423 = vld [vmem:[%s1 + $0x588] sm:$0xff]
  %v5424 = vld [vmem:[%s1 + $0x590] sm:$0xff]
  %v5425 = vld [vmem:[%s1 + $0x598] sm:$0xff]
  %v5426 = vld [vmem:[%s1 + $0x5a0] sm:$0xff]
  %v5427 = vld [vmem:[%s1 + $0x5a8] sm:$0xff]
  %v5428 = vld [vmem:[%s1 + $0x5b0] sm:$0xff]
  %v5429 = vld [vmem:[%s1 + $0x5b8] sm:$0xff]
  %v5430 = vld [vmem:[%s1 + $0x5c0] sm:$0xff]
  %v5431 = vld [vmem:[%s1 + $0x5c8] sm:$0xff]
  %v5432 = vld [vmem:[%s1 + $0x5d0] sm:$0xff]
  %v5433 = vld [vmem:[%s1 + $0x5d8] sm:$0xff]
  %v5434 = vld [vmem:[%s1 + $0x5e0] sm:$0xff]
  %v5435 = vld [vmem:[%s1 + $0x5e8] sm:$0xff]
  %v5436 = vld [vmem:[%s1 + $0x5f0] sm:$0xff]
  %v5437 = vld [vmem:[%s1 + $0x5f8] sm:$0xff]
  %v5438 = vld [vmem:[%s1 + $0x600] sm:$0xff]
  %v5439 = vld [vmem:[%s1 + $0x608] sm:$0xff]
  %v5440 = vld [vmem:[%s1 + $0x610] sm:$0xff]
  %v5441 = vld [vmem:[%s1 + $0x618] sm:$0xff]
  %v5442 = vld [vmem:[%s1 + $0x620] sm:$0xff]
  %v5443 = vld [vmem:[%s1 + $0x628] sm:$0xff]
  %v5444 = vld [vmem:[%s1 + $0x630] sm:$0xff]
  %v5445 = vld [vmem:[%s1 + $0x638] sm:$0xff]
  %v5446 = vld [vmem:[%s1 + $0x640] sm:$0xff]
  %v5447 = vld [vmem:[%s1 + $0x648] sm:$0xff]
  %v5448 = vld [vmem:[%s1 + $0x650] sm:$0xff]
  %v5449 = vld [vmem:[%s1 + $0x658] sm:$0xff]
  %v5450 = vmul.f32 %v5246, %v5042
  %v5451 = vmul.f32 %v5247, %v5043
  %v5452 = vmul.f32 %v5248, %v5044
  %v5453 = vmul.f32 %v5249, %v5045
  %v5454 = vmul.f32 %v5250, %v5046
  %v5455 = vmul.f32 %v5251, %v5047
  %v5456 = vmul.f32 %v5252, %v5048
  %v5457 = vmul.f32 %v5253, %v5049
  %v5458 = vmul.f32 %v5254, %v5050
  %v5459 = vmul.f32 %v5255, %v5051
  %v5460 = vmul.f32 %v5256, %v5052
  %v5461 = vmul.f32 %v5257, %v5053
  %v5462 = vmul.f32 %v5258, %v5054
  %v5463 = vmul.f32 %v5259, %v5055
  %v5464 = vmul.f32 %v5260, %v5056
  %v5465 = vmul.f32 %v5261, %v5057
  %v5466 = vmul.f32 %v5262, %v5058
  %v5467 = vmul.f32 %v5263, %v5059
  %v5468 = vmul.f32 %v5264, %v5060
  %v5469 = vmul.f32 %v5265, %v5061
  %v5470 = vmul.f32 %v5266, %v5062
  %v5471 = vmul.f32 %v5267, %v5063
  %v5472 = vmul.f32 %v5268, %v5064
  %v5473 = vmul.f32 %v5269, %v5065
  %v5474 = vmul.f32 %v5270, %v5066
  %v5475 = vmul.f32 %v5271, %v5067
  %v5476 = vmul.f32 %v5272, %v5068
  %v5477 = vmul.f32 %v5273, %v5069
  %v5478 = vmul.f32 %v5274, %v5070
  %v5479 = vmul.f32 %v5275, %v5071
  %v5480 = vmul.f32 %v5276, %v5072
  %v5481 = vmul.f32 %v5277, %v5073
  %v5482 = vmul.f32 %v5278, %v5074
  %v5483 = vmul.f32 %v5279, %v5075
  %v5484 = vmul.f32 %v5280, %v5076
  %v5485 = vmul.f32 %v5281, %v5077
  %v5486 = vmul.f32 %v5282, %v5078
  %v5487 = vmul.f32 %v5283, %v5079
  %v5488 = vmul.f32 %v5284, %v5080
  %v5489 = vmul.f32 %v5285, %v5081
  %v5490 = vmul.f32 %v5286, %v5082
  %v5491 = vmul.f32 %v5287, %v5083
  %v5492 = vmul.f32 %v5288, %v5084
  %v5493 = vmul.f32 %v5289, %v5085
  %v5494 = vmul.f32 %v5290, %v5086
  %v5495 = vmul.f32 %v5291, %v5087
  %v5496 = vmul.f32 %v5292, %v5088
  %v5497 = vmul.f32 %v5293, %v5089
  %v5498 = vmul.f32 %v5294, %v5090
  %v5499 = vmul.f32 %v5295, %v5091
  %v5500 = vmul.f32 %v5296, %v5092
  %v5501 = vmul.f32 %v5297, %v5093
  %v5502 = vmul.f32 %v5298, %v5094
  %v5503 = vmul.f32 %v5299, %v5095
  %v5504 = vmul.f32 %v5300, %v5096
  %v5505 = vmul.f32 %v5301, %v5097
  %v5506 = vmul.f32 %v5302, %v5098
  %v5507 = vmul.f32 %v5303, %v5099
  %v5508 = vmul.f32 %v5304, %v5100
  %v5509 = vmul.f32 %v5305, %v5101
  %v5510 = vmul.f32 %v5306, %v5102
  %v5511 = vmul.f32 %v5307, %v5103
  %v5512 = vmul.f32 %v5308, %v5104
  %v5513 = vmul.f32 %v5309, %v5105
  %v5514 = vmul.f32 %v5310, %v5106
  %v5515 = vmul.f32 %v5311, %v5107
  %v5516 = vmul.f32 %v5312, %v5108
  %v5517 = vmul.f32 %v5313, %v5109
  %v5518 = vmul.f32 %v5314, %v5110
  %v5519 = vmul.f32 %v5315, %v5111
  %v5520 = vmul.f32 %v5316, %v5112
  %v5521 = vmul.f32 %v5317, %v5113
  %v5522 = vmul.f32 %v5318, %v5114
  %v5523 = vmul.f32 %v5319, %v5115
  %v5524 = vmul.f32 %v5320, %v5116
  %v5525 = vmul.f32 %v5321, %v5117
  %v5526 = vmul.f32 %v5322, %v5118
  %v5527 = vmul.f32 %v5323, %v5119
  %v5528 = vmul.f32 %v5324, %v5120
  %v5529 = vmul.f32 %v5325, %v5121
  %v5530 = vmul.f32 %v5326, %v5122
  %v5531 = vmul.f32 %v5327, %v5123
  %v5532 = vmul.f32 %v5328, %v5124
  %v5533 = vmul.f32 %v5329, %v5125
  %v5534 = vmul.f32 %v5330, %v5126
  %v5535 = vmul.f32 %v5331, %v5127
  %v5536 = vmul.f32 %v5332, %v5128
  %v5537 = vmul.f32 %v5333, %v5129
  %v5538 = vmul.f32 %v5334, %v5130
  %v5539 = vmul.f32 %v5335, %v5131
  %v5540 = vmul.f32 %v5336, %v5132
  %v5541 = vmul.f32 %v5337, %v5133
  %v5542 = vmul.f32 %v5338, %v5134
  %v5543 = vmul.f32 %v5339, %v5135
  %v5544 = vmul.f32 %v5340, %v5136
  %v5545 = vmul.f32 %v5341, %v5137
  %v5546 = vmul.f32 %v5342, %v5138
  %v5547 = vmul.f32 %v5343, %v5139
  %v5548 = vmul.f32 %v5344, %v5140
  %v5549 = vmul.f32 %v5345, %v5141
  %v5550 = vmul.f32 %v5346, %v5142
  %v5551 = vmul.f32 %v5347, %v5143
  %v5552 = vmul.f32 %v5348, %v5144
  %v5553 = vmul.f32 %v5349, %v5145
  %v5554 = vmul.f32 %v5350, %v5146
  %v5555 = vmul.f32 %v5351, %v5147
  %v5556 = vmul.f32 %v5352, %v5148
  %v5557 = vmul.f32 %v5353, %v5149
  %v5558 = vmul.f32 %v5354, %v5150
  %v5559 = vmul.f32 %v5355, %v5151
  %v5560 = vmul.f32 %v5356, %v5152
  %v5561 = vmul.f32 %v5357, %v5153
  %v5562 = vmul.f32 %v5358, %v5154
  %v5563 = vmul.f32 %v5359, %v5155
  %v5564 = vmul.f32 %v5360, %v5156
  %v5565 = vmul.f32 %v5361, %v5157
  %v5566 = vmul.f32 %v5362, %v5158
  %v5567 = vmul.f32 %v5363, %v5159
  %v5568 = vmul.f32 %v5364, %v5160
  %v5569 = vmul.f32 %v5365, %v5161
  %v5570 = vmul.f32 %v5366, %v5162
  %v5571 = vmul.f32 %v5367, %v5163
  %v5572 = vmul.f32 %v5368, %v5164
  %v5573 = vmul.f32 %v5369, %v5165
  %v5574 = vmul.f32 %v5370, %v5166
  %v5575 = vmul.f32 %v5371, %v5167
  %v5576 = vmul.f32 %v5372, %v5168
  %v5577 = vmul.f32 %v5373, %v5169
  %v5578 = vmul.f32 %v5374, %v5170
  %v5579 = vmul.f32 %v5375, %v5171
  %v5580 = vmul.f32 %v5376, %v5172
  %v5581 = vmul.f32 %v5377, %v5173
  %v5582 = vmul.f32 %v5378, %v5174
  %v5583 = vmul.f32 %v5379, %v5175
  %v5584 = vmul.f32 %v5380, %v5176
  %v5585 = vmul.f32 %v5381, %v5177
  %v5586 = vmul.f32 %v5382, %v5178
  %v5587 = vmul.f32 %v5383, %v5179
  %v5588 = vmul.f32 %v5384, %v5180
  %v5589 = vmul.f32 %v5385, %v5181
  %v5590 = vmul.f32 %v5386, %v5182
  %v5591 = vmul.f32 %v5387, %v5183
  %v5592 = vmul.f32 %v5388, %v5184
  %v5593 = vmul.f32 %v5389, %v5185
  %v5594 = vmul.f32 %v5390, %v5186
  %v5595 = vmul.f32 %v5391, %v5187
  %v5596 = vmul.f32 %v5392, %v5188
  %v5597 = vmul.f32 %v5393, %v5189
  %v5598 = vmul.f32 %v5394, %v5190
  %v5599 = vmul.f32 %v5395, %v5191
  %v5600 = vmul.f32 %v5396, %v5192
  %v5601 = vmul.f32 %v5397, %v5193
  %v5602 = vmul.f32 %v5398, %v5194
  %v5603 = vmul.f32 %v5399, %v5195
  %v5604 = vmul.f32 %v5400, %v5196
  %v5605 = vmul.f32 %v5401, %v5197
  %v5606 = vmul.f32 %v5402, %v5198
  %v5607 = vmul.f32 %v5403, %v5199
  %v5608 = vmul.f32 %v5404, %v5200
  %v5609 = vmul.f32 %v5405, %v5201
  %v5610 = vmul.f32 %v5406, %v5202
  %v5611 = vmul.f32 %v5407, %v5203
  %v5612 = vmul.f32 %v5408, %v5204
  %v5613 = vmul.f32 %v5409, %v5205
  %v5614 = vmul.f32 %v5410, %v5206
  %v5615 = vmul.f32 %v5411, %v5207
  %v5616 = vmul.f32 %v5412, %v5208
  %v5617 = vmul.f32 %v5413, %v5209
  %v5618 = vmul.f32 %v5414, %v5210
  %v5619 = vmul.f32 %v5415, %v5211
  %v5620 = vmul.f32 %v5416, %v5212
  %v5621 = vmul.f32 %v5417, %v5213
  %v5622 = vmul.f32 %v5418, %v5214
  %v5623 = vmul.f32 %v5419, %v5215
  %v5624 = vmul.f32 %v5420, %v5216
  %v5625 = vmul.f32 %v5421, %v5217
  %v5626 = vmul.f32 %v5422, %v5218
  %v5627 = vmul.f32 %v5423, %v5219
  %v5628 = vmul.f32 %v5424, %v5220
  %v5629 = vmul.f32 %v5425, %v5221
  %v5630 = vmul.f32 %v5426, %v5222
  %v5631 = vmul.f32 %v5427, %v5223
  %v5632 = vmul.f32 %v5428, %v5224
  %v5633 = vmul.f32 %v5429, %v5225
  %v5634 = vmul.f32 %v5430, %v5226
  %v5635 = vmul.f32 %v5431, %v5227
  %v5636 = vmul.f32 %v5432, %v5228
  %v5637 = vmul.f32 %v5433, %v5229
  %v5638 = vmul.f32 %v5434, %v5230
  %v5639 = vmul.f32 %v5435, %v5231
  %v5640 = vmul.f32 %v5436, %v5232
  %v5641 = vmul.f32 %v5437, %v5233
  %v5642 = vmul.f32 %v5438, %v5234
  %v5643 = vmul.f32 %v5439, %v5235
  %v5644 = vmul.f32 %v5440, %v5236
  %v5645 = vmul.f32 %v5441, %v5237
  %v5646 = vmul.f32 %v5442, %v5238
  %v5647 = vmul.f32 %v5443, %v5239
  %v5648 = vmul.f32 %v5444, %v5240
  %v5649 = vmul.f32 %v5445, %v5241
  %v5650 = vmul.f32 %v5446, %v5242
  %v5651 = vmul.f32 %v5447, %v5243
  %v5652 = vmul.f32 %v5448, %v5244
  %v5653 = vmul.f32 %v5449, %v5245
  %v5654 = vmul.f32 %v3818, %v5450
  %v5655 = vmul.f32 %v3819, %v5451
  %v5656 = vmul.f32 %v3820, %v5452
  %v5657 = vmul.f32 %v3821, %v5453
  %v5658 = vmul.f32 %v3822, %v5454
  %v5659 = vmul.f32 %v3823, %v5455
  %v5660 = vmul.f32 %v3824, %v5456
  %v5661 = vmul.f32 %v3825, %v5457
  %v5662 = vmul.f32 %v3826, %v5458
  %v5663 = vmul.f32 %v3827, %v5459
  %v5664 = vmul.f32 %v3828, %v5460
  %v5665 = vmul.f32 %v3829, %v5461
  %v5666 = vmul.f32 %v3830, %v5462
  %v5667 = vmul.f32 %v3831, %v5463
  %v5668 = vmul.f32 %v3832, %v5464
  %v5669 = vmul.f32 %v3833, %v5465
  %v5670 = vmul.f32 %v3834, %v5466
  %v5671 = vmul.f32 %v3835, %v5467
  %v5672 = vmul.f32 %v3836, %v5468
  %v5673 = vmul.f32 %v3837, %v5469
  %v5674 = vmul.f32 %v3838, %v5470
  %v5675 = vmul.f32 %v3839, %v5471
  %v5676 = vmul.f32 %v3840, %v5472
  %v5677 = vmul.f32 %v3841, %v5473
  %v5678 = vmul.f32 %v3842, %v5474
  %v5679 = vmul.f32 %v3843, %v5475
  %v5680 = vmul.f32 %v3844, %v5476
  %v5681 = vmul.f32 %v3845, %v5477
  %v5682 = vmul.f32 %v3846, %v5478
  %v5683 = vmul.f32 %v3847, %v5479
  %v5684 = vmul.f32 %v3848, %v5480
  %v5685 = vmul.f32 %v3849, %v5481
  %v5686 = vmul.f32 %v3850, %v5482
  %v5687 = vmul.f32 %v3851, %v5483
  %v5688 = vmul.f32 %v3852, %v5484
  %v5689 = vmul.f32 %v3853, %v5485
  %v5690 = vmul.f32 %v3854, %v5486
  %v5691 = vmul.f32 %v3855, %v5487
  %v5692 = vmul.f32 %v3856, %v5488
  %v5693 = vmul.f32 %v3857, %v5489
  %v5694 = vmul.f32 %v3858, %v5490
  %v5695 = vmul.f32 %v3859, %v5491
  %v5696 = vmul.f32 %v3860, %v5492
  %v5697 = vmul.f32 %v3861, %v5493
  %v5698 = vmul.f32 %v3862, %v5494
  %v5699 = vmul.f32 %v3863, %v5495
  %v5700 = vmul.f32 %v3864, %v5496
  %v5701 = vmul.f32 %v3865, %v5497
  %v5702 = vmul.f32 %v3866, %v5498
  %v5703 = vmul.f32 %v3867, %v5499
  %v5704 = vmul.f32 %v3868, %v5500
  %v5705 = vmul.f32 %v3869, %v5501
  %v5706 = vmul.f32 %v3870, %v5502
  %v5707 = vmul.f32 %v3871, %v5503
  %v5708 = vmul.f32 %v3872, %v5504
  %v5709 = vmul.f32 %v3873, %v5505
  %v5710 = vmul.f32 %v3874, %v5506
  %v5711 = vmul.f32 %v3875, %v5507
  %v5712 = vmul.f32 %v3876, %v5508
  %v5713 = vmul.f32 %v3877, %v5509
  %v5714 = vmul.f32 %v3878, %v5510
  %v5715 = vmul.f32 %v3879, %v5511
  %v5716 = vmul.f32 %v3880, %v5512
  %v5717 = vmul.f32 %v3881, %v5513
  %v5718 = vmul.f32 %v3882, %v5514
  %v5719 = vmul.f32 %v3883, %v5515
  %v5720 = vmul.f32 %v3884, %v5516
  %v5721 = vmul.f32 %v3885, %v5517
  %v5722 = vmul.f32 %v3886, %v5518
  %v5723 = vmul.f32 %v3887, %v5519
  %v5724 = vmul.f32 %v3888, %v5520
  %v5725 = vmul.f32 %v3889, %v5521
  %v5726 = vmul.f32 %v3890, %v5522
  %v5727 = vmul.f32 %v3891, %v5523
  %v5728 = vmul.f32 %v3892, %v5524
  %v5729 = vmul.f32 %v3893, %v5525
  %v5730 = vmul.f32 %v3894, %v5526
  %v5731 = vmul.f32 %v3895, %v5527
  %v5732 = vmul.f32 %v3896, %v5528
  %v5733 = vmul.f32 %v3897, %v5529
  %v5734 = vmul.f32 %v3898, %v5530
  %v5735 = vmul.f32 %v3899, %v5531
  %v5736 = vmul.f32 %v3900, %v5532
  %v5737 = vmul.f32 %v3901, %v5533
  %v5738 = vmul.f32 %v3902, %v5534
  %v5739 = vmul.f32 %v3903, %v5535
  %v5740 = vmul.f32 %v3904, %v5536
  %v5741 = vmul.f32 %v3905, %v5537
  %v5742 = vmul.f32 %v3906, %v5538
  %v5743 = vmul.f32 %v3907, %v5539
  %v5744 = vmul.f32 %v3908, %v5540
  %v5745 = vmul.f32 %v3909, %v5541
  %v5746 = vmul.f32 %v3910, %v5542
  %v5747 = vmul.f32 %v3911, %v5543
  %v5748 = vmul.f32 %v3912, %v5544
  %v5749 = vmul.f32 %v3913, %v5545
  %v5750 = vmul.f32 %v3914, %v5546
  %v5751 = vmul.f32 %v3915, %v5547
  %v5752 = vmul.f32 %v3916, %v5548
  %v5753 = vmul.f32 %v3917, %v5549
  %v5754 = vmul.f32 %v3918, %v5550
  %v5755 = vmul.f32 %v3919, %v5551
  %v5756 = vmul.f32 %v3920, %v5552
  %v5757 = vmul.f32 %v3921, %v5553
  %v5758 = vmul.f32 %v3922, %v5554
  %v5759 = vmul.f32 %v3923, %v5555
  %v5760 = vmul.f32 %v3924, %v5556
  %v5761 = vmul.f32 %v3925, %v5557
  %v5762 = vmul.f32 %v3926, %v5558
  %v5763 = vmul.f32 %v3927, %v5559
  %v5764 = vmul.f32 %v3928, %v5560
  %v5765 = vmul.f32 %v3929, %v5561
  %v5766 = vmul.f32 %v3930, %v5562
  %v5767 = vmul.f32 %v3931, %v5563
  %v5768 = vmul.f32 %v3932, %v5564
  %v5769 = vmul.f32 %v3933, %v5565
  %v5770 = vmul.f32 %v3934, %v5566
  %v5771 = vmul.f32 %v3935, %v5567
  %v5772 = vmul.f32 %v3936, %v5568
  %v5773 = vmul.f32 %v3937, %v5569
  %v5774 = vmul.f32 %v3938, %v5570
  %v5775 = vmul.f32 %v3939, %v5571
  %v5776 = vmul.f32 %v3940, %v5572
  %v5777 = vmul.f32 %v3941, %v5573
  %v5778 = vmul.f32 %v3942, %v5574
  %v5779 = vmul.f32 %v3943, %v5575
  %v5780 = vmul.f32 %v3944, %v5576
  %v5781 = vmul.f32 %v3945, %v5577
  %v5782 = vmul.f32 %v3946, %v5578
  %v5783 = vmul.f32 %v3947, %v5579
  %v5784 = vmul.f32 %v3948, %v5580
  %v5785 = vmul.f32 %v3949, %v5581
  %v5786 = vmul.f32 %v3950, %v5582
  %v5787 = vmul.f32 %v3951, %v5583
  %v5788 = vmul.f32 %v3952, %v5584
  %v5789 = vmul.f32 %v3953, %v5585
  %v5790 = vmul.f32 %v3954, %v5586
  %v5791 = vmul.f32 %v3955, %v5587
  %v5792 = vmul.f32 %v3956, %v5588
  %v5793 = vmul.f32 %v3957, %v5589
  %v5794 = vmul.f32 %v3958, %v5590
  %v5795 = vmul.f32 %v3959, %v5591
  %v5796 = vmul.f32 %v3960, %v5592
  %v5797 = vmul.f32 %v3961, %v5593
  %v5798 = vmul.f32 %v3962, %v5594
  %v5799 = vmul.f32 %v3963, %v5595
  %v5800 = vmul.f32 %v3964, %v5596
  %v5801 = vmul.f32 %v3965, %v5597
  %v5802 = vmul.f32 %v3966, %v5598
  %v5803 = vmul.f32 %v3967, %v5599
  %v5804 = vmul.f32 %v3968, %v5600
  %v5805 = vmul.f32 %v3969, %v5601
  %v5806 = vmul.f32 %v3970, %v5602
  %v5807 = vmul.f32 %v3971, %v5603
  %v5808 = vmul.f32 %v3972, %v5604
  %v5809 = vmul.f32 %v3973, %v5605
  %v5810 = vmul.f32 %v3974, %v5606
  %v5811 = vmul.f32 %v3975, %v5607
  %v5812 = vmul.f32 %v3976, %v5608
  %v5813 = vmul.f32 %v3977, %v5609
  %v5814 = vmul.f32 %v3978, %v5610
  %v5815 = vmul.f32 %v3979, %v5611
  %v5816 = vmul.f32 %v3980, %v5612
  %v5817 = vmul.f32 %v3981, %v5613
  %v5818 = vmul.f32 %v3982, %v5614
  %v5819 = vmul.f32 %v3983, %v5615
  %v5820 = vmul.f32 %v3984, %v5616
  %v5821 = vmul.f32 %v3985, %v5617
  %v5822 = vmul.f32 %v3986, %v5618
  %v5823 = vmul.f32 %v3987, %v5619
  %v5824 = vmul.f32 %v3988, %v5620
  %v5825 = vmul.f32 %v3989, %v5621
  %v5826 = vmul.f32 %v3990, %v5622
  %v5827 = vmul.f32 %v3991, %v5623
  %v5828 = vmul.f32 %v3992, %v5624
  %v5829 = vmul.f32 %v3993, %v5625
  %v5830 = vmul.f32 %v3994, %v5626
  %v5831 = vmul.f32 %v3995, %v5627
  %v5832 = vmul.f32 %v3996, %v5628
  %v5833 = vmul.f32 %v3997, %v5629
  %v5834 = vmul.f32 %v3998, %v5630
  %v5835 = vmul.f32 %v3999, %v5631
  %v5836 = vmul.f32 %v4000, %v5632
  %v5837 = vmul.f32 %v4001, %v5633
  %v5838 = vmul.f32 %v4002, %v5634
  %v5839 = vmul.f32 %v4003, %v5635
  %v5840 = vmul.f32 %v4004, %v5636
  %v5841 = vmul.f32 %v4005, %v5637
  %v5842 = vmul.f32 %v4006, %v5638
  %v5843 = vmul.f32 %v4007, %v5639
  %v5844 = vmul.f32 %v4008, %v5640
  %v5845 = vmul.f32 %v4009, %v5641
  %v5846 = vmul.f32 %v4010, %v5642
  %v5847 = vmul.f32 %v4011, %v5643
  %v5848 = vmul.f32 %v4012, %v5644
  %v5849 = vmul.f32 %v4013, %v5645
  %v5850 = vmul.f32 %v4014, %v5646
  %v5851 = vmul.f32 %v4015, %v5647
  %v5852 = vmul.f32 %v4016, %v5648
  %v5853 = vmul.f32 %v4017, %v5649
  %v5854 = vmul.f32 %v4018, %v5650
  %v5855 = vmul.f32 %v4019, %v5651
  %v5856 = vmul.f32 %v4020, %v5652
  %v5857 = vmul.f32 %v4021, %v5653
  %6062 = vrot.lane.b32.xlu0 %v5654, 1
  %v6063 = vpop.permute.xlu0 %6062
  %6064 = vrot.lane.b32.xlu0 %v5655, 1
  %v6065 = vpop.permute.xlu0 %6064
  %6066 = vrot.lane.b32.xlu0 %v5656, 1
  %v6067 = vpop.permute.xlu0 %6066
  %6068 = vrot.lane.b32.xlu0 %v5657, 1
  %v6069 = vpop.permute.xlu0 %6068
  %6070 = vrot.lane.b32.xlu0 %v5658, 1
  %v6071 = vpop.permute.xlu0 %6070
  %6072 = vrot.lane.b32.xlu0 %v5659, 1
  %v6073 = vpop.permute.xlu0 %6072
  %6074 = vrot.lane.b32.xlu0 %v5660, 1
  %v6075 = vpop.permute.xlu0 %6074
  %6076 = vrot.lane.b32.xlu0 %v5661, 1
  %v6077 = vpop.permute.xlu0 %6076
  %6078 = vrot.lane.b32.xlu0 %v5662, 1
  %v6079 = vpop.permute.xlu0 %6078
  %6080 = vrot.lane.b32.xlu0 %v5663, 1
  %v6081 = vpop.permute.xlu0 %6080
  %6082 = vrot.lane.b32.xlu0 %v5664, 1
  %v6083 = vpop.permute.xlu0 %6082
  %6084 = vrot.lane.b32.xlu0 %v5665, 1
  %v6085 = vpop.permute.xlu0 %6084
  %6086 = vrot.lane.b32.xlu0 %v5666, 1
  %v6087 = vpop.permute.xlu0 %6086
  %6088 = vrot.lane.b32.xlu0 %v5667, 1
  %v6089 = vpop.permute.xlu0 %6088
  %6090 = vrot.lane.b32.xlu0 %v5668, 1
  %v6091 = vpop.permute.xlu0 %6090
  %6092 = vrot.lane.b32.xlu0 %v5669, 1
  %v6093 = vpop.permute.xlu0 %6092
  %6094 = vrot.lane.b32.xlu0 %v5670, 1
  %v6095 = vpop.permute.xlu0 %6094
  %6096 = vrot.lane.b32.xlu0 %v5671, 1
  %v6097 = vpop.permute.xlu0 %6096
  %6098 = vrot.lane.b32.xlu0 %v5672, 1
  %v6099 = vpop.permute.xlu0 %6098
  %6100 = vrot.lane.b32.xlu0 %v5673, 1
  %v6101 = vpop.permute.xlu0 %6100
  %6102 = vrot.lane.b32.xlu0 %v5674, 1
  %v6103 = vpop.permute.xlu0 %6102
  %6104 = vrot.lane.b32.xlu0 %v5675, 1
  %v6105 = vpop.permute.xlu0 %6104
  %6106 = vrot.lane.b32.xlu0 %v5676, 1
  %v6107 = vpop.permute.xlu0 %6106
  %6108 = vrot.lane.b32.xlu0 %v5677, 1
  %v6109 = vpop.permute.xlu0 %6108
  %6110 = vrot.lane.b32.xlu0 %v5678, 1
  %v6111 = vpop.permute.xlu0 %6110
  %6112 = vrot.lane.b32.xlu0 %v5679, 1
  %v6113 = vpop.permute.xlu0 %6112
  %6114 = vrot.lane.b32.xlu0 %v5680, 1
  %v6115 = vpop.permute.xlu0 %6114
  %6116 = vrot.lane.b32.xlu0 %v5681, 1
  %v6117 = vpop.permute.xlu0 %6116
  %6118 = vrot.lane.b32.xlu0 %v5682, 1
  %v6119 = vpop.permute.xlu0 %6118
  %6120 = vrot.lane.b32.xlu0 %v5683, 1
  %v6121 = vpop.permute.xlu0 %6120
  %6122 = vrot.lane.b32.xlu0 %v5684, 1
  %v6123 = vpop.permute.xlu0 %6122
  %6124 = vrot.lane.b32.xlu0 %v5685, 1
  %v6125 = vpop.permute.xlu0 %6124
  %6126 = vrot.lane.b32.xlu0 %v5686, 1
  %v6127 = vpop.permute.xlu0 %6126
  %6128 = vrot.lane.b32.xlu0 %v5687, 1
  %v6129 = vpop.permute.xlu0 %6128
  %6130 = vrot.lane.b32.xlu0 %v5688, 1
  %v6131 = vpop.permute.xlu0 %6130
  %6132 = vrot.lane.b32.xlu0 %v5689, 1
  %v6133 = vpop.permute.xlu0 %6132
  %6134 = vrot.lane.b32.xlu0 %v5690, 1
  %v6135 = vpop.permute.xlu0 %6134
  %6136 = vrot.lane.b32.xlu0 %v5691, 1
  %v6137 = vpop.permute.xlu0 %6136
  %6138 = vrot.lane.b32.xlu0 %v5692, 1
  %v6139 = vpop.permute.xlu0 %6138
  %6140 = vrot.lane.b32.xlu0 %v5693, 1
  %v6141 = vpop.permute.xlu0 %6140
  %6142 = vrot.lane.b32.xlu0 %v5694, 1
  %v6143 = vpop.permute.xlu0 %6142
  %6144 = vrot.lane.b32.xlu0 %v5695, 1
  %v6145 = vpop.permute.xlu0 %6144
  %6146 = vrot.lane.b32.xlu0 %v5696, 1
  %v6147 = vpop.permute.xlu0 %6146
  %6148 = vrot.lane.b32.xlu0 %v5697, 1
  %v6149 = vpop.permute.xlu0 %6148
  %6150 = vrot.lane.b32.xlu0 %v5698, 1
  %v6151 = vpop.permute.xlu0 %6150
  %6152 = vrot.lane.b32.xlu0 %v5699, 1
  %v6153 = vpop.permute.xlu0 %6152
  %6154 = vrot.lane.b32.xlu0 %v5700, 1
  %v6155 = vpop.permute.xlu0 %6154
  %6156 = vrot.lane.b32.xlu0 %v5701, 1
  %v6157 = vpop.permute.xlu0 %6156
  %6158 = vrot.lane.b32.xlu0 %v5702, 1
  %v6159 = vpop.permute.xlu0 %6158
  %6160 = vrot.lane.b32.xlu0 %v5703, 1
  %v6161 = vpop.permute.xlu0 %6160
  %6162 = vrot.lane.b32.xlu0 %v5704, 1
  %v6163 = vpop.permute.xlu0 %6162
  %6164 = vrot.lane.b32.xlu0 %v5705, 1
  %v6165 = vpop.permute.xlu0 %6164
  %6166 = vrot.lane.b32.xlu0 %v5706, 1
  %v6167 = vpop.permute.xlu0 %6166
  %6168 = vrot.lane.b32.xlu0 %v5707, 1
  %v6169 = vpop.permute.xlu0 %6168
  %6170 = vrot.lane.b32.xlu0 %v5708, 1
  %v6171 = vpop.permute.xlu0 %6170
  %6172 = vrot.lane.b32.xlu0 %v5709, 1
  %v6173 = vpop.permute.xlu0 %6172
  %6174 = vrot.lane.b32.xlu0 %v5710, 1
  %v6175 = vpop.permute.xlu0 %6174
  %6176 = vrot.lane.b32.xlu0 %v5711, 1
  %v6177 = vpop.permute.xlu0 %6176
  %6178 = vrot.lane.b32.xlu0 %v5712, 1
  %v6179 = vpop.permute.xlu0 %6178
  %6180 = vrot.lane.b32.xlu0 %v5713, 1
  %v6181 = vpop.permute.xlu0 %6180
  %6182 = vrot.lane.b32.xlu0 %v5714, 1
  %v6183 = vpop.permute.xlu0 %6182
  %6184 = vrot.lane.b32.xlu0 %v5715, 1
  %v6185 = vpop.permute.xlu0 %6184
  %6186 = vrot.lane.b32.xlu0 %v5716, 1
  %v6187 = vpop.permute.xlu0 %6186
  %6188 = vrot.lane.b32.xlu0 %v5717, 1
  %v6189 = vpop.permute.xlu0 %6188
  %6190 = vrot.lane.b32.xlu0 %v5718, 1
  %v6191 = vpop.permute.xlu0 %6190
  %6192 = vrot.lane.b32.xlu0 %v5719, 1
  %v6193 = vpop.permute.xlu0 %6192
  %6194 = vrot.lane.b32.xlu0 %v5720, 1
  %v6195 = vpop.permute.xlu0 %6194
  %6196 = vrot.lane.b32.xlu0 %v5721, 1
  %v6197 = vpop.permute.xlu0 %6196
  %6198 = vrot.lane.b32.xlu0 %v5722, 1
  %v6199 = vpop.permute.xlu0 %6198
  %6200 = vrot.lane.b32.xlu0 %v5723, 1
  %v6201 = vpop.permute.xlu0 %6200
  %6202 = vrot.lane.b32.xlu0 %v5724, 1
  %v6203 = vpop.permute.xlu0 %6202
  %6204 = vrot.lane.b32.xlu0 %v5725, 1
  %v6205 = vpop.permute.xlu0 %6204
  %6206 = vrot.lane.b32.xlu0 %v5726, 1
  %v6207 = vpop.permute.xlu0 %6206
  %6208 = vrot.lane.b32.xlu0 %v5727, 1
  %v6209 = vpop.permute.xlu0 %6208
  %6210 = vrot.lane.b32.xlu0 %v5728, 1
  %v6211 = vpop.permute.xlu0 %6210
  %6212 = vrot.lane.b32.xlu0 %v5729, 1
  %v6213 = vpop.permute.xlu0 %6212
  %6214 = vrot.lane.b32.xlu0 %v5730, 1
  %v6215 = vpop.permute.xlu0 %6214
  %6216 = vrot.lane.b32.xlu0 %v5731, 1
  %v6217 = vpop.permute.xlu0 %6216
  %6218 = vrot.lane.b32.xlu0 %v5732, 1
  %v6219 = vpop.permute.xlu0 %6218
  %6220 = vrot.lane.b32.xlu0 %v5733, 1
  %v6221 = vpop.permute.xlu0 %6220
  %6222 = vrot.lane.b32.xlu0 %v5734, 1
  %v6223 = vpop.permute.xlu0 %6222
  %6224 = vrot.lane.b32.xlu0 %v5735, 1
  %v6225 = vpop.permute.xlu0 %6224
  %6226 = vrot.lane.b32.xlu0 %v5736, 1
  %v6227 = vpop.permute.xlu0 %6226
  %6228 = vrot.lane.b32.xlu0 %v5737, 1
  %v6229 = vpop.permute.xlu0 %6228
  %6230 = vrot.lane.b32.xlu0 %v5738, 1
  %v6231 = vpop.permute.xlu0 %6230
  %6232 = vrot.lane.b32.xlu0 %v5739, 1
  %v6233 = vpop.permute.xlu0 %6232
  %6234 = vrot.lane.b32.xlu0 %v5740, 1
  %v6235 = vpop.permute.xlu0 %6234
  %6236 = vrot.lane.b32.xlu0 %v5741, 1
  %v6237 = vpop.permute.xlu0 %6236
  %6238 = vrot.lane.b32.xlu0 %v5742, 1
  %v6239 = vpop.permute.xlu0 %6238
  %6240 = vrot.lane.b32.xlu0 %v5743, 1
  %v6241 = vpop.permute.xlu0 %6240
  %6242 = vrot.lane.b32.xlu0 %v5744, 1
  %v6243 = vpop.permute.xlu0 %6242
  %6244 = vrot.lane.b32.xlu0 %v5745, 1
  %v6245 = vpop.permute.xlu0 %6244
  %6246 = vrot.lane.b32.xlu0 %v5746, 1
  %v6247 = vpop.permute.xlu0 %6246
  %6248 = vrot.lane.b32.xlu0 %v5747, 1
  %v6249 = vpop.permute.xlu0 %6248
  %6250 = vrot.lane.b32.xlu0 %v5748, 1
  %v6251 = vpop.permute.xlu0 %6250
  %6252 = vrot.lane.b32.xlu0 %v5749, 1
  %v6253 = vpop.permute.xlu0 %6252
  %6254 = vrot.lane.b32.xlu0 %v5750, 1
  %v6255 = vpop.permute.xlu0 %6254
  %6256 = vrot.lane.b32.xlu0 %v5751, 1
  %v6257 = vpop.permute.xlu0 %6256
  %6258 = vrot.lane.b32.xlu0 %v5752, 1
  %v6259 = vpop.permute.xlu0 %6258
  %6260 = vrot.lane.b32.xlu0 %v5753, 1
  %v6261 = vpop.permute.xlu0 %6260
  %6262 = vrot.lane.b32.xlu0 %v5754, 1
  %v6263 = vpop.permute.xlu0 %6262
  %6264 = vrot.lane.b32.xlu0 %v5755, 1
  %v6265 = vpop.permute.xlu0 %6264
  %6266 = vrot.lane.b32.xlu0 %v5756, 1
  %v6267 = vpop.permute.xlu0 %6266
  %6268 = vrot.lane.b32.xlu0 %v5757, 1
  %v6269 = vpop.permute.xlu0 %6268
  %6270 = vrot.lane.b32.xlu0 %v5758, 1
  %v6271 = vpop.permute.xlu0 %6270
  %6272 = vrot.lane.b32.xlu0 %v5759, 1
  %v6273 = vpop.permute.xlu0 %6272
  %6274 = vrot.lane.b32.xlu0 %v5760, 1
  %v6275 = vpop.permute.xlu0 %6274
  %6276 = vrot.lane.b32.xlu0 %v5761, 1
  %v6277 = vpop.permute.xlu0 %6276
  %6278 = vrot.lane.b32.xlu0 %v5762, 1
  %v6279 = vpop.permute.xlu0 %6278
  %6280 = vrot.lane.b32.xlu0 %v5763, 1
  %v6281 = vpop.permute.xlu0 %6280
  %6282 = vrot.lane.b32.xlu0 %v5764, 1
  %v6283 = vpop.permute.xlu0 %6282
  %6284 = vrot.lane.b32.xlu0 %v5765, 1
  %v6285 = vpop.permute.xlu0 %6284
  %6286 = vrot.lane.b32.xlu0 %v5766, 1
  %v6287 = vpop.permute.xlu0 %6286
  %6288 = vrot.lane.b32.xlu0 %v5767, 1
  %v6289 = vpop.permute.xlu0 %6288
  %6290 = vrot.lane.b32.xlu0 %v5768, 1
  %v6291 = vpop.permute.xlu0 %6290
  %6292 = vrot.lane.b32.xlu0 %v5769, 1
  %v6293 = vpop.permute.xlu0 %6292
  %6294 = vrot.lane.b32.xlu0 %v5770, 1
  %v6295 = vpop.permute.xlu0 %6294
  %6296 = vrot.lane.b32.xlu0 %v5771, 1
  %v6297 = vpop.permute.xlu0 %6296
  %6298 = vrot.lane.b32.xlu0 %v5772, 1
  %v6299 = vpop.permute.xlu0 %6298
  %6300 = vrot.lane.b32.xlu0 %v5773, 1
  %v6301 = vpop.permute.xlu0 %6300
  %6302 = vrot.lane.b32.xlu0 %v5774, 1
  %v6303 = vpop.permute.xlu0 %6302
  %6304 = vrot.lane.b32.xlu0 %v5775, 1
  %v6305 = vpop.permute.xlu0 %6304
  %6306 = vrot.lane.b32.xlu0 %v5776, 1
  %v6307 = vpop.permute.xlu0 %6306
  %6308 = vrot.lane.b32.xlu0 %v5777, 1
  %v6309 = vpop.permute.xlu0 %6308
  %6310 = vrot.lane.b32.xlu0 %v5778, 1
  %v6311 = vpop.permute.xlu0 %6310
  %6312 = vrot.lane.b32.xlu0 %v5779, 1
  %v6313 = vpop.permute.xlu0 %6312
  %6314 = vrot.lane.b32.xlu0 %v5780, 1
  %v6315 = vpop.permute.xlu0 %6314
  %6316 = vrot.lane.b32.xlu0 %v5781, 1
  %v6317 = vpop.permute.xlu0 %6316
  %6318 = vrot.lane.b32.xlu0 %v5782, 1
  %v6319 = vpop.permute.xlu0 %6318
  %6320 = vrot.lane.b32.xlu0 %v5783, 1
  %v6321 = vpop.permute.xlu0 %6320
  %6322 = vrot.lane.b32.xlu0 %v5784, 1
  %v6323 = vpop.permute.xlu0 %6322
  %6324 = vrot.lane.b32.xlu0 %v5785, 1
  %v6325 = vpop.permute.xlu0 %6324
  %6326 = vrot.lane.b32.xlu0 %v5786, 1
  %v6327 = vpop.permute.xlu0 %6326
  %6328 = vrot.lane.b32.xlu0 %v5787, 1
  %v6329 = vpop.permute.xlu0 %6328
  %6330 = vrot.lane.b32.xlu0 %v5788, 1
  %v6331 = vpop.permute.xlu0 %6330
  %6332 = vrot.lane.b32.xlu0 %v5789, 1
  %v6333 = vpop.permute.xlu0 %6332
  %6334 = vrot.lane.b32.xlu0 %v5790, 1
  %v6335 = vpop.permute.xlu0 %6334
  %6336 = vrot.lane.b32.xlu0 %v5791, 1
  %v6337 = vpop.permute.xlu0 %6336
  %6338 = vrot.lane.b32.xlu0 %v5792, 1
  %v6339 = vpop.permute.xlu0 %6338
  %6340 = vrot.lane.b32.xlu0 %v5793, 1
  %v6341 = vpop.permute.xlu0 %6340
  %6342 = vrot.lane.b32.xlu0 %v5794, 1
  %v6343 = vpop.permute.xlu0 %6342
  %6344 = vrot.lane.b32.xlu0 %v5795, 1
  %v6345 = vpop.permute.xlu0 %6344
  %6346 = vrot.lane.b32.xlu0 %v5796, 1
  %v6347 = vpop.permute.xlu0 %6346
  %6348 = vrot.lane.b32.xlu0 %v5797, 1
  %v6349 = vpop.permute.xlu0 %6348
  %6350 = vrot.lane.b32.xlu0 %v5798, 1
  %v6351 = vpop.permute.xlu0 %6350
  %6352 = vrot.lane.b32.xlu0 %v5799, 1
  %v6353 = vpop.permute.xlu0 %6352
  %6354 = vrot.lane.b32.xlu0 %v5800, 1
  %v6355 = vpop.permute.xlu0 %6354
  %6356 = vrot.lane.b32.xlu0 %v5801, 1
  %v6357 = vpop.permute.xlu0 %6356
  %6358 = vrot.lane.b32.xlu0 %v5802, 1
  %v6359 = vpop.permute.xlu0 %6358
  %6360 = vrot.lane.b32.xlu0 %v5803, 1
  %v6361 = vpop.permute.xlu0 %6360
  %6362 = vrot.lane.b32.xlu0 %v5804, 1
  %v6363 = vpop.permute.xlu0 %6362
  %6364 = vrot.lane.b32.xlu0 %v5805, 1
  %v6365 = vpop.permute.xlu0 %6364
  %6366 = vrot.lane.b32.xlu0 %v5806, 1
  %v6367 = vpop.permute.xlu0 %6366
  %6368 = vrot.lane.b32.xlu0 %v5807, 1
  %v6369 = vpop.permute.xlu0 %6368
  %6370 = vrot.lane.b32.xlu0 %v5808, 1
  %v6371 = vpop.permute.xlu0 %6370
  %6372 = vrot.lane.b32.xlu0 %v5809, 1
  %v6373 = vpop.permute.xlu0 %6372
  %6374 = vrot.lane.b32.xlu0 %v5810, 1
  %v6375 = vpop.permute.xlu0 %6374
  %6376 = vrot.lane.b32.xlu0 %v5811, 1
  %v6377 = vpop.permute.xlu0 %6376
  %6378 = vrot.lane.b32.xlu0 %v5812, 1
  %v6379 = vpop.permute.xlu0 %6378
  %6380 = vrot.lane.b32.xlu0 %v5813, 1
  %v6381 = vpop.permute.xlu0 %6380
  %6382 = vrot.lane.b32.xlu0 %v5814, 1
  %v6383 = vpop.permute.xlu0 %6382
  %6384 = vrot.lane.b32.xlu0 %v5815, 1
  %v6385 = vpop.permute.xlu0 %6384
  %6386 = vrot.lane.b32.xlu0 %v5816, 1
  %v6387 = vpop.permute.xlu0 %6386
  %6388 = vrot.lane.b32.xlu0 %v5817, 1
  %v6389 = vpop.permute.xlu0 %6388
  %6390 = vrot.lane.b32.xlu0 %v5818, 1
  %v6391 = vpop.permute.xlu0 %6390
  %6392 = vrot.lane.b32.xlu0 %v5819, 1
  %v6393 = vpop.permute.xlu0 %6392
  %6394 = vrot.lane.b32.xlu0 %v5820, 1
  %v6395 = vpop.permute.xlu0 %6394
  %6396 = vrot.lane.b32.xlu0 %v5821, 1
  %v6397 = vpop.permute.xlu0 %6396
  %6398 = vrot.lane.b32.xlu0 %v5822, 1
  %v6399 = vpop.permute.xlu0 %6398
  %6400 = vrot.lane.b32.xlu0 %v5823, 1
  %v6401 = vpop.permute.xlu0 %6400
  %6402 = vrot.lane.b32.xlu0 %v5824, 1
  %v6403 = vpop.permute.xlu0 %6402
  %6404 = vrot.lane.b32.xlu0 %v5825, 1
  %v6405 = vpop.permute.xlu0 %6404
  %6406 = vrot.lane.b32.xlu0 %v5826, 1
  %v6407 = vpop.permute.xlu0 %6406
  %6408 = vrot.lane.b32.xlu0 %v5827, 1
  %v6409 = vpop.permute.xlu0 %6408
  %6410 = vrot.lane.b32.xlu0 %v5828, 1
  %v6411 = vpop.permute.xlu0 %6410
  %6412 = vrot.lane.b32.xlu0 %v5829, 1
  %v6413 = vpop.permute.xlu0 %6412
  %6414 = vrot.lane.b32.xlu0 %v5830, 1
  %v6415 = vpop.permute.xlu0 %6414
  %6416 = vrot.lane.b32.xlu0 %v5831, 1
  %v6417 = vpop.permute.xlu0 %6416
  %6418 = vrot.lane.b32.xlu0 %v5832, 1
  %v6419 = vpop.permute.xlu0 %6418
  %6420 = vrot.lane.b32.xlu0 %v5833, 1
  %v6421 = vpop.permute.xlu0 %6420
  %6422 = vrot.lane.b32.xlu0 %v5834, 1
  %v6423 = vpop.permute.xlu0 %6422
  %6424 = vrot.lane.b32.xlu0 %v5835, 1
  %v6425 = vpop.permute.xlu0 %6424
  %6426 = vrot.lane.b32.xlu0 %v5836, 1
  %v6427 = vpop.permute.xlu0 %6426
  %6428 = vrot.lane.b32.xlu0 %v5837, 1
  %v6429 = vpop.permute.xlu0 %6428
  %6430 = vrot.lane.b32.xlu0 %v5838, 1
  %v6431 = vpop.permute.xlu0 %6430
  %6432 = vrot.lane.b32.xlu0 %v5839, 1
  %v6433 = vpop.permute.xlu0 %6432
  %6434 = vrot.lane.b32.xlu0 %v5840, 1
  %v6435 = vpop.permute.xlu0 %6434
  %6436 = vrot.lane.b32.xlu0 %v5841, 1
  %v6437 = vpop.permute.xlu0 %6436
  %6438 = vrot.lane.b32.xlu0 %v5842, 1
  %v6439 = vpop.permute.xlu0 %6438
  %6440 = vrot.lane.b32.xlu0 %v5843, 1
  %v6441 = vpop.permute.xlu0 %6440
  %6442 = vrot.lane.b32.xlu0 %v5844, 1
  %v6443 = vpop.permute.xlu0 %6442
  %6444 = vrot.lane.b32.xlu0 %v5845, 1
  %v6445 = vpop.permute.xlu0 %6444
  %6446 = vrot.lane.b32.xlu0 %v5846, 1
  %v6447 = vpop.permute.xlu0 %6446
  %6448 = vrot.lane.b32.xlu0 %v5847, 1
  %v6449 = vpop.permute.xlu0 %6448
  %6450 = vrot.lane.b32.xlu0 %v5848, 1
  %v6451 = vpop.permute.xlu0 %6450
  %6452 = vrot.lane.b32.xlu0 %v5849, 1
  %v6453 = vpop.permute.xlu0 %6452
  %6454 = vrot.lane.b32.xlu0 %v5850, 1
  %v6455 = vpop.permute.xlu0 %6454
  %6456 = vrot.lane.b32.xlu0 %v5851, 1
  %v6457 = vpop.permute.xlu0 %6456
  %6458 = vrot.lane.b32.xlu0 %v5852, 1
  %v6459 = vpop.permute.xlu0 %6458
  %6460 = vrot.lane.b32.xlu0 %v5853, 1
  %v6461 = vpop.permute.xlu0 %6460
  %6462 = vrot.lane.b32.xlu0 %v5854, 1
  %v6463 = vpop.permute.xlu0 %6462
  %6464 = vrot.lane.b32.xlu0 %v5855, 1
  %v6465 = vpop.permute.xlu0 %6464
  %6466 = vrot.lane.b32.xlu0 %v5856, 1
  %v6467 = vpop.permute.xlu0 %6466
  %6468 = vrot.lane.b32.xlu0 %v5857, 1
  %v6469 = vpop.permute.xlu0 %6468
  %v6674 = vsub.f32 %v5246, %v6063
  %v6675 = vsub.f32 %v5247, %v6065
  %v6676 = vsub.f32 %v5248, %v6067
  %v6677 = vsub.f32 %v5249, %v6069
  %v6678 = vsub.f32 %v5250, %v6071
  %v6679 = vsub.f32 %v5251, %v6073
  %v6680 = vsub.f32 %v5252, %v6075
  %v6681 = vsub.f32 %v5253, %v6077
  %v6682 = vsub.f32 %v5254, %v6079
  %v6683 = vsub.f32 %v5255, %v6081
  %v6684 = vsub.f32 %v5256, %v6083
  %v6685 = vsub.f32 %v5257, %v6085
  %v6686 = vsub.f32 %v5258, %v6087
  %v6687 = vsub.f32 %v5259, %v6089
  %v6688 = vsub.f32 %v5260, %v6091
  %v6689 = vsub.f32 %v5261, %v6093
  %v6690 = vsub.f32 %v5262, %v6095
  %v6691 = vsub.f32 %v5263, %v6097
  %v6692 = vsub.f32 %v5264, %v6099
  %v6693 = vsub.f32 %v5265, %v6101
  %v6694 = vsub.f32 %v5266, %v6103
  %v6695 = vsub.f32 %v5267, %v6105
  %v6696 = vsub.f32 %v5268, %v6107
  %v6697 = vsub.f32 %v5269, %v6109
  %v6698 = vsub.f32 %v5270, %v6111
  %v6699 = vsub.f32 %v5271, %v6113
  %v6700 = vsub.f32 %v5272, %v6115
  %v6701 = vsub.f32 %v5273, %v6117
  %v6702 = vsub.f32 %v5274, %v6119
  %v6703 = vsub.f32 %v5275, %v6121
  %v6704 = vsub.f32 %v5276, %v6123
  %v6705 = vsub.f32 %v5277, %v6125
  %v6706 = vsub.f32 %v5278, %v6127
  %v6707 = vsub.f32 %v5279, %v6129
  %v6708 = vsub.f32 %v5280, %v6131
  %v6709 = vsub.f32 %v5281, %v6133
  %v6710 = vsub.f32 %v5282, %v6135
  %v6711 = vsub.f32 %v5283, %v6137
  %v6712 = vsub.f32 %v5284, %v6139
  %v6713 = vsub.f32 %v5285, %v6141
  %v6714 = vsub.f32 %v5286, %v6143
  %v6715 = vsub.f32 %v5287, %v6145
  %v6716 = vsub.f32 %v5288, %v6147
  %v6717 = vsub.f32 %v5289, %v6149
  %v6718 = vsub.f32 %v5290, %v6151
  %v6719 = vsub.f32 %v5291, %v6153
  %v6720 = vsub.f32 %v5292, %v6155
  %v6721 = vsub.f32 %v5293, %v6157
  %v6722 = vsub.f32 %v5294, %v6159
  %v6723 = vsub.f32 %v5295, %v6161
  %v6724 = vsub.f32 %v5296, %v6163
  %v6725 = vsub.f32 %v5297, %v6165
  %v6726 = vsub.f32 %v5298, %v6167
  %v6727 = vsub.f32 %v5299, %v6169
  %v6728 = vsub.f32 %v5300, %v6171
  %v6729 = vsub.f32 %v5301, %v6173
  %v6730 = vsub.f32 %v5302, %v6175
  %v6731 = vsub.f32 %v5303, %v6177
  %v6732 = vsub.f32 %v5304, %v6179
  %v6733 = vsub.f32 %v5305, %v6181
  %v6734 = vsub.f32 %v5306, %v6183
  %v6735 = vsub.f32 %v5307, %v6185
  %v6736 = vsub.f32 %v5308, %v6187
  %v6737 = vsub.f32 %v5309, %v6189
  %v6738 = vsub.f32 %v5310, %v6191
  %v6739 = vsub.f32 %v5311, %v6193
  %v6740 = vsub.f32 %v5312, %v6195
  %v6741 = vsub.f32 %v5313, %v6197
  %v6742 = vsub.f32 %v5314, %v6199
  %v6743 = vsub.f32 %v5315, %v6201
  %v6744 = vsub.f32 %v5316, %v6203
  %v6745 = vsub.f32 %v5317, %v6205
  %v6746 = vsub.f32 %v5318, %v6207
  %v6747 = vsub.f32 %v5319, %v6209
  %v6748 = vsub.f32 %v5320, %v6211
  %v6749 = vsub.f32 %v5321, %v6213
  %v6750 = vsub.f32 %v5322, %v6215
  %v6751 = vsub.f32 %v5323, %v6217
  %v6752 = vsub.f32 %v5324, %v6219
  %v6753 = vsub.f32 %v5325, %v6221
  %v6754 = vsub.f32 %v5326, %v6223
  %v6755 = vsub.f32 %v5327, %v6225
  %v6756 = vsub.f32 %v5328, %v6227
  %v6757 = vsub.f32 %v5329, %v6229
  %v6758 = vsub.f32 %v5330, %v6231
  %v6759 = vsub.f32 %v5331, %v6233
  %v6760 = vsub.f32 %v5332, %v6235
  %v6761 = vsub.f32 %v5333, %v6237
  %v6762 = vsub.f32 %v5334, %v6239
  %v6763 = vsub.f32 %v5335, %v6241
  %v6764 = vsub.f32 %v5336, %v6243
  %v6765 = vsub.f32 %v5337, %v6245
  %v6766 = vsub.f32 %v5338, %v6247
  %v6767 = vsub.f32 %v5339, %v6249
  %v6768 = vsub.f32 %v5340, %v6251
  %v6769 = vsub.f32 %v5341, %v6253
  %v6770 = vsub.f32 %v5342, %v6255
  %v6771 = vsub.f32 %v5343, %v6257
  %v6772 = vsub.f32 %v5344, %v6259
  %v6773 = vsub.f32 %v5345, %v6261
  %v6774 = vsub.f32 %v5346, %v6263
  %v6775 = vsub.f32 %v5347, %v6265
  %v6776 = vsub.f32 %v5348, %v6267
  %v6777 = vsub.f32 %v5349, %v6269
  %v6778 = vsub.f32 %v5350, %v6271
  %v6779 = vsub.f32 %v5351, %v6273
  %v6780 = vsub.f32 %v5352, %v6275
  %v6781 = vsub.f32 %v5353, %v6277
  %v6782 = vsub.f32 %v5354, %v6279
  %v6783 = vsub.f32 %v5355, %v6281
  %v6784 = vsub.f32 %v5356, %v6283
  %v6785 = vsub.f32 %v5357, %v6285
  %v6786 = vsub.f32 %v5358, %v6287
  %v6787 = vsub.f32 %v5359, %v6289
  %v6788 = vsub.f32 %v5360, %v6291
  %v6789 = vsub.f32 %v5361, %v6293
  %v6790 = vsub.f32 %v5362, %v6295
  %v6791 = vsub.f32 %v5363, %v6297
  %v6792 = vsub.f32 %v5364, %v6299
  %v6793 = vsub.f32 %v5365, %v6301
  %v6794 = vsub.f32 %v5366, %v6303
  %v6795 = vsub.f32 %v5367, %v6305
  %v6796 = vsub.f32 %v5368, %v6307
  %v6797 = vsub.f32 %v5369, %v6309
  %v6798 = vsub.f32 %v5370, %v6311
  %v6799 = vsub.f32 %v5371, %v6313
  %v6800 = vsub.f32 %v5372, %v6315
  %v6801 = vsub.f32 %v5373, %v6317
  %v6802 = vsub.f32 %v5374, %v6319
  %v6803 = vsub.f32 %v5375, %v6321
  %v6804 = vsub.f32 %v5376, %v6323
  %v6805 = vsub.f32 %v5377, %v6325
  %v6806 = vsub.f32 %v5378, %v6327
  %v6807 = vsub.f32 %v5379, %v6329
  %v6808 = vsub.f32 %v5380, %v6331
  %v6809 = vsub.f32 %v5381, %v6333
  %v6810 = vsub.f32 %v5382, %v6335
  %v6811 = vsub.f32 %v5383, %v6337
  %v6812 = vsub.f32 %v5384, %v6339
  %v6813 = vsub.f32 %v5385, %v6341
  %v6814 = vsub.f32 %v5386, %v6343
  %v6815 = vsub.f32 %v5387, %v6345
  %v6816 = vsub.f32 %v5388, %v6347
  %v6817 = vsub.f32 %v5389, %v6349
  %v6818 = vsub.f32 %v5390, %v6351
  %v6819 = vsub.f32 %v5391, %v6353
  %v6820 = vsub.f32 %v5392, %v6355
  %v6821 = vsub.f32 %v5393, %v6357
  %v6822 = vsub.f32 %v5394, %v6359
  %v6823 = vsub.f32 %v5395, %v6361
  %v6824 = vsub.f32 %v5396, %v6363
  %v6825 = vsub.f32 %v5397, %v6365
  %v6826 = vsub.f32 %v5398, %v6367
  %v6827 = vsub.f32 %v5399, %v6369
  %v6828 = vsub.f32 %v5400, %v6371
  %v6829 = vsub.f32 %v5401, %v6373
  %v6830 = vsub.f32 %v5402, %v6375
  %v6831 = vsub.f32 %v5403, %v6377
  %v6832 = vsub.f32 %v5404, %v6379
  %v6833 = vsub.f32 %v5405, %v6381
  %v6834 = vsub.f32 %v5406, %v6383
  %v6835 = vsub.f32 %v5407, %v6385
  %v6836 = vsub.f32 %v5408, %v6387
  %v6837 = vsub.f32 %v5409, %v6389
  %v6838 = vsub.f32 %v5410, %v6391
  %v6839 = vsub.f32 %v5411, %v6393
  %v6840 = vsub.f32 %v5412, %v6395
  %v6841 = vsub.f32 %v5413, %v6397
  %v6842 = vsub.f32 %v5414, %v6399
  %v6843 = vsub.f32 %v5415, %v6401
  %v6844 = vsub.f32 %v5416, %v6403
  %v6845 = vsub.f32 %v5417, %v6405
  %v6846 = vsub.f32 %v5418, %v6407
  %v6847 = vsub.f32 %v5419, %v6409
  %v6848 = vsub.f32 %v5420, %v6411
  %v6849 = vsub.f32 %v5421, %v6413
  %v6850 = vsub.f32 %v5422, %v6415
  %v6851 = vsub.f32 %v5423, %v6417
  %v6852 = vsub.f32 %v5424, %v6419
  %v6853 = vsub.f32 %v5425, %v6421
  %v6854 = vsub.f32 %v5426, %v6423
  %v6855 = vsub.f32 %v5427, %v6425
  %v6856 = vsub.f32 %v5428, %v6427
  %v6857 = vsub.f32 %v5429, %v6429
  %v6858 = vsub.f32 %v5430, %v6431
  %v6859 = vsub.f32 %v5431, %v6433
  %v6860 = vsub.f32 %v5432, %v6435
  %v6861 = vsub.f32 %v5433, %v6437
  %v6862 = vsub.f32 %v5434, %v6439
  %v6863 = vsub.f32 %v5435, %v6441
  %v6864 = vsub.f32 %v5436, %v6443
  %v6865 = vsub.f32 %v5437, %v6445
  %v6866 = vsub.f32 %v5438, %v6447
  %v6867 = vsub.f32 %v5439, %v6449
  %v6868 = vsub.f32 %v5440, %v6451
  %v6869 = vsub.f32 %v5441, %v6453
  %v6870 = vsub.f32 %v5442, %v6455
  %v6871 = vsub.f32 %v5443, %v6457
  %v6872 = vsub.f32 %v5444, %v6459
  %v6873 = vsub.f32 %v5445, %v6461
  %v6874 = vsub.f32 %v5446, %v6463
  %v6875 = vsub.f32 %v5447, %v6465
  %v6876 = vsub.f32 %v5448, %v6467
  %v6877 = vsub.f32 %v5449, %v6469
  %6879 = vset.pattern.permute.xlu0 0
  %6880 = vperm.xlu0 %6879, %v5450
  %v6881 = vpop.permute.xlu0 %6880
  %6884 = vset.pattern.permute.xlu0 0
  %6885 = vperm.xlu0 %6884, %v5451
  %v6886 = vpop.permute.xlu0 %6885
  %6889 = vset.pattern.permute.xlu0 0
  %6890 = vperm.xlu0 %6889, %v5452
  %v6891 = vpop.permute.xlu0 %6890
  %6894 = vset.pattern.permute.xlu0 0
  %6895 = vperm.xlu0 %6894, %v5453
  %v6896 = vpop.permute.xlu0 %6895
  %6899 = vset.pattern.permute.xlu0 0
  %6900 = vperm.xlu0 %6899, %v5454
  %v6901 = vpop.permute.xlu0 %6900
  %6904 = vset.pattern.permute.xlu0 0
  %6905 = vperm.xlu0 %6904, %v5455
  %v6906 = vpop.permute.xlu0 %6905
  %6909 = vset.pattern.permute.xlu0 0
  %6910 = vperm.xlu0 %6909, %v5456
  %v6911 = vpop.permute.xlu0 %6910
  %6914 = vset.pattern.permute.xlu0 0
  %6915 = vperm.xlu0 %6914, %v5457
  %v6916 = vpop.permute.xlu0 %6915
  %6919 = vset.pattern.permute.xlu0 0
  %6920 = vperm.xlu0 %6919, %v5458
  %v6921 = vpop.permute.xlu0 %6920
  %6924 = vset.pattern.permute.xlu0 0
  %6925 = vperm.xlu0 %6924, %v5459
  %v6926 = vpop.permute.xlu0 %6925
  %6929 = vset.pattern.permute.xlu0 0
  %6930 = vperm.xlu0 %6929, %v5460
  %v6931 = vpop.permute.xlu0 %6930
  %6934 = vset.pattern.permute.xlu0 0
  %6935 = vperm.xlu0 %6934, %v5461
  %v6936 = vpop.permute.xlu0 %6935
  %6939 = vset.pattern.permute.xlu0 0
  %6940 = vperm.xlu0 %6939, %v5462
  %v6941 = vpop.permute.xlu0 %6940
  %6944 = vset.pattern.permute.xlu0 0
  %6945 = vperm.xlu0 %6944, %v5463
  %v6946 = vpop.permute.xlu0 %6945
  %6949 = vset.pattern.permute.xlu0 0
  %6950 = vperm.xlu0 %6949, %v5464
  %v6951 = vpop.permute.xlu0 %6950
  %6954 = vset.pattern.permute.xlu0 0
  %6955 = vperm.xlu0 %6954, %v5465
  %v6956 = vpop.permute.xlu0 %6955
  %6959 = vset.pattern.permute.xlu0 0
  %6960 = vperm.xlu0 %6959, %v5466
  %v6961 = vpop.permute.xlu0 %6960
  %6964 = vset.pattern.permute.xlu0 0
  %6965 = vperm.xlu0 %6964, %v5467
  %v6966 = vpop.permute.xlu0 %6965
  %6969 = vset.pattern.permute.xlu0 0
  %6970 = vperm.xlu0 %6969, %v5468
  %v6971 = vpop.permute.xlu0 %6970
  %6974 = vset.pattern.permute.xlu0 0
  %6975 = vperm.xlu0 %6974, %v5469
  %v6976 = vpop.permute.xlu0 %6975
  %6979 = vset.pattern.permute.xlu0 0
  %6980 = vperm.xlu0 %6979, %v5470
  %v6981 = vpop.permute.xlu0 %6980
  %6984 = vset.pattern.permute.xlu0 0
  %6985 = vperm.xlu0 %6984, %v5471
  %v6986 = vpop.permute.xlu0 %6985
  %6989 = vset.pattern.permute.xlu0 0
  %6990 = vperm.xlu0 %6989, %v5472
  %v6991 = vpop.permute.xlu0 %6990
  %6994 = vset.pattern.permute.xlu0 0
  %6995 = vperm.xlu0 %6994, %v5473
  %v6996 = vpop.permute.xlu0 %6995
  %6999 = vset.pattern.permute.xlu0 0
  %7000 = vperm.xlu0 %6999, %v5474
  %v7001 = vpop.permute.xlu0 %7000
  %7004 = vset.pattern.permute.xlu0 0
  %7005 = vperm.xlu0 %7004, %v5475
  %v7006 = vpop.permute.xlu0 %7005
  %7009 = vset.pattern.permute.xlu0 0
  %7010 = vperm.xlu0 %7009, %v5476
  %v7011 = vpop.permute.xlu0 %7010
  %7014 = vset.pattern.permute.xlu0 0
  %7015 = vperm.xlu0 %7014, %v5477
  %v7016 = vpop.permute.xlu0 %7015
  %7019 = vset.pattern.permute.xlu0 0
  %7020 = vperm.xlu0 %7019, %v5478
  %v7021 = vpop.permute.xlu0 %7020
  %7024 = vset.pattern.permute.xlu0 0
  %7025 = vperm.xlu0 %7024, %v5479
  %v7026 = vpop.permute.xlu0 %7025
  %7029 = vset.pattern.permute.xlu0 0
  %7030 = vperm.xlu0 %7029, %v5480
  %v7031 = vpop.permute.xlu0 %7030
  %7034 = vset.pattern.permute.xlu0 0
  %7035 = vperm.xlu0 %7034, %v5481
  %v7036 = vpop.permute.xlu0 %7035
  %7039 = vset.pattern.permute.xlu0 0
  %7040 = vperm.xlu0 %7039, %v5482
  %v7041 = vpop.permute.xlu0 %7040
  %7044 = vset.pattern.permute.xlu0 0
  %7045 = vperm.xlu0 %7044, %v5483
  %v7046 = vpop.permute.xlu0 %7045
  %7049 = vset.pattern.permute.xlu0 0
  %7050 = vperm.xlu0 %7049, %v5484
  %v7051 = vpop.permute.xlu0 %7050
  %7054 = vset.pattern.permute.xlu0 0
  %7055 = vperm.xlu0 %7054, %v5485
  %v7056 = vpop.permute.xlu0 %7055
  %7059 = vset.pattern.permute.xlu0 0
  %7060 = vperm.xlu0 %7059, %v5486
  %v7061 = vpop.permute.xlu0 %7060
  %7064 = vset.pattern.permute.xlu0 0
  %7065 = vperm.xlu0 %7064, %v5487
  %v7066 = vpop.permute.xlu0 %7065
  %7069 = vset.pattern.permute.xlu0 0
  %7070 = vperm.xlu0 %7069, %v5488
  %v7071 = vpop.permute.xlu0 %7070
  %7074 = vset.pattern.permute.xlu0 0
  %7075 = vperm.xlu0 %7074, %v5489
  %v7076 = vpop.permute.xlu0 %7075
  %7079 = vset.pattern.permute.xlu0 0
  %7080 = vperm.xlu0 %7079, %v5490
  %v7081 = vpop.permute.xlu0 %7080
  %7084 = vset.pattern.permute.xlu0 0
  %7085 = vperm.xlu0 %7084, %v5491
  %v7086 = vpop.permute.xlu0 %7085
  %7089 = vset.pattern.permute.xlu0 0
  %7090 = vperm.xlu0 %7089, %v5492
  %v7091 = vpop.permute.xlu0 %7090
  %7094 = vset.pattern.permute.xlu0 0
  %7095 = vperm.xlu0 %7094, %v5493
  %v7096 = vpop.permute.xlu0 %7095
  %7099 = vset.pattern.permute.xlu0 0
  %7100 = vperm.xlu0 %7099, %v5494
  %v7101 = vpop.permute.xlu0 %7100
  %7104 = vset.pattern.permute.xlu0 0
  %7105 = vperm.xlu0 %7104, %v5495
  %v7106 = vpop.permute.xlu0 %7105
  %7109 = vset.pattern.permute.xlu0 0
  %7110 = vperm.xlu0 %7109, %v5496
  %v7111 = vpop.permute.xlu0 %7110
  %7114 = vset.pattern.permute.xlu0 0
  %7115 = vperm.xlu0 %7114, %v5497
  %v7116 = vpop.permute.xlu0 %7115
  %7119 = vset.pattern.permute.xlu0 0
  %7120 = vperm.xlu0 %7119, %v5498
  %v7121 = vpop.permute.xlu0 %7120
  %7124 = vset.pattern.permute.xlu0 0
  %7125 = vperm.xlu0 %7124, %v5499
  %v7126 = vpop.permute.xlu0 %7125
  %7129 = vset.pattern.permute.xlu0 0
  %7130 = vperm.xlu0 %7129, %v5500
  %v7131 = vpop.permute.xlu0 %7130
  %7134 = vset.pattern.permute.xlu0 0
  %7135 = vperm.xlu0 %7134, %v5501
  %v7136 = vpop.permute.xlu0 %7135
  %7139 = vset.pattern.permute.xlu0 0
  %7140 = vperm.xlu0 %7139, %v5502
  %v7141 = vpop.permute.xlu0 %7140
  %7144 = vset.pattern.permute.xlu0 0
  %7145 = vperm.xlu0 %7144, %v5503
  %v7146 = vpop.permute.xlu0 %7145
  %7149 = vset.pattern.permute.xlu0 0
  %7150 = vperm.xlu0 %7149, %v5504
  %v7151 = vpop.permute.xlu0 %7150
  %7154 = vset.pattern.permute.xlu0 0
  %7155 = vperm.xlu0 %7154, %v5505
  %v7156 = vpop.permute.xlu0 %7155
  %7159 = vset.pattern.permute.xlu0 0
  %7160 = vperm.xlu0 %7159, %v5506
  %v7161 = vpop.permute.xlu0 %7160
  %7164 = vset.pattern.permute.xlu0 0
  %7165 = vperm.xlu0 %7164, %v5507
  %v7166 = vpop.permute.xlu0 %7165
  %7169 = vset.pattern.permute.xlu0 0
  %7170 = vperm.xlu0 %7169, %v5508
  %v7171 = vpop.permute.xlu0 %7170
  %7174 = vset.pattern.permute.xlu0 0
  %7175 = vperm.xlu0 %7174, %v5509
  %v7176 = vpop.permute.xlu0 %7175
  %7179 = vset.pattern.permute.xlu0 0
  %7180 = vperm.xlu0 %7179, %v5510
  %v7181 = vpop.permute.xlu0 %7180
  %7184 = vset.pattern.permute.xlu0 0
  %7185 = vperm.xlu0 %7184, %v5511
  %v7186 = vpop.permute.xlu0 %7185
  %7189 = vset.pattern.permute.xlu0 0
  %7190 = vperm.xlu0 %7189, %v5512
  %v7191 = vpop.permute.xlu0 %7190
  %7194 = vset.pattern.permute.xlu0 0
  %7195 = vperm.xlu0 %7194, %v5513
  %v7196 = vpop.permute.xlu0 %7195
  %7199 = vset.pattern.permute.xlu0 0
  %7200 = vperm.xlu0 %7199, %v5514
  %v7201 = vpop.permute.xlu0 %7200
  %7204 = vset.pattern.permute.xlu0 0
  %7205 = vperm.xlu0 %7204, %v5515
  %v7206 = vpop.permute.xlu0 %7205
  %7209 = vset.pattern.permute.xlu0 0
  %7210 = vperm.xlu0 %7209, %v5516
  %v7211 = vpop.permute.xlu0 %7210
  %7214 = vset.pattern.permute.xlu0 0
  %7215 = vperm.xlu0 %7214, %v5517
  %v7216 = vpop.permute.xlu0 %7215
  %7219 = vset.pattern.permute.xlu0 0
  %7220 = vperm.xlu0 %7219, %v5518
  %v7221 = vpop.permute.xlu0 %7220
  %7224 = vset.pattern.permute.xlu0 0
  %7225 = vperm.xlu0 %7224, %v5519
  %v7226 = vpop.permute.xlu0 %7225
  %7229 = vset.pattern.permute.xlu0 0
  %7230 = vperm.xlu0 %7229, %v5520
  %v7231 = vpop.permute.xlu0 %7230
  %7234 = vset.pattern.permute.xlu0 0
  %7235 = vperm.xlu0 %7234, %v5521
  %v7236 = vpop.permute.xlu0 %7235
  %7239 = vset.pattern.permute.xlu0 0
  %7240 = vperm.xlu0 %7239, %v5522
  %v7241 = vpop.permute.xlu0 %7240
  %7244 = vset.pattern.permute.xlu0 0
  %7245 = vperm.xlu0 %7244, %v5523
  %v7246 = vpop.permute.xlu0 %7245
  %7249 = vset.pattern.permute.xlu0 0
  %7250 = vperm.xlu0 %7249, %v5524
  %v7251 = vpop.permute.xlu0 %7250
  %7254 = vset.pattern.permute.xlu0 0
  %7255 = vperm.xlu0 %7254, %v5525
  %v7256 = vpop.permute.xlu0 %7255
  %7259 = vset.pattern.permute.xlu0 0
  %7260 = vperm.xlu0 %7259, %v5526
  %v7261 = vpop.permute.xlu0 %7260
  %7264 = vset.pattern.permute.xlu0 0
  %7265 = vperm.xlu0 %7264, %v5527
  %v7266 = vpop.permute.xlu0 %7265
  %7269 = vset.pattern.permute.xlu0 0
  %7270 = vperm.xlu0 %7269, %v5528
  %v7271 = vpop.permute.xlu0 %7270
  %7274 = vset.pattern.permute.xlu0 0
  %7275 = vperm.xlu0 %7274, %v5529
  %v7276 = vpop.permute.xlu0 %7275
  %7279 = vset.pattern.permute.xlu0 0
  %7280 = vperm.xlu0 %7279, %v5530
  %v7281 = vpop.permute.xlu0 %7280
  %7284 = vset.pattern.permute.xlu0 0
  %7285 = vperm.xlu0 %7284, %v5531
  %v7286 = vpop.permute.xlu0 %7285
  %7289 = vset.pattern.permute.xlu0 0
  %7290 = vperm.xlu0 %7289, %v5532
  %v7291 = vpop.permute.xlu0 %7290
  %7294 = vset.pattern.permute.xlu0 0
  %7295 = vperm.xlu0 %7294, %v5533
  %v7296 = vpop.permute.xlu0 %7295
  %7299 = vset.pattern.permute.xlu0 0
  %7300 = vperm.xlu0 %7299, %v5534
  %v7301 = vpop.permute.xlu0 %7300
  %7304 = vset.pattern.permute.xlu0 0
  %7305 = vperm.xlu0 %7304, %v5535
  %v7306 = vpop.permute.xlu0 %7305
  %7309 = vset.pattern.permute.xlu0 0
  %7310 = vperm.xlu0 %7309, %v5536
  %v7311 = vpop.permute.xlu0 %7310
  %7314 = vset.pattern.permute.xlu0 0
  %7315 = vperm.xlu0 %7314, %v5537
  %v7316 = vpop.permute.xlu0 %7315
  %7319 = vset.pattern.permute.xlu0 0
  %7320 = vperm.xlu0 %7319, %v5538
  %v7321 = vpop.permute.xlu0 %7320
  %7324 = vset.pattern.permute.xlu0 0
  %7325 = vperm.xlu0 %7324, %v5539
  %v7326 = vpop.permute.xlu0 %7325
  %7329 = vset.pattern.permute.xlu0 0
  %7330 = vperm.xlu0 %7329, %v5540
  %v7331 = vpop.permute.xlu0 %7330
  %7334 = vset.pattern.permute.xlu0 0
  %7335 = vperm.xlu0 %7334, %v5541
  %v7336 = vpop.permute.xlu0 %7335
  %7339 = vset.pattern.permute.xlu0 0
  %7340 = vperm.xlu0 %7339, %v5542
  %v7341 = vpop.permute.xlu0 %7340
  %7344 = vset.pattern.permute.xlu0 0
  %7345 = vperm.xlu0 %7344, %v5543
  %v7346 = vpop.permute.xlu0 %7345
  %7349 = vset.pattern.permute.xlu0 0
  %7350 = vperm.xlu0 %7349, %v5544
  %v7351 = vpop.permute.xlu0 %7350
  %7354 = vset.pattern.permute.xlu0 0
  %7355 = vperm.xlu0 %7354, %v5545
  %v7356 = vpop.permute.xlu0 %7355
  %7359 = vset.pattern.permute.xlu0 0
  %7360 = vperm.xlu0 %7359, %v5546
  %v7361 = vpop.permute.xlu0 %7360
  %7364 = vset.pattern.permute.xlu0 0
  %7365 = vperm.xlu0 %7364, %v5547
  %v7366 = vpop.permute.xlu0 %7365
  %7369 = vset.pattern.permute.xlu0 0
  %7370 = vperm.xlu0 %7369, %v5548
  %v7371 = vpop.permute.xlu0 %7370
  %7374 = vset.pattern.permute.xlu0 0
  %7375 = vperm.xlu0 %7374, %v5549
  %v7376 = vpop.permute.xlu0 %7375
  %7379 = vset.pattern.permute.xlu0 0
  %7380 = vperm.xlu0 %7379, %v5550
  %v7381 = vpop.permute.xlu0 %7380
  %7384 = vset.pattern.permute.xlu0 0
  %7385 = vperm.xlu0 %7384, %v5551
  %v7386 = vpop.permute.xlu0 %7385
  %7389 = vset.pattern.permute.xlu0 0
  %7390 = vperm.xlu0 %7389, %v5552
  %v7391 = vpop.permute.xlu0 %7390
  %7394 = vset.pattern.permute.xlu0 0
  %7395 = vperm.xlu0 %7394, %v5553
  %v7396 = vpop.permute.xlu0 %7395
  %7399 = vset.pattern.permute.xlu0 0
  %7400 = vperm.xlu0 %7399, %v5554
  %v7401 = vpop.permute.xlu0 %7400
  %7404 = vset.pattern.permute.xlu0 0
  %7405 = vperm.xlu0 %7404, %v5555
  %v7406 = vpop.permute.xlu0 %7405
  %7409 = vset.pattern.permute.xlu0 0
  %7410 = vperm.xlu0 %7409, %v5556
  %v7411 = vpop.permute.xlu0 %7410
  %7414 = vset.pattern.permute.xlu0 0
  %7415 = vperm.xlu0 %7414, %v5557
  %v7416 = vpop.permute.xlu0 %7415
  %7419 = vset.pattern.permute.xlu0 0
  %7420 = vperm.xlu0 %7419, %v5558
  %v7421 = vpop.permute.xlu0 %7420
  %7424 = vset.pattern.permute.xlu0 0
  %7425 = vperm.xlu0 %7424, %v5559
  %v7426 = vpop.permute.xlu0 %7425
  %7429 = vset.pattern.permute.xlu0 0
  %7430 = vperm.xlu0 %7429, %v5560
  %v7431 = vpop.permute.xlu0 %7430
  %7434 = vset.pattern.permute.xlu0 0
  %7435 = vperm.xlu0 %7434, %v5561
  %v7436 = vpop.permute.xlu0 %7435
  %7439 = vset.pattern.permute.xlu0 0
  %7440 = vperm.xlu0 %7439, %v5562
  %v7441 = vpop.permute.xlu0 %7440
  %7444 = vset.pattern.permute.xlu0 0
  %7445 = vperm.xlu0 %7444, %v5563
  %v7446 = vpop.permute.xlu0 %7445
  %7449 = vset.pattern.permute.xlu0 0
  %7450 = vperm.xlu0 %7449, %v5564
  %v7451 = vpop.permute.xlu0 %7450
  %7454 = vset.pattern.permute.xlu0 0
  %7455 = vperm.xlu0 %7454, %v5565
  %v7456 = vpop.permute.xlu0 %7455
  %7459 = vset.pattern.permute.xlu0 0
  %7460 = vperm.xlu0 %7459, %v5566
  %v7461 = vpop.permute.xlu0 %7460
  %7464 = vset.pattern.permute.xlu0 0
  %7465 = vperm.xlu0 %7464, %v5567
  %v7466 = vpop.permute.xlu0 %7465
  %7469 = vset.pattern.permute.xlu0 0
  %7470 = vperm.xlu0 %7469, %v5568
  %v7471 = vpop.permute.xlu0 %7470
  %7474 = vset.pattern.permute.xlu0 0
  %7475 = vperm.xlu0 %7474, %v5569
  %v7476 = vpop.permute.xlu0 %7475
  %7479 = vset.pattern.permute.xlu0 0
  %7480 = vperm.xlu0 %7479, %v5570
  %v7481 = vpop.permute.xlu0 %7480
  %7484 = vset.pattern.permute.xlu0 0
  %7485 = vperm.xlu0 %7484, %v5571
  %v7486 = vpop.permute.xlu0 %7485
  %7489 = vset.pattern.permute.xlu0 0
  %7490 = vperm.xlu0 %7489, %v5572
  %v7491 = vpop.permute.xlu0 %7490
  %7494 = vset.pattern.permute.xlu0 0
  %7495 = vperm.xlu0 %7494, %v5573
  %v7496 = vpop.permute.xlu0 %7495
  %7499 = vset.pattern.permute.xlu0 0
  %7500 = vperm.xlu0 %7499, %v5574
  %v7501 = vpop.permute.xlu0 %7500
  %7504 = vset.pattern.permute.xlu0 0
  %7505 = vperm.xlu0 %7504, %v5575
  %v7506 = vpop.permute.xlu0 %7505
  %7509 = vset.pattern.permute.xlu0 0
  %7510 = vperm.xlu0 %7509, %v5576
  %v7511 = vpop.permute.xlu0 %7510
  %7514 = vset.pattern.permute.xlu0 0
  %7515 = vperm.xlu0 %7514, %v5577
  %v7516 = vpop.permute.xlu0 %7515
  %7519 = vset.pattern.permute.xlu0 0
  %7520 = vperm.xlu0 %7519, %v5578
  %v7521 = vpop.permute.xlu0 %7520
  %7524 = vset.pattern.permute.xlu0 0
  %7525 = vperm.xlu0 %7524, %v5579
  %v7526 = vpop.permute.xlu0 %7525
  %7529 = vset.pattern.permute.xlu0 0
  %7530 = vperm.xlu0 %7529, %v5580
  %v7531 = vpop.permute.xlu0 %7530
  %7534 = vset.pattern.permute.xlu0 0
  %7535 = vperm.xlu0 %7534, %v5581
  %v7536 = vpop.permute.xlu0 %7535
  %7539 = vset.pattern.permute.xlu0 0
  %7540 = vperm.xlu0 %7539, %v5582
  %v7541 = vpop.permute.xlu0 %7540
  %7544 = vset.pattern.permute.xlu0 0
  %7545 = vperm.xlu0 %7544, %v5583
  %v7546 = vpop.permute.xlu0 %7545
  %7549 = vset.pattern.permute.xlu0 0
  %7550 = vperm.xlu0 %7549, %v5584
  %v7551 = vpop.permute.xlu0 %7550
  %7554 = vset.pattern.permute.xlu0 0
  %7555 = vperm.xlu0 %7554, %v5585
  %v7556 = vpop.permute.xlu0 %7555
  %7559 = vset.pattern.permute.xlu0 0
  %7560 = vperm.xlu0 %7559, %v5586
  %v7561 = vpop.permute.xlu0 %7560
  %7564 = vset.pattern.permute.xlu0 0
  %7565 = vperm.xlu0 %7564, %v5587
  %v7566 = vpop.permute.xlu0 %7565
  %7569 = vset.pattern.permute.xlu0 0
  %7570 = vperm.xlu0 %7569, %v5588
  %v7571 = vpop.permute.xlu0 %7570
  %7574 = vset.pattern.permute.xlu0 0
  %7575 = vperm.xlu0 %7574, %v5589
  %v7576 = vpop.permute.xlu0 %7575
  %7579 = vset.pattern.permute.xlu0 0
  %7580 = vperm.xlu0 %7579, %v5590
  %v7581 = vpop.permute.xlu0 %7580
  %7584 = vset.pattern.permute.xlu0 0
  %7585 = vperm.xlu0 %7584, %v5591
  %v7586 = vpop.permute.xlu0 %7585
  %7589 = vset.pattern.permute.xlu0 0
  %7590 = vperm.xlu0 %7589, %v5592
  %v7591 = vpop.permute.xlu0 %7590
  %7594 = vset.pattern.permute.xlu0 0
  %7595 = vperm.xlu0 %7594, %v5593
  %v7596 = vpop.permute.xlu0 %7595
  %7599 = vset.pattern.permute.xlu0 0
  %7600 = vperm.xlu0 %7599, %v5594
  %v7601 = vpop.permute.xlu0 %7600
  %7604 = vset.pattern.permute.xlu0 0
  %7605 = vperm.xlu0 %7604, %v5595
  %v7606 = vpop.permute.xlu0 %7605
  %7609 = vset.pattern.permute.xlu0 0
  %7610 = vperm.xlu0 %7609, %v5596
  %v7611 = vpop.permute.xlu0 %7610
  %7614 = vset.pattern.permute.xlu0 0
  %7615 = vperm.xlu0 %7614, %v5597
  %v7616 = vpop.permute.xlu0 %7615
  %7619 = vset.pattern.permute.xlu0 0
  %7620 = vperm.xlu0 %7619, %v5598
  %v7621 = vpop.permute.xlu0 %7620
  %7624 = vset.pattern.permute.xlu0 0
  %7625 = vperm.xlu0 %7624, %v5599
  %v7626 = vpop.permute.xlu0 %7625
  %7629 = vset.pattern.permute.xlu0 0
  %7630 = vperm.xlu0 %7629, %v5600
  %v7631 = vpop.permute.xlu0 %7630
  %7634 = vset.pattern.permute.xlu0 0
  %7635 = vperm.xlu0 %7634, %v5601
  %v7636 = vpop.permute.xlu0 %7635
  %7639 = vset.pattern.permute.xlu0 0
  %7640 = vperm.xlu0 %7639, %v5602
  %v7641 = vpop.permute.xlu0 %7640
  %7644 = vset.pattern.permute.xlu0 0
  %7645 = vperm.xlu0 %7644, %v5603
  %v7646 = vpop.permute.xlu0 %7645
  %7649 = vset.pattern.permute.xlu0 0
  %7650 = vperm.xlu0 %7649, %v5604
  %v7651 = vpop.permute.xlu0 %7650
  %7654 = vset.pattern.permute.xlu0 0
  %7655 = vperm.xlu0 %7654, %v5605
  %v7656 = vpop.permute.xlu0 %7655
  %7659 = vset.pattern.permute.xlu0 0
  %7660 = vperm.xlu0 %7659, %v5606
  %v7661 = vpop.permute.xlu0 %7660
  %7664 = vset.pattern.permute.xlu0 0
  %7665 = vperm.xlu0 %7664, %v5607
  %v7666 = vpop.permute.xlu0 %7665
  %7669 = vset.pattern.permute.xlu0 0
  %7670 = vperm.xlu0 %7669, %v5608
  %v7671 = vpop.permute.xlu0 %7670
  %7674 = vset.pattern.permute.xlu0 0
  %7675 = vperm.xlu0 %7674, %v5609
  %v7676 = vpop.permute.xlu0 %7675
  %7679 = vset.pattern.permute.xlu0 0
  %7680 = vperm.xlu0 %7679, %v5610
  %v7681 = vpop.permute.xlu0 %7680
  %7684 = vset.pattern.permute.xlu0 0
  %7685 = vperm.xlu0 %7684, %v5611
  %v7686 = vpop.permute.xlu0 %7685
  %7689 = vset.pattern.permute.xlu0 0
  %7690 = vperm.xlu0 %7689, %v5612
  %v7691 = vpop.permute.xlu0 %7690
  %7694 = vset.pattern.permute.xlu0 0
  %7695 = vperm.xlu0 %7694, %v5613
  %v7696 = vpop.permute.xlu0 %7695
  %7699 = vset.pattern.permute.xlu0 0
  %7700 = vperm.xlu0 %7699, %v5614
  %v7701 = vpop.permute.xlu0 %7700
  %7704 = vset.pattern.permute.xlu0 0
  %7705 = vperm.xlu0 %7704, %v5615
  %v7706 = vpop.permute.xlu0 %7705
  %7709 = vset.pattern.permute.xlu0 0
  %7710 = vperm.xlu0 %7709, %v5616
  %v7711 = vpop.permute.xlu0 %7710
  %7714 = vset.pattern.permute.xlu0 0
  %7715 = vperm.xlu0 %7714, %v5617
  %v7716 = vpop.permute.xlu0 %7715
  %7719 = vset.pattern.permute.xlu0 0
  %7720 = vperm.xlu0 %7719, %v5618
  %v7721 = vpop.permute.xlu0 %7720
  %7724 = vset.pattern.permute.xlu0 0
  %7725 = vperm.xlu0 %7724, %v5619
  %v7726 = vpop.permute.xlu0 %7725
  %7729 = vset.pattern.permute.xlu0 0
  %7730 = vperm.xlu0 %7729, %v5620
  %v7731 = vpop.permute.xlu0 %7730
  %7734 = vset.pattern.permute.xlu0 0
  %7735 = vperm.xlu0 %7734, %v5621
  %v7736 = vpop.permute.xlu0 %7735
  %7739 = vset.pattern.permute.xlu0 0
  %7740 = vperm.xlu0 %7739, %v5622
  %v7741 = vpop.permute.xlu0 %7740
  %7744 = vset.pattern.permute.xlu0 0
  %7745 = vperm.xlu0 %7744, %v5623
  %v7746 = vpop.permute.xlu0 %7745
  %7749 = vset.pattern.permute.xlu0 0
  %7750 = vperm.xlu0 %7749, %v5624
  %v7751 = vpop.permute.xlu0 %7750
  %7754 = vset.pattern.permute.xlu0 0
  %7755 = vperm.xlu0 %7754, %v5625
  %v7756 = vpop.permute.xlu0 %7755
  %7759 = vset.pattern.permute.xlu0 0
  %7760 = vperm.xlu0 %7759, %v5626
  %v7761 = vpop.permute.xlu0 %7760
  %7764 = vset.pattern.permute.xlu0 0
  %7765 = vperm.xlu0 %7764, %v5627
  %v7766 = vpop.permute.xlu0 %7765
  %7769 = vset.pattern.permute.xlu0 0
  %7770 = vperm.xlu0 %7769, %v5628
  %v7771 = vpop.permute.xlu0 %7770
  %7774 = vset.pattern.permute.xlu0 0
  %7775 = vperm.xlu0 %7774, %v5629
  %v7776 = vpop.permute.xlu0 %7775
  %7779 = vset.pattern.permute.xlu0 0
  %7780 = vperm.xlu0 %7779, %v5630
  %v7781 = vpop.permute.xlu0 %7780
  %7784 = vset.pattern.permute.xlu0 0
  %7785 = vperm.xlu0 %7784, %v5631
  %v7786 = vpop.permute.xlu0 %7785
  %7789 = vset.pattern.permute.xlu0 0
  %7790 = vperm.xlu0 %7789, %v5632
  %v7791 = vpop.permute.xlu0 %7790
  %7794 = vset.pattern.permute.xlu0 0
  %7795 = vperm.xlu0 %7794, %v5633
  %v7796 = vpop.permute.xlu0 %7795
  %7799 = vset.pattern.permute.xlu0 0
  %7800 = vperm.xlu0 %7799, %v5634
  %v7801 = vpop.permute.xlu0 %7800
  %7804 = vset.pattern.permute.xlu0 0
  %7805 = vperm.xlu0 %7804, %v5635
  %v7806 = vpop.permute.xlu0 %7805
  %7809 = vset.pattern.permute.xlu0 0
  %7810 = vperm.xlu0 %7809, %v5636
  %v7811 = vpop.permute.xlu0 %7810
  %7814 = vset.pattern.permute.xlu0 0
  %7815 = vperm.xlu0 %7814, %v5637
  %v7816 = vpop.permute.xlu0 %7815
  %7819 = vset.pattern.permute.xlu0 0
  %7820 = vperm.xlu0 %7819, %v5638
  %v7821 = vpop.permute.xlu0 %7820
  %7824 = vset.pattern.permute.xlu0 0
  %7825 = vperm.xlu0 %7824, %v5639
  %v7826 = vpop.permute.xlu0 %7825
  %7829 = vset.pattern.permute.xlu0 0
  %7830 = vperm.xlu0 %7829, %v5640
  %v7831 = vpop.permute.xlu0 %7830
  %7834 = vset.pattern.permute.xlu0 0
  %7835 = vperm.xlu0 %7834, %v5641
  %v7836 = vpop.permute.xlu0 %7835
  %7839 = vset.pattern.permute.xlu0 0
  %7840 = vperm.xlu0 %7839, %v5642
  %v7841 = vpop.permute.xlu0 %7840
  %7844 = vset.pattern.permute.xlu0 0
  %7845 = vperm.xlu0 %7844, %v5643
  %v7846 = vpop.permute.xlu0 %7845
  %7849 = vset.pattern.permute.xlu0 0
  %7850 = vperm.xlu0 %7849, %v5644
  %v7851 = vpop.permute.xlu0 %7850
  %7854 = vset.pattern.permute.xlu0 0
  %7855 = vperm.xlu0 %7854, %v5645
  %v7856 = vpop.permute.xlu0 %7855
  %7859 = vset.pattern.permute.xlu0 0
  %7860 = vperm.xlu0 %7859, %v5646
  %v7861 = vpop.permute.xlu0 %7860
  %7864 = vset.pattern.permute.xlu0 0
  %7865 = vperm.xlu0 %7864, %v5647
  %v7866 = vpop.permute.xlu0 %7865
  %7869 = vset.pattern.permute.xlu0 0
  %7870 = vperm.xlu0 %7869, %v5648
  %v7871 = vpop.permute.xlu0 %7870
  %7874 = vset.pattern.permute.xlu0 0
  %7875 = vperm.xlu0 %7874, %v5649
  %v7876 = vpop.permute.xlu0 %7875
  %7879 = vset.pattern.permute.xlu0 0
  %7880 = vperm.xlu0 %7879, %v5650
  %v7881 = vpop.permute.xlu0 %7880
  %7884 = vset.pattern.permute.xlu0 0
  %7885 = vperm.xlu0 %7884, %v5651
  %v7886 = vpop.permute.xlu0 %7885
  %7889 = vset.pattern.permute.xlu0 0
  %7890 = vperm.xlu0 %7889, %v5652
  %v7891 = vpop.permute.xlu0 %7890
  %7894 = vset.pattern.permute.xlu0 0
  %7895 = vperm.xlu0 %7894, %v5653
  %v7896 = vpop.permute.xlu0 %7895
  %v7898 = vmul.f32 %v11, %v6881
  %v7899 = vmul.f32 %v12, %v6886
  %v7900 = vmul.f32 %v13, %v6891
  %v7901 = vmul.f32 %v14, %v6896
  %v7902 = vmul.f32 %v15, %v6901
  %v7903 = vmul.f32 %v16, %v6906
  %v7904 = vmul.f32 %v17, %v6911
  %v7905 = vmul.f32 %v18, %v6916
  %v7906 = vmul.f32 %v19, %v6921
  %v7907 = vmul.f32 %v20, %v6926
  %v7908 = vmul.f32 %v21, %v6931
  %v7909 = vmul.f32 %v22, %v6936
  %v7910 = vmul.f32 %v23, %v6941
  %v7911 = vmul.f32 %v24, %v6946
  %v7912 = vmul.f32 %v25, %v6951
  %v7913 = vmul.f32 %v26, %v6956
  %v7914 = vmul.f32 %v27, %v6961
  %v7915 = vmul.f32 %v28, %v6966
  %v7916 = vmul.f32 %v29, %v6971
  %v7917 = vmul.f32 %v30, %v6976
  %v7918 = vmul.f32 %v31, %v6981
  %v7919 = vmul.f32 %v32, %v6986
  %v7920 = vmul.f32 %v33, %v6991
  %v7921 = vmul.f32 %v34, %v6996
  %v7922 = vmul.f32 %v35, %v7001
  %v7923 = vmul.f32 %v36, %v7006
  %v7924 = vmul.f32 %v37, %v7011
  %v7925 = vmul.f32 %v38, %v7016
  %v7926 = vmul.f32 %v39, %v7021
  %v7927 = vmul.f32 %v40, %v7026
  %v7928 = vmul.f32 %v41, %v7031
  %v7929 = vmul.f32 %v42, %v7036
  %v7930 = vmul.f32 %v43, %v7041
  %v7931 = vmul.f32 %v44, %v7046
  %v7932 = vmul.f32 %v45, %v7051
  %v7933 = vmul.f32 %v46, %v7056
  %v7934 = vmul.f32 %v47, %v7061
  %v7935 = vmul.f32 %v48, %v7066
  %v7936 = vmul.f32 %v49, %v7071
  %v7937 = vmul.f32 %v50, %v7076
  %v7938 = vmul.f32 %v51, %v7081
  %v7939 = vmul.f32 %v52, %v7086
  %v7940 = vmul.f32 %v53, %v7091
  %v7941 = vmul.f32 %v54, %v7096
  %v7942 = vmul.f32 %v55, %v7101
  %v7943 = vmul.f32 %v56, %v7106
  %v7944 = vmul.f32 %v57, %v7111
  %v7945 = vmul.f32 %v58, %v7116
  %v7946 = vmul.f32 %v59, %v7121
  %v7947 = vmul.f32 %v60, %v7126
  %v7948 = vmul.f32 %v61, %v7131
  %v7949 = vmul.f32 %v62, %v7136
  %v7950 = vmul.f32 %v63, %v7141
  %v7951 = vmul.f32 %v64, %v7146
  %v7952 = vmul.f32 %v65, %v7151
  %v7953 = vmul.f32 %v66, %v7156
  %v7954 = vmul.f32 %v67, %v7161
  %v7955 = vmul.f32 %v68, %v7166
  %v7956 = vmul.f32 %v69, %v7171
  %v7957 = vmul.f32 %v70, %v7176
  %v7958 = vmul.f32 %v71, %v7181
  %v7959 = vmul.f32 %v72, %v7186
  %v7960 = vmul.f32 %v73, %v7191
  %v7961 = vmul.f32 %v74, %v7196
  %v7962 = vmul.f32 %v75, %v7201
  %v7963 = vmul.f32 %v76, %v7206
  %v7964 = vmul.f32 %v77, %v7211
  %v7965 = vmul.f32 %v78, %v7216
  %v7966 = vmul.f32 %v79, %v7221
  %v7967 = vmul.f32 %v80, %v7226
  %v7968 = vmul.f32 %v81, %v7231
  %v7969 = vmul.f32 %v82, %v7236
  %v7970 = vmul.f32 %v83, %v7241
  %v7971 = vmul.f32 %v84, %v7246
  %v7972 = vmul.f32 %v85, %v7251
  %v7973 = vmul.f32 %v86, %v7256
  %v7974 = vmul.f32 %v87, %v7261
  %v7975 = vmul.f32 %v88, %v7266
  %v7976 = vmul.f32 %v89, %v7271
  %v7977 = vmul.f32 %v90, %v7276
  %v7978 = vmul.f32 %v91, %v7281
  %v7979 = vmul.f32 %v92, %v7286
  %v7980 = vmul.f32 %v93, %v7291
  %v7981 = vmul.f32 %v94, %v7296
  %v7982 = vmul.f32 %v95, %v7301
  %v7983 = vmul.f32 %v96, %v7306
  %v7984 = vmul.f32 %v97, %v7311
  %v7985 = vmul.f32 %v98, %v7316
  %v7986 = vmul.f32 %v99, %v7321
  %v7987 = vmul.f32 %v100, %v7326
  %v7988 = vmul.f32 %v101, %v7331
  %v7989 = vmul.f32 %v102, %v7336
  %v7990 = vmul.f32 %v103, %v7341
  %v7991 = vmul.f32 %v104, %v7346
  %v7992 = vmul.f32 %v105, %v7351
  %v7993 = vmul.f32 %v106, %v7356
  %v7994 = vmul.f32 %v107, %v7361
  %v7995 = vmul.f32 %v108, %v7366
  %v7996 = vmul.f32 %v109, %v7371
  %v7997 = vmul.f32 %v110, %v7376
  %v7998 = vmul.f32 %v111, %v7381
  %v7999 = vmul.f32 %v112, %v7386
  %v8000 = vmul.f32 %v113, %v7391
  %v8001 = vmul.f32 %v114, %v7396
  %v8002 = vmul.f32 %v115, %v7401
  %v8003 = vmul.f32 %v116, %v7406
  %v8004 = vmul.f32 %v117, %v7411
  %v8005 = vmul.f32 %v118, %v7416
  %v8006 = vmul.f32 %v119, %v7421
  %v8007 = vmul.f32 %v120, %v7426
  %v8008 = vmul.f32 %v121, %v7431
  %v8009 = vmul.f32 %v122, %v7436
  %v8010 = vmul.f32 %v123, %v7441
  %v8011 = vmul.f32 %v124, %v7446
  %v8012 = vmul.f32 %v125, %v7451
  %v8013 = vmul.f32 %v126, %v7456
  %v8014 = vmul.f32 %v127, %v7461
  %v8015 = vmul.f32 %v128, %v7466
  %v8016 = vmul.f32 %v129, %v7471
  %v8017 = vmul.f32 %v130, %v7476
  %v8018 = vmul.f32 %v131, %v7481
  %v8019 = vmul.f32 %v132, %v7486
  %v8020 = vmul.f32 %v133, %v7491
  %v8021 = vmul.f32 %v134, %v7496
  %v8022 = vmul.f32 %v135, %v7501
  %v8023 = vmul.f32 %v136, %v7506
  %v8024 = vmul.f32 %v137, %v7511
  %v8025 = vmul.f32 %v138, %v7516
  %v8026 = vmul.f32 %v139, %v7521
  %v8027 = vmul.f32 %v140, %v7526
  %v8028 = vmul.f32 %v141, %v7531
  %v8029 = vmul.f32 %v142, %v7536
  %v8030 = vmul.f32 %v143, %v7541
  %v8031 = vmul.f32 %v144, %v7546
  %v8032 = vmul.f32 %v145, %v7551
  %v8033 = vmul.f32 %v146, %v7556
  %v8034 = vmul.f32 %v147, %v7561
  %v8035 = vmul.f32 %v148, %v7566
  %v8036 = vmul.f32 %v149, %v7571
  %v8037 = vmul.f32 %v150, %v7576
  %v8038 = vmul.f32 %v151, %v7581
  %v8039 = vmul.f32 %v152, %v7586
  %v8040 = vmul.f32 %v153, %v7591
  %v8041 = vmul.f32 %v154, %v7596
  %v8042 = vmul.f32 %v155, %v7601
  %v8043 = vmul.f32 %v156, %v7606
  %v8044 = vmul.f32 %v157, %v7611
  %v8045 = vmul.f32 %v158, %v7616
  %v8046 = vmul.f32 %v159, %v7621
  %v8047 = vmul.f32 %v160, %v7626
  %v8048 = vmul.f32 %v161, %v7631
  %v8049 = vmul.f32 %v162, %v7636
  %v8050 = vmul.f32 %v163, %v7641
  %v8051 = vmul.f32 %v164, %v7646
  %v8052 = vmul.f32 %v165, %v7651
  %v8053 = vmul.f32 %v166, %v7656
  %v8054 = vmul.f32 %v167, %v7661
  %v8055 = vmul.f32 %v168, %v7666
  %v8056 = vmul.f32 %v169, %v7671
  %v8057 = vmul.f32 %v170, %v7676
  %v8058 = vmul.f32 %v171, %v7681
  %v8059 = vmul.f32 %v172, %v7686
  %v8060 = vmul.f32 %v173, %v7691
  %v8061 = vmul.f32 %v174, %v7696
  %v8062 = vmul.f32 %v175, %v7701
  %v8063 = vmul.f32 %v176, %v7706
  %v8064 = vmul.f32 %v177, %v7711
  %v8065 = vmul.f32 %v178, %v7716
  %v8066 = vmul.f32 %v179, %v7721
  %v8067 = vmul.f32 %v180, %v7726
  %v8068 = vmul.f32 %v181, %v7731
  %v8069 = vmul.f32 %v182, %v7736
  %v8070 = vmul.f32 %v183, %v7741
  %v8071 = vmul.f32 %v184, %v7746
  %v8072 = vmul.f32 %v185, %v7751
  %v8073 = vmul.f32 %v186, %v7756
  %v8074 = vmul.f32 %v187, %v7761
  %v8075 = vmul.f32 %v188, %v7766
  %v8076 = vmul.f32 %v189, %v7771
  %v8077 = vmul.f32 %v190, %v7776
  %v8078 = vmul.f32 %v191, %v7781
  %v8079 = vmul.f32 %v192, %v7786
  %v8080 = vmul.f32 %v193, %v7791
  %v8081 = vmul.f32 %v194, %v7796
  %v8082 = vmul.f32 %v195, %v7801
  %v8083 = vmul.f32 %v196, %v7806
  %v8084 = vmul.f32 %v197, %v7811
  %v8085 = vmul.f32 %v198, %v7816
  %v8086 = vmul.f32 %v199, %v7821
  %v8087 = vmul.f32 %v200, %v7826
  %v8088 = vmul.f32 %v201, %v7831
  %v8089 = vmul.f32 %v202, %v7836
  %v8090 = vmul.f32 %v203, %v7841
  %v8091 = vmul.f32 %v204, %v7846
  %v8092 = vmul.f32 %v205, %v7851
  %v8093 = vmul.f32 %v206, %v7856
  %v8094 = vmul.f32 %v207, %v7861
  %v8095 = vmul.f32 %v208, %v7866
  %v8096 = vmul.f32 %v209, %v7871
  %v8097 = vmul.f32 %v210, %v7876
  %v8098 = vmul.f32 %v211, %v7881
  %v8099 = vmul.f32 %v212, %v7886
  %v8100 = vmul.f32 %v213, %v7891
  %v8101 = vmul.f32 %v214, %v7896
  %8103 = vset.pattern.permute.xlu0 1
  %8104 = vperm.xlu0 %8103, %v6674
  %v8105 = vpop.permute.xlu0 %8104
  %8108 = vset.pattern.permute.xlu0 1
  %8109 = vperm.xlu0 %8108, %v6675
  %v8110 = vpop.permute.xlu0 %8109
  %8113 = vset.pattern.permute.xlu0 1
  %8114 = vperm.xlu0 %8113, %v6676
  %v8115 = vpop.permute.xlu0 %8114
  %8118 = vset.pattern.permute.xlu0 1
  %8119 = vperm.xlu0 %8118, %v6677
  %v8120 = vpop.permute.xlu0 %8119
  %8123 = vset.pattern.permute.xlu0 1
  %8124 = vperm.xlu0 %8123, %v6678
  %v8125 = vpop.permute.xlu0 %8124
  %8128 = vset.pattern.permute.xlu0 1
  %8129 = vperm.xlu0 %8128, %v6679
  %v8130 = vpop.permute.xlu0 %8129
  %8133 = vset.pattern.permute.xlu0 1
  %8134 = vperm.xlu0 %8133, %v6680
  %v8135 = vpop.permute.xlu0 %8134
  %8138 = vset.pattern.permute.xlu0 1
  %8139 = vperm.xlu0 %8138, %v6681
  %v8140 = vpop.permute.xlu0 %8139
  %8143 = vset.pattern.permute.xlu0 1
  %8144 = vperm.xlu0 %8143, %v6682
  %v8145 = vpop.permute.xlu0 %8144
  %8148 = vset.pattern.permute.xlu0 1
  %8149 = vperm.xlu0 %8148, %v6683
  %v8150 = vpop.permute.xlu0 %8149
  %8153 = vset.pattern.permute.xlu0 1
  %8154 = vperm.xlu0 %8153, %v6684
  %v8155 = vpop.permute.xlu0 %8154
  %8158 = vset.pattern.permute.xlu0 1
  %8159 = vperm.xlu0 %8158, %v6685
  %v8160 = vpop.permute.xlu0 %8159
  %8163 = vset.pattern.permute.xlu0 1
  %8164 = vperm.xlu0 %8163, %v6686
  %v8165 = vpop.permute.xlu0 %8164
  %8168 = vset.pattern.permute.xlu0 1
  %8169 = vperm.xlu0 %8168, %v6687
  %v8170 = vpop.permute.xlu0 %8169
  %8173 = vset.pattern.permute.xlu0 1
  %8174 = vperm.xlu0 %8173, %v6688
  %v8175 = vpop.permute.xlu0 %8174
  %8178 = vset.pattern.permute.xlu0 1
  %8179 = vperm.xlu0 %8178, %v6689
  %v8180 = vpop.permute.xlu0 %8179
  %8183 = vset.pattern.permute.xlu0 1
  %8184 = vperm.xlu0 %8183, %v6690
  %v8185 = vpop.permute.xlu0 %8184
  %8188 = vset.pattern.permute.xlu0 1
  %8189 = vperm.xlu0 %8188, %v6691
  %v8190 = vpop.permute.xlu0 %8189
  %8193 = vset.pattern.permute.xlu0 1
  %8194 = vperm.xlu0 %8193, %v6692
  %v8195 = vpop.permute.xlu0 %8194
  %8198 = vset.pattern.permute.xlu0 1
  %8199 = vperm.xlu0 %8198, %v6693
  %v8200 = vpop.permute.xlu0 %8199
  %8203 = vset.pattern.permute.xlu0 1
  %8204 = vperm.xlu0 %8203, %v6694
  %v8205 = vpop.permute.xlu0 %8204
  %8208 = vset.pattern.permute.xlu0 1
  %8209 = vperm.xlu0 %8208, %v6695
  %v8210 = vpop.permute.xlu0 %8209
  %8213 = vset.pattern.permute.xlu0 1
  %8214 = vperm.xlu0 %8213, %v6696
  %v8215 = vpop.permute.xlu0 %8214
  %8218 = vset.pattern.permute.xlu0 1
  %8219 = vperm.xlu0 %8218, %v6697
  %v8220 = vpop.permute.xlu0 %8219
  %8223 = vset.pattern.permute.xlu0 1
  %8224 = vperm.xlu0 %8223, %v6698
  %v8225 = vpop.permute.xlu0 %8224
  %8228 = vset.pattern.permute.xlu0 1
  %8229 = vperm.xlu0 %8228, %v6699
  %v8230 = vpop.permute.xlu0 %8229
  %8233 = vset.pattern.permute.xlu0 1
  %8234 = vperm.xlu0 %8233, %v6700
  %v8235 = vpop.permute.xlu0 %8234
  %8238 = vset.pattern.permute.xlu0 1
  %8239 = vperm.xlu0 %8238, %v6701
  %v8240 = vpop.permute.xlu0 %8239
  %8243 = vset.pattern.permute.xlu0 1
  %8244 = vperm.xlu0 %8243, %v6702
  %v8245 = vpop.permute.xlu0 %8244
  %8248 = vset.pattern.permute.xlu0 1
  %8249 = vperm.xlu0 %8248, %v6703
  %v8250 = vpop.permute.xlu0 %8249
  %8253 = vset.pattern.permute.xlu0 1
  %8254 = vperm.xlu0 %8253, %v6704
  %v8255 = vpop.permute.xlu0 %8254
  %8258 = vset.pattern.permute.xlu0 1
  %8259 = vperm.xlu0 %8258, %v6705
  %v8260 = vpop.permute.xlu0 %8259
  %8263 = vset.pattern.permute.xlu0 1
  %8264 = vperm.xlu0 %8263, %v6706
  %v8265 = vpop.permute.xlu0 %8264
  %8268 = vset.pattern.permute.xlu0 1
  %8269 = vperm.xlu0 %8268, %v6707
  %v8270 = vpop.permute.xlu0 %8269
  %8273 = vset.pattern.permute.xlu0 1
  %8274 = vperm.xlu0 %8273, %v6708
  %v8275 = vpop.permute.xlu0 %8274
  %8278 = vset.pattern.permute.xlu0 1
  %8279 = vperm.xlu0 %8278, %v6709
  %v8280 = vpop.permute.xlu0 %8279
  %8283 = vset.pattern.permute.xlu0 1
  %8284 = vperm.xlu0 %8283, %v6710
  %v8285 = vpop.permute.xlu0 %8284
  %8288 = vset.pattern.permute.xlu0 1
  %8289 = vperm.xlu0 %8288, %v6711
  %v8290 = vpop.permute.xlu0 %8289
  %8293 = vset.pattern.permute.xlu0 1
  %8294 = vperm.xlu0 %8293, %v6712
  %v8295 = vpop.permute.xlu0 %8294
  %8298 = vset.pattern.permute.xlu0 1
  %8299 = vperm.xlu0 %8298, %v6713
  %v8300 = vpop.permute.xlu0 %8299
  %8303 = vset.pattern.permute.xlu0 1
  %8304 = vperm.xlu0 %8303, %v6714
  %v8305 = vpop.permute.xlu0 %8304
  %8308 = vset.pattern.permute.xlu0 1
  %8309 = vperm.xlu0 %8308, %v6715
  %v8310 = vpop.permute.xlu0 %8309
  %8313 = vset.pattern.permute.xlu0 1
  %8314 = vperm.xlu0 %8313, %v6716
  %v8315 = vpop.permute.xlu0 %8314
  %8318 = vset.pattern.permute.xlu0 1
  %8319 = vperm.xlu0 %8318, %v6717
  %v8320 = vpop.permute.xlu0 %8319
  %8323 = vset.pattern.permute.xlu0 1
  %8324 = vperm.xlu0 %8323, %v6718
  %v8325 = vpop.permute.xlu0 %8324
  %8328 = vset.pattern.permute.xlu0 1
  %8329 = vperm.xlu0 %8328, %v6719
  %v8330 = vpop.permute.xlu0 %8329
  %8333 = vset.pattern.permute.xlu0 1
  %8334 = vperm.xlu0 %8333, %v6720
  %v8335 = vpop.permute.xlu0 %8334
  %8338 = vset.pattern.permute.xlu0 1
  %8339 = vperm.xlu0 %8338, %v6721
  %v8340 = vpop.permute.xlu0 %8339
  %8343 = vset.pattern.permute.xlu0 1
  %8344 = vperm.xlu0 %8343, %v6722
  %v8345 = vpop.permute.xlu0 %8344
  %8348 = vset.pattern.permute.xlu0 1
  %8349 = vperm.xlu0 %8348, %v6723
  %v8350 = vpop.permute.xlu0 %8349
  %8353 = vset.pattern.permute.xlu0 1
  %8354 = vperm.xlu0 %8353, %v6724
  %v8355 = vpop.permute.xlu0 %8354
  %8358 = vset.pattern.permute.xlu0 1
  %8359 = vperm.xlu0 %8358, %v6725
  %v8360 = vpop.permute.xlu0 %8359
  %8363 = vset.pattern.permute.xlu0 1
  %8364 = vperm.xlu0 %8363, %v6726
  %v8365 = vpop.permute.xlu0 %8364
  %8368 = vset.pattern.permute.xlu0 1
  %8369 = vperm.xlu0 %8368, %v6727
  %v8370 = vpop.permute.xlu0 %8369
  %8373 = vset.pattern.permute.xlu0 1
  %8374 = vperm.xlu0 %8373, %v6728
  %v8375 = vpop.permute.xlu0 %8374
  %8378 = vset.pattern.permute.xlu0 1
  %8379 = vperm.xlu0 %8378, %v6729
  %v8380 = vpop.permute.xlu0 %8379
  %8383 = vset.pattern.permute.xlu0 1
  %8384 = vperm.xlu0 %8383, %v6730
  %v8385 = vpop.permute.xlu0 %8384
  %8388 = vset.pattern.permute.xlu0 1
  %8389 = vperm.xlu0 %8388, %v6731
  %v8390 = vpop.permute.xlu0 %8389
  %8393 = vset.pattern.permute.xlu0 1
  %8394 = vperm.xlu0 %8393, %v6732
  %v8395 = vpop.permute.xlu0 %8394
  %8398 = vset.pattern.permute.xlu0 1
  %8399 = vperm.xlu0 %8398, %v6733
  %v8400 = vpop.permute.xlu0 %8399
  %8403 = vset.pattern.permute.xlu0 1
  %8404 = vperm.xlu0 %8403, %v6734
  %v8405 = vpop.permute.xlu0 %8404
  %8408 = vset.pattern.permute.xlu0 1
  %8409 = vperm.xlu0 %8408, %v6735
  %v8410 = vpop.permute.xlu0 %8409
  %8413 = vset.pattern.permute.xlu0 1
  %8414 = vperm.xlu0 %8413, %v6736
  %v8415 = vpop.permute.xlu0 %8414
  %8418 = vset.pattern.permute.xlu0 1
  %8419 = vperm.xlu0 %8418, %v6737
  %v8420 = vpop.permute.xlu0 %8419
  %8423 = vset.pattern.permute.xlu0 1
  %8424 = vperm.xlu0 %8423, %v6738
  %v8425 = vpop.permute.xlu0 %8424
  %8428 = vset.pattern.permute.xlu0 1
  %8429 = vperm.xlu0 %8428, %v6739
  %v8430 = vpop.permute.xlu0 %8429
  %8433 = vset.pattern.permute.xlu0 1
  %8434 = vperm.xlu0 %8433, %v6740
  %v8435 = vpop.permute.xlu0 %8434
  %8438 = vset.pattern.permute.xlu0 1
  %8439 = vperm.xlu0 %8438, %v6741
  %v8440 = vpop.permute.xlu0 %8439
  %8443 = vset.pattern.permute.xlu0 1
  %8444 = vperm.xlu0 %8443, %v6742
  %v8445 = vpop.permute.xlu0 %8444
  %8448 = vset.pattern.permute.xlu0 1
  %8449 = vperm.xlu0 %8448, %v6743
  %v8450 = vpop.permute.xlu0 %8449
  %8453 = vset.pattern.permute.xlu0 1
  %8454 = vperm.xlu0 %8453, %v6744
  %v8455 = vpop.permute.xlu0 %8454
  %8458 = vset.pattern.permute.xlu0 1
  %8459 = vperm.xlu0 %8458, %v6745
  %v8460 = vpop.permute.xlu0 %8459
  %8463 = vset.pattern.permute.xlu0 1
  %8464 = vperm.xlu0 %8463, %v6746
  %v8465 = vpop.permute.xlu0 %8464
  %8468 = vset.pattern.permute.xlu0 1
  %8469 = vperm.xlu0 %8468, %v6747
  %v8470 = vpop.permute.xlu0 %8469
  %8473 = vset.pattern.permute.xlu0 1
  %8474 = vperm.xlu0 %8473, %v6748
  %v8475 = vpop.permute.xlu0 %8474
  %8478 = vset.pattern.permute.xlu0 1
  %8479 = vperm.xlu0 %8478, %v6749
  %v8480 = vpop.permute.xlu0 %8479
  %8483 = vset.pattern.permute.xlu0 1
  %8484 = vperm.xlu0 %8483, %v6750
  %v8485 = vpop.permute.xlu0 %8484
  %8488 = vset.pattern.permute.xlu0 1
  %8489 = vperm.xlu0 %8488, %v6751
  %v8490 = vpop.permute.xlu0 %8489
  %8493 = vset.pattern.permute.xlu0 1
  %8494 = vperm.xlu0 %8493, %v6752
  %v8495 = vpop.permute.xlu0 %8494
  %8498 = vset.pattern.permute.xlu0 1
  %8499 = vperm.xlu0 %8498, %v6753
  %v8500 = vpop.permute.xlu0 %8499
  %8503 = vset.pattern.permute.xlu0 1
  %8504 = vperm.xlu0 %8503, %v6754
  %v8505 = vpop.permute.xlu0 %8504
  %8508 = vset.pattern.permute.xlu0 1
  %8509 = vperm.xlu0 %8508, %v6755
  %v8510 = vpop.permute.xlu0 %8509
  %8513 = vset.pattern.permute.xlu0 1
  %8514 = vperm.xlu0 %8513, %v6756
  %v8515 = vpop.permute.xlu0 %8514
  %8518 = vset.pattern.permute.xlu0 1
  %8519 = vperm.xlu0 %8518, %v6757
  %v8520 = vpop.permute.xlu0 %8519
  %8523 = vset.pattern.permute.xlu0 1
  %8524 = vperm.xlu0 %8523, %v6758
  %v8525 = vpop.permute.xlu0 %8524
  %8528 = vset.pattern.permute.xlu0 1
  %8529 = vperm.xlu0 %8528, %v6759
  %v8530 = vpop.permute.xlu0 %8529
  %8533 = vset.pattern.permute.xlu0 1
  %8534 = vperm.xlu0 %8533, %v6760
  %v8535 = vpop.permute.xlu0 %8534
  %8538 = vset.pattern.permute.xlu0 1
  %8539 = vperm.xlu0 %8538, %v6761
  %v8540 = vpop.permute.xlu0 %8539
  %8543 = vset.pattern.permute.xlu0 1
  %8544 = vperm.xlu0 %8543, %v6762
  %v8545 = vpop.permute.xlu0 %8544
  %8548 = vset.pattern.permute.xlu0 1
  %8549 = vperm.xlu0 %8548, %v6763
  %v8550 = vpop.permute.xlu0 %8549
  %8553 = vset.pattern.permute.xlu0 1
  %8554 = vperm.xlu0 %8553, %v6764
  %v8555 = vpop.permute.xlu0 %8554
  %8558 = vset.pattern.permute.xlu0 1
  %8559 = vperm.xlu0 %8558, %v6765
  %v8560 = vpop.permute.xlu0 %8559
  %8563 = vset.pattern.permute.xlu0 1
  %8564 = vperm.xlu0 %8563, %v6766
  %v8565 = vpop.permute.xlu0 %8564
  %8568 = vset.pattern.permute.xlu0 1
  %8569 = vperm.xlu0 %8568, %v6767
  %v8570 = vpop.permute.xlu0 %8569
  %8573 = vset.pattern.permute.xlu0 1
  %8574 = vperm.xlu0 %8573, %v6768
  %v8575 = vpop.permute.xlu0 %8574
  %8578 = vset.pattern.permute.xlu0 1
  %8579 = vperm.xlu0 %8578, %v6769
  %v8580 = vpop.permute.xlu0 %8579
  %8583 = vset.pattern.permute.xlu0 1
  %8584 = vperm.xlu0 %8583, %v6770
  %v8585 = vpop.permute.xlu0 %8584
  %8588 = vset.pattern.permute.xlu0 1
  %8589 = vperm.xlu0 %8588, %v6771
  %v8590 = vpop.permute.xlu0 %8589
  %8593 = vset.pattern.permute.xlu0 1
  %8594 = vperm.xlu0 %8593, %v6772
  %v8595 = vpop.permute.xlu0 %8594
  %8598 = vset.pattern.permute.xlu0 1
  %8599 = vperm.xlu0 %8598, %v6773
  %v8600 = vpop.permute.xlu0 %8599
  %8603 = vset.pattern.permute.xlu0 1
  %8604 = vperm.xlu0 %8603, %v6774
  %v8605 = vpop.permute.xlu0 %8604
  %8608 = vset.pattern.permute.xlu0 1
  %8609 = vperm.xlu0 %8608, %v6775
  %v8610 = vpop.permute.xlu0 %8609
  %8613 = vset.pattern.permute.xlu0 1
  %8614 = vperm.xlu0 %8613, %v6776
  %v8615 = vpop.permute.xlu0 %8614
  %8618 = vset.pattern.permute.xlu0 1
  %8619 = vperm.xlu0 %8618, %v6777
  %v8620 = vpop.permute.xlu0 %8619
  %8623 = vset.pattern.permute.xlu0 1
  %8624 = vperm.xlu0 %8623, %v6778
  %v8625 = vpop.permute.xlu0 %8624
  %8628 = vset.pattern.permute.xlu0 1
  %8629 = vperm.xlu0 %8628, %v6779
  %v8630 = vpop.permute.xlu0 %8629
  %8633 = vset.pattern.permute.xlu0 1
  %8634 = vperm.xlu0 %8633, %v6780
  %v8635 = vpop.permute.xlu0 %8634
  %8638 = vset.pattern.permute.xlu0 1
  %8639 = vperm.xlu0 %8638, %v6781
  %v8640 = vpop.permute.xlu0 %8639
  %8643 = vset.pattern.permute.xlu0 1
  %8644 = vperm.xlu0 %8643, %v6782
  %v8645 = vpop.permute.xlu0 %8644
  %8648 = vset.pattern.permute.xlu0 1
  %8649 = vperm.xlu0 %8648, %v6783
  %v8650 = vpop.permute.xlu0 %8649
  %8653 = vset.pattern.permute.xlu0 1
  %8654 = vperm.xlu0 %8653, %v6784
  %v8655 = vpop.permute.xlu0 %8654
  %8658 = vset.pattern.permute.xlu0 1
  %8659 = vperm.xlu0 %8658, %v6785
  %v8660 = vpop.permute.xlu0 %8659
  %8663 = vset.pattern.permute.xlu0 1
  %8664 = vperm.xlu0 %8663, %v6786
  %v8665 = vpop.permute.xlu0 %8664
  %8668 = vset.pattern.permute.xlu0 1
  %8669 = vperm.xlu0 %8668, %v6787
  %v8670 = vpop.permute.xlu0 %8669
  %8673 = vset.pattern.permute.xlu0 1
  %8674 = vperm.xlu0 %8673, %v6788
  %v8675 = vpop.permute.xlu0 %8674
  %8678 = vset.pattern.permute.xlu0 1
  %8679 = vperm.xlu0 %8678, %v6789
  %v8680 = vpop.permute.xlu0 %8679
  %8683 = vset.pattern.permute.xlu0 1
  %8684 = vperm.xlu0 %8683, %v6790
  %v8685 = vpop.permute.xlu0 %8684
  %8688 = vset.pattern.permute.xlu0 1
  %8689 = vperm.xlu0 %8688, %v6791
  %v8690 = vpop.permute.xlu0 %8689
  %8693 = vset.pattern.permute.xlu0 1
  %8694 = vperm.xlu0 %8693, %v6792
  %v8695 = vpop.permute.xlu0 %8694
  %8698 = vset.pattern.permute.xlu0 1
  %8699 = vperm.xlu0 %8698, %v6793
  %v8700 = vpop.permute.xlu0 %8699
  %8703 = vset.pattern.permute.xlu0 1
  %8704 = vperm.xlu0 %8703, %v6794
  %v8705 = vpop.permute.xlu0 %8704
  %8708 = vset.pattern.permute.xlu0 1
  %8709 = vperm.xlu0 %8708, %v6795
  %v8710 = vpop.permute.xlu0 %8709
  %8713 = vset.pattern.permute.xlu0 1
  %8714 = vperm.xlu0 %8713, %v6796
  %v8715 = vpop.permute.xlu0 %8714
  %8718 = vset.pattern.permute.xlu0 1
  %8719 = vperm.xlu0 %8718, %v6797
  %v8720 = vpop.permute.xlu0 %8719
  %8723 = vset.pattern.permute.xlu0 1
  %8724 = vperm.xlu0 %8723, %v6798
  %v8725 = vpop.permute.xlu0 %8724
  %8728 = vset.pattern.permute.xlu0 1
  %8729 = vperm.xlu0 %8728, %v6799
  %v8730 = vpop.permute.xlu0 %8729
  %8733 = vset.pattern.permute.xlu0 1
  %8734 = vperm.xlu0 %8733, %v6800
  %v8735 = vpop.permute.xlu0 %8734
  %8738 = vset.pattern.permute.xlu0 1
  %8739 = vperm.xlu0 %8738, %v6801
  %v8740 = vpop.permute.xlu0 %8739
  %8743 = vset.pattern.permute.xlu0 1
  %8744 = vperm.xlu0 %8743, %v6802
  %v8745 = vpop.permute.xlu0 %8744
  %8748 = vset.pattern.permute.xlu0 1
  %8749 = vperm.xlu0 %8748, %v6803
  %v8750 = vpop.permute.xlu0 %8749
  %8753 = vset.pattern.permute.xlu0 1
  %8754 = vperm.xlu0 %8753, %v6804
  %v8755 = vpop.permute.xlu0 %8754
  %8758 = vset.pattern.permute.xlu0 1
  %8759 = vperm.xlu0 %8758, %v6805
  %v8760 = vpop.permute.xlu0 %8759
  %8763 = vset.pattern.permute.xlu0 1
  %8764 = vperm.xlu0 %8763, %v6806
  %v8765 = vpop.permute.xlu0 %8764
  %8768 = vset.pattern.permute.xlu0 1
  %8769 = vperm.xlu0 %8768, %v6807
  %v8770 = vpop.permute.xlu0 %8769
  %8773 = vset.pattern.permute.xlu0 1
  %8774 = vperm.xlu0 %8773, %v6808
  %v8775 = vpop.permute.xlu0 %8774
  %8778 = vset.pattern.permute.xlu0 1
  %8779 = vperm.xlu0 %8778, %v6809
  %v8780 = vpop.permute.xlu0 %8779
  %8783 = vset.pattern.permute.xlu0 1
  %8784 = vperm.xlu0 %8783, %v6810
  %v8785 = vpop.permute.xlu0 %8784
  %8788 = vset.pattern.permute.xlu0 1
  %8789 = vperm.xlu0 %8788, %v6811
  %v8790 = vpop.permute.xlu0 %8789
  %8793 = vset.pattern.permute.xlu0 1
  %8794 = vperm.xlu0 %8793, %v6812
  %v8795 = vpop.permute.xlu0 %8794
  %8798 = vset.pattern.permute.xlu0 1
  %8799 = vperm.xlu0 %8798, %v6813
  %v8800 = vpop.permute.xlu0 %8799
  %8803 = vset.pattern.permute.xlu0 1
  %8804 = vperm.xlu0 %8803, %v6814
  %v8805 = vpop.permute.xlu0 %8804
  %8808 = vset.pattern.permute.xlu0 1
  %8809 = vperm.xlu0 %8808, %v6815
  %v8810 = vpop.permute.xlu0 %8809
  %8813 = vset.pattern.permute.xlu0 1
  %8814 = vperm.xlu0 %8813, %v6816
  %v8815 = vpop.permute.xlu0 %8814
  %8818 = vset.pattern.permute.xlu0 1
  %8819 = vperm.xlu0 %8818, %v6817
  %v8820 = vpop.permute.xlu0 %8819
  %8823 = vset.pattern.permute.xlu0 1
  %8824 = vperm.xlu0 %8823, %v6818
  %v8825 = vpop.permute.xlu0 %8824
  %8828 = vset.pattern.permute.xlu0 1
  %8829 = vperm.xlu0 %8828, %v6819
  %v8830 = vpop.permute.xlu0 %8829
  %8833 = vset.pattern.permute.xlu0 1
  %8834 = vperm.xlu0 %8833, %v6820
  %v8835 = vpop.permute.xlu0 %8834
  %8838 = vset.pattern.permute.xlu0 1
  %8839 = vperm.xlu0 %8838, %v6821
  %v8840 = vpop.permute.xlu0 %8839
  %8843 = vset.pattern.permute.xlu0 1
  %8844 = vperm.xlu0 %8843, %v6822
  %v8845 = vpop.permute.xlu0 %8844
  %8848 = vset.pattern.permute.xlu0 1
  %8849 = vperm.xlu0 %8848, %v6823
  %v8850 = vpop.permute.xlu0 %8849
  %8853 = vset.pattern.permute.xlu0 1
  %8854 = vperm.xlu0 %8853, %v6824
  %v8855 = vpop.permute.xlu0 %8854
  %8858 = vset.pattern.permute.xlu0 1
  %8859 = vperm.xlu0 %8858, %v6825
  %v8860 = vpop.permute.xlu0 %8859
  %8863 = vset.pattern.permute.xlu0 1
  %8864 = vperm.xlu0 %8863, %v6826
  %v8865 = vpop.permute.xlu0 %8864
  %8868 = vset.pattern.permute.xlu0 1
  %8869 = vperm.xlu0 %8868, %v6827
  %v8870 = vpop.permute.xlu0 %8869
  %8873 = vset.pattern.permute.xlu0 1
  %8874 = vperm.xlu0 %8873, %v6828
  %v8875 = vpop.permute.xlu0 %8874
  %8878 = vset.pattern.permute.xlu0 1
  %8879 = vperm.xlu0 %8878, %v6829
  %v8880 = vpop.permute.xlu0 %8879
  %8883 = vset.pattern.permute.xlu0 1
  %8884 = vperm.xlu0 %8883, %v6830
  %v8885 = vpop.permute.xlu0 %8884
  %8888 = vset.pattern.permute.xlu0 1
  %8889 = vperm.xlu0 %8888, %v6831
  %v8890 = vpop.permute.xlu0 %8889
  %8893 = vset.pattern.permute.xlu0 1
  %8894 = vperm.xlu0 %8893, %v6832
  %v8895 = vpop.permute.xlu0 %8894
  %8898 = vset.pattern.permute.xlu0 1
  %8899 = vperm.xlu0 %8898, %v6833
  %v8900 = vpop.permute.xlu0 %8899
  %8903 = vset.pattern.permute.xlu0 1
  %8904 = vperm.xlu0 %8903, %v6834
  %v8905 = vpop.permute.xlu0 %8904
  %8908 = vset.pattern.permute.xlu0 1
  %8909 = vperm.xlu0 %8908, %v6835
  %v8910 = vpop.permute.xlu0 %8909
  %8913 = vset.pattern.permute.xlu0 1
  %8914 = vperm.xlu0 %8913, %v6836
  %v8915 = vpop.permute.xlu0 %8914
  %8918 = vset.pattern.permute.xlu0 1
  %8919 = vperm.xlu0 %8918, %v6837
  %v8920 = vpop.permute.xlu0 %8919
  %8923 = vset.pattern.permute.xlu0 1
  %8924 = vperm.xlu0 %8923, %v6838
  %v8925 = vpop.permute.xlu0 %8924
  %8928 = vset.pattern.permute.xlu0 1
  %8929 = vperm.xlu0 %8928, %v6839
  %v8930 = vpop.permute.xlu0 %8929
  %8933 = vset.pattern.permute.xlu0 1
  %8934 = vperm.xlu0 %8933, %v6840
  %v8935 = vpop.permute.xlu0 %8934
  %8938 = vset.pattern.permute.xlu0 1
  %8939 = vperm.xlu0 %8938, %v6841
  %v8940 = vpop.permute.xlu0 %8939
  %8943 = vset.pattern.permute.xlu0 1
  %8944 = vperm.xlu0 %8943, %v6842
  %v8945 = vpop.permute.xlu0 %8944
  %8948 = vset.pattern.permute.xlu0 1
  %8949 = vperm.xlu0 %8948, %v6843
  %v8950 = vpop.permute.xlu0 %8949
  %8953 = vset.pattern.permute.xlu0 1
  %8954 = vperm.xlu0 %8953, %v6844
  %v8955 = vpop.permute.xlu0 %8954
  %8958 = vset.pattern.permute.xlu0 1
  %8959 = vperm.xlu0 %8958, %v6845
  %v8960 = vpop.permute.xlu0 %8959
  %8963 = vset.pattern.permute.xlu0 1
  %8964 = vperm.xlu0 %8963, %v6846
  %v8965 = vpop.permute.xlu0 %8964
  %8968 = vset.pattern.permute.xlu0 1
  %8969 = vperm.xlu0 %8968, %v6847
  %v8970 = vpop.permute.xlu0 %8969
  %8973 = vset.pattern.permute.xlu0 1
  %8974 = vperm.xlu0 %8973, %v6848
  %v8975 = vpop.permute.xlu0 %8974
  %8978 = vset.pattern.permute.xlu0 1
  %8979 = vperm.xlu0 %8978, %v6849
  %v8980 = vpop.permute.xlu0 %8979
  %8983 = vset.pattern.permute.xlu0 1
  %8984 = vperm.xlu0 %8983, %v6850
  %v8985 = vpop.permute.xlu0 %8984
  %8988 = vset.pattern.permute.xlu0 1
  %8989 = vperm.xlu0 %8988, %v6851
  %v8990 = vpop.permute.xlu0 %8989
  %8993 = vset.pattern.permute.xlu0 1
  %8994 = vperm.xlu0 %8993, %v6852
  %v8995 = vpop.permute.xlu0 %8994
  %8998 = vset.pattern.permute.xlu0 1
  %8999 = vperm.xlu0 %8998, %v6853
  %v9000 = vpop.permute.xlu0 %8999
  %9003 = vset.pattern.permute.xlu0 1
  %9004 = vperm.xlu0 %9003, %v6854
  %v9005 = vpop.permute.xlu0 %9004
  %9008 = vset.pattern.permute.xlu0 1
  %9009 = vperm.xlu0 %9008, %v6855
  %v9010 = vpop.permute.xlu0 %9009
  %9013 = vset.pattern.permute.xlu0 1
  %9014 = vperm.xlu0 %9013, %v6856
  %v9015 = vpop.permute.xlu0 %9014
  %9018 = vset.pattern.permute.xlu0 1
  %9019 = vperm.xlu0 %9018, %v6857
  %v9020 = vpop.permute.xlu0 %9019
  %9023 = vset.pattern.permute.xlu0 1
  %9024 = vperm.xlu0 %9023, %v6858
  %v9025 = vpop.permute.xlu0 %9024
  %9028 = vset.pattern.permute.xlu0 1
  %9029 = vperm.xlu0 %9028, %v6859
  %v9030 = vpop.permute.xlu0 %9029
  %9033 = vset.pattern.permute.xlu0 1
  %9034 = vperm.xlu0 %9033, %v6860
  %v9035 = vpop.permute.xlu0 %9034
  %9038 = vset.pattern.permute.xlu0 1
  %9039 = vperm.xlu0 %9038, %v6861
  %v9040 = vpop.permute.xlu0 %9039
  %9043 = vset.pattern.permute.xlu0 1
  %9044 = vperm.xlu0 %9043, %v6862
  %v9045 = vpop.permute.xlu0 %9044
  %9048 = vset.pattern.permute.xlu0 1
  %9049 = vperm.xlu0 %9048, %v6863
  %v9050 = vpop.permute.xlu0 %9049
  %9053 = vset.pattern.permute.xlu0 1
  %9054 = vperm.xlu0 %9053, %v6864
  %v9055 = vpop.permute.xlu0 %9054
  %9058 = vset.pattern.permute.xlu0 1
  %9059 = vperm.xlu0 %9058, %v6865
  %v9060 = vpop.permute.xlu0 %9059
  %9063 = vset.pattern.permute.xlu0 1
  %9064 = vperm.xlu0 %9063, %v6866
  %v9065 = vpop.permute.xlu0 %9064
  %9068 = vset.pattern.permute.xlu0 1
  %9069 = vperm.xlu0 %9068, %v6867
  %v9070 = vpop.permute.xlu0 %9069
  %9073 = vset.pattern.permute.xlu0 1
  %9074 = vperm.xlu0 %9073, %v6868
  %v9075 = vpop.permute.xlu0 %9074
  %9078 = vset.pattern.permute.xlu0 1
  %9079 = vperm.xlu0 %9078, %v6869
  %v9080 = vpop.permute.xlu0 %9079
  %9083 = vset.pattern.permute.xlu0 1
  %9084 = vperm.xlu0 %9083, %v6870
  %v9085 = vpop.permute.xlu0 %9084
  %9088 = vset.pattern.permute.xlu0 1
  %9089 = vperm.xlu0 %9088, %v6871
  %v9090 = vpop.permute.xlu0 %9089
  %9093 = vset.pattern.permute.xlu0 1
  %9094 = vperm.xlu0 %9093, %v6872
  %v9095 = vpop.permute.xlu0 %9094
  %9098 = vset.pattern.permute.xlu0 1
  %9099 = vperm.xlu0 %9098, %v6873
  %v9100 = vpop.permute.xlu0 %9099
  %9103 = vset.pattern.permute.xlu0 1
  %9104 = vperm.xlu0 %9103, %v6874
  %v9105 = vpop.permute.xlu0 %9104
  %9108 = vset.pattern.permute.xlu0 1
  %9109 = vperm.xlu0 %9108, %v6875
  %v9110 = vpop.permute.xlu0 %9109
  %9113 = vset.pattern.permute.xlu0 1
  %9114 = vperm.xlu0 %9113, %v6876
  %v9115 = vpop.permute.xlu0 %9114
  %9118 = vset.pattern.permute.xlu0 1
  %9119 = vperm.xlu0 %9118, %v6877
  %v9120 = vpop.permute.xlu0 %9119
  %v9122 = vadd.f32 %v7898, %v8105
  %v9123 = vadd.f32 %v7899, %v8110
  %v9124 = vadd.f32 %v7900, %v8115
  %v9125 = vadd.f32 %v7901, %v8120
  %v9126 = vadd.f32 %v7902, %v8125
  %v9127 = vadd.f32 %v7903, %v8130
  %v9128 = vadd.f32 %v7904, %v8135
  %v9129 = vadd.f32 %v7905, %v8140
  %v9130 = vadd.f32 %v7906, %v8145
  %v9131 = vadd.f32 %v7907, %v8150
  %v9132 = vadd.f32 %v7908, %v8155
  %v9133 = vadd.f32 %v7909, %v8160
  %v9134 = vadd.f32 %v7910, %v8165
  %v9135 = vadd.f32 %v7911, %v8170
  %v9136 = vadd.f32 %v7912, %v8175
  %v9137 = vadd.f32 %v7913, %v8180
  %v9138 = vadd.f32 %v7914, %v8185
  %v9139 = vadd.f32 %v7915, %v8190
  %v9140 = vadd.f32 %v7916, %v8195
  %v9141 = vadd.f32 %v7917, %v8200
  %v9142 = vadd.f32 %v7918, %v8205
  %v9143 = vadd.f32 %v7919, %v8210
  %v9144 = vadd.f32 %v7920, %v8215
  %v9145 = vadd.f32 %v7921, %v8220
  %v9146 = vadd.f32 %v7922, %v8225
  %v9147 = vadd.f32 %v7923, %v8230
  %v9148 = vadd.f32 %v7924, %v8235
  %v9149 = vadd.f32 %v7925, %v8240
  %v9150 = vadd.f32 %v7926, %v8245
  %v9151 = vadd.f32 %v7927, %v8250
  %v9152 = vadd.f32 %v7928, %v8255
  %v9153 = vadd.f32 %v7929, %v8260
  %v9154 = vadd.f32 %v7930, %v8265
  %v9155 = vadd.f32 %v7931, %v8270
  %v9156 = vadd.f32 %v7932, %v8275
  %v9157 = vadd.f32 %v7933, %v8280
  %v9158 = vadd.f32 %v7934, %v8285
  %v9159 = vadd.f32 %v7935, %v8290
  %v9160 = vadd.f32 %v7936, %v8295
  %v9161 = vadd.f32 %v7937, %v8300
  %v9162 = vadd.f32 %v7938, %v8305
  %v9163 = vadd.f32 %v7939, %v8310
  %v9164 = vadd.f32 %v7940, %v8315
  %v9165 = vadd.f32 %v7941, %v8320
  %v9166 = vadd.f32 %v7942, %v8325
  %v9167 = vadd.f32 %v7943, %v8330
  %v9168 = vadd.f32 %v7944, %v8335
  %v9169 = vadd.f32 %v7945, %v8340
  %v9170 = vadd.f32 %v7946, %v8345
  %v9171 = vadd.f32 %v7947, %v8350
  %v9172 = vadd.f32 %v7948, %v8355
  %v9173 = vadd.f32 %v7949, %v8360
  %v9174 = vadd.f32 %v7950, %v8365
  %v9175 = vadd.f32 %v7951, %v8370
  %v9176 = vadd.f32 %v7952, %v8375
  %v9177 = vadd.f32 %v7953, %v8380
  %v9178 = vadd.f32 %v7954, %v8385
  %v9179 = vadd.f32 %v7955, %v8390
  %v9180 = vadd.f32 %v7956, %v8395
  %v9181 = vadd.f32 %v7957, %v8400
  %v9182 = vadd.f32 %v7958, %v8405
  %v9183 = vadd.f32 %v7959, %v8410
  %v9184 = vadd.f32 %v7960, %v8415
  %v9185 = vadd.f32 %v7961, %v8420
  %v9186 = vadd.f32 %v7962, %v8425
  %v9187 = vadd.f32 %v7963, %v8430
  %v9188 = vadd.f32 %v7964, %v8435
  %v9189 = vadd.f32 %v7965, %v8440
  %v9190 = vadd.f32 %v7966, %v8445
  %v9191 = vadd.f32 %v7967, %v8450
  %v9192 = vadd.f32 %v7968, %v8455
  %v9193 = vadd.f32 %v7969, %v8460
  %v9194 = vadd.f32 %v7970, %v8465
  %v9195 = vadd.f32 %v7971, %v8470
  %v9196 = vadd.f32 %v7972, %v8475
  %v9197 = vadd.f32 %v7973, %v8480
  %v9198 = vadd.f32 %v7974, %v8485
  %v9199 = vadd.f32 %v7975, %v8490
  %v9200 = vadd.f32 %v7976, %v8495
  %v9201 = vadd.f32 %v7977, %v8500
  %v9202 = vadd.f32 %v7978, %v8505
  %v9203 = vadd.f32 %v7979, %v8510
  %v9204 = vadd.f32 %v7980, %v8515
  %v9205 = vadd.f32 %v7981, %v8520
  %v9206 = vadd.f32 %v7982, %v8525
  %v9207 = vadd.f32 %v7983, %v8530
  %v9208 = vadd.f32 %v7984, %v8535
  %v9209 = vadd.f32 %v7985, %v8540
  %v9210 = vadd.f32 %v7986, %v8545
  %v9211 = vadd.f32 %v7987, %v8550
  %v9212 = vadd.f32 %v7988, %v8555
  %v9213 = vadd.f32 %v7989, %v8560
  %v9214 = vadd.f32 %v7990, %v8565
  %v9215 = vadd.f32 %v7991, %v8570
  %v9216 = vadd.f32 %v7992, %v8575
  %v9217 = vadd.f32 %v7993, %v8580
  %v9218 = vadd.f32 %v7994, %v8585
  %v9219 = vadd.f32 %v7995, %v8590
  %v9220 = vadd.f32 %v7996, %v8595
  %v9221 = vadd.f32 %v7997, %v8600
  %v9222 = vadd.f32 %v7998, %v8605
  %v9223 = vadd.f32 %v7999, %v8610
  %v9224 = vadd.f32 %v8000, %v8615
  %v9225 = vadd.f32 %v8001, %v8620
  %v9226 = vadd.f32 %v8002, %v8625
  %v9227 = vadd.f32 %v8003, %v8630
  %v9228 = vadd.f32 %v8004, %v8635
  %v9229 = vadd.f32 %v8005, %v8640
  %v9230 = vadd.f32 %v8006, %v8645
  %v9231 = vadd.f32 %v8007, %v8650
  %v9232 = vadd.f32 %v8008, %v8655
  %v9233 = vadd.f32 %v8009, %v8660
  %v9234 = vadd.f32 %v8010, %v8665
  %v9235 = vadd.f32 %v8011, %v8670
  %v9236 = vadd.f32 %v8012, %v8675
  %v9237 = vadd.f32 %v8013, %v8680
  %v9238 = vadd.f32 %v8014, %v8685
  %v9239 = vadd.f32 %v8015, %v8690
  %v9240 = vadd.f32 %v8016, %v8695
  %v9241 = vadd.f32 %v8017, %v8700
  %v9242 = vadd.f32 %v8018, %v8705
  %v9243 = vadd.f32 %v8019, %v8710
  %v9244 = vadd.f32 %v8020, %v8715
  %v9245 = vadd.f32 %v8021, %v8720
  %v9246 = vadd.f32 %v8022, %v8725
  %v9247 = vadd.f32 %v8023, %v8730
  %v9248 = vadd.f32 %v8024, %v8735
  %v9249 = vadd.f32 %v8025, %v8740
  %v9250 = vadd.f32 %v8026, %v8745
  %v9251 = vadd.f32 %v8027, %v8750
  %v9252 = vadd.f32 %v8028, %v8755
  %v9253 = vadd.f32 %v8029, %v8760
  %v9254 = vadd.f32 %v8030, %v8765
  %v9255 = vadd.f32 %v8031, %v8770
  %v9256 = vadd.f32 %v8032, %v8775
  %v9257 = vadd.f32 %v8033, %v8780
  %v9258 = vadd.f32 %v8034, %v8785
  %v9259 = vadd.f32 %v8035, %v8790
  %v9260 = vadd.f32 %v8036, %v8795
  %v9261 = vadd.f32 %v8037, %v8800
  %v9262 = vadd.f32 %v8038, %v8805
  %v9263 = vadd.f32 %v8039, %v8810
  %v9264 = vadd.f32 %v8040, %v8815
  %v9265 = vadd.f32 %v8041, %v8820
  %v9266 = vadd.f32 %v8042, %v8825
  %v9267 = vadd.f32 %v8043, %v8830
  %v9268 = vadd.f32 %v8044, %v8835
  %v9269 = vadd.f32 %v8045, %v8840
  %v9270 = vadd.f32 %v8046, %v8845
  %v9271 = vadd.f32 %v8047, %v8850
  %v9272 = vadd.f32 %v8048, %v8855
  %v9273 = vadd.f32 %v8049, %v8860
  %v9274 = vadd.f32 %v8050, %v8865
  %v9275 = vadd.f32 %v8051, %v8870
  %v9276 = vadd.f32 %v8052, %v8875
  %v9277 = vadd.f32 %v8053, %v8880
  %v9278 = vadd.f32 %v8054, %v8885
  %v9279 = vadd.f32 %v8055, %v8890
  %v9280 = vadd.f32 %v8056, %v8895
  %v9281 = vadd.f32 %v8057, %v8900
  %v9282 = vadd.f32 %v8058, %v8905
  %v9283 = vadd.f32 %v8059, %v8910
  %v9284 = vadd.f32 %v8060, %v8915
  %v9285 = vadd.f32 %v8061, %v8920
  %v9286 = vadd.f32 %v8062, %v8925
  %v9287 = vadd.f32 %v8063, %v8930
  %v9288 = vadd.f32 %v8064, %v8935
  %v9289 = vadd.f32 %v8065, %v8940
  %v9290 = vadd.f32 %v8066, %v8945
  %v9291 = vadd.f32 %v8067, %v8950
  %v9292 = vadd.f32 %v8068, %v8955
  %v9293 = vadd.f32 %v8069, %v8960
  %v9294 = vadd.f32 %v8070, %v8965
  %v9295 = vadd.f32 %v8071, %v8970
  %v9296 = vadd.f32 %v8072, %v8975
  %v9297 = vadd.f32 %v8073, %v8980
  %v9298 = vadd.f32 %v8074, %v8985
  %v9299 = vadd.f32 %v8075, %v8990
  %v9300 = vadd.f32 %v8076, %v8995
  %v9301 = vadd.f32 %v8077, %v9000
  %v9302 = vadd.f32 %v8078, %v9005
  %v9303 = vadd.f32 %v8079, %v9010
  %v9304 = vadd.f32 %v8080, %v9015
  %v9305 = vadd.f32 %v8081, %v9020
  %v9306 = vadd.f32 %v8082, %v9025
  %v9307 = vadd.f32 %v8083, %v9030
  %v9308 = vadd.f32 %v8084, %v9035
  %v9309 = vadd.f32 %v8085, %v9040
  %v9310 = vadd.f32 %v8086, %v9045
  %v9311 = vadd.f32 %v8087, %v9050
  %v9312 = vadd.f32 %v8088, %v9055
  %v9313 = vadd.f32 %v8089, %v9060
  %v9314 = vadd.f32 %v8090, %v9065
  %v9315 = vadd.f32 %v8091, %v9070
  %v9316 = vadd.f32 %v8092, %v9075
  %v9317 = vadd.f32 %v8093, %v9080
  %v9318 = vadd.f32 %v8094, %v9085
  %v9319 = vadd.f32 %v8095, %v9090
  %v9320 = vadd.f32 %v8096, %v9095
  %v9321 = vadd.f32 %v8097, %v9100
  %v9322 = vadd.f32 %v8098, %v9105
  %v9323 = vadd.f32 %v8099, %v9110
  %v9324 = vadd.f32 %v8100, %v9115
  %v9325 = vadd.f32 %v8101, %v9120
  %9326 = vst.msk [vmem:[%s2] sm:$0xff] %vm215, %v9122
  %9327 = vst.msk [vmem:[%s2 + $0x8] sm:$0xff] %vm215, %v9123
  %9328 = vst.msk [vmem:[%s2 + $0x10] sm:$0xff] %vm215, %v9124
  %9329 = vst.msk [vmem:[%s2 + $0x18] sm:$0xff] %vm215, %v9125
  %9330 = vst.msk [vmem:[%s2 + $0x20] sm:$0xff] %vm215, %v9126
  %9331 = vst.msk [vmem:[%s2 + $0x28] sm:$0xff] %vm215, %v9127
  %9332 = vst.msk [vmem:[%s2 + $0x30] sm:$0xff] %vm215, %v9128
  %9333 = vst.msk [vmem:[%s2 + $0x38] sm:$0xff] %vm215, %v9129
  %9334 = vst.msk [vmem:[%s2 + $0x40] sm:$0xff] %vm215, %v9130
  %9335 = vst.msk [vmem:[%s2 + $0x48] sm:$0xff] %vm215, %v9131
  %9336 = vst.msk [vmem:[%s2 + $0x50] sm:$0xff] %vm215, %v9132
  %9337 = vst.msk [vmem:[%s2 + $0x58] sm:$0xff] %vm215, %v9133
  %9338 = vst.msk [vmem:[%s2 + $0x60] sm:$0xff] %vm215, %v9134
  %9339 = vst.msk [vmem:[%s2 + $0x68] sm:$0xff] %vm215, %v9135
  %9340 = vst.msk [vmem:[%s2 + $0x70] sm:$0xff] %vm215, %v9136
  %9341 = vst.msk [vmem:[%s2 + $0x78] sm:$0xff] %vm215, %v9137
  %9342 = vst.msk [vmem:[%s2 + $0x80] sm:$0xff] %vm215, %v9138
  %9343 = vst.msk [vmem:[%s2 + $0x88] sm:$0xff] %vm215, %v9139
  %9344 = vst.msk [vmem:[%s2 + $0x90] sm:$0xff] %vm215, %v9140
  %9345 = vst.msk [vmem:[%s2 + $0x98] sm:$0xff] %vm215, %v9141
  %9346 = vst.msk [vmem:[%s2 + $0xa0] sm:$0xff] %vm215, %v9142
  %9347 = vst.msk [vmem:[%s2 + $0xa8] sm:$0xff] %vm215, %v9143
  %9348 = vst.msk [vmem:[%s2 + $0xb0] sm:$0xff] %vm215, %v9144
  %9349 = vst.msk [vmem:[%s2 + $0xb8] sm:$0xff] %vm215, %v9145
  %9350 = vst.msk [vmem:[%s2 + $0xc0] sm:$0xff] %vm215, %v9146
  %9351 = vst.msk [vmem:[%s2 + $0xc8] sm:$0xff] %vm215, %v9147
  %9352 = vst.msk [vmem:[%s2 + $0xd0] sm:$0xff] %vm215, %v9148
  %9353 = vst.msk [vmem:[%s2 + $0xd8] sm:$0xff] %vm215, %v9149
  %9354 = vst.msk [vmem:[%s2 + $0xe0] sm:$0xff] %vm215, %v9150
  %9355 = vst.msk [vmem:[%s2 + $0xe8] sm:$0xff] %vm215, %v9151
  %9356 = vst.msk [vmem:[%s2 + $0xf0] sm:$0xff] %vm215, %v9152
  %9357 = vst.msk [vmem:[%s2 + $0xf8] sm:$0xff] %vm215, %v9153
  %9358 = vst.msk [vmem:[%s2 + $0x100] sm:$0xff] %vm215, %v9154
  %9359 = vst.msk [vmem:[%s2 + $0x108] sm:$0xff] %vm215, %v9155
  %9360 = vst.msk [vmem:[%s2 + $0x110] sm:$0xff] %vm215, %v9156
  %9361 = vst.msk [vmem:[%s2 + $0x118] sm:$0xff] %vm215, %v9157
  %9362 = vst.msk [vmem:[%s2 + $0x120] sm:$0xff] %vm215, %v9158
  %9363 = vst.msk [vmem:[%s2 + $0x128] sm:$0xff] %vm215, %v9159
  %9364 = vst.msk [vmem:[%s2 + $0x130] sm:$0xff] %vm215, %v9160
  %9365 = vst.msk [vmem:[%s2 + $0x138] sm:$0xff] %vm215, %v9161
  %9366 = vst.msk [vmem:[%s2 + $0x140] sm:$0xff] %vm215, %v9162
  %9367 = vst.msk [vmem:[%s2 + $0x148] sm:$0xff] %vm215, %v9163
  %9368 = vst.msk [vmem:[%s2 + $0x150] sm:$0xff] %vm215, %v9164
  %9369 = vst.msk [vmem:[%s2 + $0x158] sm:$0xff] %vm215, %v9165
  %9370 = vst.msk [vmem:[%s2 + $0x160] sm:$0xff] %vm215, %v9166
  %9371 = vst.msk [vmem:[%s2 + $0x168] sm:$0xff] %vm215, %v9167
  %9372 = vst.msk [vmem:[%s2 + $0x170] sm:$0xff] %vm215, %v9168
  %9373 = vst.msk [vmem:[%s2 + $0x178] sm:$0xff] %vm215, %v9169
  %9374 = vst.msk [vmem:[%s2 + $0x180] sm:$0xff] %vm215, %v9170
  %9375 = vst.msk [vmem:[%s2 + $0x188] sm:$0xff] %vm215, %v9171
  %9376 = vst.msk [vmem:[%s2 + $0x190] sm:$0xff] %vm215, %v9172
  %9377 = vst.msk [vmem:[%s2 + $0x198] sm:$0xff] %vm215, %v9173
  %9378 = vst.msk [vmem:[%s2 + $0x1a0] sm:$0xff] %vm215, %v9174
  %9379 = vst.msk [vmem:[%s2 + $0x1a8] sm:$0xff] %vm215, %v9175
  %9380 = vst.msk [vmem:[%s2 + $0x1b0] sm:$0xff] %vm215, %v9176
  %9381 = vst.msk [vmem:[%s2 + $0x1b8] sm:$0xff] %vm215, %v9177
  %9382 = vst.msk [vmem:[%s2 + $0x1c0] sm:$0xff] %vm215, %v9178
  %9383 = vst.msk [vmem:[%s2 + $0x1c8] sm:$0xff] %vm215, %v9179
  %9384 = vst.msk [vmem:[%s2 + $0x1d0] sm:$0xff] %vm215, %v9180
  %9385 = vst.msk [vmem:[%s2 + $0x1d8] sm:$0xff] %vm215, %v9181
  %9386 = vst.msk [vmem:[%s2 + $0x1e0] sm:$0xff] %vm215, %v9182
  %9387 = vst.msk [vmem:[%s2 + $0x1e8] sm:$0xff] %vm215, %v9183
  %9388 = vst.msk [vmem:[%s2 + $0x1f0] sm:$0xff] %vm215, %v9184
  %9389 = vst.msk [vmem:[%s2 + $0x1f8] sm:$0xff] %vm215, %v9185
  %9390 = vst.msk [vmem:[%s2 + $0x200] sm:$0xff] %vm215, %v9186
  %9391 = vst.msk [vmem:[%s2 + $0x208] sm:$0xff] %vm215, %v9187
  %9392 = vst.msk [vmem:[%s2 + $0x210] sm:$0xff] %vm215, %v9188
  %9393 = vst.msk [vmem:[%s2 + $0x218] sm:$0xff] %vm215, %v9189
  %9394 = vst.msk [vmem:[%s2 + $0x220] sm:$0xff] %vm215, %v9190
  %9395 = vst.msk [vmem:[%s2 + $0x228] sm:$0xff] %vm215, %v9191
  %9396 = vst.msk [vmem:[%s2 + $0x230] sm:$0xff] %vm215, %v9192
  %9397 = vst.msk [vmem:[%s2 + $0x238] sm:$0xff] %vm215, %v9193
  %9398 = vst.msk [vmem:[%s2 + $0x240] sm:$0xff] %vm215, %v9194
  %9399 = vst.msk [vmem:[%s2 + $0x248] sm:$0xff] %vm215, %v9195
  %9400 = vst.msk [vmem:[%s2 + $0x250] sm:$0xff] %vm215, %v9196
  %9401 = vst.msk [vmem:[%s2 + $0x258] sm:$0xff] %vm215, %v9197
  %9402 = vst.msk [vmem:[%s2 + $0x260] sm:$0xff] %vm215, %v9198
  %9403 = vst.msk [vmem:[%s2 + $0x268] sm:$0xff] %vm215, %v9199
  %9404 = vst.msk [vmem:[%s2 + $0x270] sm:$0xff] %vm215, %v9200
  %9405 = vst.msk [vmem:[%s2 + $0x278] sm:$0xff] %vm215, %v9201
  %9406 = vst.msk [vmem:[%s2 + $0x280] sm:$0xff] %vm215, %v9202
  %9407 = vst.msk [vmem:[%s2 + $0x288] sm:$0xff] %vm215, %v9203
  %9408 = vst.msk [vmem:[%s2 + $0x290] sm:$0xff] %vm215, %v9204
  %9409 = vst.msk [vmem:[%s2 + $0x298] sm:$0xff] %vm215, %v9205
  %9410 = vst.msk [vmem:[%s2 + $0x2a0] sm:$0xff] %vm215, %v9206
  %9411 = vst.msk [vmem:[%s2 + $0x2a8] sm:$0xff] %vm215, %v9207
  %9412 = vst.msk [vmem:[%s2 + $0x2b0] sm:$0xff] %vm215, %v9208
  %9413 = vst.msk [vmem:[%s2 + $0x2b8] sm:$0xff] %vm215, %v9209
  %9414 = vst.msk [vmem:[%s2 + $0x2c0] sm:$0xff] %vm215, %v9210
  %9415 = vst.msk [vmem:[%s2 + $0x2c8] sm:$0xff] %vm215, %v9211
  %9416 = vst.msk [vmem:[%s2 + $0x2d0] sm:$0xff] %vm215, %v9212
  %9417 = vst.msk [vmem:[%s2 + $0x2d8] sm:$0xff] %vm215, %v9213
  %9418 = vst.msk [vmem:[%s2 + $0x2e0] sm:$0xff] %vm215, %v9214
  %9419 = vst.msk [vmem:[%s2 + $0x2e8] sm:$0xff] %vm215, %v9215
  %9420 = vst.msk [vmem:[%s2 + $0x2f0] sm:$0xff] %vm215, %v9216
  %9421 = vst.msk [vmem:[%s2 + $0x2f8] sm:$0xff] %vm215, %v9217
  %9422 = vst.msk [vmem:[%s2 + $0x300] sm:$0xff] %vm215, %v9218
  %9423 = vst.msk [vmem:[%s2 + $0x308] sm:$0xff] %vm215, %v9219
  %9424 = vst.msk [vmem:[%s2 + $0x310] sm:$0xff] %vm215, %v9220
  %9425 = vst.msk [vmem:[%s2 + $0x318] sm:$0xff] %vm215, %v9221
  %9426 = vst.msk [vmem:[%s2 + $0x320] sm:$0xff] %vm215, %v9222
  %9427 = vst.msk [vmem:[%s2 + $0x328] sm:$0xff] %vm215, %v9223
  %9428 = vst.msk [vmem:[%s2 + $0x330] sm:$0xff] %vm215, %v9224
  %9429 = vst.msk [vmem:[%s2 + $0x338] sm:$0xff] %vm215, %v9225
  %9430 = vst.msk [vmem:[%s2 + $0x340] sm:$0xff] %vm215, %v9226
  %9431 = vst.msk [vmem:[%s2 + $0x348] sm:$0xff] %vm215, %v9227
  %9432 = vst.msk [vmem:[%s2 + $0x350] sm:$0xff] %vm215, %v9228
  %9433 = vst.msk [vmem:[%s2 + $0x358] sm:$0xff] %vm215, %v9229
  %9434 = vst.msk [vmem:[%s2 + $0x360] sm:$0xff] %vm215, %v9230
  %9435 = vst.msk [vmem:[%s2 + $0x368] sm:$0xff] %vm215, %v9231
  %9436 = vst.msk [vmem:[%s2 + $0x370] sm:$0xff] %vm215, %v9232
  %9437 = vst.msk [vmem:[%s2 + $0x378] sm:$0xff] %vm215, %v9233
  %9438 = vst.msk [vmem:[%s2 + $0x380] sm:$0xff] %vm215, %v9234
  %9439 = vst.msk [vmem:[%s2 + $0x388] sm:$0xff] %vm215, %v9235
  %9440 = vst.msk [vmem:[%s2 + $0x390] sm:$0xff] %vm215, %v9236
  %9441 = vst.msk [vmem:[%s2 + $0x398] sm:$0xff] %vm215, %v9237
  %9442 = vst.msk [vmem:[%s2 + $0x3a0] sm:$0xff] %vm215, %v9238
  %9443 = vst.msk [vmem:[%s2 + $0x3a8] sm:$0xff] %vm215, %v9239
  %9444 = vst.msk [vmem:[%s2 + $0x3b0] sm:$0xff] %vm215, %v9240
  %9445 = vst.msk [vmem:[%s2 + $0x3b8] sm:$0xff] %vm215, %v9241
  %9446 = vst.msk [vmem:[%s2 + $0x3c0] sm:$0xff] %vm215, %v9242
  %9447 = vst.msk [vmem:[%s2 + $0x3c8] sm:$0xff] %vm215, %v9243
  %9448 = vst.msk [vmem:[%s2 + $0x3d0] sm:$0xff] %vm215, %v9244
  %9449 = vst.msk [vmem:[%s2 + $0x3d8] sm:$0xff] %vm215, %v9245
  %9450 = vst.msk [vmem:[%s2 + $0x3e0] sm:$0xff] %vm215, %v9246
  %9451 = vst.msk [vmem:[%s2 + $0x3e8] sm:$0xff] %vm215, %v9247
  %9452 = vst.msk [vmem:[%s2 + $0x3f0] sm:$0xff] %vm215, %v9248
  %9453 = vst.msk [vmem:[%s2 + $0x3f8] sm:$0xff] %vm215, %v9249
  %9454 = vst.msk [vmem:[%s2 + $0x400] sm:$0xff] %vm215, %v9250
  %9455 = vst.msk [vmem:[%s2 + $0x408] sm:$0xff] %vm215, %v9251
  %9456 = vst.msk [vmem:[%s2 + $0x410] sm:$0xff] %vm215, %v9252
  %9457 = vst.msk [vmem:[%s2 + $0x418] sm:$0xff] %vm215, %v9253
  %9458 = vst.msk [vmem:[%s2 + $0x420] sm:$0xff] %vm215, %v9254
  %9459 = vst.msk [vmem:[%s2 + $0x428] sm:$0xff] %vm215, %v9255
  %9460 = vst.msk [vmem:[%s2 + $0x430] sm:$0xff] %vm215, %v9256
  %9461 = vst.msk [vmem:[%s2 + $0x438] sm:$0xff] %vm215, %v9257
  %9462 = vst.msk [vmem:[%s2 + $0x440] sm:$0xff] %vm215, %v9258
  %9463 = vst.msk [vmem:[%s2 + $0x448] sm:$0xff] %vm215, %v9259
  %9464 = vst.msk [vmem:[%s2 + $0x450] sm:$0xff] %vm215, %v9260
  %9465 = vst.msk [vmem:[%s2 + $0x458] sm:$0xff] %vm215, %v9261
  %9466 = vst.msk [vmem:[%s2 + $0x460] sm:$0xff] %vm215, %v9262
  %9467 = vst.msk [vmem:[%s2 + $0x468] sm:$0xff] %vm215, %v9263
  %9468 = vst.msk [vmem:[%s2 + $0x470] sm:$0xff] %vm215, %v9264
  %9469 = vst.msk [vmem:[%s2 + $0x478] sm:$0xff] %vm215, %v9265
  %9470 = vst.msk [vmem:[%s2 + $0x480] sm:$0xff] %vm215, %v9266
  %9471 = vst.msk [vmem:[%s2 + $0x488] sm:$0xff] %vm215, %v9267
  %9472 = vst.msk [vmem:[%s2 + $0x490] sm:$0xff] %vm215, %v9268
  %9473 = vst.msk [vmem:[%s2 + $0x498] sm:$0xff] %vm215, %v9269
  %9474 = vst.msk [vmem:[%s2 + $0x4a0] sm:$0xff] %vm215, %v9270
  %9475 = vst.msk [vmem:[%s2 + $0x4a8] sm:$0xff] %vm215, %v9271
  %9476 = vst.msk [vmem:[%s2 + $0x4b0] sm:$0xff] %vm215, %v9272
  %9477 = vst.msk [vmem:[%s2 + $0x4b8] sm:$0xff] %vm215, %v9273
  %9478 = vst.msk [vmem:[%s2 + $0x4c0] sm:$0xff] %vm215, %v9274
  %9479 = vst.msk [vmem:[%s2 + $0x4c8] sm:$0xff] %vm215, %v9275
  %9480 = vst.msk [vmem:[%s2 + $0x4d0] sm:$0xff] %vm215, %v9276
  %9481 = vst.msk [vmem:[%s2 + $0x4d8] sm:$0xff] %vm215, %v9277
  %9482 = vst.msk [vmem:[%s2 + $0x4e0] sm:$0xff] %vm215, %v9278
  %9483 = vst.msk [vmem:[%s2 + $0x4e8] sm:$0xff] %vm215, %v9279
  %9484 = vst.msk [vmem:[%s2 + $0x4f0] sm:$0xff] %vm215, %v9280
  %9485 = vst.msk [vmem:[%s2 + $0x4f8] sm:$0xff] %vm215, %v9281
  %9486 = vst.msk [vmem:[%s2 + $0x500] sm:$0xff] %vm215, %v9282
  %9487 = vst.msk [vmem:[%s2 + $0x508] sm:$0xff] %vm215, %v9283
  %9488 = vst.msk [vmem:[%s2 + $0x510] sm:$0xff] %vm215, %v9284
  %9489 = vst.msk [vmem:[%s2 + $0x518] sm:$0xff] %vm215, %v9285
  %9490 = vst.msk [vmem:[%s2 + $0x520] sm:$0xff] %vm215, %v9286
  %9491 = vst.msk [vmem:[%s2 + $0x528] sm:$0xff] %vm215, %v9287
  %9492 = vst.msk [vmem:[%s2 + $0x530] sm:$0xff] %vm215, %v9288
  %9493 = vst.msk [vmem:[%s2 + $0x538] sm:$0xff] %vm215, %v9289
  %9494 = vst.msk [vmem:[%s2 + $0x540] sm:$0xff] %vm215, %v9290
  %9495 = vst.msk [vmem:[%s2 + $0x548] sm:$0xff] %vm215, %v9291
  %9496 = vst.msk [vmem:[%s2 + $0x550] sm:$0xff] %vm215, %v9292
  %9497 = vst.msk [vmem:[%s2 + $0x558] sm:$0xff] %vm215, %v9293
  %9498 = vst.msk [vmem:[%s2 + $0x560] sm:$0xff] %vm215, %v9294
  %9499 = vst.msk [vmem:[%s2 + $0x568] sm:$0xff] %vm215, %v9295
  %9500 = vst.msk [vmem:[%s2 + $0x570] sm:$0xff] %vm215, %v9296
  %9501 = vst.msk [vmem:[%s2 + $0x578] sm:$0xff] %vm215, %v9297
  %9502 = vst.msk [vmem:[%s2 + $0x580] sm:$0xff] %vm215, %v9298
  %9503 = vst.msk [vmem:[%s2 + $0x588] sm:$0xff] %vm215, %v9299
  %9504 = vst.msk [vmem:[%s2 + $0x590] sm:$0xff] %vm215, %v9300
  %9505 = vst.msk [vmem:[%s2 + $0x598] sm:$0xff] %vm215, %v9301
  %9506 = vst.msk [vmem:[%s2 + $0x5a0] sm:$0xff] %vm215, %v9302
  %9507 = vst.msk [vmem:[%s2 + $0x5a8] sm:$0xff] %vm215, %v9303
  %9508 = vst.msk [vmem:[%s2 + $0x5b0] sm:$0xff] %vm215, %v9304
  %9509 = vst.msk [vmem:[%s2 + $0x5b8] sm:$0xff] %vm215, %v9305
  %9510 = vst.msk [vmem:[%s2 + $0x5c0] sm:$0xff] %vm215, %v9306
  %9511 = vst.msk [vmem:[%s2 + $0x5c8] sm:$0xff] %vm215, %v9307
  %9512 = vst.msk [vmem:[%s2 + $0x5d0] sm:$0xff] %vm215, %v9308
  %9513 = vst.msk [vmem:[%s2 + $0x5d8] sm:$0xff] %vm215, %v9309
  %9514 = vst.msk [vmem:[%s2 + $0x5e0] sm:$0xff] %vm215, %v9310
  %9515 = vst.msk [vmem:[%s2 + $0x5e8] sm:$0xff] %vm215, %v9311
  %9516 = vst.msk [vmem:[%s2 + $0x5f0] sm:$0xff] %vm215, %v9312
  %9517 = vst.msk [vmem:[%s2 + $0x5f8] sm:$0xff] %vm215, %v9313
  %9518 = vst.msk [vmem:[%s2 + $0x600] sm:$0xff] %vm215, %v9314
  %9519 = vst.msk [vmem:[%s2 + $0x608] sm:$0xff] %vm215, %v9315
  %9520 = vst.msk [vmem:[%s2 + $0x610] sm:$0xff] %vm215, %v9316
  %9521 = vst.msk [vmem:[%s2 + $0x618] sm:$0xff] %vm215, %v9317
  %9522 = vst.msk [vmem:[%s2 + $0x620] sm:$0xff] %vm215, %v9318
  %9523 = vst.msk [vmem:[%s2 + $0x628] sm:$0xff] %vm215, %v9319
  %9524 = vst.msk [vmem:[%s2 + $0x630] sm:$0xff] %vm215, %v9320
  %9525 = vst.msk [vmem:[%s2 + $0x638] sm:$0xff] %vm215, %v9321
  %9526 = vst.msk [vmem:[%s2 + $0x640] sm:$0xff] %vm215, %v9322
  %9527 = vst.msk [vmem:[%s2 + $0x648] sm:$0xff] %vm215, %v9323
  %9528 = vst.msk [vmem:[%s2 + $0x650] sm:$0xff] %vm215, %v9324
  %9529 = vst.msk [vmem:[%s2 + $0x658] sm:$0xff] %vm215, %v9325
  // Predicated region
  $region10: #{_batchnorm2d_pallas.1} parent=0 // pred_check
    _
  $region11: #{_batchnorm2d_pallas.1} parent=0 // pred_check_branch
    %9531 = sbr.rel (0) target = $region13
  $region12: #{_batchnorm2d_pallas.1} parent=0 // pred_region
    _
  $region13: #{_batchnorm2d_pallas.1} parent=0 // pred_fallthru
    _
  // Predicated region
  $region14: #{_batchnorm2d_pallas.1} parent=0 // pred_check
    _
  $region15: #{_batchnorm2d_pallas.1} parent=0 // pred_check_branch
    %9533 = sbr.rel (0) target = $region17
  $region16: #{_batchnorm2d_pallas.1} parent=0 // pred_region
    _
  $region17: #{_batchnorm2d_pallas.1} parent=0 // pred_fallthru
    _

</llo_original>
